<compile_context>
chip_gen: v7x
topology: tpu7x:2x2x1
jax: 0.10.0
libtpu: 0.0.40
codegen_flags: <defaults>
</compile_context>

<pallas_src>
import functools
import numpy as np
import jax
import jax.numpy as jnp
from jax.experimental import pallas as pl
from jax.experimental.pallas import tpu as pltpu

# ---------------- model hyper-params (from the torch script) ----------------
embed_dim    = 64
patch_size   = (2, 2)
num_heads    = 8
window_size  = 2
num_mlp      = 128
shift_size   = 1
num_classes  = 6
input_shape  = (32, 32, 1)
num_patch_x  = input_shape[0] // patch_size[0]   # 16
num_patch_y  = input_shape[1] // patch_size[1]   # 16

_LN_EPS = 1e-5


# ============================ small helpers ============================

def _relative_position_index(ws):
    coords_h = np.arange(ws)
    coords_w = np.arange(ws)
    coords = np.stack(np.meshgrid(coords_h, coords_w, indexing="ij"))     # (2, ws, ws)
    cf = coords.reshape(2, -1)                                            # (2, ws*ws)
    rel = cf[:, :, None] - cf[:, None, :]                                 # (2, N, N)
    rel = rel.transpose(1, 2, 0).astype(np.int32)                         # (N, N, 2)
    rel[:, :, 0] += ws - 1
    rel[:, :, 1] += ws - 1
    rel[:, :, 0] *= 2 * ws - 1
    return rel.sum(-1)                                                    # (N, N)


def _gelu_exact(x):
    # exact (erf-based) GELU as in torch nn.GELU(); erf via the Abramowitz-Stegun
    # 7.1.26 rational approximation (|err| < 1.5e-7), so the kernel only needs
    # exp/abs/where lowering (EUP + VPU).
    z = x * 0.7071067811865476
    a = jnp.abs(z)
    t = 1.0 / (1.0 + 0.3275911 * a)
    poly = t * (0.254829592 + t * (-0.284496736 + t * (1.421413741
             + t * (-1.453152027 + t * 1.061405429))))
    erf_abs = 1.0 - poly * jnp.exp(-a * a)
    erf = jnp.where(z >= 0, erf_abs, -erf_abs)
    return x * 0.5 * (1.0 + erf)


# ============================ Pallas kernels ============================

# ---- fused patch-embed (conv-as-matmul) + bias + pos-embed, channel-major out ----
def _patch_embed_kernel(cols_ref, w_ref, b_ref, pos_ref, o_ref):
    t = jnp.dot(w_ref[...].astype(jnp.float32), cols_ref[...].astype(jnp.float32),
                preferred_element_type=jnp.float32)
    o_ref[...] = (t + b_ref[...] + pos_ref[...]).astype(o_ref.dtype)


def patch_embed(x, w, b, pos):
    """x NHWC (B, 32, 32, 1) -> channel-major tokens (E, B*P)."""
    B, H, W, Cin = x.shape
    ph, pw = patch_size
    P = (H // ph) * (W // pw)
    K = ph * pw * Cin
    E = w.shape[1]
    cols = x.reshape(B, H // ph, ph, W // pw, pw, Cin)
    cols_t = cols.transpose(2, 4, 5, 0, 1, 3).reshape(K, B * P)      # (K, B*P)
    return pl.pallas_call(
        _patch_embed_kernel,
        out_shape=jax.ShapeDtypeStruct((E, B * P), x.dtype),
        grid=(B,),
        in_specs=[pl.BlockSpec((K, P), lambda i: (0, i)),
                  pl.BlockSpec((E, K), lambda i: (0, 0)),
                  pl.BlockSpec((E, 1), lambda i: (0, 0)),
                  pl.BlockSpec((E, P), lambda i: (0, 0))],
        out_specs=pl.BlockSpec((E, P), lambda i: (0, i)),
        compiler_params=pltpu.CompilerParams(dimension_semantics=("parallel",)),
    )(cols_t, w.T, b.reshape(E, 1), pos.T)


# ---- fused LN1 + qkv + per-window attention + rel-pos bias + proj ----
# Layout: xt (C, N*G): channels on sublanes, lane = n*G + g with n = window slot,
# g = (batch, window) index.  qkv rows are pre-permuted to (d, h) order so that
# every per-head product / reduction is an aligned (nh, G) vreg op.
def _make_attn_kernel(nh, hd, N, G):
    C = nh * hd

    def kernel(xt_ref, wqkv_ref, bqkv_ref, wproj_ref, bproj_ref,
               g1_ref, b1_ref, bias_ref, out_ref):
        x = xt_ref[...].astype(jnp.float32)                         # (C, N*G)
        mu = jnp.mean(x, axis=0, keepdims=True)
        xc = x - mu
        var = jnp.mean(xc * xc, axis=0, keepdims=True)
        y = xc * jax.lax.rsqrt(var + _LN_EPS) * g1_ref[...] + b1_ref[...]

        # single big qkv projection (q-scale, channel roll and (d,h) perm folded in)
        qkv = jnp.dot(wqkv_ref[...], y, preferred_element_type=jnp.float32) + bqkv_ref[...]

        q = [qkv[0:C,       n * G:(n + 1) * G] for n in range(N)]   # (C, G) each
        k = [qkv[C:2 * C,   n * G:(n + 1) * G] for n in range(N)]
        v = [qkv[2 * C:3 * C, n * G:(n + 1) * G] for n in range(N)]
        bias = bias_ref[...]                                        # (N*N*nh, 1), order (n,m,h)

        # scores: per (query n, key m) -> (nh, G); rows are (d, h) ordered so the
        # head_dim contraction is a sum of hd aligned (nh, G) vregs.
        s = [[None] * N for _ in range(N)]
        for n in range(N):
            for m in range(N):
                prod = q[n] * k[m]                                  # (C, G)
                acc = prod[0:nh, :]
                for d in range(1, hd):
                    acc = acc + prod[d * nh:(d + 1) * nh, :]
                s[n][m] = acc + bias[(n * N + m) * nh:(n * N + m + 1) * nh, :]

        outs = []
        for n in range(N):
            mx = s[n][0]
            for m in range(1, N):
                mx = jnp.maximum(mx, s[n][m])
            e = [jnp.exp(s[n][m] - mx) for m in range(N)]
            den = e[0]
            for m in range(1, N):
                den = den + e[m]
            inv = 1.0 / den
            p = [e[m] * inv for m in range(N)]                      # (nh, G) softmax probs
            # attn @ v: v rows are (d, h) ordered, so each hd-group of nh sublanes
            # lines up elementwise with the (nh, G) probability vreg (no broadcasts).
            rows = []
            for d in range(hd):
                accv = p[0] * v[0][d * nh:(d + 1) * nh, :]
                for m in range(1, N):
                    accv = accv + p[m] * v[m][d * nh:(d + 1) * nh, :]
                rows.append(accv)
            outs.append(jnp.concatenate(rows, axis=0))              # (C, G), (d,h) order

        attn = jnp.concatenate(outs, axis=1)                        # (C, N*G)
        pr = jnp.dot(wproj_ref[...], attn,
                     preferred_element_type=jnp.float32) + bproj_ref[...]
        out_ref[...] = pr.astype(out_ref.dtype)                     # native channel order

    return kernel


# ---- fused residual + LN2 + MLP (GELU) + residual, channel-major ----
def _mlp_kernel_t(x_ref, a_ref, g_ref, bt_ref, w1t_ref, b1_ref, w2t_ref, b2_ref, o_ref):
    x1 = x_ref[...].astype(jnp.float32) + a_ref[...].astype(jnp.float32)   # (C, tm)
    mu = jnp.mean(x1, axis=0, keepdims=True)
    xc = x1 - mu
    var = jnp.mean(xc * xc, axis=0, keepdims=True)
    xn = xc * jax.lax.rsqrt(var + _LN_EPS) * g_ref[...] + bt_ref[...]
    h = jnp.dot(w1t_ref[...], xn, preferred_element_type=jnp.float32) + b1_ref[...]
    h = _gelu_exact(h)
    y = jnp.dot(w2t_ref[...], h, preferred_element_type=jnp.float32) + b2_ref[...]
    o_ref[...] = (x1 + y).astype(o_ref.dtype)


def mlp_residual_t(x_t, a_t, p):
    C, M = x_t.shape
    H = p["mlp_w1"].shape[1]
    tm = 256 if (M % 256 == 0 and M >= 256) else M   # 2 lane-dense tiles (both TCs on v7x)
    return pl.pallas_call(
        _mlp_kernel_t,
        out_shape=jax.ShapeDtypeStruct((C, M), x_t.dtype),
        grid=(M // tm,),
        in_specs=[pl.BlockSpec((C, tm), lambda i: (0, i)),
                  pl.BlockSpec((C, tm), lambda i: (0, i)),
                  pl.BlockSpec((C, 1), lambda i: (0, 0)),
                  pl.BlockSpec((C, 1), lambda i: (0, 0)),
                  pl.BlockSpec((H, C), lambda i: (0, 0)),
                  pl.BlockSpec((H, 1), lambda i: (0, 0)),
                  pl.BlockSpec((C, H), lambda i: (0, 0)),
                  pl.BlockSpec((C, 1), lambda i: (0, 0))],
        out_specs=pl.BlockSpec((C, tm), lambda i: (0, i)),
        compiler_params=pltpu.CompilerParams(dimension_semantics=("parallel",)),
    )(x_t, a_t, p["ln2_g"].reshape(C, 1), p["ln2_b"].reshape(C, 1),
      p["mlp_w1"].T, p["mlp_b1"].reshape(H, 1), p["mlp_w2"].T, p["mlp_b2"].reshape(C, 1))


# ---- fused patch-merge linear + AdaptiveAvgPool1d(1) + classifier ----
def _tail_kernel(y_ref, w_ref, fcw_ref, fcb_ref, o_ref, *, batch, tokens):
    merged = jnp.dot(y_ref[...].astype(jnp.float32), w_ref[...].astype(jnp.float32),
                     preferred_element_type=jnp.float32)             # (B*T, 2C)
    pooled = jnp.mean(merged, axis=-1, keepdims=True)                # (B*T, 1) pool over 2C
    fcw = fcw_ref[...].astype(jnp.float32)                           # (T, ncls)
    fcb = fcb_ref[...].astype(jnp.float32)                           # (1, ncls)
    for b in range(batch):
        pb = pooled[b * tokens:(b + 1) * tokens, :]                  # (T, 1)
        row = jnp.sum(pb * fcw, axis=0, keepdims=True) + fcb         # (1, ncls)
        o_ref[b:b + 1, :] = row.astype(o_ref.dtype)


def merge_pool_fc(y, pm_w, fc_w, fc_b, batch):
    tokens = y.shape[0] // batch
    ncls = fc_w.shape[1]
    kernel = functools.partial(_tail_kernel, batch=batch, tokens=tokens)
    return pl.pallas_call(
        kernel,
        out_shape=jax.ShapeDtypeStruct((batch, ncls), y.dtype),
    )(y, pm_w, fc_w, fc_b.reshape(1, ncls))


# ============================ model (plain-JAX layout glue) ============================

def swin_block(x_t, p, num_patch, nh, ws, shift):
    """x_t: channel-major tokens (C, B*L)."""
    C, M = x_t.shape
    Hs, Ws = num_patch
    B = M // (Hs * Ws)
    if min(num_patch) < ws:
        shift, ws = 0, min(num_patch)
    N = ws * ws
    nWy, nWx = Hs // ws, Ws // ws
    G = B * nWy * nWx
    hd = C // nh
    scale = hd ** (-0.5)

    # ---- host-side weight prep: fold channel-roll, q-scale and (d,h) permutation ----
    perm = np.arange(C).reshape(nh, hd).T.reshape(-1)          # new row d*nh+h <- old h*hd+d
    full_perm = np.concatenate([perm, perm + C, perm + 2 * C])
    qscale = np.concatenate([np.full((C,), scale, np.float32),
                             np.ones((2 * C,), np.float32)])
    wqkv_t = p["qkv_w"].T                                       # (3C, C)
    if shift > 0:
        # the torch reference cyclically shifts the *channel* axis after norm1;
        # fold that roll into the qkv weight's input-channel axis.
        wqkv_t = jnp.roll(wqkv_t, shift, axis=1)
    wqkv_t = wqkv_t[full_perm, :] * qscale[:, None]
    bqkv = (p["qkv_b"][full_perm] * qscale).reshape(3 * C, 1)
    wproj_t = p["proj_w"].T[:, perm]                            # columns follow (d,h) order

    # relative position bias as a (N*N*nh, 1) column, rows ordered (n, m, h)
    rel_idx = _relative_position_index(ws)
    bias_col = p["rel_table"][rel_idx.reshape(-1)].reshape(N * N * nh, 1).astype(x_t.dtype)

    # ---- glue: W-shift (torch ref shifts dim=2 only) + window partition ----
    # TODO(synk): these token permutations stay as XLA transposes/rolls; an in-kernel
    #             lane-gather back to raster order has no clean Pallas expression.
    x4 = x_t.reshape(C, B, Hs, Ws)
    xs = jnp.roll(x4, -shift, axis=3) if shift > 0 else x4
    xt2 = (xs.reshape(C, B, nWy, ws, nWx, ws)
             .transpose(0, 3, 5, 1, 2, 4)
             .reshape(C, N * G))

    at2 = pl.pallas_call(
        _make_attn_kernel(nh, hd, N, G),
        out_shape=jax.ShapeDtypeStruct((C, N * G), x_t.dtype),
    )(xt2, wqkv_t, bqkv, wproj_t, p["proj_b"].reshape(C, 1),
      p["ln1_g"].reshape(C, 1), p["ln1_b"].reshape(C, 1), bias_col)

    # ---- glue: window reverse + (H, W) reverse roll (faithful to the torch ref) ----
    a4 = (at2.reshape(C, ws, ws, B, nWy, nWx)
             .transpose(0, 3, 4, 1, 5, 2)
             .reshape(C, B, Hs, Ws))
    if shift > 0:
        a4 = jnp.roll(a4, (shift, shift), axis=(2, 3))
    a_t = a4.reshape(C, M)

    # ---- fused residual + LN2 + MLP(GELU) + residual ----
    return mlp_residual_t(x_t, a_t, p)


def swin_model(x, params):
    B = x.shape[0]
    C = embed_dim
    tok_t = patch_embed(x, params["pe_w"], params["pe_b"], params["pos_embed"][0])  # (C, B*256)
    tok_t = swin_block(tok_t, params["block1"], (num_patch_x, num_patch_y),
                       num_heads, window_size, shift_size)
    tok_t = swin_block(tok_t, params["block2"], (num_patch_x, num_patch_y),
                       num_heads, window_size, shift_size)

    # patch-merging rearrangement (replicates the torch permute pattern), then fused tail
    H, W = num_patch_x, num_patch_y
    y = (tok_t.reshape(C, B, H // 2, 2, W // 2, 2)
              .transpose(1, 2, 4, 0, 3, 5)
              .reshape(B * (H // 2) * (W // 2), 4 * C))                             # (B*64, 4C)
    return merge_pool_fc(y, params["pm_w"], params["fc_w"], params["fc_b"], B)       # (B, ncls)


# ============================ parameter init ============================

def init_params(key):
    ks = jax.random.split(key, 16)

    def nrm(k, shape, s=0.02):
        return jax.random.normal(k, shape, jnp.float32) * s

    def block(k):
        bk = jax.random.split(k, 6)
        return dict(
            ln1_g=jnp.ones((embed_dim,), jnp.float32),
            ln1_b=jnp.zeros((embed_dim,), jnp.float32),
            qkv_w=nrm(bk[0], (embed_dim, 3 * embed_dim)),
            qkv_b=jnp.zeros((3 * embed_dim,), jnp.float32),
            proj_w=nrm(bk[1], (embed_dim, embed_dim)),
            proj_b=jnp.zeros((embed_dim,), jnp.float32),
            rel_table=nrm(bk[2], ((2 * window_size - 1) ** 2, num_heads)),
            ln2_g=jnp.ones((embed_dim,), jnp.float32),
            ln2_b=jnp.zeros((embed_dim,), jnp.float32),
            mlp_w1=nrm(bk[3], (embed_dim, num_mlp)),
            mlp_b1=jnp.zeros((num_mlp,), jnp.float32),
            mlp_w2=nrm(bk[4], (num_mlp, embed_dim)),
            mlp_b2=jnp.zeros((embed_dim,), jnp.float32),
        )

    params = dict(
        pe_w=nrm(ks[0], (patch_size[0] * patch_size[1] * 1, embed_dim)),
        pe_b=jnp.zeros((embed_dim,), jnp.float32),
        pos_embed=nrm(ks[1], (1, num_patch_x * num_patch_y, embed_dim)),
        block1=block(ks[2]),
        block2=block(ks[3]),
        pm_w=nrm(ks[4], (4 * embed_dim, 2 * embed_dim)),
        fc_w=nrm(ks[5], (embed_dim, num_classes)),
        fc_b=jnp.zeros((num_classes,), jnp.float32),
    )
    return params


# ============================ main ============================

if __name__ == "__main__":
    key = jax.random.PRNGKey(0)
    pkey, xkey = jax.random.split(key)
    params = init_params(pkey)

    # NHWC input (the torch model is fed NHWC and permutes internally)
    x = jax.random.normal(xkey, (2, 32, 32, 1), jnp.float32)

    fwd = jax.jit(functools.partial(swin_model, params=params))
    out = fwd(x)
    jax.block_until_ready(out)
    assert out.shape == (2, num_classes), out.shape
    assert bool(jnp.all(jnp.isfinite(out)))
    print("KERNEL_OK")
</pallas_src>

<mosaic_0001>
module attributes {stable_mosaic.version = 11 : i64} {
  func.func @_patch_embed_kernel(%arg0: i32, %arg1: memref<4x256xf32, #tpu.memory_space<vmem>>, %arg2: memref<64x4xf32, #tpu.memory_space<vmem>>, %arg3: memref<64x1xf32, #tpu.memory_space<vmem>>, %arg4: memref<64x256xf32, #tpu.memory_space<vmem>>, %arg5: memref<64x256xf32, #tpu.memory_space<vmem>>) attributes {dimension_semantics = [#tpu.dimension_semantics<parallel>], iteration_bounds = array<i64: 2>, scalar_prefetch = 0 : i64, scratch_operands = 0 : i64, tpu.core_type = #tpu.core_type<tc>, window_params = [{transform_indices = @transform_0, window_bounds = array<i64: 4, 256>}, {pipeline_mode = #tpu.pipeline_mode<synchronous>, transform_indices = @transform_1, window_bounds = array<i64: 64, 4>}, {pipeline_mode = #tpu.pipeline_mode<synchronous>, transform_indices = @transform_2, window_bounds = array<i64: 64, 1>}, {pipeline_mode = #tpu.pipeline_mode<synchronous>, transform_indices = @transform_3, window_bounds = array<i64: 64, 256>}, {transform_indices = @transform_4, window_bounds = array<i64: 64, 256>}]} {
    %c0 = arith.constant 0 : index
    %c0_0 = arith.constant 0 : index
    %0 = vector.load %arg2[%c0, %c0_0] : memref<64x4xf32, #tpu.memory_space<vmem>>, vector<64x4xf32>
    %c0_1 = arith.constant 0 : index
    %c0_2 = arith.constant 0 : index
    %1 = vector.load %arg1[%c0_1, %c0_2] : memref<4x256xf32, #tpu.memory_space<vmem>>, vector<4x256xf32>
    %cst = arith.constant dense<0.000000e+00> : vector<64x256xf32>
    %2 = tpu.matmul %0, %1, %cst {dimension_numbers = #tpu.dot_dimension_numbers<[1], [0], [0], [1], [0, 0, 1, 1], [], []>} : vector<64x4xf32>, vector<4x256xf32>, vector<64x256xf32> -> vector<64x256xf32>
    %c0_3 = arith.constant 0 : index
    %c0_4 = arith.constant 0 : index
    %3 = vector.load %arg3[%c0_3, %c0_4] : memref<64x1xf32, #tpu.memory_space<vmem>>, vector<64x1xf32>
    %4 = vector.broadcast %3 : vector<64x1xf32> to vector<64x256xf32>
    %5 = arith.addf %2, %4 : vector<64x256xf32>
    %c0_5 = arith.constant 0 : index
    %c0_6 = arith.constant 0 : index
    %6 = vector.load %arg4[%c0_5, %c0_6] : memref<64x256xf32, #tpu.memory_space<vmem>>, vector<64x256xf32>
    %7 = arith.addf %5, %6 : vector<64x256xf32>
    %c0_7 = arith.constant 0 : index
    %c0_8 = arith.constant 0 : index
    %8 = vector.load %arg5[%c0_7, %c0_8] : memref<64x256xf32, #tpu.memory_space<vmem>>, vector<64x256xf32>
    tpu.vector_store %arg5[%c0_7, %c0_8], %7 {strides = array<i32>} : memref<64x256xf32, #tpu.memory_space<vmem>>, vector<64x256xf32>,
    return
  }
  func.func @transform_0(%arg0: i32) -> (i32, i32) {
    %c0_i32 = arith.constant 0 : i32
    %c0_i32_0 = arith.constant 0 : i32
    return %c0_i32, %arg0 : i32, i32
  }
  func.func @transform_1(%arg0: i32) -> (i32, i32) {
    %c0_i32 = arith.constant 0 : i32
    %c0_i32_0 = arith.constant 0 : i32
    %c0_i32_1 = arith.constant 0 : i32
    return %c0_i32, %c0_i32_0 : i32, i32
  }
  func.func @transform_2(%arg0: i32) -> (i32, i32) {
    %c0_i32 = arith.constant 0 : i32
    %c0_i32_0 = arith.constant 0 : i32
    %c0_i32_1 = arith.constant 0 : i32
    return %c0_i32, %c0_i32_0 : i32, i32
  }
  func.func @transform_3(%arg0: i32) -> (i32, i32) {
    %c0_i32 = arith.constant 0 : i32
    %c0_i32_0 = arith.constant 0 : i32
    %c0_i32_1 = arith.constant 0 : i32
    return %c0_i32, %c0_i32_0 : i32, i32
  }
  func.func @transform_4(%arg0: i32) -> (i32, i32) {
    %c0_i32 = arith.constant 0 : i32
    %c0_i32_0 = arith.constant 0 : i32
    return %c0_i32, %arg0 : i32, i32
  }
}

module attributes {stable_mosaic.version = 11 : i64} {
  func.func @kernel(%arg0: memref<64x512xf32, #tpu.memory_space<vmem>>, %arg1: memref<192x64xf32, #tpu.memory_space<vmem>>, %arg2: memref<192x1xf32, #tpu.memory_space<vmem>>, %arg3: memref<64x64xf32, #tpu.memory_space<vmem>>, %arg4: memref<64x1xf32, #tpu.memory_space<vmem>>, %arg5: memref<64x1xf32, #tpu.memory_space<vmem>>, %arg6: memref<64x1xf32, #tpu.memory_space<vmem>>, %arg7: memref<128x1xf32, #tpu.memory_space<vmem>>, %arg8: memref<64x512xf32, #tpu.memory_space<vmem>>) attributes {dimension_semantics = [], scalar_prefetch = 0 : i64, scratch_operands = 0 : i64, tpu.core_type = #tpu.core_type<tc>} {
    %c0 = arith.constant 0 : index
    %c0_0 = arith.constant 0 : index
    %0 = vector.load %arg0[%c0, %c0_0] : memref<64x512xf32, #tpu.memory_space<vmem>>, vector<64x512xf32>
    %cst = arith.constant dense<0.000000e+00> : vector<512xf32>
    %1 = vector.multi_reduction <add>, %0, %cst [0] : vector<64x512xf32> to vector<512xf32>
    %2 = vector.shape_cast %1 : vector<512xf32> to vector<1x512xf32>
    %cst_1 = arith.constant 6.400000e+01 : f32
    %3 = vector.broadcast %cst_1 : f32 to vector<1x512xf32>
    %4 = arith.divf %2, %3 : vector<1x512xf32>
    %5 = vector.broadcast %4 : vector<1x512xf32> to vector<64x512xf32>
    %6 = arith.subf %0, %5 : vector<64x512xf32>
    %7 = arith.mulf %6, %6 : vector<64x512xf32>
    %cst_2 = arith.constant dense<0.000000e+00> : vector<512xf32>
    %8 = vector.multi_reduction <add>, %7, %cst_2 [0] : vector<64x512xf32> to vector<512xf32>
    %9 = vector.shape_cast %8 : vector<512xf32> to vector<1x512xf32>
    %cst_3 = arith.constant 6.400000e+01 : f32
    %10 = vector.broadcast %cst_3 : f32 to vector<1x512xf32>
    %11 = arith.divf %9, %10 : vector<1x512xf32>
    %cst_4 = arith.constant 9.99999974E-6 : f32
    %12 = vector.broadcast %cst_4 : f32 to vector<1x512xf32>
    %13 = arith.addf %11, %12 : vector<1x512xf32>
    %14 = math.rsqrt %13 : vector<1x512xf32>
    %15 = vector.broadcast %14 : vector<1x512xf32> to vector<64x512xf32>
    %16 = arith.mulf %6, %15 : vector<64x512xf32>
    %c0_5 = arith.constant 0 : index
    %c0_6 = arith.constant 0 : index
    %17 = vector.load %arg5[%c0_5, %c0_6] : memref<64x1xf32, #tpu.memory_space<vmem>>, vector<64x1xf32>
    %18 = vector.broadcast %17 : vector<64x1xf32> to vector<64x512xf32>
    %19 = arith.mulf %16, %18 : vector<64x512xf32>
    %c0_7 = arith.constant 0 : index
    %c0_8 = arith.constant 0 : index
    %20 = vector.load %arg6[%c0_7, %c0_8] : memref<64x1xf32, #tpu.memory_space<vmem>>, vector<64x1xf32>
    %21 = vector.broadcast %20 : vector<64x1xf32> to vector<64x512xf32>
    %22 = arith.addf %19, %21 : vector<64x512xf32>
    %c0_9 = arith.constant 0 : index
    %c0_10 = arith.constant 0 : index
    %23 = vector.load %arg1[%c0_9, %c0_10] : memref<192x64xf32, #tpu.memory_space<vmem>>, vector<192x64xf32>
    %cst_11 = arith.constant dense<0.000000e+00> : vector<192x512xf32>
    %24 = tpu.matmul %23, %22, %cst_11 {dimension_numbers = #tpu.dot_dimension_numbers<[1], [0], [0], [1], [0, 0, 1, 1], [], []>} : vector<192x64xf32>, vector<64x512xf32>, vector<192x512xf32> -> vector<192x512xf32>
    %c0_12 = arith.constant 0 : index
    %c0_13 = arith.constant 0 : index
    %25 = vector.load %arg2[%c0_12, %c0_13] : memref<192x1xf32, #tpu.memory_space<vmem>>, vector<192x1xf32>
    %26 = vector.broadcast %25 : vector<192x1xf32> to vector<192x512xf32>
    %27 = arith.addf %24, %26 : vector<192x512xf32>
    %28 = vector.extract_strided_slice %27 {offsets = [0, 0], sizes = [64, 128], strides = [1, 1]} : vector<192x512xf32> to vector<64x128xf32>
    %29 = vector.extract_strided_slice %27 {offsets = [0, 128], sizes = [64, 128], strides = [1, 1]} : vector<192x512xf32> to vector<64x128xf32>
    %30 = vector.extract_strided_slice %27 {offsets = [0, 256], sizes = [64, 128], strides = [1, 1]} : vector<192x512xf32> to vector<64x128xf32>
    %31 = vector.extract_strided_slice %27 {offsets = [0, 384], sizes = [64, 128], strides = [1, 1]} : vector<192x512xf32> to vector<64x128xf32>
    %32 = vector.extract_strided_slice %27 {offsets = [64, 0], sizes = [64, 128], strides = [1, 1]} : vector<192x512xf32> to vector<64x128xf32>
    %33 = vector.extract_strided_slice %27 {offsets = [64, 128], sizes = [64, 128], strides = [1, 1]} : vector<192x512xf32> to vector<64x128xf32>
    %34 = vector.extract_strided_slice %27 {offsets = [64, 256], sizes = [64, 128], strides = [1, 1]} : vector<192x512xf32> to vector<64x128xf32>
    %35 = vector.extract_strided_slice %27 {offsets = [64, 384], sizes = [64, 128], strides = [1, 1]} : vector<192x512xf32> to vector<64x128xf32>
    %36 = vector.extract_strided_slice %27 {offsets = [128, 0], sizes = [64, 128], strides = [1, 1]} : vector<192x512xf32> to vector<64x128xf32>
    %37 = vector.extract_strided_slice %27 {offsets = [128, 128], sizes = [64, 128], strides = [1, 1]} : vector<192x512xf32> to vector<64x128xf32>
    %38 = vector.extract_strided_slice %27 {offsets = [128, 256], sizes = [64, 128], strides = [1, 1]} : vector<192x512xf32> to vector<64x128xf32>
    %39 = vector.extract_strided_slice %27 {offsets = [128, 384], sizes = [64, 128], strides = [1, 1]} : vector<192x512xf32> to vector<64x128xf32>
    %c0_14 = arith.constant 0 : index
    %c0_15 = arith.constant 0 : index
    %40 = vector.load %arg7[%c0_14, %c0_15] : memref<128x1xf32, #tpu.memory_space<vmem>>, vector<128x1xf32>
    %41 = arith.mulf %28, %32 : vector<64x128xf32>
    %42 = vector.extract_strided_slice %41 {offsets = [0, 0], sizes = [8, 128], strides = [1, 1]} : vector<64x128xf32> to vector<8x128xf32>
    %43 = vector.extract_strided_slice %41 {offsets = [8, 0], sizes = [8, 128], strides = [1, 1]} : vector<64x128xf32> to vector<8x128xf32>
    %44 = arith.addf %42, %43 : vector<8x128xf32>
    %45 = vector.extract_strided_slice %41 {offsets = [16, 0], sizes = [8, 128], strides = [1, 1]} : vector<64x128xf32> to vector<8x128xf32>
    %46 = arith.addf %44, %45 : vector<8x128xf32>
    %47 = vector.extract_strided_slice %41 {offsets = [24, 0], sizes = [8, 128], strides = [1, 1]} : vector<64x128xf32> to vector<8x128xf32>
    %48 = arith.addf %46, %47 : vector<8x128xf32>
    %49 = vector.extract_strided_slice %41 {offsets = [32, 0], sizes = [8, 128], strides = [1, 1]} : vector<64x128xf32> to vector<8x128xf32>
    %50 = arith.addf %48, %49 : vector<8x128xf32>
    %51 = vector.extract_strided_slice %41 {offsets = [40, 0], sizes = [8, 128], strides = [1, 1]} : vector<64x128xf32> to vector<8x128xf32>
    %52 = arith.addf %50, %51 : vector<8x128xf32>
    %53 = vector.extract_strided_slice %41 {offsets = [48, 0], sizes = [8, 128], strides = [1, 1]} : vector<64x128xf32> to vector<8x128xf32>
    %54 = arith.addf %52, %53 : vector<8x128xf32>
    %55 = vector.extract_strided_slice %41 {offsets = [56, 0], sizes = [8, 128], strides = [1, 1]} : vector<64x128xf32> to vector<8x128xf32>
    %56 = arith.addf %54, %55 : vector<8x128xf32>
    %57 = vector.extract_strided_slice %40 {offsets = [0, 0], sizes = [8, 1], strides = [1, 1]} : vector<128x1xf32> to vector<8x1xf32>
    %58 = vector.broadcast %57 : vector<8x1xf32> to vector<8x128xf32>
    %59 = arith.addf %56, %58 : vector<8x128xf32>
    %60 = arith.mulf %28, %33 : vector<64x128xf32>
    %61 = vector.extract_strided_slice %60 {offsets = [0, 0], sizes = [8, 128], strides = [1, 1]} : vector<64x128xf32> to vector<8x128xf32>
    %62 = vector.extract_strided_slice %60 {offsets = [8, 0], sizes = [8, 128], strides = [1, 1]} : vector<64x128xf32> to vector<8x128xf32>
    %63 = arith.addf %61, %62 : vector<8x128xf32>
    %64 = vector.extract_strided_slice %60 {offsets = [16, 0], sizes = [8, 128], strides = [1, 1]} : vector<64x128xf32> to vector<8x128xf32>
    %65 = arith.addf %63, %64 : vector<8x128xf32>
    %66 = vector.extract_strided_slice %60 {offsets = [24, 0], sizes = [8, 128], strides = [1, 1]} : vector<64x128xf32> to vector<8x128xf32>
    %67 = arith.addf %65, %66 : vector<8x128xf32>
    %68 = vector.extract_strided_slice %60 {offsets = [32, 0], sizes = [8, 128], strides = [1, 1]} : vector<64x128xf32> to vector<8x128xf32>
    %69 = arith.addf %67, %68 : vector<8x128xf32>
    %70 = vector.extract_strided_slice %60 {offsets = [40, 0], sizes = [8, 128], strides = [1, 1]} : vector<64x128xf32> to vector<8x128xf32>
    %71 = arith.addf %69, %70 : vector<8x128xf32>
    %72 = vector.extract_strided_slice %60 {offsets = [48, 0], sizes = [8, 128], strides = [1, 1]} : vector<64x128xf32> to vector<8x128xf32>
    %73 = arith.addf %71, %72 : vector<8x128xf32>
    %74 = vector.extract_strided_slice %60 {offsets = [56, 0], sizes = [8, 128], strides = [1, 1]} : vector<64x128xf32> to vector<8x128xf32>
    %75 = arith.addf %73, %74 : vector<8x128xf32>
    %76 = vector.extract_strided_slice %40 {offsets = [8, 0], sizes = [8, 1], strides = [1, 1]} : vector<128x1xf32> to vector<8x1xf32>
    %77 = vector.broadcast %76 : vector<8x1xf32> to vector<8x128xf32>
    %78 = arith.addf %75, %77 : vector<8x128xf32>
    %79 = arith.mulf %28, %34 : vector<64x128xf32>
    %80 = vector.extract_strided_slice %79 {offsets = [0, 0], sizes = [8, 128], strides = [1, 1]} : vector<64x128xf32> to vector<8x128xf32>
    %81 = vector.extract_strided_slice %79 {offsets = [8, 0], sizes = [8, 128], strides = [1, 1]} : vector<64x128xf32> to vector<8x128xf32>
    %82 = arith.addf %80, %81 : vector<8x128xf32>
    %83 = vector.extract_strided_slice %79 {offsets = [16, 0], sizes = [8, 128], strides = [1, 1]} : vector<64x128xf32> to vector<8x128xf32>
    %84 = arith.addf %82, %83 : vector<8x128xf32>
    %85 = vector.extract_strided_slice %79 {offsets = [24, 0], sizes = [8, 128], strides = [1, 1]} : vector<64x128xf32> to vector<8x128xf32>
    %86 = arith.addf %84, %85 : vector<8x128xf32>
    %87 = vector.extract_strided_slice %79 {offsets = [32, 0], sizes = [8, 128], strides = [1, 1]} : vector<64x128xf32> to vector<8x128xf32>
    %88 = arith.addf %86, %87 : vector<8x128xf32>
    %89 = vector.extract_strided_slice %79 {offsets = [40, 0], sizes = [8, 128], strides = [1, 1]} : vector<64x128xf32> to vector<8x128xf32>
    %90 = arith.addf %88, %89 : vector<8x128xf32>
    %91 = vector.extract_strided_slice %79 {offsets = [48, 0], sizes = [8, 128], strides = [1, 1]} : vector<64x128xf32> to vector<8x128xf32>
    %92 = arith.addf %90, %91 : vector<8x128xf32>
    %93 = vector.extract_strided_slice %79 {offsets = [56, 0], sizes = [8, 128], strides = [1, 1]} : vector<64x128xf32> to vector<8x128xf32>
    %94 = arith.addf %92, %93 : vector<8x128xf32>
    %95 = vector.extract_strided_slice %40 {offsets = [16, 0], sizes = [8, 1], strides = [1, 1]} : vector<128x1xf32> to vector<8x1xf32>
    %96 = vector.broadcast %95 : vector<8x1xf32> to vector<8x128xf32>
    %97 = arith.addf %94, %96 : vector<8x128xf32>
    %98 = arith.mulf %28, %35 : vector<64x128xf32>
    %99 = vector.extract_strided_slice %98 {offsets = [0, 0], sizes = [8, 128], strides = [1, 1]} : vector<64x128xf32> to vector<8x128xf32>
    %100 = vector.extract_strided_slice %98 {offsets = [8, 0], sizes = [8, 128], strides = [1, 1]} : vector<64x128xf32> to vector<8x128xf32>
    %101 = arith.addf %99, %100 : vector<8x128xf32>
    %102 = vector.extract_strided_slice %98 {offsets = [16, 0], sizes = [8, 128], strides = [1, 1]} : vector<64x128xf32> to vector<8x128xf32>
    %103 = arith.addf %101, %102 : vector<8x128xf32>
    %104 = vector.extract_strided_slice %98 {offsets = [24, 0], sizes = [8, 128], strides = [1, 1]} : vector<64x128xf32> to vector<8x128xf32>
    %105 = arith.addf %103, %104 : vector<8x128xf32>
    %106 = vector.extract_strided_slice %98 {offsets = [32, 0], sizes = [8, 128], strides = [1, 1]} : vector<64x128xf32> to vector<8x128xf32>
    %107 = arith.addf %105, %106 : vector<8x128xf32>
    %108 = vector.extract_strided_slice %98 {offsets = [40, 0], sizes = [8, 128], strides = [1, 1]} : vector<64x128xf32> to vector<8x128xf32>
    %109 = arith.addf %107, %108 : vector<8x128xf32>
    %110 = vector.extract_strided_slice %98 {offsets = [48, 0], sizes = [8, 128], strides = [1, 1]} : vector<64x128xf32> to vector<8x128xf32>
    %111 = arith.addf %109, %110 : vector<8x128xf32>
    %112 = vector.extract_strided_slice %98 {offsets = [56, 0], sizes = [8, 128], strides = [1, 1]} : vector<64x128xf32> to vector<8x128xf32>
    %113 = arith.addf %111, %112 : vector<8x128xf32>
    %114 = vector.extract_strided_slice %40 {offsets = [24, 0], sizes = [8, 1], strides = [1, 1]} : vector<128x1xf32> to vector<8x1xf32>
    %115 = vector.broadcast %114 : vector<8x1xf32> to vector<8x128xf32>
    %116 = arith.addf %113, %115 : vector<8x128xf32>
    %117 = arith.mulf %29, %32 : vector<64x128xf32>
    %118 = vector.extract_strided_slice %117 {offsets = [0, 0], sizes = [8, 128], strides = [1, 1]} : vector<64x128xf32> to vector<8x128xf32>
    %119 = vector.extract_strided_slice %117 {offsets = [8, 0], sizes = [8, 128], strides = [1, 1]} : vector<64x128xf32> to vector<8x128xf32>
    %120 = arith.addf %118, %119 : vector<8x128xf32>
    %121 = vector.extract_strided_slice %117 {offsets = [16, 0], sizes = [8, 128], strides = [1, 1]} : vector<64x128xf32> to vector<8x128xf32>
    %122 = arith.addf %120, %121 : vector<8x128xf32>
    %123 = vector.extract_strided_slice %117 {offsets = [24, 0], sizes = [8, 128], strides = [1, 1]} : vector<64x128xf32> to vector<8x128xf32>
    %124 = arith.addf %122, %123 : vector<8x128xf32>
    %125 = vector.extract_strided_slice %117 {offsets = [32, 0], sizes = [8, 128], strides = [1, 1]} : vector<64x128xf32> to vector<8x128xf32>
    %126 = arith.addf %124, %125 : vector<8x128xf32>
    %127 = vector.extract_strided_slice %117 {offsets = [40, 0], sizes = [8, 128], strides = [1, 1]} : vector<64x128xf32> to vector<8x128xf32>
    %128 = arith.addf %126, %127 : vector<8x128xf32>
    %129 = vector.extract_strided_slice %117 {offsets = [48, 0], sizes = [8, 128], strides = [1, 1]} : vector<64x128xf32> to vector<8x128xf32>
    %130 = arith.addf %128, %129 : vector<8x128xf32>
    %131 = vector.extract_strided_slice %117 {offsets = [56, 0], sizes = [8, 128], strides = [1, 1]} : vector<64x128xf32> to vector<8x128xf32>
    %132 = arith.addf %130, %131 : vector<8x128xf32>
    %133 = vector.extract_strided_slice %40 {offsets = [32, 0], sizes = [8, 1], strides = [1, 1]} : vector<128x1xf32> to vector<8x1xf32>
    %134 = vector.broadcast %133 : vector<8x1xf32> to vector<8x128xf32>
    %135 = arith.addf %132, %134 : vector<8x128xf32>
    %136 = arith.mulf %29, %33 : vector<64x128xf32>
    %137 = vector.extract_strided_slice %136 {offsets = [0, 0], sizes = [8, 128], strides = [1, 1]} : vector<64x128xf32> to vector<8x128xf32>
    %138 = vector.extract_strided_slice %136 {offsets = [8, 0], sizes = [8, 128], strides = [1, 1]} : vector<64x128xf32> to vector<8x128xf32>
    %139 = arith.addf %137, %138 : vector<8x128xf32>
    %140 = vector.extract_strided_slice %136 {offsets = [16, 0], sizes = [8, 128], strides = [1, 1]} : vector<64x128xf32> to vector<8x128xf32>
    %141 = arith.addf %139, %140 : vector<8x128xf32>
    %142 = vector.extract_strided_slice %136 {offsets = [24, 0], sizes = [8, 128], strides = [1, 1]} : vector<64x128xf32> to vector<8x128xf32>
    %143 = arith.addf %141, %142 : vector<8x128xf32>
    %144 = vector.extract_strided_slice %136 {offsets = [32, 0], sizes = [8, 128], strides = [1, 1]} : vector<64x128xf32> to vector<8x128xf32>
    %145 = arith.addf %143, %144 : vector<8x128xf32>
    %146 = vector.extract_strided_slice %136 {offsets = [40, 0], sizes = [8, 128], strides = [1, 1]} : vector<64x128xf32> to vector<8x128xf32>
    %147 = arith.addf %145, %146 : vector<8x128xf32>
    %148 = vector.extract_strided_slice %136 {offsets = [48, 0], sizes = [8, 128], strides = [1, 1]} : vector<64x128xf32> to vector<8x128xf32>
    %149 = arith.addf %147, %148 : vector<8x128xf32>
    %150 = vector.extract_strided_slice %136 {offsets = [56, 0], sizes = [8, 128], strides = [1, 1]} : vector<64x128xf32> to vector<8x128xf32>
    %151 = arith.addf %149, %150 : vector<8x128xf32>
    %152 = vector.extract_strided_slice %40 {offsets = [40, 0], sizes = [8, 1], strides = [1, 1]} : vector<128x1xf32> to vector<8x1xf32>
    %153 = vector.broadcast %152 : vector<8x1xf32> to vector<8x128xf32>
    %154 = arith.addf %151, %153 : vector<8x128xf32>
    %155 = arith.mulf %29, %34 : vector<64x128xf32>
    %156 = vector.extract_strided_slice %155 {offsets = [0, 0], sizes = [8, 128], strides = [1, 1]} : vector<64x128xf32> to vector<8x128xf32>
    %157 = vector.extract_strided_slice %155 {offsets = [8, 0], sizes = [8, 128], strides = [1, 1]} : vector<64x128xf32> to vector<8x128xf32>
    %158 = arith.addf %156, %157 : vector<8x128xf32>
    %159 = vector.extract_strided_slice %155 {offsets = [16, 0], sizes = [8, 128], strides = [1, 1]} : vector<64x128xf32> to vector<8x128xf32>
    %160 = arith.addf %158, %159 : vector<8x128xf32>
    %161 = vector.extract_strided_slice %155 {offsets = [24, 0], sizes = [8, 128], strides = [1, 1]} : vector<64x128xf32> to vector<8x128xf32>
    %162 = arith.addf %160, %161 : vector<8x128xf32>
    %163 = vector.extract_strided_slice %155 {offsets = [32, 0], sizes = [8, 128], strides = [1, 1]} : vector<64x128xf32> to vector<8x128xf32>
    %164 = arith.addf %162, %163 : vector<8x128xf32>
    %165 = vector.extract_strided_slice %155 {offsets = [40, 0], sizes = [8, 128], strides = [1, 1]} : vector<64x128xf32> to vector<8x128xf32>
    %166 = arith.addf %164, %165 : vector<8x128xf32>
    %167 = vector.extract_strided_slice %155 {offsets = [48, 0], sizes = [8, 128], strides = [1, 1]} : vector<64x128xf32> to vector<8x128xf32>
    %168 = arith.addf %166, %167 : vector<8x128xf32>
    %169 = vector.extract_strided_slice %155 {offsets = [56, 0], sizes = [8, 128], strides = [1, 1]} : vector<64x128xf32> to vector<8x128xf32>
    %170 = arith.addf %168, %169 : vector<8x128xf32>
    %171 = vector.extract_strided_slice %40 {offsets = [48, 0], sizes = [8, 1], strides = [1, 1]} : vector<128x1xf32> to vector<8x1xf32>
    %172 = vector.broadcast %171 : vector<8x1xf32> to vector<8x128xf32>
    %173 = arith.addf %170, %172 : vector<8x128xf32>
    %174 = arith.mulf %29, %35 : vector<64x128xf32>
    %175 = vector.extract_strided_slice %174 {offsets = [0, 0], sizes = [8, 128], strides = [1, 1]} : vector<64x128xf32> to vector<8x128xf32>
    %176 = vector.extract_strided_slice %174 {offsets = [8, 0], sizes = [8, 128], strides = [1, 1]} : vector<64x128xf32> to vector<8x128xf32>
    %177 = arith.addf %175, %176 : vector<8x128xf32>
    %178 = vector.extract_strided_slice %174 {offsets = [16, 0], sizes = [8, 128], strides = [1, 1]} : vector<64x128xf32> to vector<8x128xf32>
    %179 = arith.addf %177, %178 : vector<8x128xf32>
    %180 = vector.extract_strided_slice %174 {offsets = [24, 0], sizes = [8, 128], strides = [1, 1]} : vector<64x128xf32> to vector<8x128xf32>
    %181 = arith.addf %179, %180 : vector<8x128xf32>
    %182 = vector.extract_strided_slice %174 {offsets = [32, 0], sizes = [8, 128], strides = [1, 1]} : vector<64x128xf32> to vector<8x128xf32>
    %183 = arith.addf %181, %182 : vector<8x128xf32>
    %184 = vector.extract_strided_slice %174 {offsets = [40, 0], sizes = [8, 128], strides = [1, 1]} : vector<64x128xf32> to vector<8x128xf32>
    %185 = arith.addf %183, %184 : vector<8x128xf32>
    %186 = vector.extract_strided_slice %174 {offsets = [48, 0], sizes = [8, 128], strides = [1, 1]} : vector<64x128xf32> to vector<8x128xf32>
    %187 = arith.addf %185, %186 : vector<8x128xf32>
    %188 = vector.extract_strided_slice %174 {offsets = [56, 0], sizes = [8, 128], strides = [1, 1]} : vector<64x128xf32> to vector<8x128xf32>
    %189 = arith.addf %187, %188 : vector<8x128xf32>
    %190 = vector.extract_strided_slice %40 {offsets = [56, 0], sizes = [8, 1], strides = [1, 1]} : vector<128x1xf32> to vector<8x1xf32>
    %191 = vector.broadcast %190 : vector<8x1xf32> to vector<8x128xf32>
    %192 = arith.addf %189, %191 : vector<8x128xf32>
    %193 = arith.mulf %30, %32 : vector<64x128xf32>
    %194 = vector.extract_strided_slice %193 {offsets = [0, 0], sizes = [8, 128], strides = [1, 1]} : vector<64x128xf32> to vector<8x128xf32>
    %195 = vector.extract_strided_slice %193 {offsets = [8, 0], sizes = [8, 128], strides = [1, 1]} : vector<64x128xf32> to vector<8x128xf32>
    %196 = arith.addf %194, %195 : vector<8x128xf32>
    %197 = vector.extract_strided_slice %193 {offsets = [16, 0], sizes = [8, 128], strides = [1, 1]} : vector<64x128xf32> to vector<8x128xf32>
    %198 = arith.addf %196, %197 : vector<8x128xf32>
    %199 = vector.extract_strided_slice %193 {offsets = [24, 0], sizes = [8, 128], strides = [1, 1]} : vector<64x128xf32> to vector<8x128xf32>
    %200 = arith.addf %198, %199 : vector<8x128xf32>
    %201 = vector.extract_strided_slice %193 {offsets = [32, 0], sizes = [8, 128], strides = [1, 1]} : vector<64x128xf32> to vector<8x128xf32>
    %202 = arith.addf %200, %201 : vector<8x128xf32>
    %203 = vector.extract_strided_slice %193 {offsets = [40, 0], sizes = [8, 128], strides = [1, 1]} : vector<64x128xf32> to vector<8x128xf32>
    %204 = arith.addf %202, %203 : vector<8x128xf32>
    %205 = vector.extract_strided_slice %193 {offsets = [48, 0], sizes = [8, 128], strides = [1, 1]} : vector<64x128xf32> to vector<8x128xf32>
    %206 = arith.addf %204, %205 : vector<8x128xf32>
    %207 = vector.extract_strided_slice %193 {offsets = [56, 0], sizes = [8, 128], strides = [1, 1]} : vector<64x128xf32> to vector<8x128xf32>
    %208 = arith.addf %206, %207 : vector<8x128xf32>
    %209 = vector.extract_strided_slice %40 {offsets = [64, 0], sizes = [8, 1], strides = [1, 1]} : vector<128x1xf32> to vector<8x1xf32>
    %210 = vector.broadcast %209 : vector<8x1xf32> to vector<8x128xf32>
    %211 = arith.addf %208, %210 : vector<8x128xf32>
    %212 = arith.mulf %30, %33 : vector<64x128xf32>
    %213 = vector.extract_strided_slice %212 {offsets = [0, 0], sizes = [8, 128], strides = [1, 1]} : vector<64x128xf32> to vector<8x128xf32>
    %214 = vector.extract_strided_slice %212 {offsets = [8, 0], sizes = [8, 128], strides = [1, 1]} : vector<64x128xf32> to vector<8x128xf32>
    %215 = arith.addf %213, %214 : vector<8x128xf32>
    %216 = vector.extract_strided_slice %212 {offsets = [16, 0], sizes = [8, 128], strides = [1, 1]} : vector<64x128xf32> to vector<8x128xf32>
    %217 = arith.addf %215, %216 : vector<8x128xf32>
    %218 = vector.extract_strided_slice %212 {offsets = [24, 0], sizes = [8, 128], strides = [1, 1]} : vector<64x128xf32> to vector<8x128xf32>
    %219 = arith.addf %217, %218 : vector<8x128xf32>
    %220 = vector.extract_strided_slice %212 {offsets = [32, 0], sizes = [8, 128], strides = [1, 1]} : vector<64x128xf32> to vector<8x128xf32>
    %221 = arith.addf %219, %220 : vector<8x128xf32>
    %222 = vector.extract_strided_slice %212 {offsets = [40, 0], sizes = [8, 128], strides = [1, 1]} : vector<64x128xf32> to vector<8x128xf32>
    %223 = arith.addf %221, %222 : vector<8x128xf32>
    %224 = vector.extract_strided_slice %212 {offsets = [48, 0], sizes = [8, 128], strides = [1, 1]} : vector<64x128xf32> to vector<8x128xf32>
    %225 = arith.addf %223, %224 : vector<8x128xf32>
    %226 = vector.extract_strided_slice %212 {offsets = [56, 0], sizes = [8, 128], strides = [1, 1]} : vector<64x128xf32> to vector<8x128xf32>
    %227 = arith.addf %225, %226 : vector<8x128xf32>
    %228 = vector.extract_strided_slice %40 {offsets = [72, 0], sizes = [8, 1], strides = [1, 1]} : vector<128x1xf32> to vector<8x1xf32>
    %229 = vector.broadcast %228 : vector<8x1xf32> to vector<8x128xf32>
    %230 = arith.addf %227, %229 : vector<8x128xf32>
    %231 = arith.mulf %30, %34 : vector<64x128xf32>
    %232 = vector.extract_strided_slice %231 {offsets = [0, 0], sizes = [8, 128], strides = [1, 1]} : vector<64x128xf32> to vector<8x128xf32>
    %233 = vector.extract_strided_slice %231 {offsets = [8, 0], sizes = [8, 128], strides = [1, 1]} : vector<64x128xf32> to vector<8x128xf32>
    %234 = arith.addf %232, %233 : vector<8x128xf32>
    %235 = vector.extract_strided_slice %231 {offsets = [16, 0], sizes = [8, 128], strides = [1, 1]} : vector<64x128xf32> to vector<8x128xf32>
    %236 = arith.addf %234, %235 : vector<8x128xf32>
    %237 = vector.extract_strided_slice %231 {offsets = [24, 0], sizes = [8, 128], strides = [1, 1]} : vector<64x128xf32> to vector<8x128xf32>
    %238 = arith.addf %236, %237 : vector<8x128xf32>
    %239 = vector.extract_strided_slice %231 {offsets = [32, 0], sizes = [8, 128], strides = [1, 1]} : vector<64x128xf32> to vector<8x128xf32>
    %240 = arith.addf %238, %239 : vector<8x128xf32>
    %241 = vector.extract_strided_slice %231 {offsets = [40, 0], sizes = [8, 128], strides = [1, 1]} : vector<64x128xf32> to vector<8x128xf32>
    %242 = arith.addf %240, %241 : vector<8x128xf32>
    %243 = vector.extract_strided_slice %231 {offsets = [48, 0], sizes = [8, 128], strides = [1, 1]} : vector<64x128xf32> to vector<8x128xf32>
    %244 = arith.addf %242, %243 : vector<8x128xf32>
    %245 = vector.extract_strided_slice %231 {offsets = [56, 0], sizes = [8, 128], strides = [1, 1]} : vector<64x128xf32> to vector<8x128xf32>
    %246 = arith.addf %244, %245 : vector<8x128xf32>
    %247 = vector.extract_strided_slice %40 {offsets = [80, 0], sizes = [8, 1], strides = [1, 1]} : vector<128x1xf32> to vector<8x1xf32>
    %248 = vector.broadcast %247 : vector<8x1xf32> to vector<8x128xf32>
    %249 = arith.addf %246, %248 : vector<8x128xf32>
    %250 = arith.mulf %30, %35 : vector<64x128xf32>
    %251 = vector.extract_strided_slice %250 {offsets = [0, 0], sizes = [8, 128], strides = [1, 1]} : vector<64x128xf32> to vector<8x128xf32>
    %252 = vector.extract_strided_slice %250 {offsets = [8, 0], sizes = [8, 128], strides = [1, 1]} : vector<64x128xf32> to vector<8x128xf32>
    %253 = arith.addf %251, %252 : vector<8x128xf32>
    %254 = vector.extract_strided_slice %250 {offsets = [16, 0], sizes = [8, 128], strides = [1, 1]} : vector<64x128xf32> to vector<8x128xf32>
    %255 = arith.addf %253, %254 : vector<8x128xf32>
    %256 = vector.extract_strided_slice %250 {offsets = [24, 0], sizes = [8, 128], strides = [1, 1]} : vector<64x128xf32> to vector<8x128xf32>
    %257 = arith.addf %255, %256 : vector<8x128xf32>
    %258 = vector.extract_strided_slice %250 {offsets = [32, 0], sizes = [8, 128], strides = [1, 1]} : vector<64x128xf32> to vector<8x128xf32>
    %259 = arith.addf %257, %258 : vector<8x128xf32>
    %260 = vector.extract_strided_slice %250 {offsets = [40, 0], sizes = [8, 128], strides = [1, 1]} : vector<64x128xf32> to vector<8x128xf32>
    %261 = arith.addf %259, %260 : vector<8x128xf32>
    %262 = vector.extract_strided_slice %250 {offsets = [48, 0], sizes = [8, 128], strides = [1, 1]} : vector<64x128xf32> to vector<8x128xf32>
    %263 = arith.addf %261, %262 : vector<8x128xf32>
    %264 = vector.extract_strided_slice %250 {offsets = [56, 0], sizes = [8, 128], strides = [1, 1]} : vector<64x128xf32> to vector<8x128xf32>
    %265 = arith.addf %263, %264 : vector<8x128xf32>
    %266 = vector.extract_strided_slice %40 {offsets = [88, 0], sizes = [8, 1], strides = [1, 1]} : vector<128x1xf32> to vector<8x1xf32>
    %267 = vector.broadcast %266 : vector<8x1xf32> to vector<8x128xf32>
    %268 = arith.addf %265, %267 : vector<8x128xf32>
    %269 = arith.mulf %31, %32 : vector<64x128xf32>
    %270 = vector.extract_strided_slice %269 {offsets = [0, 0], sizes = [8, 128], strides = [1, 1]} : vector<64x128xf32> to vector<8x128xf32>
    %271 = vector.extract_strided_slice %269 {offsets = [8, 0], sizes = [8, 128], strides = [1, 1]} : vector<64x128xf32> to vector<8x128xf32>
    %272 = arith.addf %270, %271 : vector<8x128xf32>
    %273 = vector.extract_strided_slice %269 {offsets = [16, 0], sizes = [8, 128], strides = [1, 1]} : vector<64x128xf32> to vector<8x128xf32>
    %274 = arith.addf %272, %273 : vector<8x128xf32>
    %275 = vector.extract_strided_slice %269 {offsets = [24, 0], sizes = [8, 128], strides = [1, 1]} : vector<64x128xf32> to vector<8x128xf32>
    %276 = arith.addf %274, %275 : vector<8x128xf32>
    %277 = vector.extract_strided_slice %269 {offsets = [32, 0], sizes = [8, 128], strides = [1, 1]} : vector<64x128xf32> to vector<8x128xf32>
    %278 = arith.addf %276, %277 : vector<8x128xf32>
    %279 = vector.extract_strided_slice %269 {offsets = [40, 0], sizes = [8, 128], strides = [1, 1]} : vector<64x128xf32> to vector<8x128xf32>
    %280 = arith.addf %278, %279 : vector<8x128xf32>
    %281 = vector.extract_strided_slice %269 {offsets = [48, 0], sizes = [8, 128], strides = [1, 1]} : vector<64x128xf32> to vector<8x128xf32>
    %282 = arith.addf %280, %281 : vector<8x128xf32>
    %283 = vector.extract_strided_slice %269 {offsets = [56, 0], sizes = [8, 128], strides = [1, 1]} : vector<64x128xf32> to vector<8x128xf32>
    %284 = arith.addf %282, %283 : vector<8x128xf32>
    %285 = vector.extract_strided_slice %40 {offsets = [96, 0], sizes = [8, 1], strides = [1, 1]} : vector<128x1xf32> to vector<8x1xf32>
    %286 = vector.broadcast %285 : vector<8x1xf32> to vector<8x128xf32>
    %287 = arith.addf %284, %286 : vector<8x128xf32>
    %288 = arith.mulf %31, %33 : vector<64x128xf32>
    %289 = vector.extract_strided_slice %288 {offsets = [0, 0], sizes = [8, 128], strides = [1, 1]} : vector<64x128xf32> to vector<8x128xf32>
    %290 = vector.extract_strided_slice %288 {offsets = [8, 0], sizes = [8, 128], strides = [1, 1]} : vector<64x128xf32> to vector<8x128xf32>
    %291 = arith.addf %289, %290 : vector<8x128xf32>
    %292 = vector.extract_strided_slice %288 {offsets = [16, 0], sizes = [8, 128], strides = [1, 1]} : vector<64x128xf32> to vector<8x128xf32>
    %293 = arith.addf %291, %292 : vector<8x128xf32>
    %294 = vector.extract_strided_slice %288 {offsets = [24, 0], sizes = [8, 128], strides = [1, 1]} : vector<64x128xf32> to vector<8x128xf32>
    %295 = arith.addf %293, %294 : vector<8x128xf32>
    %296 = vector.extract_strided_slice %288 {offsets = [32, 0], sizes = [8, 128], strides = [1, 1]} : vector<64x128xf32> to vector<8x128xf32>
    %297 = arith.addf %295, %296 : vector<8x128xf32>
    %298 = vector.extract_strided_slice %288 {offsets = [40, 0], sizes = [8, 128], strides = [1, 1]} : vector<64x128xf32> to vector<8x128xf32>
    %299 = arith.addf %297, %298 : vector<8x128xf32>
    %300 = vector.extract_strided_slice %288 {offsets = [48, 0], sizes = [8, 128], strides = [1, 1]} : vector<64x128xf32> to vector<8x128xf32>
    %301 = arith.addf %299, %300 : vector<8x128xf32>
    %302 = vector.extract_strided_slice %288 {offsets = [56, 0], sizes = [8, 128], strides = [1, 1]} : vector<64x128xf32> to vector<8x128xf32>
    %303 = arith.addf %301, %302 : vector<8x128xf32>
    %304 = vector.extract_strided_slice %40 {offsets = [104, 0], sizes = [8, 1], strides = [1, 1]} : vector<128x1xf32> to vector<8x1xf32>
    %305 = vector.broadcast %304 : vector<8x1xf32> to vector<8x128xf32>
    %306 = arith.addf %303, %305 : vector<8x128xf32>
    %307 = arith.mulf %31, %34 : vector<64x128xf32>
    %308 = vector.extract_strided_slice %307 {offsets = [0, 0], sizes = [8, 128], strides = [1, 1]} : vector<64x128xf32> to vector<8x128xf32>
    %309 = vector.extract_strided_slice %307 {offsets = [8, 0], sizes = [8, 128], strides = [1, 1]} : vector<64x128xf32> to vector<8x128xf32>
    %310 = arith.addf %308, %309 : vector<8x128xf32>
    %311 = vector.extract_strided_slice %307 {offsets = [16, 0], sizes = [8, 128], strides = [1, 1]} : vector<64x128xf32> to vector<8x128xf32>
    %312 = arith.addf %310, %311 : vector<8x128xf32>
    %313 = vector.extract_strided_slice %307 {offsets = [24, 0], sizes = [8, 128], strides = [1, 1]} : vector<64x128xf32> to vector<8x128xf32>
    %314 = arith.addf %312, %313 : vector<8x128xf32>
    %315 = vector.extract_strided_slice %307 {offsets = [32, 0], sizes = [8, 128], strides = [1, 1]} : vector<64x128xf32> to vector<8x128xf32>
    %316 = arith.addf %314, %315 : vector<8x128xf32>
    %317 = vector.extract_strided_slice %307 {offsets = [40, 0], sizes = [8, 128], strides = [1, 1]} : vector<64x128xf32> to vector<8x128xf32>
    %318 = arith.addf %316, %317 : vector<8x128xf32>
    %319 = vector.extract_strided_slice %307 {offsets = [48, 0], sizes = [8, 128], strides = [1, 1]} : vector<64x128xf32> to vector<8x128xf32>
    %320 = arith.addf %318, %319 : vector<8x128xf32>
    %321 = vector.extract_strided_slice %307 {offsets = [56, 0], sizes = [8, 128], strides = [1, 1]} : vector<64x128xf32> to vector<8x128xf32>
    %322 = arith.addf %320, %321 : vector<8x128xf32>
    %323 = vector.extract_strided_slice %40 {offsets = [112, 0], sizes = [8, 1], strides = [1, 1]} : vector<128x1xf32> to vector<8x1xf32>
    %324 = vector.broadcast %323 : vector<8x1xf32> to vector<8x128xf32>
    %325 = arith.addf %322, %324 : vector<8x128xf32>
    %326 = arith.mulf %31, %35 : vector<64x128xf32>
    %327 = vector.extract_strided_slice %326 {offsets = [0, 0], sizes = [8, 128], strides = [1, 1]} : vector<64x128xf32> to vector<8x128xf32>
    %328 = vector.extract_strided_slice %326 {offsets = [8, 0], sizes = [8, 128], strides = [1, 1]} : vector<64x128xf32> to vector<8x128xf32>
    %329 = arith.addf %327, %328 : vector<8x128xf32>
    %330 = vector.extract_strided_slice %326 {offsets = [16, 0], sizes = [8, 128], strides = [1, 1]} : vector<64x128xf32> to vector<8x128xf32>
    %331 = arith.addf %329, %330 : vector<8x128xf32>
    %332 = vector.extract_strided_slice %326 {offsets = [24, 0], sizes = [8, 128], strides = [1, 1]} : vector<64x128xf32> to vector<8x128xf32>
    %333 = arith.addf %331, %332 : vector<8x128xf32>
    %334 = vector.extract_strided_slice %326 {offsets = [32, 0], sizes = [8, 128], strides = [1, 1]} : vector<64x128xf32> to vector<8x128xf32>
    %335 = arith.addf %333, %334 : vector<8x128xf32>
    %336 = vector.extract_strided_slice %326 {offsets = [40, 0], sizes = [8, 128], strides = [1, 1]} : vector<64x128xf32> to vector<8x128xf32>
    %337 = arith.addf %335, %336 : vector<8x128xf32>
    %338 = vector.extract_strided_slice %326 {offsets = [48, 0], sizes = [8, 128], strides = [1, 1]} : vector<64x128xf32> to vector<8x128xf32>
    %339 = arith.addf %337, %338 : vector<8x128xf32>
    %340 = vector.extract_strided_slice %326 {offsets = [56, 0], sizes = [8, 128], strides = [1, 1]} : vector<64x128xf32> to vector<8x128xf32>
    %341 = arith.addf %339, %340 : vector<8x128xf32>
    %342 = vector.extract_strided_slice %40 {offsets = [120, 0], sizes = [8, 1], strides = [1, 1]} : vector<128x1xf32> to vector<8x1xf32>
    %343 = vector.broadcast %342 : vector<8x1xf32> to vector<8x128xf32>
    %344 = arith.addf %341, %343 : vector<8x128xf32>
    %345 = arith.maximumf %59, %78 : vector<8x128xf32>
    %346 = arith.maximumf %345, %97 : vector<8x128xf32>
    %347 = arith.maximumf %346, %116 : vector<8x128xf32>
    %348 = arith.subf %59, %347 : vector<8x128xf32>
    %349 = math.exp %348 : vector<8x128xf32>
    %350 = arith.subf %78, %347 : vector<8x128xf32>
    %351 = math.exp %350 : vector<8x128xf32>
    %352 = arith.subf %97, %347 : vector<8x128xf32>
    %353 = math.exp %352 : vector<8x128xf32>
    %354 = arith.subf %116, %347 : vector<8x128xf32>
    %355 = math.exp %354 : vector<8x128xf32>
    %356 = arith.addf %349, %351 : vector<8x128xf32>
    %357 = arith.addf %356, %353 : vector<8x128xf32>
    %358 = arith.addf %357, %355 : vector<8x128xf32>
    %cst_16 = arith.constant 1.000000e+00 : f32
    %359 = vector.broadcast %cst_16 : f32 to vector<8x128xf32>
    %360 = arith.divf %359, %358 : vector<8x128xf32>
    %361 = arith.mulf %349, %360 : vector<8x128xf32>
    %362 = arith.mulf %351, %360 : vector<8x128xf32>
    %363 = arith.mulf %353, %360 : vector<8x128xf32>
    %364 = arith.mulf %355, %360 : vector<8x128xf32>
    %365 = vector.extract_strided_slice %36 {offsets = [0, 0], sizes = [8, 128], strides = [1, 1]} : vector<64x128xf32> to vector<8x128xf32>
    %366 = arith.mulf %361, %365 : vector<8x128xf32>
    %367 = vector.extract_strided_slice %37 {offsets = [0, 0], sizes = [8, 128], strides = [1, 1]} : vector<64x128xf32> to vector<8x128xf32>
    %368 = arith.mulf %362, %367 : vector<8x128xf32>
    %369 = arith.addf %366, %368 : vector<8x128xf32>
    %370 = vector.extract_strided_slice %38 {offsets = [0, 0], sizes = [8, 128], strides = [1, 1]} : vector<64x128xf32> to vector<8x128xf32>
    %371 = arith.mulf %363, %370 : vector<8x128xf32>
    %372 = arith.addf %369, %371 : vector<8x128xf32>
    %373 = vector.extract_strided_slice %39 {offsets = [0, 0], sizes = [8, 128], strides = [1, 1]} : vector<64x128xf32> to vector<8x128xf32>
    %374 = arith.mulf %364, %373 : vector<8x128xf32>
    %375 = arith.addf %372, %374 : vector<8x128xf32>
    %376 = vector.extract_strided_slice %36 {offsets = [8, 0], sizes = [8, 128], strides = [1, 1]} : vector<64x128xf32> to vector<8x128xf32>
    %377 = arith.mulf %361, %376 : vector<8x128xf32>
    %378 = vector.extract_strided_slice %37 {offsets = [8, 0], sizes = [8, 128], strides = [1, 1]} : vector<64x128xf32> to vector<8x128xf32>
    %379 = arith.mulf %362, %378 : vector<8x128xf32>
    %380 = arith.addf %377, %379 : vector<8x128xf32>
    %381 = vector.extract_strided_slice %38 {offsets = [8, 0], sizes = [8, 128], strides = [1, 1]} : vector<64x128xf32> to vector<8x128xf32>
    %382 = arith.mulf %363, %381 : vector<8x128xf32>
    %383 = arith.addf %380, %382 : vector<8x128xf32>
    %384 = vector.extract_strided_slice %39 {offsets = [8, 0], sizes = [8, 128], strides = [1, 1]} : vector<64x128xf32> to vector<8x128xf32>
    %385 = arith.mulf %364, %384 : vector<8x128xf32>
    %386 = arith.addf %383, %385 : vector<8x128xf32>
    %387 = vector.extract_strided_slice %36 {offsets = [16, 0], sizes = [8, 128], strides = [1, 1]} : vector<64x128xf32> to vector<8x128xf32>
    %388 = arith.mulf %361, %387 : vector<8x128xf32>
    %389 = vector.extract_strided_slice %37 {offsets = [16, 0], sizes = [8, 128], strides = [1, 1]} : vector<64x128xf32> to vector<8x128xf32>
    %390 = arith.mulf %362, %389 : vector<8x128xf32>
    %391 = arith.addf %388, %390 : vector<8x128xf32>
    %392 = vector.extract_strided_slice %38 {offsets = [16, 0], sizes = [8, 128], strides = [1, 1]} : vector<64x128xf32> to vector<8x128xf32>
    %393 = arith.mulf %363, %392 : vector<8x128xf32>
    %394 = arith.addf %391, %393 : vector<8x128xf32>
    %395 = vector.extract_strided_slice %39 {offsets = [16, 0], sizes = [8, 128], strides = [1, 1]} : vector<64x128xf32> to vector<8x128xf32>
    %396 = arith.mulf %364, %395 : vector<8x128xf32>
    %397 = arith.addf %394, %396 : vector<8x128xf32>
    %398 = vector.extract_strided_slice %36 {offsets = [24, 0], sizes = [8, 128], strides = [1, 1]} : vector<64x128xf32> to vector<8x128xf32>
    %399 = arith.mulf %361, %398 : vector<8x128xf32>
    %400 = vector.extract_strided_slice %37 {offsets = [24, 0], sizes = [8, 128], strides = [1, 1]} : vector<64x128xf32> to vector<8x128xf32>
    %401 = arith.mulf %362, %400 : vector<8x128xf32>
    %402 = arith.addf %399, %401 : vector<8x128xf32>
    %403 = vector.extract_strided_slice %38 {offsets = [24, 0], sizes = [8, 128], strides = [1, 1]} : vector<64x128xf32> to vector<8x128xf32>
    %404 = arith.mulf %363, %403 : vector<8x128xf32>
    %405 = arith.addf %402, %404 : vector<8x128xf32>
    %406 = vector.extract_strided_slice %39 {offsets = [24, 0], sizes = [8, 128], strides = [1, 1]} : vector<64x128xf32> to vector<8x128xf32>
    %407 = arith.mulf %364, %406 : vector<8x128xf32>
    %408 = arith.addf %405, %407 : vector<8x128xf32>
    %409 = vector.extract_strided_slice %36 {offsets = [32, 0], sizes = [8, 128], strides = [1, 1]} : vector<64x128xf32> to vector<8x128xf32>
    %410 = arith.mulf %361, %409 : vector<8x128xf32>
    %411 = vector.extract_strided_slice %37 {offsets = [32, 0], sizes = [8, 128], strides = [1, 1]} : vector<64x128xf32> to vector<8x128xf32>
    %412 = arith.mulf %362, %411 : vector<8x128xf32>
    %413 = arith.addf %410, %412 : vector<8x128xf32>
    %414 = vector.extract_strided_slice %38 {offsets = [32, 0], sizes = [8, 128], strides = [1, 1]} : vector<64x128xf32> to vector<8x128xf32>
    %415 = arith.mulf %363, %414 : vector<8x128xf32>
    %416 = arith.addf %413, %415 : vector<8x128xf32>
    %417 = vector.extract_strided_slice %39 {offsets = [32, 0], sizes = [8, 128], strides = [1, 1]} : vector<64x128xf32> to vector<8x128xf32>
    %418 = arith.mulf %364, %417 : vector<8x128xf32>
    %419 = arith.addf %416, %418 : vector<8x128xf32>
    %420 = vector.extract_strided_slice %36 {offsets = [40, 0], sizes = [8, 128], strides = [1, 1]} : vector<64x128xf32> to vector<8x128xf32>
    %421 = arith.mulf %361, %420 : vector<8x128xf32>
    %422 = vector.extract_strided_slice %37 {offsets = [40, 0], sizes = [8, 128], strides = [1, 1]} : vector<64x128xf32> to vector<8x128xf32>
    %423 = arith.mulf %362, %422 : vector<8x128xf32>
    %424 = arith.addf %421, %423 : vector<8x128xf32>
    %425 = vector.extract_strided_slice %38 {offsets = [40, 0], sizes = [8, 128], strides = [1, 1]} : vector<64x128xf32> to vector<8x128xf32>
    %426 = arith.mulf %363, %425 : vector<8x128xf32>
    %427 = arith.addf %424, %426 : vector<8x128xf32>
    %428 = vector.extract_strided_slice %39 {offsets = [40, 0], sizes = [8, 128], strides = [1, 1]} : vector<64x128xf32> to vector<8x128xf32>
    %429 = arith.mulf %364, %428 : vector<8x128xf32>
    %430 = arith.addf %427, %429 : vector<8x128xf32>
    %431 = vector.extract_strided_slice %36 {offsets = [48, 0], sizes = [8, 128], strides = [1, 1]} : vector<64x128xf32> to vector<8x128xf32>
    %432 = arith.mulf %361, %431 : vector<8x128xf32>
    %433 = vector.extract_strided_slice %37 {offsets = [48, 0], sizes = [8, 128], strides = [1, 1]} : vector<64x128xf32> to vector<8x128xf32>
    %434 = arith.mulf %362, %433 : vector<8x128xf32>
    %435 = arith.addf %432, %434 : vector<8x128xf32>
    %436 = vector.extract_strided_slice %38 {offsets = [48, 0], sizes = [8, 128], strides = [1, 1]} : vector<64x128xf32> to vector<8x128xf32>
    %437 = arith.mulf %363, %436 : vector<8x128xf32>
    %438 = arith.addf %435, %437 : vector<8x128xf32>
    %439 = vector.extract_strided_slice %39 {offsets = [48, 0], sizes = [8, 128], strides = [1, 1]} : vector<64x128xf32> to vector<8x128xf32>
    %440 = arith.mulf %364, %439 : vector<8x128xf32>
    %441 = arith.addf %438, %440 : vector<8x128xf32>
    %442 = vector.extract_strided_slice %36 {offsets = [56, 0], sizes = [8, 128], strides = [1, 1]} : vector<64x128xf32> to vector<8x128xf32>
    %443 = arith.mulf %361, %442 : vector<8x128xf32>
    %444 = vector.extract_strided_slice %37 {offsets = [56, 0], sizes = [8, 128], strides = [1, 1]} : vector<64x128xf32> to vector<8x128xf32>
    %445 = arith.mulf %362, %444 : vector<8x128xf32>
    %446 = arith.addf %443, %445 : vector<8x128xf32>
    %447 = vector.extract_strided_slice %38 {offsets = [56, 0], sizes = [8, 128], strides = [1, 1]} : vector<64x128xf32> to vector<8x128xf32>
    %448 = arith.mulf %363, %447 : vector<8x128xf32>
    %449 = arith.addf %446, %448 : vector<8x128xf32>
    %450 = vector.extract_strided_slice %39 {offsets = [56, 0], sizes = [8, 128], strides = [1, 1]} : vector<64x128xf32> to vector<8x128xf32>
    %451 = arith.mulf %364, %450 : vector<8x128xf32>
    %452 = arith.addf %449, %451 : vector<8x128xf32>
    %453 = tpu.concatenate %375, %386, %397, %408, %419, %430, %441, %452 in 0 : vector<8x128xf32>, vector<8x128xf32>, vector<8x128xf32>, vector<8x128xf32>, vector<8x128xf32>, vector<8x128xf32>, vector<8x128xf32>, vector<8x128xf32> -> vector<64x128xf32>
    %454 = arith.maximumf %135, %154 : vector<8x128xf32>
    %455 = arith.maximumf %454, %173 : vector<8x128xf32>
    %456 = arith.maximumf %455, %192 : vector<8x128xf32>
    %457 = arith.subf %135, %456 : vector<8x128xf32>
    %458 = math.exp %457 : vector<8x128xf32>
    %459 = arith.subf %154, %456 : vector<8x128xf32>
    %460 = math.exp %459 : vector<8x128xf32>
    %461 = arith.subf %173, %456 : vector<8x128xf32>
    %462 = math.exp %461 : vector<8x128xf32>
    %463 = arith.subf %192, %456 : vector<8x128xf32>
    %464 = math.exp %463 : vector<8x128xf32>
    %465 = arith.addf %458, %460 : vector<8x128xf32>
    %466 = arith.addf %465, %462 : vector<8x128xf32>
    %467 = arith.addf %466, %464 : vector<8x128xf32>
    %cst_17 = arith.constant 1.000000e+00 : f32
    %468 = vector.broadcast %cst_17 : f32 to vector<8x128xf32>
    %469 = arith.divf %468, %467 : vector<8x128xf32>
    %470 = arith.mulf %458, %469 : vector<8x128xf32>
    %471 = arith.mulf %460, %469 : vector<8x128xf32>
    %472 = arith.mulf %462, %469 : vector<8x128xf32>
    %473 = arith.mulf %464, %469 : vector<8x128xf32>
    %474 = vector.extract_strided_slice %36 {offsets = [0, 0], sizes = [8, 128], strides = [1, 1]} : vector<64x128xf32> to vector<8x128xf32>
    %475 = arith.mulf %470, %474 : vector<8x128xf32>
    %476 = vector.extract_strided_slice %37 {offsets = [0, 0], sizes = [8, 128], strides = [1, 1]} : vector<64x128xf32> to vector<8x128xf32>
    %477 = arith.mulf %471, %476 : vector<8x128xf32>
    %478 = arith.addf %475, %477 : vector<8x128xf32>
    %479 = vector.extract_strided_slice %38 {offsets = [0, 0], sizes = [8, 128], strides = [1, 1]} : vector<64x128xf32> to vector<8x128xf32>
    %480 = arith.mulf %472, %479 : vector<8x128xf32>
    %481 = arith.addf %478, %480 : vector<8x128xf32>
    %482 = vector.extract_strided_slice %39 {offsets = [0, 0], sizes = [8, 128], strides = [1, 1]} : vector<64x128xf32> to vector<8x128xf32>
    %483 = arith.mulf %473, %482 : vector<8x128xf32>
    %484 = arith.addf %481, %483 : vector<8x128xf32>
    %485 = vector.extract_strided_slice %36 {offsets = [8, 0], sizes = [8, 128], strides = [1, 1]} : vector<64x128xf32> to vector<8x128xf32>
    %486 = arith.mulf %470, %485 : vector<8x128xf32>
    %487 = vector.extract_strided_slice %37 {offsets = [8, 0], sizes = [8, 128], strides = [1, 1]} : vector<64x128xf32> to vector<8x128xf32>
    %488 = arith.mulf %471, %487 : vector<8x128xf32>
    %489 = arith.addf %486, %488 : vector<8x128xf32>
    %490 = vector.extract_strided_slice %38 {offsets = [8, 0], sizes = [8, 128], strides = [1, 1]} : vector<64x128xf32> to vector<8x128xf32>
    %491 = arith.mulf %472, %490 : vector<8x128xf32>
    %492 = arith.addf %489, %491 : vector<8x128xf32>
    %493 = vector.extract_strided_slice %39 {offsets = [8, 0], sizes = [8, 128], strides = [1, 1]} : vector<64x128xf32> to vector<8x128xf32>
    %494 = arith.mulf %473, %493 : vector<8x128xf32>
    %495 = arith.addf %492, %494 : vector<8x128xf32>
    %496 = vector.extract_strided_slice %36 {offsets = [16, 0], sizes = [8, 128], strides = [1, 1]} : vector<64x128xf32> to vector<8x128xf32>
    %497 = arith.mulf %470, %496 : vector<8x128xf32>
    %498 = vector.extract_strided_slice %37 {offsets = [16, 0], sizes = [8, 128], strides = [1, 1]} : vector<64x128xf32> to vector<8x128xf32>
    %499 = arith.mulf %471, %498 : vector<8x128xf32>
    %500 = arith.addf %497, %499 : vector<8x128xf32>
    %501 = vector.extract_strided_slice %38 {offsets = [16, 0], sizes = [8, 128], strides = [1, 1]} : vector<64x128xf32> to vector<8x128xf32>
    %502 = arith.mulf %472, %501 : vector<8x128xf32>
    %503 = arith.addf %500, %502 : vector<8x128xf32>
    %504 = vector.extract_strided_slice %39 {offsets = [16, 0], sizes = [8, 128], strides = [1, 1]} : vector<64x128xf32> to vector<8x128xf32>
    %505 = arith.mulf %473, %504 : vector<8x128xf32>
    %506 = arith.addf %503, %505 : vector<8x128xf32>
    %507 = vector.extract_strided_slice %36 {offsets = [24, 0], sizes = [8, 128], strides = [1, 1]} : vector<64x128xf32> to vector<8x128xf32>
    %508 = arith.mulf %470, %507 : vector<8x128xf32>
    %509 = vector.extract_strided_slice %37 {offsets = [24, 0], sizes = [8, 128], strides = [1, 1]} : vector<64x128xf32> to vector<8x128xf32>
    %510 = arith.mulf %471, %509 : vector<8x128xf32>
    %511 = arith.addf %508, %510 : vector<8x128xf32>
    %512 = vector.extract_strided_slice %38 {offsets = [24, 0], sizes = [8, 128], strides = [1, 1]} : vector<64x128xf32> to vector<8x128xf32>
    %513 = arith.mulf %472, %512 : vector<8x128xf32>
    %514 = arith.addf %511, %513 : vector<8x128xf32>
    %515 = vector.extract_strided_slice %39 {offsets = [24, 0], sizes = [8, 128], strides = [1, 1]} : vector<64x128xf32> to vector<8x128xf32>
    %516 = arith.mulf %473, %515 : vector<8x128xf32>
    %517 = arith.addf %514, %516 : vector<8x128xf32>
    %518 = vector.extract_strided_slice %36 {offsets = [32, 0], sizes = [8, 128], strides = [1, 1]} : vector<64x128xf32> to vector<8x128xf32>
    %519 = arith.mulf %470, %518 : vector<8x128xf32>
    %520 = vector.extract_strided_slice %37 {offsets = [32, 0], sizes = [8, 128], strides = [1, 1]} : vector<64x128xf32> to vector<8x128xf32>
    %521 = arith.mulf %471, %520 : vector<8x128xf32>
    %522 = arith.addf %519, %521 : vector<8x128xf32>
    %523 = vector.extract_strided_slice %38 {offsets = [32, 0], sizes = [8, 128], strides = [1, 1]} : vector<64x128xf32> to vector<8x128xf32>
    %524 = arith.mulf %472, %523 : vector<8x128xf32>
    %525 = arith.addf %522, %524 : vector<8x128xf32>
    %526 = vector.extract_strided_slice %39 {offsets = [32, 0], sizes = [8, 128], strides = [1, 1]} : vector<64x128xf32> to vector<8x128xf32>
    %527 = arith.mulf %473, %526 : vector<8x128xf32>
    %528 = arith.addf %525, %527 : vector<8x128xf32>
    %529 = vector.extract_strided_slice %36 {offsets = [40, 0], sizes = [8, 128], strides = [1, 1]} : vector<64x128xf32> to vector<8x128xf32>
    %530 = arith.mulf %470, %529 : vector<8x128xf32>
    %531 = vector.extract_strided_slice %37 {offsets = [40, 0], sizes = [8, 128], strides = [1, 1]} : vector<64x128xf32> to vector<8x128xf32>
    %532 = arith.mulf %471, %531 : vector<8x128xf32>
    %533 = arith.addf %530, %532 : vector<8x128xf32>
    %534 = vector.extract_strided_slice %38 {offsets = [40, 0], sizes = [8, 128], strides = [1, 1]} : vector<64x128xf32> to vector<8x128xf32>
    %535 = arith.mulf %472, %534 : vector<8x128xf32>
    %536 = arith.addf %533, %535 : vector<8x128xf32>
    %537 = vector.extract_strided_slice %39 {offsets = [40, 0], sizes = [8, 128], strides = [1, 1]} : vector<64x128xf32> to vector<8x128xf32>
    %538 = arith.mulf %473, %537 : vector<8x128xf32>
    %539 = arith.addf %536, %538 : vector<8x128xf32>
    %540 = vector.extract_strided_slice %36 {offsets = [48, 0], sizes = [8, 128], strides = [1, 1]} : vector<64x128xf32> to vector<8x128xf32>
    %541 = arith.mulf %470, %540 : vector<8x128xf32>
    %542 = vector.extract_strided_slice %37 {offsets = [48, 0], sizes = [8, 128], strides = [1, 1]} : vector<64x128xf32> to vector<8x128xf32>
    %543 = arith.mulf %471, %542 : vector<8x128xf32>
    %544 = arith.addf %541, %543 : vector<8x128xf32>
    %545 = vector.extract_strided_slice %38 {offsets = [48, 0], sizes = [8, 128], strides = [1, 1]} : vector<64x128xf32> to vector<8x128xf32>
    %546 = arith.mulf %472, %545 : vector<8x128xf32>
    %547 = arith.addf %544, %546 : vector<8x128xf32>
    %548 = vector.extract_strided_slice %39 {offsets = [48, 0], sizes = [8, 128], strides = [1, 1]} : vector<64x128xf32> to vector<8x128xf32>
    %549 = arith.mulf %473, %548 : vector<8x128xf32>
    %550 = arith.addf %547, %549 : vector<8x128xf32>
    %551 = vector.extract_strided_slice %36 {offsets = [56, 0], sizes = [8, 128], strides = [1, 1]} : vector<64x128xf32> to vector<8x128xf32>
    %552 = arith.mulf %470, %551 : vector<8x128xf32>
    %553 = vector.extract_strided_slice %37 {offsets = [56, 0], sizes = [8, 128], strides = [1, 1]} : vector<64x128xf32> to vector<8x128xf32>
    %554 = arith.mulf %471, %553 : vector<8x128xf32>
    %555 = arith.addf %552, %554 : vector<8x128xf32>
    %556 = vector.extract_strided_slice %38 {offsets = [56, 0], sizes = [8, 128], strides = [1, 1]} : vector<64x128xf32> to vector<8x128xf32>
    %557 = arith.mulf %472, %556 : vector<8x128xf32>
    %558 = arith.addf %555, %557 : vector<8x128xf32>
    %559 = vector.extract_strided_slice %39 {offsets = [56, 0], sizes = [8, 128], strides = [1, 1]} : vector<64x128xf32> to vector<8x128xf32>
    %560 = arith.mulf %473, %559 : vector<8x128xf32>
    %561 = arith.addf %558, %560 : vector<8x128xf32>
    %562 = tpu.concatenate %484, %495, %506, %517, %528, %539, %550, %561 in 0 : vector<8x128xf32>, vector<8x128xf32>, vector<8x128xf32>, vector<8x128xf32>, vector<8x128xf32>, vector<8x128xf32>, vector<8x128xf32>, vector<8x128xf32> -> vector<64x128xf32>
    %563 = arith.maximumf %211, %230 : vector<8x128xf32>
    %564 = arith.maximumf %563, %249 : vector<8x128xf32>
    %565 = arith.maximumf %564, %268 : vector<8x128xf32>
    %566 = arith.subf %211, %565 : vector<8x128xf32>
    %567 = math.exp %566 : vector<8x128xf32>
    %568 = arith.subf %230, %565 : vector<8x128xf32>
    %569 = math.exp %568 : vector<8x128xf32>
    %570 = arith.subf %249, %565 : vector<8x128xf32>
    %571 = math.exp %570 : vector<8x128xf32>
    %572 = arith.subf %268, %565 : vector<8x128xf32>
    %573 = math.exp %572 : vector<8x128xf32>
    %574 = arith.addf %567, %569 : vector<8x128xf32>
    %575 = arith.addf %574, %571 : vector<8x128xf32>
    %576 = arith.addf %575, %573 : vector<8x128xf32>
    %cst_18 = arith.constant 1.000000e+00 : f32
    %577 = vector.broadcast %cst_18 : f32 to vector<8x128xf32>
    %578 = arith.divf %577, %576 : vector<8x128xf32>
    %579 = arith.mulf %567, %578 : vector<8x128xf32>
    %580 = arith.mulf %569, %578 : vector<8x128xf32>
    %581 = arith.mulf %571, %578 : vector<8x128xf32>
    %582 = arith.mulf %573, %578 : vector<8x128xf32>
    %583 = vector.extract_strided_slice %36 {offsets = [0, 0], sizes = [8, 128], strides = [1, 1]} : vector<64x128xf32> to vector<8x128xf32>
    %584 = arith.mulf %579, %583 : vector<8x128xf32>
    %585 = vector.extract_strided_slice %37 {offsets = [0, 0], sizes = [8, 128], strides = [1, 1]} : vector<64x128xf32> to vector<8x128xf32>
    %586 = arith.mulf %580, %585 : vector<8x128xf32>
    %587 = arith.addf %584, %586 : vector<8x128xf32>
    %588 = vector.extract_strided_slice %38 {offsets = [0, 0], sizes = [8, 128], strides = [1, 1]} : vector<64x128xf32> to vector<8x128xf32>
    %589 = arith.mulf %581, %588 : vector<8x128xf32>
    %590 = arith.addf %587, %589 : vector<8x128xf32>
    %591 = vector.extract_strided_slice %39 {offsets = [0, 0], sizes = [8, 128], strides = [1, 1]} : vector<64x128xf32> to vector<8x128xf32>
    %592 = arith.mulf %582, %591 : vector<8x128xf32>
    %593 = arith.addf %590, %592 : vector<8x128xf32>
    %594 = vector.extract_strided_slice %36 {offsets = [8, 0], sizes = [8, 128], strides = [1, 1]} : vector<64x128xf32> to vector<8x128xf32>
    %595 = arith.mulf %579, %594 : vector<8x128xf32>
    %596 = vector.extract_strided_slice %37 {offsets = [8, 0], sizes = [8, 128], strides = [1, 1]} : vector<64x128xf32> to vector<8x128xf32>
    %597 = arith.mulf %580, %596 : vector<8x128xf32>
    %598 = arith.addf %595, %597 : vector<8x128xf32>
    %599 = vector.extract_strided_slice %38 {offsets = [8, 0], sizes = [8, 128], strides = [1, 1]} : vector<64x128xf32> to vector<8x128xf32>
    %600 = arith.mulf %581, %599 : vector<8x128xf32>
    %601 = arith.addf %598, %600 : vector<8x128xf32>
    %602 = vector.extract_strided_slice %39 {offsets = [8, 0], sizes = [8, 128], strides = [1, 1]} : vector<64x128xf32> to vector<8x128xf32>
    %603 = arith.mulf %582, %602 : vector<8x128xf32>
    %604 = arith.addf %601, %603 : vector<8x128xf32>
    %605 = vector.extract_strided_slice %36 {offsets = [16, 0], sizes = [8, 128], strides = [1, 1]} : vector<64x128xf32> to vector<8x128xf32>
    %606 = arith.mulf %579, %605 : vector<8x128xf32>
    %607 = vector.extract_strided_slice %37 {offsets = [16, 0], sizes = [8, 128], strides = [1, 1]} : vector<64x128xf32> to vector<8x128xf32>
    %608 = arith.mulf %580, %607 : vector<8x128xf32>
    %609 = arith.addf %606, %608 : vector<8x128xf32>
    %610 = vector.extract_strided_slice %38 {offsets = [16, 0], sizes = [8, 128], strides = [1, 1]} : vector<64x128xf32> to vector<8x128xf32>
    %611 = arith.mulf %581, %610 : vector<8x128xf32>
    %612 = arith.addf %609, %611 : vector<8x128xf32>
    %613 = vector.extract_strided_slice %39 {offsets = [16, 0], sizes = [8, 128], strides = [1, 1]} : vector<64x128xf32> to vector<8x128xf32>
    %614 = arith.mulf %582, %613 : vector<8x128xf32>
    %615 = arith.addf %612, %614 : vector<8x128xf32>
    %616 = vector.extract_strided_slice %36 {offsets = [24, 0], sizes = [8, 128], strides = [1, 1]} : vector<64x128xf32> to vector<8x128xf32>
    %617 = arith.mulf %579, %616 : vector<8x128xf32>
    %618 = vector.extract_strided_slice %37 {offsets = [24, 0], sizes = [8, 128], strides = [1, 1]} : vector<64x128xf32> to vector<8x128xf32>
    %619 = arith.mulf %580, %618 : vector<8x128xf32>
    %620 = arith.addf %617, %619 : vector<8x128xf32>
    %621 = vector.extract_strided_slice %38 {offsets = [24, 0], sizes = [8, 128], strides = [1, 1]} : vector<64x128xf32> to vector<8x128xf32>
    %622 = arith.mulf %581, %621 : vector<8x128xf32>
    %623 = arith.addf %620, %622 : vector<8x128xf32>
    %624 = vector.extract_strided_slice %39 {offsets = [24, 0], sizes = [8, 128], strides = [1, 1]} : vector<64x128xf32> to vector<8x128xf32>
    %625 = arith.mulf %582, %624 : vector<8x128xf32>
    %626 = arith.addf %623, %625 : vector<8x128xf32>
    %627 = vector.extract_strided_slice %36 {offsets = [32, 0], sizes = [8, 128], strides = [1, 1]} : vector<64x128xf32> to vector<8x128xf32>
    %628 = arith.mulf %579, %627 : vector<8x128xf32>
    %629 = vector.extract_strided_slice %37 {offsets = [32, 0], sizes = [8, 128], strides = [1, 1]} : vector<64x128xf32> to vector<8x128xf32>
    %630 = arith.mulf %580, %629 : vector<8x128xf32>
    %631 = arith.addf %628, %630 : vector<8x128xf32>
    %632 = vector.extract_strided_slice %38 {offsets = [32, 0], sizes = [8, 128], strides = [1, 1]} : vector<64x128xf32> to vector<8x128xf32>
    %633 = arith.mulf %581, %632 : vector<8x128xf32>
    %634 = arith.addf %631, %633 : vector<8x128xf32>
    %635 = vector.extract_strided_slice %39 {offsets = [32, 0], sizes = [8, 128], strides = [1, 1]} : vector<64x128xf32> to vector<8x128xf32>
    %636 = arith.mulf %582, %635 : vector<8x128xf32>
    %637 = arith.addf %634, %636 : vector<8x128xf32>
    %638 = vector.extract_strided_slice %36 {offsets = [40, 0], sizes = [8, 128], strides = [1, 1]} : vector<64x128xf32> to vector<8x128xf32>
    %639 = arith.mulf %579, %638 : vector<8x128xf32>
    %640 = vector.extract_strided_slice %37 {offsets = [40, 0], sizes = [8, 128], strides = [1, 1]} : vector<64x128xf32> to vector<8x128xf32>
    %641 = arith.mulf %580, %640 : vector<8x128xf32>
    %642 = arith.addf %639, %641 : vector<8x128xf32>
    %643 = vector.extract_strided_slice %38 {offsets = [40, 0], sizes = [8, 128], strides = [1, 1]} : vector<64x128xf32> to vector<8x128xf32>
    %644 = arith.mulf %581, %643 : vector<8x128xf32>
    %645 = arith.addf %642, %644 : vector<8x128xf32>
    %646 = vector.extract_strided_slice %39 {offsets = [40, 0], sizes = [8, 128], strides = [1, 1]} : vector<64x128xf32> to vector<8x128xf32>
    %647 = arith.mulf %582, %646 : vector<8x128xf32>
    %648 = arith.addf %645, %647 : vector<8x128xf32>
    %649 = vector.extract_strided_slice %36 {offsets = [48, 0], sizes = [8, 128], strides = [1, 1]} : vector<64x128xf32> to vector<8x128xf32>
    %650 = arith.mulf %579, %649 : vector<8x128xf32>
    %651 = vector.extract_strided_slice %37 {offsets = [48, 0], sizes = [8, 128], strides = [1, 1]} : vector<64x128xf32> to vector<8x128xf32>
    %652 = arith.mulf %580, %651 : vector<8x128xf32>
    %653 = arith.addf %650, %652 : vector<8x128xf32>
    %654 = vector.extract_strided_slice %38 {offsets = [48, 0], sizes = [8, 128], strides = [1, 1]} : vector<64x128xf32> to vector<8x128xf32>
    %655 = arith.mulf %581, %654 : vector<8x128xf32>
    %656 = arith.addf %653, %655 : vector<8x128xf32>
    %657 = vector.extract_strided_slice %39 {offsets = [48, 0], sizes = [8, 128], strides = [1, 1]} : vector<64x128xf32> to vector<8x128xf32>
    %658 = arith.mulf %582, %657 : vector<8x128xf32>
    %659 = arith.addf %656, %658 : vector<8x128xf32>
    %660 = vector.extract_strided_slice %36 {offsets = [56, 0], sizes = [8, 128], strides = [1, 1]} : vector<64x128xf32> to vector<8x128xf32>
    %661 = arith.mulf %579, %660 : vector<8x128xf32>
    %662 = vector.extract_strided_slice %37 {offsets = [56, 0], sizes = [8, 128], strides = [1, 1]} : vector<64x128xf32> to vector<8x128xf32>
    %663 = arith.mulf %580, %662 : vector<8x128xf32>
    %664 = arith.addf %661, %663 : vector<8x128xf32>
    %665 = vector.extract_strided_slice %38 {offsets = [56, 0], sizes = [8, 128], strides = [1, 1]} : vector<64x128xf32> to vector<8x128xf32>
    %666 = arith.mulf %581, %665 : vector<8x128xf32>
    %667 = arith.addf %664, %666 : vector<8x128xf32>
    %668 = vector.extract_strided_slice %39 {offsets = [56, 0], sizes = [8, 128], strides = [1, 1]} : vector<64x128xf32> to vector<8x128xf32>
    %669 = arith.mulf %582, %668 : vector<8x128xf32>
    %670 = arith.addf %667, %669 : vector<8x128xf32>
    %671 = tpu.concatenate %593, %604, %615, %626, %637, %648, %659, %670 in 0 : vector<8x128xf32>, vector<8x128xf32>, vector<8x128xf32>, vector<8x128xf32>, vector<8x128xf32>, vector<8x128xf32>, vector<8x128xf32>, vector<8x128xf32> -> vector<64x128xf32>
    %672 = arith.maximumf %287, %306 : vector<8x128xf32>
    %673 = arith.maximumf %672, %325 : vector<8x128xf32>
    %674 = arith.maximumf %673, %344 : vector<8x128xf32>
    %675 = arith.subf %287, %674 : vector<8x128xf32>
    %676 = math.exp %675 : vector<8x128xf32>
    %677 = arith.subf %306, %674 : vector<8x128xf32>
    %678 = math.exp %677 : vector<8x128xf32>
    %679 = arith.subf %325, %674 : vector<8x128xf32>
    %680 = math.exp %679 : vector<8x128xf32>
    %681 = arith.subf %344, %674 : vector<8x128xf32>
    %682 = math.exp %681 : vector<8x128xf32>
    %683 = arith.addf %676, %678 : vector<8x128xf32>
    %684 = arith.addf %683, %680 : vector<8x128xf32>
    %685 = arith.addf %684, %682 : vector<8x128xf32>
    %cst_19 = arith.constant 1.000000e+00 : f32
    %686 = vector.broadcast %cst_19 : f32 to vector<8x128xf32>
    %687 = arith.divf %686, %685 : vector<8x128xf32>
    %688 = arith.mulf %676, %687 : vector<8x128xf32>
    %689 = arith.mulf %678, %687 : vector<8x128xf32>
    %690 = arith.mulf %680, %687 : vector<8x128xf32>
    %691 = arith.mulf %682, %687 : vector<8x128xf32>
    %692 = vector.extract_strided_slice %36 {offsets = [0, 0], sizes = [8, 128], strides = [1, 1]} : vector<64x128xf32> to vector<8x128xf32>
    %693 = arith.mulf %688, %692 : vector<8x128xf32>
    %694 = vector.extract_strided_slice %37 {offsets = [0, 0], sizes = [8, 128], strides = [1, 1]} : vector<64x128xf32> to vector<8x128xf32>
    %695 = arith.mulf %689, %694 : vector<8x128xf32>
    %696 = arith.addf %693, %695 : vector<8x128xf32>
    %697 = vector.extract_strided_slice %38 {offsets = [0, 0], sizes = [8, 128], strides = [1, 1]} : vector<64x128xf32> to vector<8x128xf32>
    %698 = arith.mulf %690, %697 : vector<8x128xf32>
    %699 = arith.addf %696, %698 : vector<8x128xf32>
    %700 = vector.extract_strided_slice %39 {offsets = [0, 0], sizes = [8, 128], strides = [1, 1]} : vector<64x128xf32> to vector<8x128xf32>
    %701 = arith.mulf %691, %700 : vector<8x128xf32>
    %702 = arith.addf %699, %701 : vector<8x128xf32>
    %703 = vector.extract_strided_slice %36 {offsets = [8, 0], sizes = [8, 128], strides = [1, 1]} : vector<64x128xf32> to vector<8x128xf32>
    %704 = arith.mulf %688, %703 : vector<8x128xf32>
    %705 = vector.extract_strided_slice %37 {offsets = [8, 0], sizes = [8, 128], strides = [1, 1]} : vector<64x128xf32> to vector<8x128xf32>
    %706 = arith.mulf %689, %705 : vector<8x128xf32>
    %707 = arith.addf %704, %706 : vector<8x128xf32>
    %708 = vector.extract_strided_slice %38 {offsets = [8, 0], sizes = [8, 128], strides = [1, 1]} : vector<64x128xf32> to vector<8x128xf32>
    %709 = arith.mulf %690, %708 : vector<8x128xf32>
    %710 = arith.addf %707, %709 : vector<8x128xf32>
    %711 = vector.extract_strided_slice %39 {offsets = [8, 0], sizes = [8, 128], strides = [1, 1]} : vector<64x128xf32> to vector<8x128xf32>
    %712 = arith.mulf %691, %711 : vector<8x128xf32>
    %713 = arith.addf %710, %712 : vector<8x128xf32>
    %714 = vector.extract_strided_slice %36 {offsets = [16, 0], sizes = [8, 128], strides = [1, 1]} : vector<64x128xf32> to vector<8x128xf32>
    %715 = arith.mulf %688, %714 : vector<8x128xf32>
    %716 = vector.extract_strided_slice %37 {offsets = [16, 0], sizes = [8, 128], strides = [1, 1]} : vector<64x128xf32> to vector<8x128xf32>
    %717 = arith.mulf %689, %716 : vector<8x128xf32>
    %718 = arith.addf %715, %717 : vector<8x128xf32>
    %719 = vector.extract_strided_slice %38 {offsets = [16, 0], sizes = [8, 128], strides = [1, 1]} : vector<64x128xf32> to vector<8x128xf32>
    %720 = arith.mulf %690, %719 : vector<8x128xf32>
    %721 = arith.addf %718, %720 : vector<8x128xf32>
    %722 = vector.extract_strided_slice %39 {offsets = [16, 0], sizes = [8, 128], strides = [1, 1]} : vector<64x128xf32> to vector<8x128xf32>
    %723 = arith.mulf %691, %722 : vector<8x128xf32>
    %724 = arith.addf %721, %723 : vector<8x128xf32>
    %725 = vector.extract_strided_slice %36 {offsets = [24, 0], sizes = [8, 128], strides = [1, 1]} : vector<64x128xf32> to vector<8x128xf32>
    %726 = arith.mulf %688, %725 : vector<8x128xf32>
    %727 = vector.extract_strided_slice %37 {offsets = [24, 0], sizes = [8, 128], strides = [1, 1]} : vector<64x128xf32> to vector<8x128xf32>
    %728 = arith.mulf %689, %727 : vector<8x128xf32>
    %729 = arith.addf %726, %728 : vector<8x128xf32>
    %730 = vector.extract_strided_slice %38 {offsets = [24, 0], sizes = [8, 128], strides = [1, 1]} : vector<64x128xf32> to vector<8x128xf32>
    %731 = arith.mulf %690, %730 : vector<8x128xf32>
    %732 = arith.addf %729, %731 : vector<8x128xf32>
    %733 = vector.extract_strided_slice %39 {offsets = [24, 0], sizes = [8, 128], strides = [1, 1]} : vector<64x128xf32> to vector<8x128xf32>
    %734 = arith.mulf %691, %733 : vector<8x128xf32>
    %735 = arith.addf %732, %734 : vector<8x128xf32>
    %736 = vector.extract_strided_slice %36 {offsets = [32, 0], sizes = [8, 128], strides = [1, 1]} : vector<64x128xf32> to vector<8x128xf32>
    %737 = arith.mulf %688, %736 : vector<8x128xf32>
    %738 = vector.extract_strided_slice %37 {offsets = [32, 0], sizes = [8, 128], strides = [1, 1]} : vector<64x128xf32> to vector<8x128xf32>
    %739 = arith.mulf %689, %738 : vector<8x128xf32>
    %740 = arith.addf %737, %739 : vector<8x128xf32>
    %741 = vector.extract_strided_slice %38 {offsets = [32, 0], sizes = [8, 128], strides = [1, 1]} : vector<64x128xf32> to vector<8x128xf32>
    %742 = arith.mulf %690, %741 : vector<8x128xf32>
    %743 = arith.addf %740, %742 : vector<8x128xf32>
    %744 = vector.extract_strided_slice %39 {offsets = [32, 0], sizes = [8, 128], strides = [1, 1]} : vector<64x128xf32> to vector<8x128xf32>
    %745 = arith.mulf %691, %744 : vector<8x128xf32>
    %746 = arith.addf %743, %745 : vector<8x128xf32>
    %747 = vector.extract_strided_slice %36 {offsets = [40, 0], sizes = [8, 128], strides = [1, 1]} : vector<64x128xf32> to vector<8x128xf32>
    %748 = arith.mulf %688, %747 : vector<8x128xf32>
    %749 = vector.extract_strided_slice %37 {offsets = [40, 0], sizes = [8, 128], strides = [1, 1]} : vector<64x128xf32> to vector<8x128xf32>
    %750 = arith.mulf %689, %749 : vector<8x128xf32>
    %751 = arith.addf %748, %750 : vector<8x128xf32>
    %752 = vector.extract_strided_slice %38 {offsets = [40, 0], sizes = [8, 128], strides = [1, 1]} : vector<64x128xf32> to vector<8x128xf32>
    %753 = arith.mulf %690, %752 : vector<8x128xf32>
    %754 = arith.addf %751, %753 : vector<8x128xf32>
    %755 = vector.extract_strided_slice %39 {offsets = [40, 0], sizes = [8, 128], strides = [1, 1]} : vector<64x128xf32> to vector<8x128xf32>
    %756 = arith.mulf %691, %755 : vector<8x128xf32>
    %757 = arith.addf %754, %756 : vector<8x128xf32>
    %758 = vector.extract_strided_slice %36 {offsets = [48, 0], sizes = [8, 128], strides = [1, 1]} : vector<64x128xf32> to vector<8x128xf32>
    %759 = arith.mulf %688, %758 : vector<8x128xf32>
    %760 = vector.extract_strided_slice %37 {offsets = [48, 0], sizes = [8, 128], strides = [1, 1]} : vector<64x128xf32> to vector<8x128xf32>
    %761 = arith.mulf %689, %760 : vector<8x128xf32>
    %762 = arith.addf %759, %761 : vector<8x128xf32>
    %763 = vector.extract_strided_slice %38 {offsets = [48, 0], sizes = [8, 128], strides = [1, 1]} : vector<64x128xf32> to vector<8x128xf32>
    %764 = arith.mulf %690, %763 : vector<8x128xf32>
    %765 = arith.addf %762, %764 : vector<8x128xf32>
    %766 = vector.extract_strided_slice %39 {offsets = [48, 0], sizes = [8, 128], strides = [1, 1]} : vector<64x128xf32> to vector<8x128xf32>
    %767 = arith.mulf %691, %766 : vector<8x128xf32>
    %768 = arith.addf %765, %767 : vector<8x128xf32>
    %769 = vector.extract_strided_slice %36 {offsets = [56, 0], sizes = [8, 128], strides = [1, 1]} : vector<64x128xf32> to vector<8x128xf32>
    %770 = arith.mulf %688, %769 : vector<8x128xf32>
    %771 = vector.extract_strided_slice %37 {offsets = [56, 0], sizes = [8, 128], strides = [1, 1]} : vector<64x128xf32> to vector<8x128xf32>
    %772 = arith.mulf %689, %771 : vector<8x128xf32>
    %773 = arith.addf %770, %772 : vector<8x128xf32>
    %774 = vector.extract_strided_slice %38 {offsets = [56, 0], sizes = [8, 128], strides = [1, 1]} : vector<64x128xf32> to vector<8x128xf32>
    %775 = arith.mulf %690, %774 : vector<8x128xf32>
    %776 = arith.addf %773, %775 : vector<8x128xf32>
    %777 = vector.extract_strided_slice %39 {offsets = [56, 0], sizes = [8, 128], strides = [1, 1]} : vector<64x128xf32> to vector<8x128xf32>
    %778 = arith.mulf %691, %777 : vector<8x128xf32>
    %779 = arith.addf %776, %778 : vector<8x128xf32>
    %780 = tpu.concatenate %702, %713, %724, %735, %746, %757, %768, %779 in 0 : vector<8x128xf32>, vector<8x128xf32>, vector<8x128xf32>, vector<8x128xf32>, vector<8x128xf32>, vector<8x128xf32>, vector<8x128xf32>, vector<8x128xf32> -> vector<64x128xf32>
    %781 = tpu.concatenate %453, %562, %671, %780 in 1 : vector<64x128xf32>, vector<64x128xf32>, vector<64x128xf32>, vector<64x128xf32> -> vector<64x512xf32>
    %c0_20 = arith.constant 0 : index
    %c0_21 = arith.constant 0 : index
    %782 = vector.load %arg3[%c0_20, %c0_21] : memref<64x64xf32, #tpu.memory_space<vmem>>, vector<64x64xf32>
    %cst_22 = arith.constant dense<0.000000e+00> : vector<64x512xf32>
    %783 = tpu.matmul %782, %781, %cst_22 {dimension_numbers = #tpu.dot_dimension_numbers<[1], [0], [0], [1], [0, 0, 1, 1], [], []>} : vector<64x64xf32>, vector<64x512xf32>, vector<64x512xf32> -> vector<64x512xf32>
    %c0_23 = arith.constant 0 : index
    %c0_24 = arith.constant 0 : index
    %784 = vector.load %arg4[%c0_23, %c0_24] : memref<64x1xf32, #tpu.memory_space<vmem>>, vector<64x1xf32>
    %785 = vector.broadcast %784 : vector<64x1xf32> to vector<64x512xf32>
    %786 = arith.addf %783, %785 : vector<64x512xf32>
    %c0_25 = arith.constant 0 : index
    %c0_26 = arith.constant 0 : index
    %787 = vector.load %arg8[%c0_25, %c0_26] : memref<64x512xf32, #tpu.memory_space<vmem>>, vector<64x512xf32>
    tpu.vector_store %arg8[%c0_25, %c0_26], %786 {strides = array<i32>} : memref<64x512xf32, #tpu.memory_space<vmem>>, vector<64x512xf32>,
    return
  }
}

module attributes {stable_mosaic.version = 11 : i64} {
  func.func @_mlp_kernel_t(%arg0: i32, %arg1: memref<64x256xf32, #tpu.memory_space<vmem>>, %arg2: memref<64x256xf32, #tpu.memory_space<vmem>>, %arg3: memref<64x1xf32, #tpu.memory_space<vmem>>, %arg4: memref<64x1xf32, #tpu.memory_space<vmem>>, %arg5: memref<128x64xf32, #tpu.memory_space<vmem>>, %arg6: memref<128x1xf32, #tpu.memory_space<vmem>>, %arg7: memref<64x128xf32, #tpu.memory_space<vmem>>, %arg8: memref<64x1xf32, #tpu.memory_space<vmem>>, %arg9: memref<64x256xf32, #tpu.memory_space<vmem>>) attributes {dimension_semantics = [#tpu.dimension_semantics<parallel>], iteration_bounds = array<i64: 2>, scalar_prefetch = 0 : i64, scratch_operands = 0 : i64, tpu.core_type = #tpu.core_type<tc>, window_params = [{transform_indices = @transform_0, window_bounds = array<i64: 64, 256>}, {transform_indices = @transform_1, window_bounds = array<i64: 64, 256>}, {pipeline_mode = #tpu.pipeline_mode<synchronous>, transform_indices = @transform_2, window_bounds = array<i64: 64, 1>}, {pipeline_mode = #tpu.pipeline_mode<synchronous>, transform_indices = @transform_3, window_bounds = array<i64: 64, 1>}, {pipeline_mode = #tpu.pipeline_mode<synchronous>, transform_indices = @transform_4, window_bounds = array<i64: 128, 64>}, {pipeline_mode = #tpu.pipeline_mode<synchronous>, transform_indices = @transform_5, window_bounds = array<i64: 128, 1>}, {pipeline_mode = #tpu.pipeline_mode<synchronous>, transform_indices = @transform_6, window_bounds = array<i64: 64, 128>}, {pipeline_mode = #tpu.pipeline_mode<synchronous>, transform_indices = @transform_7, window_bounds = array<i64: 64, 1>}, {transform_indices = @transform_8, window_bounds = array<i64: 64, 256>}]} {
    %c0 = arith.constant 0 : index
    %c0_0 = arith.constant 0 : index
    %0 = vector.load %arg1[%c0, %c0_0] : memref<64x256xf32, #tpu.memory_space<vmem>>, vector<64x256xf32>
    %c0_1 = arith.constant 0 : index
    %c0_2 = arith.constant 0 : index
    %1 = vector.load %arg2[%c0_1, %c0_2] : memref<64x256xf32, #tpu.memory_space<vmem>>, vector<64x256xf32>
    %2 = arith.addf %0, %1 : vector<64x256xf32>
    %cst = arith.constant dense<0.000000e+00> : vector<256xf32>
    %3 = vector.multi_reduction <add>, %2, %cst [0] : vector<64x256xf32> to vector<256xf32>
    %4 = vector.shape_cast %3 : vector<256xf32> to vector<1x256xf32>
    %cst_3 = arith.constant 6.400000e+01 : f32
    %5 = vector.broadcast %cst_3 : f32 to vector<1x256xf32>
    %6 = arith.divf %4, %5 : vector<1x256xf32>
    %7 = vector.broadcast %6 : vector<1x256xf32> to vector<64x256xf32>
    %8 = arith.subf %2, %7 : vector<64x256xf32>
    %9 = arith.mulf %8, %8 : vector<64x256xf32>
    %cst_4 = arith.constant dense<0.000000e+00> : vector<256xf32>
    %10 = vector.multi_reduction <add>, %9, %cst_4 [0] : vector<64x256xf32> to vector<256xf32>
    %11 = vector.shape_cast %10 : vector<256xf32> to vector<1x256xf32>
    %cst_5 = arith.constant 6.400000e+01 : f32
    %12 = vector.broadcast %cst_5 : f32 to vector<1x256xf32>
    %13 = arith.divf %11, %12 : vector<1x256xf32>
    %cst_6 = arith.constant 9.99999974E-6 : f32
    %14 = vector.broadcast %cst_6 : f32 to vector<1x256xf32>
    %15 = arith.addf %13, %14 : vector<1x256xf32>
    %16 = math.rsqrt %15 : vector<1x256xf32>
    %17 = vector.broadcast %16 : vector<1x256xf32> to vector<64x256xf32>
    %18 = arith.mulf %8, %17 : vector<64x256xf32>
    %c0_7 = arith.constant 0 : index
    %c0_8 = arith.constant 0 : index
    %19 = vector.load %arg3[%c0_7, %c0_8] : memref<64x1xf32, #tpu.memory_space<vmem>>, vector<64x1xf32>
    %20 = vector.broadcast %19 : vector<64x1xf32> to vector<64x256xf32>
    %21 = arith.mulf %18, %20 : vector<64x256xf32>
    %c0_9 = arith.constant 0 : index
    %c0_10 = arith.constant 0 : index
    %22 = vector.load %arg4[%c0_9, %c0_10] : memref<64x1xf32, #tpu.memory_space<vmem>>, vector<64x1xf32>
    %23 = vector.broadcast %22 : vector<64x1xf32> to vector<64x256xf32>
    %24 = arith.addf %21, %23 : vector<64x256xf32>
    %c0_11 = arith.constant 0 : index
    %c0_12 = arith.constant 0 : index
    %25 = vector.load %arg5[%c0_11, %c0_12] : memref<128x64xf32, #tpu.memory_space<vmem>>, vector<128x64xf32>
    %cst_13 = arith.constant dense<0.000000e+00> : vector<128x256xf32>
    %26 = tpu.matmul %25, %24, %cst_13 {dimension_numbers = #tpu.dot_dimension_numbers<[1], [0], [0], [1], [0, 0, 1, 1], [], []>} : vector<128x64xf32>, vector<64x256xf32>, vector<128x256xf32> -> vector<128x256xf32>
    %c0_14 = arith.constant 0 : index
    %c0_15 = arith.constant 0 : index
    %27 = vector.load %arg6[%c0_14, %c0_15] : memref<128x1xf32, #tpu.memory_space<vmem>>, vector<128x1xf32>
    %28 = vector.broadcast %27 : vector<128x1xf32> to vector<128x256xf32>
    %29 = arith.addf %26, %28 : vector<128x256xf32>
    %cst_16 = arith.constant 0.707106769 : f32
    %30 = vector.broadcast %cst_16 : f32 to vector<128x256xf32>
    %31 = arith.mulf %29, %30 : vector<128x256xf32>
    %32 = math.absf %31 : vector<128x256xf32>
    %cst_17 = arith.constant 0.327591091 : f32
    %33 = vector.broadcast %cst_17 : f32 to vector<128x256xf32>
    %34 = arith.mulf %33, %32 : vector<128x256xf32>
    %cst_18 = arith.constant 1.000000e+00 : f32
    %35 = vector.broadcast %cst_18 : f32 to vector<128x256xf32>
    %36 = arith.addf %35, %34 : vector<128x256xf32>
    %cst_19 = arith.constant 1.000000e+00 : f32
    %37 = vector.broadcast %cst_19 : f32 to vector<128x256xf32>
    %38 = arith.divf %37, %36 : vector<128x256xf32>
    %cst_20 = arith.constant 1.06140542 : f32
    %39 = vector.broadcast %cst_20 : f32 to vector<128x256xf32>
    %40 = arith.mulf %38, %39 : vector<128x256xf32>
    %cst_21 = arith.constant -1.45315206 : f32
    %41 = vector.broadcast %cst_21 : f32 to vector<128x256xf32>
    %42 = arith.addf %41, %40 : vector<128x256xf32>
    %43 = arith.mulf %38, %42 : vector<128x256xf32>
    %cst_22 = arith.constant 1.42141378 : f32
    %44 = vector.broadcast %cst_22 : f32 to vector<128x256xf32>
    %45 = arith.addf %44, %43 : vector<128x256xf32>
    %46 = arith.mulf %38, %45 : vector<128x256xf32>
    %cst_23 = arith.constant -0.284496725 : f32
    %47 = vector.broadcast %cst_23 : f32 to vector<128x256xf32>
    %48 = arith.addf %47, %46 : vector<128x256xf32>
    %49 = arith.mulf %38, %48 : vector<128x256xf32>
    %cst_24 = arith.constant 0.254829586 : f32
    %50 = vector.broadcast %cst_24 : f32 to vector<128x256xf32>
    %51 = arith.addf %50, %49 : vector<128x256xf32>
    %52 = arith.mulf %38, %51 : vector<128x256xf32>
    %cst_25 = arith.constant 0.000000e+00 : f32
    %53 = vector.broadcast %cst_25 : f32 to vector<128x256xf32>
    %54 = arith.subf %53, %32 : vector<128x256xf32>
    %55 = arith.mulf %54, %32 : vector<128x256xf32>
    %56 = math.exp %55 : vector<128x256xf32>
    %57 = arith.mulf %52, %56 : vector<128x256xf32>
    %cst_26 = arith.constant 1.000000e+00 : f32
    %58 = vector.broadcast %cst_26 : f32 to vector<128x256xf32>
    %59 = arith.subf %58, %57 : vector<128x256xf32>
    %cst_27 = arith.constant 0.000000e+00 : f32
    %60 = vector.broadcast %cst_27 : f32 to vector<128x256xf32>
    %61 = arith.cmpf oge, %31, %60 : vector<128x256xf32>
    %cst_28 = arith.constant 0.000000e+00 : f32
    %62 = vector.broadcast %cst_28 : f32 to vector<128x256xf32>
    %63 = arith.subf %62, %59 : vector<128x256xf32>
    %64 = arith.select %61, %59, %63 : vector<128x256xi1>, vector<128x256xf32>
    %cst_29 = arith.constant 5.000000e-01 : f32
    %65 = vector.broadcast %cst_29 : f32 to vector<128x256xf32>
    %66 = arith.mulf %29, %65 : vector<128x256xf32>
    %cst_30 = arith.constant 1.000000e+00 : f32
    %67 = vector.broadcast %cst_30 : f32 to vector<128x256xf32>
    %68 = arith.addf %67, %64 : vector<128x256xf32>
    %69 = arith.mulf %66, %68 : vector<128x256xf32>
    %c0_31 = arith.constant 0 : index
    %c0_32 = arith.constant 0 : index
    %70 = vector.load %arg7[%c0_31, %c0_32] : memref<64x128xf32, #tpu.memory_space<vmem>>, vector<64x128xf32>
    %cst_33 = arith.constant dense<0.000000e+00> : vector<64x256xf32>
    %71 = tpu.matmul %70, %69, %cst_33 {dimension_numbers = #tpu.dot_dimension_numbers<[1], [0], [0], [1], [0, 0, 1, 1], [], []>} : vector<64x128xf32>, vector<128x256xf32>, vector<64x256xf32> -> vector<64x256xf32>
    %c0_34 = arith.constant 0 : index
    %c0_35 = arith.constant 0 : index
    %72 = vector.load %arg8[%c0_34, %c0_35] : memref<64x1xf32, #tpu.memory_space<vmem>>, vector<64x1xf32>
    %73 = vector.broadcast %72 : vector<64x1xf32> to vector<64x256xf32>
    %74 = arith.addf %71, %73 : vector<64x256xf32>
    %75 = arith.addf %2, %74 : vector<64x256xf32>
    %c0_36 = arith.constant 0 : index
    %c0_37 = arith.constant 0 : index
    %76 = vector.load %arg9[%c0_36, %c0_37] : memref<64x256xf32, #tpu.memory_space<vmem>>, vector<64x256xf32>
    tpu.vector_store %arg9[%c0_36, %c0_37], %75 {strides = array<i32>} : memref<64x256xf32, #tpu.memory_space<vmem>>, vector<64x256xf32>,
    return
  }
  func.func @transform_0(%arg0: i32) -> (i32, i32) {
    %c0_i32 = arith.constant 0 : i32
    %c0_i32_0 = arith.constant 0 : i32
    return %c0_i32, %arg0 : i32, i32
  }
  func.func @transform_1(%arg0: i32) -> (i32, i32) {
    %c0_i32 = arith.constant 0 : i32
    %c0_i32_0 = arith.constant 0 : i32
    return %c0_i32, %arg0 : i32, i32
  }
  func.func @transform_2(%arg0: i32) -> (i32, i32) {
    %c0_i32 = arith.constant 0 : i32
    %c0_i32_0 = arith.constant 0 : i32
    %c0_i32_1 = arith.constant 0 : i32
    return %c0_i32, %c0_i32_0 : i32, i32
  }
  func.func @transform_3(%arg0: i32) -> (i32, i32) {
    %c0_i32 = arith.constant 0 : i32
    %c0_i32_0 = arith.constant 0 : i32
    %c0_i32_1 = arith.constant 0 : i32
    return %c0_i32, %c0_i32_0 : i32, i32
  }
  func.func @transform_4(%arg0: i32) -> (i32, i32) {
    %c0_i32 = arith.constant 0 : i32
    %c0_i32_0 = arith.constant 0 : i32
    %c0_i32_1 = arith.constant 0 : i32
    return %c0_i32, %c0_i32_0 : i32, i32
  }
  func.func @transform_5(%arg0: i32) -> (i32, i32) {
    %c0_i32 = arith.constant 0 : i32
    %c0_i32_0 = arith.constant 0 : i32
    %c0_i32_1 = arith.constant 0 : i32
    return %c0_i32, %c0_i32_0 : i32, i32
  }
  func.func @transform_6(%arg0: i32) -> (i32, i32) {
    %c0_i32 = arith.constant 0 : i32
    %c0_i32_0 = arith.constant 0 : i32
    %c0_i32_1 = arith.constant 0 : i32
    return %c0_i32, %c0_i32_0 : i32, i32
  }
  func.func @transform_7(%arg0: i32) -> (i32, i32) {
    %c0_i32 = arith.constant 0 : i32
    %c0_i32_0 = arith.constant 0 : i32
    %c0_i32_1 = arith.constant 0 : i32
    return %c0_i32, %c0_i32_0 : i32, i32
  }
  func.func @transform_8(%arg0: i32) -> (i32, i32) {
    %c0_i32 = arith.constant 0 : i32
    %c0_i32_0 = arith.constant 0 : i32
    return %c0_i32, %arg0 : i32, i32
  }
}

module attributes {stable_mosaic.version = 11 : i64} {
  func.func @_tail_kernel(%arg0: memref<128x256xf32, #tpu.memory_space<vmem>>, %arg1: memref<256x128xf32, #tpu.memory_space<vmem>>, %arg2: memref<64x6xf32, #tpu.memory_space<vmem>>, %arg3: memref<1x6xf32, #tpu.memory_space<vmem>>, %arg4: memref<2x6xf32, #tpu.memory_space<vmem>>) attributes {dimension_semantics = [], scalar_prefetch = 0 : i64, scratch_operands = 0 : i64, tpu.core_type = #tpu.core_type<tc>} {
    %c0 = arith.constant 0 : index
    %c0_0 = arith.constant 0 : index
    %0 = vector.load %arg0[%c0, %c0_0] : memref<128x256xf32, #tpu.memory_space<vmem>>, vector<128x256xf32>
    %c0_1 = arith.constant 0 : index
    %c0_2 = arith.constant 0 : index
    %1 = vector.load %arg1[%c0_1, %c0_2] : memref<256x128xf32, #tpu.memory_space<vmem>>, vector<256x128xf32>
    %cst = arith.constant dense<0.000000e+00> : vector<128x128xf32>
    %2 = tpu.matmul %0, %1, %cst {dimension_numbers = #tpu.dot_dimension_numbers<[1], [0], [0], [1], [0, 0, 1, 1], [], []>} : vector<128x256xf32>, vector<256x128xf32>, vector<128x128xf32> -> vector<128x128xf32>
    %cst_3 = arith.constant dense<0.000000e+00> : vector<128xf32>
    %3 = vector.multi_reduction <add>, %2, %cst_3 [1] : vector<128x128xf32> to vector<128xf32>
    %4 = vector.shape_cast %3 : vector<128xf32> to vector<128x1xf32>
    %cst_4 = arith.constant 1.280000e+02 : f32
    %5 = vector.broadcast %cst_4 : f32 to vector<128x1xf32>
    %6 = arith.divf %4, %5 : vector<128x1xf32>
    %c0_5 = arith.constant 0 : index
    %c0_6 = arith.constant 0 : index
    %7 = vector.load %arg2[%c0_5, %c0_6] : memref<64x6xf32, #tpu.memory_space<vmem>>, vector<64x6xf32>
    %c0_7 = arith.constant 0 : index
    %c0_8 = arith.constant 0 : index
    %8 = vector.load %arg3[%c0_7, %c0_8] : memref<1x6xf32, #tpu.memory_space<vmem>>, vector<1x6xf32>
    %9 = vector.extract_strided_slice %6 {offsets = [0, 0], sizes = [64, 1], strides = [1, 1]} : vector<128x1xf32> to vector<64x1xf32>
    %10 = vector.broadcast %9 : vector<64x1xf32> to vector<64x6xf32>
    %11 = arith.mulf %10, %7 : vector<64x6xf32>
    %cst_9 = arith.constant dense<0.000000e+00> : vector<6xf32>
    %12 = vector.multi_reduction <add>, %11, %cst_9 [0] : vector<64x6xf32> to vector<6xf32>
    %13 = vector.shape_cast %12 : vector<6xf32> to vector<1x6xf32>
    %14 = arith.addf %13, %8 : vector<1x6xf32>
    %c0_10 = arith.constant 0 : index
    %c0_11 = arith.constant 0 : index
    %15 = vector.load %arg4[%c0_10, %c0_11] : memref<2x6xf32, #tpu.memory_space<vmem>>, vector<1x6xf32>
    tpu.vector_store %arg4[%c0_10, %c0_11], %14 {strides = array<i32>} : memref<2x6xf32, #tpu.memory_space<vmem>>, vector<1x6xf32>,
    %16 = vector.extract_strided_slice %6 {offsets = [64, 0], sizes = [64, 1], strides = [1, 1]} : vector<128x1xf32> to vector<64x1xf32>
    %17 = vector.broadcast %16 : vector<64x1xf32> to vector<64x6xf32>
    %18 = arith.mulf %17, %7 : vector<64x6xf32>
    %cst_12 = arith.constant dense<0.000000e+00> : vector<6xf32>
    %19 = vector.multi_reduction <add>, %18, %cst_12 [0] : vector<64x6xf32> to vector<6xf32>
    %20 = vector.shape_cast %19 : vector<6xf32> to vector<1x6xf32>
    %21 = arith.addf %20, %8 : vector<1x6xf32>
    %c1 = arith.constant 1 : index
    %c0_13 = arith.constant 0 : index
    %22 = vector.load %arg4[%c1, %c0_13] : memref<2x6xf32, #tpu.memory_space<vmem>>, vector<1x6xf32>
    tpu.vector_store %arg4[%c1, %c0_13], %21 {strides = array<i32>} : memref<2x6xf32, #tpu.memory_space<vmem>>, vector<1x6xf32>,
    return
  }
}

</mosaic_0001>

<llo_original>
// kernel: swin_model.6
$region0: #{swin_model.6}
  #allocation0 [shape = 'u32[]', space=smem, size = 0x4, offset = 0x4, fixed_abs, tag = 'smem constant byte address 0x4 - core index']
  #allocation1 [shape = 'u32[144,128]{1,0:T(1,128)}', space=vmem, size = 0x12000, scoped, tag = 'internal scratch']
  %s0 = inlined_call_operand.vmem [shape: f32[4,512], index: 0, kind: input, shape index: {}]
  %s1 = inlined_call_operand.hbm [shape: f32[64,4], index: 1, kind: input, shape index: {}]
  %s2 = inlined_call_operand.vmem [shape: f32[64,1], index: 2, kind: input, shape index: {}]
  %s3 = inlined_call_operand.hbm [shape: f32[64,256], index: 3, kind: input, shape index: {}]
  %s4 = inlined_call_operand.vmem [shape: f32[64,512], index: 4, kind: output, shape index: {}]
  %s5 = sld [smem:[#allocation0]]
  $region76: #{swin_model.6} parent=0
    _
  %s7 = ssub.s32 1, %s5
  %s8 = scalar_select 0, %s7, %s5
  $region1: #{swin_model.6} parent=0
    #allocation2 [shape = 'u8[32768]{0}', space=vmem, size = 0x8000, scoped, tag = 'input window, operand 1, single buffered']
    #allocation3 [shape = 's32[2]{0}', space=sflag, size = 0x8, scoped, tag = 'scoped memory for swin_model.6']
    #allocation4 [shape = 'u8[65536]{0}', space=vmem, size = 0x10000, scoped, tag = 'input window, operand 3, single buffered']
    #allocation5 [shape = 's32[1]{0}', space=sflag, size = 0x4, scoped, tag = 'scoped memory for swin_model.6']
    #allocation6 [shape = 'u8[131072]{0}', space=vmem, size = 0x20000, scoped, tag = 'output window, operand 0']
    %9 = vsyncpa [#allocation3], 0
    %10 = vsyncpa [#allocation5], 0
    loop: start=0, step=1, limit=4
    $region2: #{swin_model.6} parent=1 // loop_pre_header
      _
    $region3: #{swin_model.6} parent=1 // loop_header
      %s12 = sphi 0, %s16
      %p13 = scmp.ge.s32.totalorder %s12, 4
      %s22 = sphi 0, %s24
      %s25 = sphi 0, %s22
      %s26 = sphi 0, %s25
      %s42 = sphi 0, %s26
      %s46 = sphi 0, %s46
      %s48 = sphi 0, %s46
      %s49 = sphi 0, %s48
      %s63 = sphi 0, %s49
      %s67 = sphi 0, %s67
      %s69 = sphi 0, %s67
      %s70 = sphi 0, %s69
      %s84 = sphi 0, %s70
      %s88 = sphi 0, %s88
      %s90 = sphi 0, %s88
      %s91 = sphi 0, %s90
      %s105 = sphi 0, %s91
      %s111 = sphi 0, %s113
      %s114 = sphi 0, %s111
      %s115 = sphi 0, %s114
      %s131 = sphi 0, %s115
    $region4: #{swin_model.6} parent=1 // loop_header_branch
      %15 = sbr.rel (%p13) target = $region8
    $region5: #{swin_model.6} parent=1 // loop_body
      %s17 = ssub.s32 %s12, 1
      %s18 = ssub.s32 %s12, 2
      %s19 = sadd.s32 %s12, 1
      %s20 = ssub.s32 %s12, %s19
      %p21 = scmp.eq.s32.totalorder %s20, 0
      %s23 = sadd.s32 %s22, 1
      %s24 = scalar_select %p21, %s22, %s23
      %p27 = pneg %p21
      %p28 = scmp.eq.s32.totalorder %s12, 1
      %p29 = por %p27, %p28
      %p30 = scmp.ne.s32.totalorder %s22, %s25
      %p31 = scmp.eq.s32.totalorder %s12, 0
      %p32 = por %p30, %p31
      %p33 = scmp.ne.s32.totalorder %s22, %s25
      %p34 = scmp.eq.s32.totalorder %s17, 1
      %p35 = por %p33, %p34
      %p36 = scmp.ne.s32.totalorder %s25, %s26
      %p37 = scmp.eq.s32.totalorder %s17, 0
      %p38 = por %p36, %p37
      %p39 = scmp.ne.s32.totalorder %s25, %s26
      %p40 = scmp.eq.s32.totalorder %s18, 1
      %p41 = por %p39, %p40
      %p43 = scmp.ne.s32.totalorder %s26, %s42
      %p44 = scmp.eq.s32.totalorder %s18, 0
      %p45 = por %p43, %p44
      %s47 = sadd.s32 %s46, 1
      %p50 = scmp.eq.s32.totalorder %s12, 1
      %p51 = scmp.ne.s32.totalorder %s46, %s48
      %p52 = scmp.eq.s32.totalorder %s12, 0
      %p53 = por %p51, %p52
      %p54 = scmp.ne.s32.totalorder %s46, %s48
      %p55 = scmp.eq.s32.totalorder %s17, 1
      %p56 = por %p54, %p55
      %p57 = scmp.ne.s32.totalorder %s48, %s49
      %p58 = scmp.eq.s32.totalorder %s17, 0
      %p59 = por %p57, %p58
      %p60 = scmp.ne.s32.totalorder %s48, %s49
      %p61 = scmp.eq.s32.totalorder %s18, 1
      %p62 = por %p60, %p61
      %p64 = scmp.ne.s32.totalorder %s49, %s63
      %p65 = scmp.eq.s32.totalorder %s18, 0
      %p66 = por %p64, %p65
      %s68 = sadd.s32 %s67, 1
      %p71 = scmp.eq.s32.totalorder %s12, 1
      %p72 = scmp.ne.s32.totalorder %s67, %s69
      %p73 = scmp.eq.s32.totalorder %s12, 0
      %p74 = por %p72, %p73
      %p75 = scmp.ne.s32.totalorder %s67, %s69
      %p76 = scmp.eq.s32.totalorder %s17, 1
      %p77 = por %p75, %p76
      %p78 = scmp.ne.s32.totalorder %s69, %s70
      %p79 = scmp.eq.s32.totalorder %s17, 0
      %p80 = por %p78, %p79
      %p81 = scmp.ne.s32.totalorder %s69, %s70
      %p82 = scmp.eq.s32.totalorder %s18, 1
      %p83 = por %p81, %p82
      %p85 = scmp.ne.s32.totalorder %s70, %s84
      %p86 = scmp.eq.s32.totalorder %s18, 0
      %p87 = por %p85, %p86
      %s89 = sadd.s32 %s88, 1
      %p92 = scmp.eq.s32.totalorder %s12, 1
      %p93 = scmp.ne.s32.totalorder %s88, %s90
      %p94 = scmp.eq.s32.totalorder %s12, 0
      %p95 = por %p93, %p94
      %p96 = scmp.ne.s32.totalorder %s88, %s90
      %p97 = scmp.eq.s32.totalorder %s17, 1
      %p98 = por %p96, %p97
      %p99 = scmp.ne.s32.totalorder %s90, %s91
      %p100 = scmp.eq.s32.totalorder %s17, 0
      %p101 = por %p99, %p100
      %p102 = scmp.ne.s32.totalorder %s90, %s91
      %p103 = scmp.eq.s32.totalorder %s18, 1
      %p104 = por %p102, %p103
      %p106 = scmp.ne.s32.totalorder %s91, %s105
      %p107 = scmp.eq.s32.totalorder %s18, 0
      %p108 = por %p106, %p107
      %s109 = ssub.s32 %s12, %s19
      %p110 = scmp.eq.s32.totalorder %s109, 0
      %s112 = sadd.s32 %s111, 1
      %s113 = scalar_select %p110, %s111, %s112
      %p116 = pneg %p110
      %p117 = scmp.eq.s32.totalorder %s12, 1
      %p118 = por %p116, %p117
      %p119 = scmp.ne.s32.totalorder %s111, %s114
      %p120 = scmp.eq.s32.totalorder %s12, 0
      %p121 = por %p119, %p120
      %p122 = scmp.ne.s32.totalorder %s111, %s114
      %p123 = scmp.eq.s32.totalorder %s17, 1
      %p124 = por %p122, %p123
      %p125 = scmp.ne.s32.totalorder %s114, %s115
      %p126 = scmp.eq.s32.totalorder %s17, 0
      %p127 = por %p125, %p126
      %p128 = scmp.ne.s32.totalorder %s114, %s115
      %p129 = scmp.eq.s32.totalorder %s18, 1
      %p130 = por %p128, %p129
      %p132 = scmp.ne.s32.totalorder %s115, %s131
      %p133 = scmp.eq.s32.totalorder %s18, 0
      %p134 = por %p132, %p133
      %p135 = scmp.le.s32.totalorder 1, %s12
      %p136 = scmp.lt.s32.totalorder %s12, 3
      %p137 = pnand %p135, %p136
      %p138 = pneg %p137
      // Predicated region
      $region9: #{swin_model.6} parent=5 // pred_check
        _
      $region10: #{swin_model.6} parent=5 // pred_check_branch
        %140 = sbr.rel (%p137) target = $region12
      $region11: #{swin_model.6} parent=5 // pred_region
        %s141 = ssub.s32 %s12, 1
        // Predicated region
        $region13: #{swin_model.6} parent=11 // pred_check
          %p142 = pneg %p59
        $region14: #{swin_model.6} parent=11 // pred_check_branch
          %144 = sbr.rel (%p142) target = $region16
        $region15: #{swin_model.6} parent=11 // pred_region
          %s146 = ssub.s32 1024, 1024
          %147 = vsyncadd [#allocation3], %s146
          %s148 = sshll.u32 [#allocation2], 4
          %s149 = int_to_ptr.vmem [resolvable:$true] %s148
          %154 = dma.hbm_to_vmem [thread:$0]  %s1, 1024, %s149, [#allocation3], 128, 128, 8
        $region16: #{swin_model.6} parent=11 // pred_fallthru
          _
        // Predicated region
        $region17: #{swin_model.6} parent=11 // pred_check
          %p155 = pneg %p80
        $region18: #{swin_model.6} parent=11 // pred_check_branch
          %157 = sbr.rel (%p155) target = $region20
        $region19: #{swin_model.6} parent=11 // pred_region
          _
        $region20: #{swin_model.6} parent=11 // pred_fallthru
          _
        // Predicated region
        $region21: #{swin_model.6} parent=11 // pred_check
          %p158 = pneg %p101
        $region22: #{swin_model.6} parent=11 // pred_check_branch
          %160 = sbr.rel (%p158) target = $region24
        $region23: #{swin_model.6} parent=11 // pred_region
          %s162 = ssub.s32 2048, 2048
          %163 = vsyncadd [#allocation5], %s162
          %s164 = sshll.u32 [#allocation4], 4
          %s165 = int_to_ptr.vmem [resolvable:$true] %s164
          %170 = dma.hbm_to_vmem [thread:$0]  %s3, 2048, %s165, [#allocation5], 256, 256, 16
        $region24: #{swin_model.6} parent=11 // pred_fallthru
          _
      $region12: #{swin_model.6} parent=5 // pred_fallthru
        _
      %p171 = scmp.lt.s32.totalorder %s12, 2
      // Predicated region
      $region25: #{swin_model.6} parent=5 // pred_check
        %p172 = pneg %p171
      $region26: #{swin_model.6} parent=5 // pred_check_branch
        %174 = sbr.rel (%p172) target = $region28
      $region27: #{swin_model.6} parent=5 // pred_region
        // Predicated region
        $region29: #{swin_model.6} parent=27 // pred_check
          %p175 = pneg %p32
        $region30: #{swin_model.6} parent=27 // pred_check_branch
          %177 = sbr.rel (%p175) target = $region32
        $region31: #{swin_model.6} parent=27 // pred_region
          %s178 = smul.u32 2, %s12
          %p179 = scmp.lt.s32.totalorder %s178, 3
          %s180 = scalar_select %p179, %s178, 3
          %s181 = smul.addr %s180, 4
          %s182 = scalar_lea.vmem %s0, %s181
          %s183 = smul.u32 2, %s12
        $region32: #{swin_model.6} parent=27 // pred_fallthru
          _
      $region28: #{swin_model.6} parent=5 // pred_fallthru
        _
      %p184 = scmp.le.s32.totalorder 1, %s12
      %p185 = scmp.lt.s32.totalorder %s12, 3
      %p186 = pnand %p184, %p185
      %p187 = pneg %p186
      // Predicated region
      $region33: #{swin_model.6} parent=5 // pred_check
        _
      $region34: #{swin_model.6} parent=5 // pred_check_branch
        %189 = sbr.rel (%p186) target = $region36
      $region35: #{swin_model.6} parent=5 // pred_region
        %s190 = ssub.s32 %s12, 1
        // Predicated region
        $region37: #{swin_model.6} parent=35 // pred_check
          %p191 = pneg %p59
        $region38: #{swin_model.6} parent=35 // pred_check_branch
          %193 = sbr.rel (%p191) target = $region40
        $region39: #{swin_model.6} parent=35 // pred_region
          %194 = dma.done [#allocation3], 1024
        $region40: #{swin_model.6} parent=35 // pred_fallthru
          _
        // Predicated region
        $region41: #{swin_model.6} parent=35 // pred_check
          %p195 = pneg %p101
        $region42: #{swin_model.6} parent=35 // pred_check_branch
          %197 = sbr.rel (%p195) target = $region44
        $region43: #{swin_model.6} parent=35 // pred_region
          %198 = dma.done [#allocation5], 2048
        $region44: #{swin_model.6} parent=35 // pred_fallthru
          _
        %s199 = smul.u32 2, %s17
        %p200 = scmp.lt.s32.totalorder %s199, 3
        %s201 = scalar_select %p200, %s199, 3
        %s202 = smul.addr %s201, 4
        %s203 = scalar_lea.vmem %s0, %s202
        %p204 = pneg %p38
        %p205 = pneg %p35
        %p206 = pneg %p59
        %p207 = pneg %p56
        %p208 = pneg %p80
        %p209 = pneg %p77
        %p210 = pneg %p101
        %p211 = pneg %p98
        %p212 = pneg %p127
        %p213 = pneg %p124
        %s214 = sand.u32 %s114, 1
        %s215 = sand.u32 %s114, 1
        %s216 = smul.addr %s215, 128
        %s217 = scalar_lea.vmem [#allocation6], %s216
        %s218 = smul.u32 2, %s17
        %p219 = scmp.lt.s32.totalorder %s218, 3
        %s220 = scalar_select %p219, %s218, 3
        %s221 = smul.addr %s220, 4
        %s222 = scalar_lea.vmem %s0, %s221
        %s223 = smul.u32 2, %s17
        %s224 = smul.u32 2, %s17
        %v225 = vld [vmem:[#allocation2] sm:$0xff]
        %v226 = vld [vmem:[#allocation2 + $0x8] sm:$0xff]
        %v227 = vld [vmem:[#allocation2 + $0x10] sm:$0xff]
        %v228 = vld [vmem:[#allocation2 + $0x18] sm:$0xff]
        %v229 = vld [vmem:[#allocation2 + $0x20] sm:$0xff]
        %v230 = vld [vmem:[#allocation2 + $0x28] sm:$0xff]
        %v231 = vld [vmem:[#allocation2 + $0x30] sm:$0xff]
        %v232 = vld [vmem:[#allocation2 + $0x38] sm:$0xff]
        %v233 = vld [vmem:[%s222] sm:$0xff]
        %v234 = vld [vmem:[%s2] sm:$0xff]
        %v235 = vld [vmem:[%s2 + $0x8] sm:$0xff]
        %v236 = vld [vmem:[%s2 + $0x10] sm:$0xff]
        %v237 = vld [vmem:[%s2 + $0x18] sm:$0xff]
        %v238 = vld [vmem:[%s2 + $0x20] sm:$0xff]
        %v239 = vld [vmem:[%s2 + $0x28] sm:$0xff]
        %v240 = vld [vmem:[%s2 + $0x30] sm:$0xff]
        %v241 = vld [vmem:[%s2 + $0x38] sm:$0xff]
        %243 = vset.pattern.permute.xlu0 0
        %244 = vperm.xlu0 %243, %v234
        %v245 = vpop.permute.xlu0 %244
        %248 = vset.pattern.permute.xlu0 0
        %249 = vperm.xlu0 %248, %v235
        %v250 = vpop.permute.xlu0 %249
        %253 = vset.pattern.permute.xlu0 0
        %254 = vperm.xlu0 %253, %v236
        %v255 = vpop.permute.xlu0 %254
        %258 = vset.pattern.permute.xlu0 0
        %259 = vperm.xlu0 %258, %v237
        %v260 = vpop.permute.xlu0 %259
        %263 = vset.pattern.permute.xlu0 0
        %264 = vperm.xlu0 %263, %v238
        %v265 = vpop.permute.xlu0 %264
        %268 = vset.pattern.permute.xlu0 0
        %269 = vperm.xlu0 %268, %v239
        %v270 = vpop.permute.xlu0 %269
        %273 = vset.pattern.permute.xlu0 0
        %274 = vperm.xlu0 %273, %v240
        %v275 = vpop.permute.xlu0 %274
        %278 = vset.pattern.permute.xlu0 0
        %279 = vperm.xlu0 %278, %v241
        %v280 = vpop.permute.xlu0 %279
        %v283 = vcombine.high %v233, %v233
        %vm284 = vcmask 31744
        %v286 = vsel %vm284, %v225, 0
        %v289 = vsel %vm284, %v226, 0
        %v292 = vsel %vm284, %v227, 0
        %v295 = vsel %vm284, %v228, 0
        %v298 = vsel %vm284, %v229, 0
        %v301 = vsel %vm284, %v230, 0
        %v304 = vsel %vm284, %v231, 0
        %v307 = vsel %vm284, %v232, 0
        %vm309 = vcmask 1043456
        %v310 = vsel %vm309, %v233, 0
        %v312 = vsel %vm309, %v283, 0
        %314 = vmatprep.subr.mxu0 %v312
        %315 = vmatpush1.msra.mxu0 %v310
        %316 = vmatprep.subr.mxu0 0.0
        %317 = vmatpush1.msra.mxu0 0.0
        %318 = vmatprep.subr.mxu0 0.0
        %319 = vmatpush1.msra.mxu0 0.0
        %320 = vmatprep.subr.mxu0 0.0
        %321 = vmatpush1.msra.mxu0 0.0
        %322 = vmatprep.subr.mxu0 0.0
        %323 = vmatpush1.msra.mxu0 0.0
        %324 = vmatprep.subr.mxu0 0.0
        %325 = vmatpush1.msra.mxu0 0.0
        %326 = vmatprep.subr.mxu0 0.0
        %327 = vmatpush1.msra.mxu0 0.0
        %328 = vmatprep.subr.mxu0 0.0
        %329 = vmatpush1.msra.mxu0 0.0
        %330 = vmatprep.subr.mxu0 0.0
        %331 = vmatpush1.msra.mxu0 0.0
        %332 = vmatprep.subr.mxu0 0.0
        %333 = vmatpush1.msra.mxu0 0.0
        %334 = vmatprep.subr.mxu0 0.0
        %335 = vmatpush1.msra.mxu0 0.0
        %336 = vmatprep.subr.mxu0 0.0
        %337 = vmatpush1.msra.mxu0 0.0
        %338 = vmatprep.subr.mxu0 0.0
        %339 = vmatpush1.msra.mxu0 0.0
        %340 = vmatprep.subr.mxu0 0.0
        %341 = vmatpush1.msra.mxu0 0.0
        %342 = vmatprep.subr.mxu0 0.0
        %343 = vmatpush1.msra.mxu0 0.0
        %344 = vmatprep.subr.mxu0 0.0
        %345 = vmatpush1.msra.mxu0 0.0
        %346 = vmatprep.subr.mxu0 0.0
        %347 = vmatpush1.msra.mxu0 0.0
        %348 = vmatprep.subr.mxu0 0.0
        %349 = vmatpush1.msra.mxu0 0.0
        %350 = vmatprep.subr.mxu0 0.0
        %351 = vmatpush1.msra.mxu0 0.0
        %352 = vmatprep.subr.mxu0 0.0
        %353 = vmatpush1.msra.mxu0 0.0
        %354 = vmatprep.subr.mxu0 0.0
        %355 = vmatpush1.msra.mxu0 0.0
        %356 = vmatprep.subr.mxu0 0.0
        %357 = vmatpush1.msra.mxu0 0.0
        %358 = vmatprep.subr.mxu0 0.0
        %359 = vmatpush1.msra.mxu0 0.0
        %360 = vmatprep.subr.mxu0 0.0
        %361 = vmatpush1.msra.mxu0 0.0
        %362 = vmatprep.subr.mxu0 0.0
        %363 = vmatpush1.msra.mxu0 0.0
        %364 = vmatprep.subr.mxu0 0.0
        %365 = vmatpush1.msra.mxu0 0.0
        %366 = vmatprep.subr.mxu0 0.0
        %367 = vmatpush1.msra.mxu0 0.0
        %368 = vmatprep.subr.mxu0 0.0
        %369 = vmatpush1.msra.mxu0 0.0
        %370 = vmatprep.subr.mxu0 0.0
        %371 = vmatpush1.msra.mxu0 0.0
        %372 = vmatprep.subr.mxu0 0.0
        %373 = vmatpush1.msra.mxu0 0.0
        %374 = vmatprep.subr.mxu0 0.0
        %375 = vmatpush1.msra.mxu0 0.0
        %376 = vmatprep.subr.mxu0 0.0
        %377 = vmatpush1.msra.mxu0 0.0
        %378 = vmatprep.mubr.f32.mxu0 0.0
        %379 = vmatmul.mubr.f32.gmra.mrb[0].mxu0 %v286
        %v380 = vpop.f32.mrb[0].mxu0
        %v381 = vadd.f32 %v245, %v380
        %v382 = vpop.f32.mrb[0].mxu0
        %v383 = vadd.f32 %v245, %v382
        %384 = vmatprep.mubr.f32.mxu0 0.0
        %385 = vmatmul.mubr.f32.gmra.mrb[0].mxu0 %v289
        %v386 = vpop.f32.mrb[0].mxu0
        %v387 = vadd.f32 %v250, %v386
        %v388 = vpop.f32.mrb[0].mxu0
        %v389 = vadd.f32 %v250, %v388
        %390 = vmatprep.mubr.f32.mxu0 0.0
        %391 = vmatmul.mubr.f32.gmra.mrb[0].mxu0 %v292
        %v392 = vpop.f32.mrb[0].mxu0
        %v393 = vadd.f32 %v255, %v392
        %v394 = vpop.f32.mrb[0].mxu0
        %v395 = vadd.f32 %v255, %v394
        %396 = vmatprep.mubr.f32.mxu0 0.0
        %397 = vmatmul.mubr.f32.gmra.mrb[0].mxu0 %v295
        %v398 = vpop.f32.mrb[0].mxu0
        %v399 = vadd.f32 %v260, %v398
        %v400 = vpop.f32.mrb[0].mxu0
        %v401 = vadd.f32 %v260, %v400
        %402 = vmatprep.mubr.f32.mxu0 0.0
        %403 = vmatmul.mubr.f32.gmra.mrb[0].mxu0 %v298
        %v404 = vpop.f32.mrb[0].mxu0
        %v405 = vadd.f32 %v265, %v404
        %v406 = vpop.f32.mrb[0].mxu0
        %v407 = vadd.f32 %v265, %v406
        %408 = vmatprep.mubr.f32.mxu0 0.0
        %409 = vmatmul.mubr.f32.gmra.mrb[0].mxu0 %v301
        %v410 = vpop.f32.mrb[0].mxu0
        %v411 = vadd.f32 %v270, %v410
        %v412 = vpop.f32.mrb[0].mxu0
        %v413 = vadd.f32 %v270, %v412
        %414 = vmatprep.mubr.f32.mxu0 0.0
        %415 = vmatmul.mubr.f32.gmra.mrb[0].mxu0 %v304
        %v416 = vpop.f32.mrb[0].mxu0
        %v417 = vadd.f32 %v275, %v416
        %v418 = vpop.f32.mrb[0].mxu0
        %v419 = vadd.f32 %v275, %v418
        %420 = vmatprep.mubr.f32.mxu0 0.0
        %421 = vmatmul.mubr.f32.gmra.mrb[0].mxu0 %v307
        %v422 = vpop.f32.mrb[0].mxu0
        %v423 = vadd.f32 %v280, %v422
        %v424 = vpop.f32.mrb[0].mxu0
        %v425 = vadd.f32 %v280, %v424
        %426 = vdwg.mxu0
        %v427 = vld [vmem:[#allocation4] sm:$0xff]
        %v428 = vld [vmem:[#allocation4 + $0x8] sm:$0xff]
        %v429 = vld [vmem:[#allocation4 + $0x10] sm:$0xff]
        %v430 = vld [vmem:[#allocation4 + $0x18] sm:$0xff]
        %v431 = vld [vmem:[#allocation4 + $0x20] sm:$0xff]
        %v432 = vld [vmem:[#allocation4 + $0x28] sm:$0xff]
        %v433 = vld [vmem:[#allocation4 + $0x30] sm:$0xff]
        %v434 = vld [vmem:[#allocation4 + $0x38] sm:$0xff]
        %v435 = vld [vmem:[#allocation4 + $0x40] sm:$0xff]
        %v436 = vld [vmem:[#allocation4 + $0x48] sm:$0xff]
        %v437 = vld [vmem:[#allocation4 + $0x50] sm:$0xff]
        %v438 = vld [vmem:[#allocation4 + $0x58] sm:$0xff]
        %v439 = vld [vmem:[#allocation4 + $0x60] sm:$0xff]
        %v440 = vld [vmem:[#allocation4 + $0x68] sm:$0xff]
        %v441 = vld [vmem:[#allocation4 + $0x70] sm:$0xff]
        %v442 = vld [vmem:[#allocation4 + $0x78] sm:$0xff]
        %v443 = vadd.f32 %v381, %v427
        %v444 = vadd.f32 %v383, %v428
        %v445 = vadd.f32 %v387, %v429
        %v446 = vadd.f32 %v389, %v430
        %v447 = vadd.f32 %v393, %v431
        %v448 = vadd.f32 %v395, %v432
        %v449 = vadd.f32 %v399, %v433
        %v450 = vadd.f32 %v401, %v434
        %v451 = vadd.f32 %v405, %v435
        %v452 = vadd.f32 %v407, %v436
        %v453 = vadd.f32 %v411, %v437
        %v454 = vadd.f32 %v413, %v438
        %v455 = vadd.f32 %v417, %v439
        %v456 = vadd.f32 %v419, %v440
        %v457 = vadd.f32 %v423, %v441
        %v458 = vadd.f32 %v425, %v442
        %459 = vst [vmem:[%s217] sm:$0xff] %v443
        %460 = vst [vmem:[%s217 + $0x8] sm:$0xff] %v444
        %461 = vst [vmem:[%s217 + $0x10] sm:$0xff] %v445
        %462 = vst [vmem:[%s217 + $0x18] sm:$0xff] %v446
        %463 = vst [vmem:[%s217 + $0x20] sm:$0xff] %v447
        %464 = vst [vmem:[%s217 + $0x28] sm:$0xff] %v448
        %465 = vst [vmem:[%s217 + $0x30] sm:$0xff] %v449
        %466 = vst [vmem:[%s217 + $0x38] sm:$0xff] %v450
        %467 = vst [vmem:[%s217 + $0x40] sm:$0xff] %v451
        %468 = vst [vmem:[%s217 + $0x48] sm:$0xff] %v452
        %469 = vst [vmem:[%s217 + $0x50] sm:$0xff] %v453
        %470 = vst [vmem:[%s217 + $0x58] sm:$0xff] %v454
        %471 = vst [vmem:[%s217 + $0x60] sm:$0xff] %v455
        %472 = vst [vmem:[%s217 + $0x68] sm:$0xff] %v456
        %473 = vst [vmem:[%s217 + $0x70] sm:$0xff] %v457
        %474 = vst [vmem:[%s217 + $0x78] sm:$0xff] %v458
        %s475 = sand.u32 %s114, 1
        %s476 = sand.u32 %s114, 1
        %s477 = smul.addr %s476, 128
        %s478 = scalar_lea.vmem [#allocation6], %s477
        // Predicated region
        $region45: #{swin_model.6} parent=35 // pred_check
          %p479 = pneg %p124
        $region46: #{swin_model.6} parent=35 // pred_check_branch
          %481 = sbr.rel (%p479) target = $region48
        $region47: #{swin_model.6} parent=35 // pred_region
          %s482 = smul.u32 2, %s17
          %s483 = smul.addr %s482, 8
          %s484 = scalar_lea.vmem %s4, %s483
          // Predicated region
          $region49: #{swin_model.6} parent=47 // pred_check
            _
          $region50: #{swin_model.6} parent=47 // pred_check_branch
            %486 = sbr.rel (0) target = $region52
          $region51: #{swin_model.6} parent=47 // pred_region
            // Predicated region
            $region53: #{swin_model.6} parent=51 // pred_check
              _
            $region54: #{swin_model.6} parent=51 // pred_check_branch
              %488 = sbr.rel (0) target = $region56
            $region55: #{swin_model.6} parent=51 // pred_region
              loop: start=0, step=1, limit=1
              $region57: #{swin_model.6} parent=55 // loop_pre_header
                _
              $region58: #{swin_model.6} parent=55 // loop_header
                %s490 = sphi 0, %s494
                %p491 = scmp.ge.s32.totalorder %s490, 1
                %s495 = sphi %s478, %s478
                %s496 = sphi %s484, %s484
              $region59: #{swin_model.6} parent=55 // loop_header_branch
                %493 = sbr.rel (%p491) target = $region63
              $region60: #{swin_model.6} parent=55 // loop_body
                %v497 = vld [vmem:[%s495] sm:$0xff]
                %498 = vst [vmem:[%s496] sm:$0xff] %v497
                %v499 = vld [vmem:[%s495 + $0x8] sm:$0xff]
                %500 = vst [vmem:[%s496 + $0x8] sm:$0xff] %v499
                %v501 = vld [vmem:[%s495 + $0x10] sm:$0xff]
                %502 = vst [vmem:[%s496 + $0x20] sm:$0xff] %v501
                %v503 = vld [vmem:[%s495 + $0x18] sm:$0xff]
                %504 = vst [vmem:[%s496 + $0x28] sm:$0xff] %v503
                %v505 = vld [vmem:[%s495 + $0x20] sm:$0xff]
                %506 = vst [vmem:[%s496 + $0x40] sm:$0xff] %v505
                %v507 = vld [vmem:[%s495 + $0x28] sm:$0xff]
                %508 = vst [vmem:[%s496 + $0x48] sm:$0xff] %v507
                %v509 = vld [vmem:[%s495 + $0x30] sm:$0xff]
                %510 = vst [vmem:[%s496 + $0x60] sm:$0xff] %v509
                %v511 = vld [vmem:[%s495 + $0x38] sm:$0xff]
                %512 = vst [vmem:[%s496 + $0x68] sm:$0xff] %v511
                %v513 = vld [vmem:[%s495 + $0x40] sm:$0xff]
                %514 = vst [vmem:[%s496 + $0x80] sm:$0xff] %v513
                %v515 = vld [vmem:[%s495 + $0x48] sm:$0xff]
                %516 = vst [vmem:[%s496 + $0x88] sm:$0xff] %v515
                %v517 = vld [vmem:[%s495 + $0x50] sm:$0xff]
                %518 = vst [vmem:[%s496 + $0xa0] sm:$0xff] %v517
                %v519 = vld [vmem:[%s495 + $0x58] sm:$0xff]
                %520 = vst [vmem:[%s496 + $0xa8] sm:$0xff] %v519
                %v521 = vld [vmem:[%s495 + $0x60] sm:$0xff]
                %522 = vst [vmem:[%s496 + $0xc0] sm:$0xff] %v521
                %v523 = vld [vmem:[%s495 + $0x68] sm:$0xff]
                %524 = vst [vmem:[%s496 + $0xc8] sm:$0xff] %v523
                %v525 = vld [vmem:[%s495 + $0x70] sm:$0xff]
                %526 = vst [vmem:[%s496 + $0xe0] sm:$0xff] %v525
                %v527 = vld [vmem:[%s495 + $0x78] sm:$0xff]
                %528 = vst [vmem:[%s496 + $0xe8] sm:$0xff] %v527
              $region61: #{swin_model.6} parent=55 // loop_footer
                %s494 = sadd.s32 1, %s490
              $region62: #{swin_model.6} parent=55 // loop_footer_branch
                %489 = sbr.rel target = $region58
              $region63: #{swin_model.6} parent=55 // loop_exit
                _
            $region56: #{swin_model.6} parent=51 // pred_fallthru
              _
            // Predicated region
            $region64: #{swin_model.6} parent=51 // pred_check
              _
            $region65: #{swin_model.6} parent=51 // pred_check_branch
              %530 = sbr.rel target = $region67
            $region66: #{swin_model.6} parent=51 // pred_region
              _
            $region67: #{swin_model.6} parent=51 // pred_fallthru
              _
          $region52: #{swin_model.6} parent=47 // pred_fallthru
            _
          %531 = vnop
        $region48: #{swin_model.6} parent=35 // pred_fallthru
          _
      $region36: #{swin_model.6} parent=5 // pred_fallthru
        _
      %p532 = scmp.le.s32.totalorder 2, %s12
      // Predicated region
      $region68: #{swin_model.6} parent=5 // pred_check
        %p533 = pneg %p532
      $region69: #{swin_model.6} parent=5 // pred_check_branch
        %535 = sbr.rel (%p533) target = $region71
      $region70: #{swin_model.6} parent=5 // pred_region
        %s536 = ssub.s32 %s12, 2
        // Predicated region
        $region72: #{swin_model.6} parent=70 // pred_check
          %p537 = pneg %p130
        $region73: #{swin_model.6} parent=70 // pred_check_branch
          %539 = sbr.rel (%p537) target = $region75
        $region74: #{swin_model.6} parent=70 // pred_region
          %s540 = sand.u32 %s115, 1
          %s541 = sand.u32 %s115, 1
          %s542 = smul.addr %s541, 128
          %s543 = scalar_lea.vmem [#allocation6], %s542
        $region75: #{swin_model.6} parent=70 // pred_fallthru
          _
      $region71: #{swin_model.6} parent=5 // pred_fallthru
        _
    $region6: #{swin_model.6} parent=1 // loop_footer
      %s16 = sadd.s32 1, %s12
    $region7: #{swin_model.6} parent=1 // loop_footer_branch
      %11 = sbr.rel target = $region3
    $region8: #{swin_model.6} parent=1 // loop_exit
      _
    %544 = vsyncpa [#allocation3], 1
    %s545 = scalar_lea.sflag [#allocation3], 1
    %546 = vsyncpa %s545, 1
    %547 = vsyncpa [#allocation5], 1

// kernel: swin_model.8
$region0: #{swin_model.8}
  #allocation0 [shape = 'u32[]', space=smem, size = 0x4, offset = 0x4, fixed_abs, tag = 'smem constant byte address 0x4 - core index']
  #allocation1 [shape = 'u32[144,128]{1,0:T(1,128)}', space=vmem, size = 0x12000, scoped, tag = 'internal scratch']
  %s0 = inlined_call_operand.vmem [shape: f32[64,512], index: 0, kind: input, shape index: {}]
  %s1 = inlined_call_operand.vmem [shape: f32[64,512], index: 1, kind: input, shape index: {}]
  %s2 = inlined_call_operand.vmem [shape: f32[64,1], index: 2, kind: input, shape index: {}]
  %s3 = inlined_call_operand.vmem [shape: f32[64,1], index: 3, kind: input, shape index: {}, may-alias: {3,7}]
  %s4 = inlined_call_operand.vmem [shape: f32[128,64], index: 4, kind: input, shape index: {}]
  %s5 = inlined_call_operand.vmem [shape: f32[128,1], index: 5, kind: input, shape index: {}]
  %s6 = inlined_call_operand.vmem [shape: f32[64,128], index: 6, kind: input, shape index: {}]
  %s7 = inlined_call_operand.vmem [shape: f32[64,1], index: 7, kind: input, shape index: {}, may-alias: {3,7}]
  %s8 = inlined_call_operand.vmem [shape: f32[64,512], index: 8, kind: output, shape index: {}]
  %s9 = sld [smem:[#allocation0]]
  $region130: #{swin_model.8} parent=0
    _
  %s11 = ssub.s32 1, %s9
  %s12 = scalar_select 0, %s11, %s9
  $region1: #{swin_model.8} parent=0
    #allocation2 [shape = 'u8[131072]{0}', space=vmem, size = 0x20000, scoped, tag = 'input window, operand 0']
    #allocation3 [shape = 'u8[131072]{0}', space=vmem, size = 0x20000, scoped, tag = 'input window, operand 1']
    #allocation4 [shape = 'u8[131072]{0}', space=vmem, size = 0x20000, scoped, tag = 'output window, operand 0']
    loop: start=0, step=1, limit=4
    $region2: #{swin_model.8} parent=1 // loop_pre_header
      _
    $region3: #{swin_model.8} parent=1 // loop_header
      %s14 = sphi 0, %s18
      %p15 = scmp.ge.s32.totalorder %s14, 4
      %s24 = sphi 0, %s26
      %s27 = sphi 0, %s24
      %s28 = sphi 0, %s27
      %s44 = sphi 0, %s28
      %s50 = sphi 0, %s52
      %s53 = sphi 0, %s50
      %s54 = sphi 0, %s53
      %s70 = sphi 0, %s54
      %s74 = sphi 0, %s74
      %s76 = sphi 0, %s74
      %s77 = sphi 0, %s76
      %s91 = sphi 0, %s77
      %s95 = sphi 0, %s95
      %s97 = sphi 0, %s95
      %s98 = sphi 0, %s97
      %s112 = sphi 0, %s98
      %s116 = sphi 0, %s116
      %s118 = sphi 0, %s116
      %s119 = sphi 0, %s118
      %s133 = sphi 0, %s119
      %s137 = sphi 0, %s137
      %s139 = sphi 0, %s137
      %s140 = sphi 0, %s139
      %s154 = sphi 0, %s140
      %s158 = sphi 0, %s158
      %s160 = sphi 0, %s158
      %s161 = sphi 0, %s160
      %s175 = sphi 0, %s161
      %s179 = sphi 0, %s179
      %s181 = sphi 0, %s179
      %s182 = sphi 0, %s181
      %s196 = sphi 0, %s182
      %s202 = sphi 0, %s204
      %s205 = sphi 0, %s202
      %s206 = sphi 0, %s205
      %s222 = sphi 0, %s206
    $region4: #{swin_model.8} parent=1 // loop_header_branch
      %17 = sbr.rel (%p15) target = $region8
    $region5: #{swin_model.8} parent=1 // loop_body
      %s19 = ssub.s32 %s14, 1
      %s20 = ssub.s32 %s14, 2
      %s21 = sadd.s32 %s14, 1
      %s22 = ssub.s32 %s14, %s21
      %p23 = scmp.eq.s32.totalorder %s22, 0
      %s25 = sadd.s32 %s24, 1
      %s26 = scalar_select %p23, %s24, %s25
      %p29 = pneg %p23
      %p30 = scmp.eq.s32.totalorder %s14, 1
      %p31 = por %p29, %p30
      %p32 = scmp.ne.s32.totalorder %s24, %s27
      %p33 = scmp.eq.s32.totalorder %s14, 0
      %p34 = por %p32, %p33
      %p35 = scmp.ne.s32.totalorder %s24, %s27
      %p36 = scmp.eq.s32.totalorder %s19, 1
      %p37 = por %p35, %p36
      %p38 = scmp.ne.s32.totalorder %s27, %s28
      %p39 = scmp.eq.s32.totalorder %s19, 0
      %p40 = por %p38, %p39
      %p41 = scmp.ne.s32.totalorder %s27, %s28
      %p42 = scmp.eq.s32.totalorder %s20, 1
      %p43 = por %p41, %p42
      %p45 = scmp.ne.s32.totalorder %s28, %s44
      %p46 = scmp.eq.s32.totalorder %s20, 0
      %p47 = por %p45, %p46
      %s48 = ssub.s32 %s14, %s21
      %p49 = scmp.eq.s32.totalorder %s48, 0
      %s51 = sadd.s32 %s50, 1
      %s52 = scalar_select %p49, %s50, %s51
      %p55 = pneg %p49
      %p56 = scmp.eq.s32.totalorder %s14, 1
      %p57 = por %p55, %p56
      %p58 = scmp.ne.s32.totalorder %s50, %s53
      %p59 = scmp.eq.s32.totalorder %s14, 0
      %p60 = por %p58, %p59
      %p61 = scmp.ne.s32.totalorder %s50, %s53
      %p62 = scmp.eq.s32.totalorder %s19, 1
      %p63 = por %p61, %p62
      %p64 = scmp.ne.s32.totalorder %s53, %s54
      %p65 = scmp.eq.s32.totalorder %s19, 0
      %p66 = por %p64, %p65
      %p67 = scmp.ne.s32.totalorder %s53, %s54
      %p68 = scmp.eq.s32.totalorder %s20, 1
      %p69 = por %p67, %p68
      %p71 = scmp.ne.s32.totalorder %s54, %s70
      %p72 = scmp.eq.s32.totalorder %s20, 0
      %p73 = por %p71, %p72
      %s75 = sadd.s32 %s74, 1
      %p78 = scmp.eq.s32.totalorder %s14, 1
      %p79 = scmp.ne.s32.totalorder %s74, %s76
      %p80 = scmp.eq.s32.totalorder %s14, 0
      %p81 = por %p79, %p80
      %p82 = scmp.ne.s32.totalorder %s74, %s76
      %p83 = scmp.eq.s32.totalorder %s19, 1
      %p84 = por %p82, %p83
      %p85 = scmp.ne.s32.totalorder %s76, %s77
      %p86 = scmp.eq.s32.totalorder %s19, 0
      %p87 = por %p85, %p86
      %p88 = scmp.ne.s32.totalorder %s76, %s77
      %p89 = scmp.eq.s32.totalorder %s20, 1
      %p90 = por %p88, %p89
      %p92 = scmp.ne.s32.totalorder %s77, %s91
      %p93 = scmp.eq.s32.totalorder %s20, 0
      %p94 = por %p92, %p93
      %s96 = sadd.s32 %s95, 1
      %p99 = scmp.eq.s32.totalorder %s14, 1
      %p100 = scmp.ne.s32.totalorder %s95, %s97
      %p101 = scmp.eq.s32.totalorder %s14, 0
      %p102 = por %p100, %p101
      %p103 = scmp.ne.s32.totalorder %s95, %s97
      %p104 = scmp.eq.s32.totalorder %s19, 1
      %p105 = por %p103, %p104
      %p106 = scmp.ne.s32.totalorder %s97, %s98
      %p107 = scmp.eq.s32.totalorder %s19, 0
      %p108 = por %p106, %p107
      %p109 = scmp.ne.s32.totalorder %s97, %s98
      %p110 = scmp.eq.s32.totalorder %s20, 1
      %p111 = por %p109, %p110
      %p113 = scmp.ne.s32.totalorder %s98, %s112
      %p114 = scmp.eq.s32.totalorder %s20, 0
      %p115 = por %p113, %p114
      %s117 = sadd.s32 %s116, 1
      %p120 = scmp.eq.s32.totalorder %s14, 1
      %p121 = scmp.ne.s32.totalorder %s116, %s118
      %p122 = scmp.eq.s32.totalorder %s14, 0
      %p123 = por %p121, %p122
      %p124 = scmp.ne.s32.totalorder %s116, %s118
      %p125 = scmp.eq.s32.totalorder %s19, 1
      %p126 = por %p124, %p125
      %p127 = scmp.ne.s32.totalorder %s118, %s119
      %p128 = scmp.eq.s32.totalorder %s19, 0
      %p129 = por %p127, %p128
      %p130 = scmp.ne.s32.totalorder %s118, %s119
      %p131 = scmp.eq.s32.totalorder %s20, 1
      %p132 = por %p130, %p131
      %p134 = scmp.ne.s32.totalorder %s119, %s133
      %p135 = scmp.eq.s32.totalorder %s20, 0
      %p136 = por %p134, %p135
      %s138 = sadd.s32 %s137, 1
      %p141 = scmp.eq.s32.totalorder %s14, 1
      %p142 = scmp.ne.s32.totalorder %s137, %s139
      %p143 = scmp.eq.s32.totalorder %s14, 0
      %p144 = por %p142, %p143
      %p145 = scmp.ne.s32.totalorder %s137, %s139
      %p146 = scmp.eq.s32.totalorder %s19, 1
      %p147 = por %p145, %p146
      %p148 = scmp.ne.s32.totalorder %s139, %s140
      %p149 = scmp.eq.s32.totalorder %s19, 0
      %p150 = por %p148, %p149
      %p151 = scmp.ne.s32.totalorder %s139, %s140
      %p152 = scmp.eq.s32.totalorder %s20, 1
      %p153 = por %p151, %p152
      %p155 = scmp.ne.s32.totalorder %s140, %s154
      %p156 = scmp.eq.s32.totalorder %s20, 0
      %p157 = por %p155, %p156
      %s159 = sadd.s32 %s158, 1
      %p162 = scmp.eq.s32.totalorder %s14, 1
      %p163 = scmp.ne.s32.totalorder %s158, %s160
      %p164 = scmp.eq.s32.totalorder %s14, 0
      %p165 = por %p163, %p164
      %p166 = scmp.ne.s32.totalorder %s158, %s160
      %p167 = scmp.eq.s32.totalorder %s19, 1
      %p168 = por %p166, %p167
      %p169 = scmp.ne.s32.totalorder %s160, %s161
      %p170 = scmp.eq.s32.totalorder %s19, 0
      %p171 = por %p169, %p170
      %p172 = scmp.ne.s32.totalorder %s160, %s161
      %p173 = scmp.eq.s32.totalorder %s20, 1
      %p174 = por %p172, %p173
      %p176 = scmp.ne.s32.totalorder %s161, %s175
      %p177 = scmp.eq.s32.totalorder %s20, 0
      %p178 = por %p176, %p177
      %s180 = sadd.s32 %s179, 1
      %p183 = scmp.eq.s32.totalorder %s14, 1
      %p184 = scmp.ne.s32.totalorder %s179, %s181
      %p185 = scmp.eq.s32.totalorder %s14, 0
      %p186 = por %p184, %p185
      %p187 = scmp.ne.s32.totalorder %s179, %s181
      %p188 = scmp.eq.s32.totalorder %s19, 1
      %p189 = por %p187, %p188
      %p190 = scmp.ne.s32.totalorder %s181, %s182
      %p191 = scmp.eq.s32.totalorder %s19, 0
      %p192 = por %p190, %p191
      %p193 = scmp.ne.s32.totalorder %s181, %s182
      %p194 = scmp.eq.s32.totalorder %s20, 1
      %p195 = por %p193, %p194
      %p197 = scmp.ne.s32.totalorder %s182, %s196
      %p198 = scmp.eq.s32.totalorder %s20, 0
      %p199 = por %p197, %p198
      %s200 = ssub.s32 %s14, %s21
      %p201 = scmp.eq.s32.totalorder %s200, 0
      %s203 = sadd.s32 %s202, 1
      %s204 = scalar_select %p201, %s202, %s203
      %p207 = pneg %p201
      %p208 = scmp.eq.s32.totalorder %s14, 1
      %p209 = por %p207, %p208
      %p210 = scmp.ne.s32.totalorder %s202, %s205
      %p211 = scmp.eq.s32.totalorder %s14, 0
      %p212 = por %p210, %p211
      %p213 = scmp.ne.s32.totalorder %s202, %s205
      %p214 = scmp.eq.s32.totalorder %s19, 1
      %p215 = por %p213, %p214
      %p216 = scmp.ne.s32.totalorder %s205, %s206
      %p217 = scmp.eq.s32.totalorder %s19, 0
      %p218 = por %p216, %p217
      %p219 = scmp.ne.s32.totalorder %s205, %s206
      %p220 = scmp.eq.s32.totalorder %s20, 1
      %p221 = por %p219, %p220
      %p223 = scmp.ne.s32.totalorder %s206, %s222
      %p224 = scmp.eq.s32.totalorder %s20, 0
      %p225 = por %p223, %p224
      %p226 = scmp.le.s32.totalorder 1, %s14
      %p227 = scmp.lt.s32.totalorder %s14, 3
      %p228 = pnand %p226, %p227
      %p229 = pneg %p228
      // Predicated region
      $region9: #{swin_model.8} parent=5 // pred_check
        _
      $region10: #{swin_model.8} parent=5 // pred_check_branch
        %231 = sbr.rel (%p228) target = $region12
      $region11: #{swin_model.8} parent=5 // pred_region
        %s232 = ssub.s32 %s14, 1
        // Predicated region
        $region13: #{swin_model.8} parent=11 // pred_check
          %p233 = pneg %p87
        $region14: #{swin_model.8} parent=11 // pred_check_branch
          %235 = sbr.rel (%p233) target = $region16
        $region15: #{swin_model.8} parent=11 // pred_region
          _
        $region16: #{swin_model.8} parent=11 // pred_fallthru
          _
        // Predicated region
        $region17: #{swin_model.8} parent=11 // pred_check
          %p236 = pneg %p108
        $region18: #{swin_model.8} parent=11 // pred_check_branch
          %238 = sbr.rel (%p236) target = $region20
        $region19: #{swin_model.8} parent=11 // pred_region
          _
        $region20: #{swin_model.8} parent=11 // pred_fallthru
          _
        // Predicated region
        $region21: #{swin_model.8} parent=11 // pred_check
          %p239 = pneg %p129
        $region22: #{swin_model.8} parent=11 // pred_check_branch
          %241 = sbr.rel (%p239) target = $region24
        $region23: #{swin_model.8} parent=11 // pred_region
          _
        $region24: #{swin_model.8} parent=11 // pred_fallthru
          _
        // Predicated region
        $region25: #{swin_model.8} parent=11 // pred_check
          %p242 = pneg %p150
        $region26: #{swin_model.8} parent=11 // pred_check_branch
          %244 = sbr.rel (%p242) target = $region28
        $region27: #{swin_model.8} parent=11 // pred_region
          _
        $region28: #{swin_model.8} parent=11 // pred_fallthru
          _
        // Predicated region
        $region29: #{swin_model.8} parent=11 // pred_check
          %p245 = pneg %p171
        $region30: #{swin_model.8} parent=11 // pred_check_branch
          %247 = sbr.rel (%p245) target = $region32
        $region31: #{swin_model.8} parent=11 // pred_region
          _
        $region32: #{swin_model.8} parent=11 // pred_fallthru
          _
        // Predicated region
        $region33: #{swin_model.8} parent=11 // pred_check
          %p248 = pneg %p192
        $region34: #{swin_model.8} parent=11 // pred_check_branch
          %250 = sbr.rel (%p248) target = $region36
        $region35: #{swin_model.8} parent=11 // pred_region
          _
        $region36: #{swin_model.8} parent=11 // pred_fallthru
          _
      $region12: #{swin_model.8} parent=5 // pred_fallthru
        _
      %p251 = scmp.lt.s32.totalorder %s14, 2
      // Predicated region
      $region37: #{swin_model.8} parent=5 // pred_check
        %p252 = pneg %p251
      $region38: #{swin_model.8} parent=5 // pred_check_branch
        %254 = sbr.rel (%p252) target = $region40
      $region39: #{swin_model.8} parent=5 // pred_region
        // Predicated region
        $region41: #{swin_model.8} parent=39 // pred_check
          %p255 = pneg %p34
        $region42: #{swin_model.8} parent=39 // pred_check_branch
          %257 = sbr.rel (%p255) target = $region44
        $region43: #{swin_model.8} parent=39 // pred_region
          %s258 = sand.u32 %s24, 1
          %s259 = sand.u32 %s24, 1
          %s260 = smul.addr %s259, 128
          %s261 = scalar_lea.vmem [#allocation2], %s260
          %s262 = smul.u32 2, %s14
          %s263 = smul.addr %s262, 8
          %s264 = scalar_lea.vmem %s0, %s263
          // Predicated region
          $region45: #{swin_model.8} parent=43 // pred_check
            _
          $region46: #{swin_model.8} parent=43 // pred_check_branch
            %266 = sbr.rel (0) target = $region48
          $region47: #{swin_model.8} parent=43 // pred_region
            // Predicated region
            $region49: #{swin_model.8} parent=47 // pred_check
              _
            $region50: #{swin_model.8} parent=47 // pred_check_branch
              %268 = sbr.rel (0) target = $region52
            $region51: #{swin_model.8} parent=47 // pred_region
              loop: start=0, step=1, limit=1
              $region53: #{swin_model.8} parent=51 // loop_pre_header
                _
              $region54: #{swin_model.8} parent=51 // loop_header
                %s270 = sphi 0, %s274
                %p271 = scmp.ge.s32.totalorder %s270, 1
                %s275 = sphi %s264, %s264
                %s276 = sphi %s261, %s261
              $region55: #{swin_model.8} parent=51 // loop_header_branch
                %273 = sbr.rel (%p271) target = $region59
              $region56: #{swin_model.8} parent=51 // loop_body
                %v277 = vld [vmem:[%s275] sm:$0xff]
                %278 = vst [vmem:[%s276] sm:$0xff] %v277
                %v279 = vld [vmem:[%s275 + $0x8] sm:$0xff]
                %280 = vst [vmem:[%s276 + $0x8] sm:$0xff] %v279
                %v281 = vld [vmem:[%s275 + $0x20] sm:$0xff]
                %282 = vst [vmem:[%s276 + $0x10] sm:$0xff] %v281
                %v283 = vld [vmem:[%s275 + $0x28] sm:$0xff]
                %284 = vst [vmem:[%s276 + $0x18] sm:$0xff] %v283
                %v285 = vld [vmem:[%s275 + $0x40] sm:$0xff]
                %286 = vst [vmem:[%s276 + $0x20] sm:$0xff] %v285
                %v287 = vld [vmem:[%s275 + $0x48] sm:$0xff]
                %288 = vst [vmem:[%s276 + $0x28] sm:$0xff] %v287
                %v289 = vld [vmem:[%s275 + $0x60] sm:$0xff]
                %290 = vst [vmem:[%s276 + $0x30] sm:$0xff] %v289
                %v291 = vld [vmem:[%s275 + $0x68] sm:$0xff]
                %292 = vst [vmem:[%s276 + $0x38] sm:$0xff] %v291
                %v293 = vld [vmem:[%s275 + $0x80] sm:$0xff]
                %294 = vst [vmem:[%s276 + $0x40] sm:$0xff] %v293
                %v295 = vld [vmem:[%s275 + $0x88] sm:$0xff]
                %296 = vst [vmem:[%s276 + $0x48] sm:$0xff] %v295
                %v297 = vld [vmem:[%s275 + $0xa0] sm:$0xff]
                %298 = vst [vmem:[%s276 + $0x50] sm:$0xff] %v297
                %v299 = vld [vmem:[%s275 + $0xa8] sm:$0xff]
                %300 = vst [vmem:[%s276 + $0x58] sm:$0xff] %v299
                %v301 = vld [vmem:[%s275 + $0xc0] sm:$0xff]
                %302 = vst [vmem:[%s276 + $0x60] sm:$0xff] %v301
                %v303 = vld [vmem:[%s275 + $0xc8] sm:$0xff]
                %304 = vst [vmem:[%s276 + $0x68] sm:$0xff] %v303
                %v305 = vld [vmem:[%s275 + $0xe0] sm:$0xff]
                %306 = vst [vmem:[%s276 + $0x70] sm:$0xff] %v305
                %v307 = vld [vmem:[%s275 + $0xe8] sm:$0xff]
                %308 = vst [vmem:[%s276 + $0x78] sm:$0xff] %v307
              $region57: #{swin_model.8} parent=51 // loop_footer
                %s274 = sadd.s32 1, %s270
              $region58: #{swin_model.8} parent=51 // loop_footer_branch
                %269 = sbr.rel target = $region54
              $region59: #{swin_model.8} parent=51 // loop_exit
                _
            $region52: #{swin_model.8} parent=47 // pred_fallthru
              _
            // Predicated region
            $region60: #{swin_model.8} parent=47 // pred_check
              _
            $region61: #{swin_model.8} parent=47 // pred_check_branch
              %310 = sbr.rel target = $region63
            $region62: #{swin_model.8} parent=47 // pred_region
              _
            $region63: #{swin_model.8} parent=47 // pred_fallthru
              _
          $region48: #{swin_model.8} parent=43 // pred_fallthru
            _
          %311 = vnop
        $region44: #{swin_model.8} parent=39 // pred_fallthru
          _
        // Predicated region
        $region64: #{swin_model.8} parent=39 // pred_check
          %p312 = pneg %p60
        $region65: #{swin_model.8} parent=39 // pred_check_branch
          %314 = sbr.rel (%p312) target = $region67
        $region66: #{swin_model.8} parent=39 // pred_region
          %s315 = sand.u32 %s50, 1
          %s316 = sand.u32 %s50, 1
          %s317 = smul.addr %s316, 128
          %s318 = scalar_lea.vmem [#allocation3], %s317
          %s319 = smul.u32 2, %s14
          %s320 = smul.addr %s319, 8
          %s321 = scalar_lea.vmem %s1, %s320
          // Predicated region
          $region68: #{swin_model.8} parent=66 // pred_check
            _
          $region69: #{swin_model.8} parent=66 // pred_check_branch
            %323 = sbr.rel (0) target = $region71
          $region70: #{swin_model.8} parent=66 // pred_region
            // Predicated region
            $region72: #{swin_model.8} parent=70 // pred_check
              _
            $region73: #{swin_model.8} parent=70 // pred_check_branch
              %325 = sbr.rel (0) target = $region75
            $region74: #{swin_model.8} parent=70 // pred_region
              loop: start=0, step=1, limit=1
              $region76: #{swin_model.8} parent=74 // loop_pre_header
                _
              $region77: #{swin_model.8} parent=74 // loop_header
                %s327 = sphi 0, %s331
                %p328 = scmp.ge.s32.totalorder %s327, 1
                %s332 = sphi %s321, %s321
                %s333 = sphi %s318, %s318
              $region78: #{swin_model.8} parent=74 // loop_header_branch
                %330 = sbr.rel (%p328) target = $region82
              $region79: #{swin_model.8} parent=74 // loop_body
                %v334 = vld [vmem:[%s332] sm:$0xff]
                %335 = vst [vmem:[%s333] sm:$0xff] %v334
                %v336 = vld [vmem:[%s332 + $0x8] sm:$0xff]
                %337 = vst [vmem:[%s333 + $0x8] sm:$0xff] %v336
                %v338 = vld [vmem:[%s332 + $0x20] sm:$0xff]
                %339 = vst [vmem:[%s333 + $0x10] sm:$0xff] %v338
                %v340 = vld [vmem:[%s332 + $0x28] sm:$0xff]
                %341 = vst [vmem:[%s333 + $0x18] sm:$0xff] %v340
                %v342 = vld [vmem:[%s332 + $0x40] sm:$0xff]
                %343 = vst [vmem:[%s333 + $0x20] sm:$0xff] %v342
                %v344 = vld [vmem:[%s332 + $0x48] sm:$0xff]
                %345 = vst [vmem:[%s333 + $0x28] sm:$0xff] %v344
                %v346 = vld [vmem:[%s332 + $0x60] sm:$0xff]
                %347 = vst [vmem:[%s333 + $0x30] sm:$0xff] %v346
                %v348 = vld [vmem:[%s332 + $0x68] sm:$0xff]
                %349 = vst [vmem:[%s333 + $0x38] sm:$0xff] %v348
                %v350 = vld [vmem:[%s332 + $0x80] sm:$0xff]
                %351 = vst [vmem:[%s333 + $0x40] sm:$0xff] %v350
                %v352 = vld [vmem:[%s332 + $0x88] sm:$0xff]
                %353 = vst [vmem:[%s333 + $0x48] sm:$0xff] %v352
                %v354 = vld [vmem:[%s332 + $0xa0] sm:$0xff]
                %355 = vst [vmem:[%s333 + $0x50] sm:$0xff] %v354
                %v356 = vld [vmem:[%s332 + $0xa8] sm:$0xff]
                %357 = vst [vmem:[%s333 + $0x58] sm:$0xff] %v356
                %v358 = vld [vmem:[%s332 + $0xc0] sm:$0xff]
                %359 = vst [vmem:[%s333 + $0x60] sm:$0xff] %v358
                %v360 = vld [vmem:[%s332 + $0xc8] sm:$0xff]
                %361 = vst [vmem:[%s333 + $0x68] sm:$0xff] %v360
                %v362 = vld [vmem:[%s332 + $0xe0] sm:$0xff]
                %363 = vst [vmem:[%s333 + $0x70] sm:$0xff] %v362
                %v364 = vld [vmem:[%s332 + $0xe8] sm:$0xff]
                %365 = vst [vmem:[%s333 + $0x78] sm:$0xff] %v364
              $region80: #{swin_model.8} parent=74 // loop_footer
                %s331 = sadd.s32 1, %s327
              $region81: #{swin_model.8} parent=74 // loop_footer_branch
                %326 = sbr.rel target = $region77
              $region82: #{swin_model.8} parent=74 // loop_exit
                _
            $region75: #{swin_model.8} parent=70 // pred_fallthru
              _
            // Predicated region
            $region83: #{swin_model.8} parent=70 // pred_check
              _
            $region84: #{swin_model.8} parent=70 // pred_check_branch
              %367 = sbr.rel target = $region86
            $region85: #{swin_model.8} parent=70 // pred_region
              _
            $region86: #{swin_model.8} parent=70 // pred_fallthru
              _
          $region71: #{swin_model.8} parent=66 // pred_fallthru
            _
          %368 = vnop
        $region67: #{swin_model.8} parent=39 // pred_fallthru
          _
      $region40: #{swin_model.8} parent=5 // pred_fallthru
        _
      %p369 = scmp.le.s32.totalorder 1, %s14
      %p370 = scmp.lt.s32.totalorder %s14, 3
      %p371 = pnand %p369, %p370
      %p372 = pneg %p371
      // Predicated region
      $region87: #{swin_model.8} parent=5 // pred_check
        _
      $region88: #{swin_model.8} parent=5 // pred_check_branch
        %374 = sbr.rel (%p371) target = $region90
      $region89: #{swin_model.8} parent=5 // pred_region
        %s375 = ssub.s32 %s14, 1
        %s376 = sand.u32 %s27, 1
        %s377 = sand.u32 %s27, 1
        %s378 = smul.addr %s377, 128
        %s379 = scalar_lea.vmem [#allocation2], %s378
        // Predicated region
        $region91: #{swin_model.8} parent=89 // pred_check
          %p380 = pneg %p40
        $region92: #{swin_model.8} parent=89 // pred_check_branch
          %382 = sbr.rel (%p380) target = $region94
        $region93: #{swin_model.8} parent=89 // pred_region
          _
        $region94: #{swin_model.8} parent=89 // pred_fallthru
          _
        %s383 = sand.u32 %s53, 1
        %s384 = sand.u32 %s53, 1
        %s385 = smul.addr %s384, 128
        %s386 = scalar_lea.vmem [#allocation3], %s385
        // Predicated region
        $region95: #{swin_model.8} parent=89 // pred_check
          %p387 = pneg %p66
        $region96: #{swin_model.8} parent=89 // pred_check_branch
          %389 = sbr.rel (%p387) target = $region98
        $region97: #{swin_model.8} parent=89 // pred_region
          _
        $region98: #{swin_model.8} parent=89 // pred_fallthru
          _
        %s390 = sand.u32 %s27, 1
        %s391 = sand.u32 %s27, 1
        %s392 = smul.addr %s391, 128
        %s393 = scalar_lea.vmem [#allocation2], %s392
        %p394 = pneg %p40
        %p395 = pneg %p37
        %s396 = sand.u32 %s53, 1
        %s397 = sand.u32 %s53, 1
        %s398 = smul.addr %s397, 128
        %s399 = scalar_lea.vmem [#allocation3], %s398
        %p400 = pneg %p66
        %p401 = pneg %p63
        %p402 = pneg %p87
        %p403 = pneg %p84
        %p404 = pneg %p108
        %p405 = pneg %p105
        %p406 = pneg %p129
        %p407 = pneg %p126
        %p408 = pneg %p150
        %p409 = pneg %p147
        %p410 = pneg %p171
        %p411 = pneg %p168
        %p412 = pneg %p192
        %p413 = pneg %p189
        %p414 = pneg %p218
        %p415 = pneg %p215
        %s416 = sand.u32 %s205, 1
        %s417 = sand.u32 %s205, 1
        %s418 = smul.addr %s417, 128
        %s419 = scalar_lea.vmem [#allocation4], %s418
        %s420 = smul.u32 2, %s19
        %s421 = smul.u32 2, %s19
        %s422 = smul.u32 2, %s19
        %v423 = vld [vmem:[%s379] sm:$0xff]
        %v424 = vld [vmem:[%s379 + $0x8] sm:$0xff]
        %v425 = vld [vmem:[%s379 + $0x10] sm:$0xff]
        %v426 = vld [vmem:[%s379 + $0x18] sm:$0xff]
        %v427 = vld [vmem:[%s379 + $0x20] sm:$0xff]
        %v428 = vld [vmem:[%s379 + $0x28] sm:$0xff]
        %v429 = vld [vmem:[%s379 + $0x30] sm:$0xff]
        %v430 = vld [vmem:[%s379 + $0x38] sm:$0xff]
        %v431 = vld [vmem:[%s379 + $0x40] sm:$0xff]
        %v432 = vld [vmem:[%s379 + $0x48] sm:$0xff]
        %v433 = vld [vmem:[%s379 + $0x50] sm:$0xff]
        %v434 = vld [vmem:[%s379 + $0x58] sm:$0xff]
        %v435 = vld [vmem:[%s379 + $0x60] sm:$0xff]
        %v436 = vld [vmem:[%s379 + $0x68] sm:$0xff]
        %v437 = vld [vmem:[%s379 + $0x70] sm:$0xff]
        %v438 = vld [vmem:[%s379 + $0x78] sm:$0xff]
        %v439 = vld [vmem:[%s386] sm:$0xff]
        %v440 = vld [vmem:[%s386 + $0x8] sm:$0xff]
        %v441 = vld [vmem:[%s386 + $0x10] sm:$0xff]
        %v442 = vld [vmem:[%s386 + $0x18] sm:$0xff]
        %v443 = vld [vmem:[%s386 + $0x20] sm:$0xff]
        %v444 = vld [vmem:[%s386 + $0x28] sm:$0xff]
        %v445 = vld [vmem:[%s386 + $0x30] sm:$0xff]
        %v446 = vld [vmem:[%s386 + $0x38] sm:$0xff]
        %v447 = vld [vmem:[%s386 + $0x40] sm:$0xff]
        %v448 = vld [vmem:[%s386 + $0x48] sm:$0xff]
        %v449 = vld [vmem:[%s386 + $0x50] sm:$0xff]
        %v450 = vld [vmem:[%s386 + $0x58] sm:$0xff]
        %v451 = vld [vmem:[%s386 + $0x60] sm:$0xff]
        %v452 = vld [vmem:[%s386 + $0x68] sm:$0xff]
        %v453 = vld [vmem:[%s386 + $0x70] sm:$0xff]
        %v454 = vld [vmem:[%s386 + $0x78] sm:$0xff]
        %v455 = vadd.f32 %v423, %v439
        %v456 = vadd.f32 %v424, %v440
        %v457 = vadd.f32 %v425, %v441
        %v458 = vadd.f32 %v426, %v442
        %v459 = vadd.f32 %v427, %v443
        %v460 = vadd.f32 %v428, %v444
        %v461 = vadd.f32 %v429, %v445
        %v462 = vadd.f32 %v430, %v446
        %v463 = vadd.f32 %v431, %v447
        %v464 = vadd.f32 %v432, %v448
        %v465 = vadd.f32 %v433, %v449
        %v466 = vadd.f32 %v434, %v450
        %v467 = vadd.f32 %v435, %v451
        %v468 = vadd.f32 %v436, %v452
        %v469 = vadd.f32 %v437, %v453
        %v470 = vadd.f32 %v438, %v454
        %v471 = vadd.f32 %v455, %v457
        %v472 = vadd.f32 %v471, %v459
        %v473 = vadd.f32 %v472, %v461
        %v474 = vadd.f32 %v473, %v463
        %v475 = vadd.f32 %v474, %v465
        %v476 = vadd.f32 %v475, %v467
        %v477 = vadd.f32 %v476, %v469
        %v478 = vrot.slane %v477, 4
        %v479 = vadd.f32 %v477, %v478
        %v480 = vrot.slane %v479, 2
        %v481 = vadd.f32 %v479, %v480
        %v482 = vrot.slane %v481, 1
        %v483 = vadd.f32 %v481, %v482
        %v484 = vadd.f32 %v456, %v458
        %v485 = vadd.f32 %v484, %v460
        %v486 = vadd.f32 %v485, %v462
        %v487 = vadd.f32 %v486, %v464
        %v488 = vadd.f32 %v487, %v466
        %v489 = vadd.f32 %v488, %v468
        %v490 = vadd.f32 %v489, %v470
        %v491 = vrot.slane %v490, 4
        %v492 = vadd.f32 %v490, %v491
        %v493 = vrot.slane %v492, 2
        %v494 = vadd.f32 %v492, %v493
        %v495 = vrot.slane %v494, 1
        %v496 = vadd.f32 %v494, %v495
        %v497 = vrcp.pop 64.0
        %v498 = vmul.f32 %v483, %v497
        %v499 = vmul.f32 %v496, %v497
        %v500 = vsub.f32 %v455, %v498
        %v501 = vsub.f32 %v456, %v499
        %v502 = vsub.f32 %v457, %v498
        %v503 = vsub.f32 %v458, %v499
        %v504 = vsub.f32 %v459, %v498
        %v505 = vsub.f32 %v460, %v499
        %v506 = vsub.f32 %v461, %v498
        %v507 = vsub.f32 %v462, %v499
        %v508 = vsub.f32 %v463, %v498
        %v509 = vsub.f32 %v464, %v499
        %v510 = vsub.f32 %v465, %v498
        %v511 = vsub.f32 %v466, %v499
        %v512 = vsub.f32 %v467, %v498
        %v513 = vsub.f32 %v468, %v499
        %v514 = vsub.f32 %v469, %v498
        %v515 = vsub.f32 %v470, %v499
        %v516 = vmul.f32 %v500, %v500
        %v517 = vmul.f32 %v501, %v501
        %v518 = vmul.f32 %v502, %v502
        %v519 = vmul.f32 %v503, %v503
        %v520 = vmul.f32 %v504, %v504
        %v521 = vmul.f32 %v505, %v505
        %v522 = vmul.f32 %v506, %v506
        %v523 = vmul.f32 %v507, %v507
        %v524 = vmul.f32 %v508, %v508
        %v525 = vmul.f32 %v509, %v509
        %v526 = vmul.f32 %v510, %v510
        %v527 = vmul.f32 %v511, %v511
        %v528 = vmul.f32 %v512, %v512
        %v529 = vmul.f32 %v513, %v513
        %v530 = vmul.f32 %v514, %v514
        %v531 = vmul.f32 %v515, %v515
        %v532 = vadd.f32 %v516, %v518
        %v533 = vadd.f32 %v532, %v520
        %v534 = vadd.f32 %v533, %v522
        %v535 = vadd.f32 %v534, %v524
        %v536 = vadd.f32 %v535, %v526
        %v537 = vadd.f32 %v536, %v528
        %v538 = vadd.f32 %v537, %v530
        %v539 = vrot.slane %v538, 4
        %v540 = vadd.f32 %v538, %v539
        %v541 = vrot.slane %v540, 2
        %v542 = vadd.f32 %v540, %v541
        %v543 = vrot.slane %v542, 1
        %v544 = vadd.f32 %v542, %v543
        %v545 = vadd.f32 %v517, %v519
        %v546 = vadd.f32 %v545, %v521
        %v547 = vadd.f32 %v546, %v523
        %v548 = vadd.f32 %v547, %v525
        %v549 = vadd.f32 %v548, %v527
        %v550 = vadd.f32 %v549, %v529
        %v551 = vadd.f32 %v550, %v531
        %v552 = vrot.slane %v551, 4
        %v553 = vadd.f32 %v551, %v552
        %v554 = vrot.slane %v553, 2
        %v555 = vadd.f32 %v553, %v554
        %v556 = vrot.slane %v555, 1
        %v557 = vadd.f32 %v555, %v556
        %v558 = vmul.f32 %v544, %v497
        %v559 = vmul.f32 %v557, %v497
        %v560 = vadd.f32 %v558, 1e-05
        %v561 = vadd.f32 %v559, 1e-05
        %v562 = vrsqrt.pop %v560
        %v563 = vrsqrt.pop %v561
        %v564 = vmul.f32 %v500, %v562
        %v565 = vmul.f32 %v501, %v563
        %v566 = vmul.f32 %v502, %v562
        %v567 = vmul.f32 %v503, %v563
        %v568 = vmul.f32 %v504, %v562
        %v569 = vmul.f32 %v505, %v563
        %v570 = vmul.f32 %v506, %v562
        %v571 = vmul.f32 %v507, %v563
        %v572 = vmul.f32 %v508, %v562
        %v573 = vmul.f32 %v509, %v563
        %v574 = vmul.f32 %v510, %v562
        %v575 = vmul.f32 %v511, %v563
        %v576 = vmul.f32 %v512, %v562
        %v577 = vmul.f32 %v513, %v563
        %v578 = vmul.f32 %v514, %v562
        %v579 = vmul.f32 %v515, %v563
        %v580 = vld [vmem:[%s2] sm:$0xff]
        %v581 = vld [vmem:[%s2 + $0x8] sm:$0xff]
        %v582 = vld [vmem:[%s2 + $0x10] sm:$0xff]
        %v583 = vld [vmem:[%s2 + $0x18] sm:$0xff]
        %v584 = vld [vmem:[%s2 + $0x20] sm:$0xff]
        %v585 = vld [vmem:[%s2 + $0x28] sm:$0xff]
        %v586 = vld [vmem:[%s2 + $0x30] sm:$0xff]
        %v587 = vld [vmem:[%s2 + $0x38] sm:$0xff]
        %589 = vset.pattern.permute.xlu0 0
        %590 = vperm.xlu0 %589, %v580
        %v591 = vpop.permute.xlu0 %590
        %594 = vset.pattern.permute.xlu0 0
        %595 = vperm.xlu0 %594, %v581
        %v596 = vpop.permute.xlu0 %595
        %599 = vset.pattern.permute.xlu0 0
        %600 = vperm.xlu0 %599, %v582
        %v601 = vpop.permute.xlu0 %600
        %604 = vset.pattern.permute.xlu0 0
        %605 = vperm.xlu0 %604, %v583
        %v606 = vpop.permute.xlu0 %605
        %609 = vset.pattern.permute.xlu0 0
        %610 = vperm.xlu0 %609, %v584
        %v611 = vpop.permute.xlu0 %610
        %614 = vset.pattern.permute.xlu0 0
        %615 = vperm.xlu0 %614, %v585
        %v616 = vpop.permute.xlu0 %615
        %619 = vset.pattern.permute.xlu0 0
        %620 = vperm.xlu0 %619, %v586
        %v621 = vpop.permute.xlu0 %620
        %624 = vset.pattern.permute.xlu0 0
        %625 = vperm.xlu0 %624, %v587
        %v626 = vpop.permute.xlu0 %625
        %v628 = vmul.f32 %v564, %v591
        %v629 = vmul.f32 %v565, %v591
        %v630 = vmul.f32 %v566, %v596
        %v631 = vmul.f32 %v567, %v596
        %v632 = vmul.f32 %v568, %v601
        %v633 = vmul.f32 %v569, %v601
        %v634 = vmul.f32 %v570, %v606
        %v635 = vmul.f32 %v571, %v606
        %v636 = vmul.f32 %v572, %v611
        %v637 = vmul.f32 %v573, %v611
        %v638 = vmul.f32 %v574, %v616
        %v639 = vmul.f32 %v575, %v616
        %v640 = vmul.f32 %v576, %v621
        %v641 = vmul.f32 %v577, %v621
        %v642 = vmul.f32 %v578, %v626
        %v643 = vmul.f32 %v579, %v626
        %v644 = vld [vmem:[%s3] sm:$0xff]
        %v645 = vld [vmem:[%s3 + $0x8] sm:$0xff]
        %v646 = vld [vmem:[%s3 + $0x10] sm:$0xff]
        %v647 = vld [vmem:[%s3 + $0x18] sm:$0xff]
        %v648 = vld [vmem:[%s3 + $0x20] sm:$0xff]
        %v649 = vld [vmem:[%s3 + $0x28] sm:$0xff]
        %v650 = vld [vmem:[%s3 + $0x30] sm:$0xff]
        %v651 = vld [vmem:[%s3 + $0x38] sm:$0xff]
        %653 = vset.pattern.permute.xlu0 0
        %654 = vperm.xlu0 %653, %v644
        %v655 = vpop.permute.xlu0 %654
        %658 = vset.pattern.permute.xlu0 0
        %659 = vperm.xlu0 %658, %v645
        %v660 = vpop.permute.xlu0 %659
        %663 = vset.pattern.permute.xlu0 0
        %664 = vperm.xlu0 %663, %v646
        %v665 = vpop.permute.xlu0 %664
        %668 = vset.pattern.permute.xlu0 0
        %669 = vperm.xlu0 %668, %v647
        %v670 = vpop.permute.xlu0 %669
        %673 = vset.pattern.permute.xlu0 0
        %674 = vperm.xlu0 %673, %v648
        %v675 = vpop.permute.xlu0 %674
        %678 = vset.pattern.permute.xlu0 0
        %679 = vperm.xlu0 %678, %v649
        %v680 = vpop.permute.xlu0 %679
        %683 = vset.pattern.permute.xlu0 0
        %684 = vperm.xlu0 %683, %v650
        %v685 = vpop.permute.xlu0 %684
        %688 = vset.pattern.permute.xlu0 0
        %689 = vperm.xlu0 %688, %v651
        %v690 = vpop.permute.xlu0 %689
        %v692 = vadd.f32 %v628, %v655
        %v693 = vadd.f32 %v629, %v655
        %v694 = vadd.f32 %v630, %v660
        %v695 = vadd.f32 %v631, %v660
        %v696 = vadd.f32 %v632, %v665
        %v697 = vadd.f32 %v633, %v665
        %v698 = vadd.f32 %v634, %v670
        %v699 = vadd.f32 %v635, %v670
        %v700 = vadd.f32 %v636, %v675
        %v701 = vadd.f32 %v637, %v675
        %v702 = vadd.f32 %v638, %v680
        %v703 = vadd.f32 %v639, %v680
        %v704 = vadd.f32 %v640, %v685
        %v705 = vadd.f32 %v641, %v685
        %v706 = vadd.f32 %v642, %v690
        %v707 = vadd.f32 %v643, %v690
        %v708 = vld [vmem:[%s4] sm:$0xff]
        %v709 = vld [vmem:[%s4 + $0x8] sm:$0xff]
        %v710 = vld [vmem:[%s4 + $0x10] sm:$0xff]
        %v711 = vld [vmem:[%s4 + $0x18] sm:$0xff]
        %v712 = vld [vmem:[%s4 + $0x20] sm:$0xff]
        %v713 = vld [vmem:[%s4 + $0x28] sm:$0xff]
        %v714 = vld [vmem:[%s4 + $0x30] sm:$0xff]
        %v715 = vld [vmem:[%s4 + $0x38] sm:$0xff]
        %v716 = vld [vmem:[%s4 + $0x40] sm:$0xff]
        %v717 = vld [vmem:[%s4 + $0x48] sm:$0xff]
        %v718 = vld [vmem:[%s4 + $0x50] sm:$0xff]
        %v719 = vld [vmem:[%s4 + $0x58] sm:$0xff]
        %v720 = vld [vmem:[%s4 + $0x60] sm:$0xff]
        %v721 = vld [vmem:[%s4 + $0x68] sm:$0xff]
        %v722 = vld [vmem:[%s4 + $0x70] sm:$0xff]
        %v723 = vld [vmem:[%s4 + $0x78] sm:$0xff]
        %v724 = vld [vmem:[%s5] sm:$0xff]
        %v725 = vld [vmem:[%s5 + $0x8] sm:$0xff]
        %v726 = vld [vmem:[%s5 + $0x10] sm:$0xff]
        %v727 = vld [vmem:[%s5 + $0x18] sm:$0xff]
        %v728 = vld [vmem:[%s5 + $0x20] sm:$0xff]
        %v729 = vld [vmem:[%s5 + $0x28] sm:$0xff]
        %v730 = vld [vmem:[%s5 + $0x30] sm:$0xff]
        %v731 = vld [vmem:[%s5 + $0x38] sm:$0xff]
        %v732 = vld [vmem:[%s5 + $0x40] sm:$0xff]
        %v733 = vld [vmem:[%s5 + $0x48] sm:$0xff]
        %v734 = vld [vmem:[%s5 + $0x50] sm:$0xff]
        %v735 = vld [vmem:[%s5 + $0x58] sm:$0xff]
        %v736 = vld [vmem:[%s5 + $0x60] sm:$0xff]
        %v737 = vld [vmem:[%s5 + $0x68] sm:$0xff]
        %v738 = vld [vmem:[%s5 + $0x70] sm:$0xff]
        %v739 = vld [vmem:[%s5 + $0x78] sm:$0xff]
        %741 = vset.pattern.permute.xlu0 0
        %742 = vperm.xlu0 %741, %v724
        %v743 = vpop.permute.xlu0 %742
        %746 = vset.pattern.permute.xlu0 0
        %747 = vperm.xlu0 %746, %v725
        %v748 = vpop.permute.xlu0 %747
        %751 = vset.pattern.permute.xlu0 0
        %752 = vperm.xlu0 %751, %v726
        %v753 = vpop.permute.xlu0 %752
        %756 = vset.pattern.permute.xlu0 0
        %757 = vperm.xlu0 %756, %v727
        %v758 = vpop.permute.xlu0 %757
        %761 = vset.pattern.permute.xlu0 0
        %762 = vperm.xlu0 %761, %v728
        %v763 = vpop.permute.xlu0 %762
        %766 = vset.pattern.permute.xlu0 0
        %767 = vperm.xlu0 %766, %v729
        %v768 = vpop.permute.xlu0 %767
        %771 = vset.pattern.permute.xlu0 0
        %772 = vperm.xlu0 %771, %v730
        %v773 = vpop.permute.xlu0 %772
        %776 = vset.pattern.permute.xlu0 0
        %777 = vperm.xlu0 %776, %v731
        %v778 = vpop.permute.xlu0 %777
        %781 = vset.pattern.permute.xlu0 0
        %782 = vperm.xlu0 %781, %v732
        %v783 = vpop.permute.xlu0 %782
        %786 = vset.pattern.permute.xlu0 0
        %787 = vperm.xlu0 %786, %v733
        %v788 = vpop.permute.xlu0 %787
        %791 = vset.pattern.permute.xlu0 0
        %792 = vperm.xlu0 %791, %v734
        %v793 = vpop.permute.xlu0 %792
        %796 = vset.pattern.permute.xlu0 0
        %797 = vperm.xlu0 %796, %v735
        %v798 = vpop.permute.xlu0 %797
        %801 = vset.pattern.permute.xlu0 0
        %802 = vperm.xlu0 %801, %v736
        %v803 = vpop.permute.xlu0 %802
        %806 = vset.pattern.permute.xlu0 0
        %807 = vperm.xlu0 %806, %v737
        %v808 = vpop.permute.xlu0 %807
        %811 = vset.pattern.permute.xlu0 0
        %812 = vperm.xlu0 %811, %v738
        %v813 = vpop.permute.xlu0 %812
        %816 = vset.pattern.permute.xlu0 0
        %817 = vperm.xlu0 %816, %v739
        %v818 = vpop.permute.xlu0 %817
        %vm820 = vcmask 523264
        %v822 = vsel %vm820, %v708, 0
        %v825 = vsel %vm820, %v709, 0
        %v828 = vsel %vm820, %v710, 0
        %v831 = vsel %vm820, %v711, 0
        %v834 = vsel %vm820, %v712, 0
        %v837 = vsel %vm820, %v713, 0
        %v840 = vsel %vm820, %v714, 0
        %v843 = vsel %vm820, %v715, 0
        %v846 = vsel %vm820, %v716, 0
        %v849 = vsel %vm820, %v717, 0
        %v852 = vsel %vm820, %v718, 0
        %v855 = vsel %vm820, %v719, 0
        %v858 = vsel %vm820, %v720, 0
        %v861 = vsel %vm820, %v721, 0
        %v864 = vsel %vm820, %v722, 0
        %v867 = vsel %vm820, %v723, 0
        %869 = vmatprep.subr.mxu0 %v693
        %870 = vmatpush1.msra.mxu0 %v692
        %871 = vmatprep.subr.mxu0 %v695
        %872 = vmatpush1.msra.mxu0 %v694
        %873 = vmatprep.subr.mxu0 %v697
        %874 = vmatpush1.msra.mxu0 %v696
        %875 = vmatprep.subr.mxu0 %v699
        %876 = vmatpush1.msra.mxu0 %v698
        %877 = vmatprep.subr.mxu0 %v701
        %878 = vmatpush1.msra.mxu0 %v700
        %879 = vmatprep.subr.mxu0 %v703
        %880 = vmatpush1.msra.mxu0 %v702
        %881 = vmatprep.subr.mxu0 %v705
        %882 = vmatpush1.msra.mxu0 %v704
        %883 = vmatprep.subr.mxu0 %v707
        %884 = vmatpush1.msra.mxu0 %v706
        %885 = vmatprep.subr.mxu0 0.0
        %886 = vmatpush1.msra.mxu0 0.0
        %887 = vmatprep.subr.mxu0 0.0
        %888 = vmatpush1.msra.mxu0 0.0
        %889 = vmatprep.subr.mxu0 0.0
        %890 = vmatpush1.msra.mxu0 0.0
        %891 = vmatprep.subr.mxu0 0.0
        %892 = vmatpush1.msra.mxu0 0.0
        %893 = vmatprep.subr.mxu0 0.0
        %894 = vmatpush1.msra.mxu0 0.0
        %895 = vmatprep.subr.mxu0 0.0
        %896 = vmatpush1.msra.mxu0 0.0
        %897 = vmatprep.subr.mxu0 0.0
        %898 = vmatpush1.msra.mxu0 0.0
        %899 = vmatprep.subr.mxu0 0.0
        %900 = vmatpush1.msra.mxu0 0.0
        %901 = vmatprep.subr.mxu0 0.0
        %902 = vmatpush1.msra.mxu0 0.0
        %903 = vmatprep.subr.mxu0 0.0
        %904 = vmatpush1.msra.mxu0 0.0
        %905 = vmatprep.subr.mxu0 0.0
        %906 = vmatpush1.msra.mxu0 0.0
        %907 = vmatprep.subr.mxu0 0.0
        %908 = vmatpush1.msra.mxu0 0.0
        %909 = vmatprep.subr.mxu0 0.0
        %910 = vmatpush1.msra.mxu0 0.0
        %911 = vmatprep.subr.mxu0 0.0
        %912 = vmatpush1.msra.mxu0 0.0
        %913 = vmatprep.subr.mxu0 0.0
        %914 = vmatpush1.msra.mxu0 0.0
        %915 = vmatprep.subr.mxu0 0.0
        %916 = vmatpush1.msra.mxu0 0.0
        %917 = vmatprep.subr.mxu0 0.0
        %918 = vmatpush1.msra.mxu0 0.0
        %919 = vmatprep.subr.mxu0 0.0
        %920 = vmatpush1.msra.mxu0 0.0
        %921 = vmatprep.subr.mxu0 0.0
        %922 = vmatpush1.msra.mxu0 0.0
        %923 = vmatprep.subr.mxu0 0.0
        %924 = vmatpush1.msra.mxu0 0.0
        %925 = vmatprep.subr.mxu0 0.0
        %926 = vmatpush1.msra.mxu0 0.0
        %927 = vmatprep.subr.mxu0 0.0
        %928 = vmatpush1.msra.mxu0 0.0
        %929 = vmatprep.subr.mxu0 0.0
        %930 = vmatpush1.msra.mxu0 0.0
        %931 = vmatprep.subr.mxu0 0.0
        %932 = vmatpush1.msra.mxu0 0.0
        %933 = vmatprep.mubr.f32.mxu0 0.0
        %934 = vmatmul.mubr.f32.gmra.mrb[0].mxu0 %v822
        %v935 = vpop.f32.mrb[0].mxu0
        %v936 = vadd.f32 %v743, %v935
        %v937 = vpop.f32.mrb[0].mxu0
        %v938 = vadd.f32 %v743, %v937
        %939 = vmatprep.mubr.f32.mxu0 0.0
        %940 = vmatmul.mubr.f32.gmra.mrb[0].mxu0 %v825
        %v941 = vpop.f32.mrb[0].mxu0
        %v942 = vadd.f32 %v748, %v941
        %v943 = vpop.f32.mrb[0].mxu0
        %v944 = vadd.f32 %v748, %v943
        %945 = vmatprep.mubr.f32.mxu0 0.0
        %946 = vmatmul.mubr.f32.gmra.mrb[0].mxu0 %v828
        %v947 = vpop.f32.mrb[0].mxu0
        %v948 = vadd.f32 %v753, %v947
        %v949 = vpop.f32.mrb[0].mxu0
        %v950 = vadd.f32 %v753, %v949
        %951 = vmatprep.mubr.f32.mxu0 0.0
        %952 = vmatmul.mubr.f32.gmra.mrb[0].mxu0 %v831
        %v953 = vpop.f32.mrb[0].mxu0
        %v954 = vadd.f32 %v758, %v953
        %v955 = vpop.f32.mrb[0].mxu0
        %v956 = vadd.f32 %v758, %v955
        %957 = vmatprep.mubr.f32.mxu0 0.0
        %958 = vmatmul.mubr.f32.gmra.mrb[0].mxu0 %v834
        %v959 = vpop.f32.mrb[0].mxu0
        %v960 = vadd.f32 %v763, %v959
        %v961 = vpop.f32.mrb[0].mxu0
        %v962 = vadd.f32 %v763, %v961
        %963 = vmatprep.mubr.f32.mxu0 0.0
        %964 = vmatmul.mubr.f32.gmra.mrb[0].mxu0 %v837
        %v965 = vpop.f32.mrb[0].mxu0
        %v966 = vadd.f32 %v768, %v965
        %v967 = vpop.f32.mrb[0].mxu0
        %v968 = vadd.f32 %v768, %v967
        %969 = vmatprep.mubr.f32.mxu0 0.0
        %970 = vmatmul.mubr.f32.gmra.mrb[0].mxu0 %v840
        %v971 = vpop.f32.mrb[0].mxu0
        %v972 = vadd.f32 %v773, %v971
        %v973 = vpop.f32.mrb[0].mxu0
        %v974 = vadd.f32 %v773, %v973
        %975 = vmatprep.mubr.f32.mxu0 0.0
        %976 = vmatmul.mubr.f32.gmra.mrb[0].mxu0 %v843
        %v977 = vpop.f32.mrb[0].mxu0
        %v978 = vadd.f32 %v778, %v977
        %v979 = vpop.f32.mrb[0].mxu0
        %v980 = vadd.f32 %v778, %v979
        %981 = vmatprep.mubr.f32.mxu0 0.0
        %982 = vmatmul.mubr.f32.gmra.mrb[0].mxu0 %v846
        %v983 = vpop.f32.mrb[0].mxu0
        %v984 = vadd.f32 %v783, %v983
        %v985 = vpop.f32.mrb[0].mxu0
        %v986 = vadd.f32 %v783, %v985
        %987 = vmatprep.mubr.f32.mxu0 0.0
        %988 = vmatmul.mubr.f32.gmra.mrb[0].mxu0 %v849
        %v989 = vpop.f32.mrb[0].mxu0
        %v990 = vadd.f32 %v788, %v989
        %v991 = vpop.f32.mrb[0].mxu0
        %v992 = vadd.f32 %v788, %v991
        %993 = vmatprep.mubr.f32.mxu0 0.0
        %994 = vmatmul.mubr.f32.gmra.mrb[0].mxu0 %v852
        %v995 = vpop.f32.mrb[0].mxu0
        %v996 = vadd.f32 %v793, %v995
        %v997 = vpop.f32.mrb[0].mxu0
        %v998 = vadd.f32 %v793, %v997
        %999 = vmatprep.mubr.f32.mxu0 0.0
        %1000 = vmatmul.mubr.f32.gmra.mrb[0].mxu0 %v855
        %v1001 = vpop.f32.mrb[0].mxu0
        %v1002 = vadd.f32 %v798, %v1001
        %v1003 = vpop.f32.mrb[0].mxu0
        %v1004 = vadd.f32 %v798, %v1003
        %1005 = vmatprep.mubr.f32.mxu0 0.0
        %1006 = vmatmul.mubr.f32.gmra.mrb[0].mxu0 %v858
        %v1007 = vpop.f32.mrb[0].mxu0
        %v1008 = vadd.f32 %v803, %v1007
        %v1009 = vpop.f32.mrb[0].mxu0
        %v1010 = vadd.f32 %v803, %v1009
        %1011 = vmatprep.mubr.f32.mxu0 0.0
        %1012 = vmatmul.mubr.f32.gmra.mrb[0].mxu0 %v861
        %v1013 = vpop.f32.mrb[0].mxu0
        %v1014 = vadd.f32 %v808, %v1013
        %v1015 = vpop.f32.mrb[0].mxu0
        %v1016 = vadd.f32 %v808, %v1015
        %1017 = vmatprep.mubr.f32.mxu0 0.0
        %1018 = vmatmul.mubr.f32.gmra.mrb[0].mxu0 %v864
        %v1019 = vpop.f32.mrb[0].mxu0
        %v1020 = vadd.f32 %v813, %v1019
        %v1021 = vpop.f32.mrb[0].mxu0
        %v1022 = vadd.f32 %v813, %v1021
        %1023 = vmatprep.mubr.f32.mxu0 0.0
        %1024 = vmatmul.mubr.f32.gmra.mrb[0].mxu0 %v867
        %v1025 = vpop.f32.mrb[0].mxu0
        %v1026 = vadd.f32 %v818, %v1025
        %v1027 = vpop.f32.mrb[0].mxu0
        %v1028 = vadd.f32 %v818, %v1027
        %1029 = vdwg.mxu0
        %v1030 = vmul.f32 %v936, 0.70710677
        %v1031 = vmul.f32 %v938, 0.70710677
        %v1032 = vmul.f32 %v942, 0.70710677
        %v1033 = vmul.f32 %v944, 0.70710677
        %v1034 = vmul.f32 %v948, 0.70710677
        %v1035 = vmul.f32 %v950, 0.70710677
        %v1036 = vmul.f32 %v954, 0.70710677
        %v1037 = vmul.f32 %v956, 0.70710677
        %v1038 = vmul.f32 %v960, 0.70710677
        %v1039 = vmul.f32 %v962, 0.70710677
        %v1040 = vmul.f32 %v966, 0.70710677
        %v1041 = vmul.f32 %v968, 0.70710677
        %v1042 = vmul.f32 %v972, 0.70710677
        %v1043 = vmul.f32 %v974, 0.70710677
        %v1044 = vmul.f32 %v978, 0.70710677
        %v1045 = vmul.f32 %v980, 0.70710677
        %v1046 = vmul.f32 %v984, 0.70710677
        %v1047 = vmul.f32 %v986, 0.70710677
        %v1048 = vmul.f32 %v990, 0.70710677
        %v1049 = vmul.f32 %v992, 0.70710677
        %v1050 = vmul.f32 %v996, 0.70710677
        %v1051 = vmul.f32 %v998, 0.70710677
        %v1052 = vmul.f32 %v1002, 0.70710677
        %v1053 = vmul.f32 %v1004, 0.70710677
        %v1054 = vmul.f32 %v1008, 0.70710677
        %v1055 = vmul.f32 %v1010, 0.70710677
        %v1056 = vmul.f32 %v1014, 0.70710677
        %v1057 = vmul.f32 %v1016, 0.70710677
        %v1058 = vmul.f32 %v1020, 0.70710677
        %v1059 = vmul.f32 %v1022, 0.70710677
        %v1060 = vmul.f32 %v1026, 0.70710677
        %v1061 = vmul.f32 %v1028, 0.70710677
        %v1062 = vand.u32 2147483647, %v1030
        %v1063 = vand.u32 2147483647, %v1031
        %v1064 = vand.u32 2147483647, %v1032
        %v1065 = vand.u32 2147483647, %v1033
        %v1066 = vand.u32 2147483647, %v1034
        %v1067 = vand.u32 2147483647, %v1035
        %v1068 = vand.u32 2147483647, %v1036
        %v1069 = vand.u32 2147483647, %v1037
        %v1070 = vand.u32 2147483647, %v1038
        %v1071 = vand.u32 2147483647, %v1039
        %v1072 = vand.u32 2147483647, %v1040
        %v1073 = vand.u32 2147483647, %v1041
        %v1074 = vand.u32 2147483647, %v1042
        %v1075 = vand.u32 2147483647, %v1043
        %v1076 = vand.u32 2147483647, %v1044
        %v1077 = vand.u32 2147483647, %v1045
        %v1078 = vand.u32 2147483647, %v1046
        %v1079 = vand.u32 2147483647, %v1047
        %v1080 = vand.u32 2147483647, %v1048
        %v1081 = vand.u32 2147483647, %v1049
        %v1082 = vand.u32 2147483647, %v1050
        %v1083 = vand.u32 2147483647, %v1051
        %v1084 = vand.u32 2147483647, %v1052
        %v1085 = vand.u32 2147483647, %v1053
        %v1086 = vand.u32 2147483647, %v1054
        %v1087 = vand.u32 2147483647, %v1055
        %v1088 = vand.u32 2147483647, %v1056
        %v1089 = vand.u32 2147483647, %v1057
        %v1090 = vand.u32 2147483647, %v1058
        %v1091 = vand.u32 2147483647, %v1059
        %v1092 = vand.u32 2147483647, %v1060
        %v1093 = vand.u32 2147483647, %v1061
        %v1094 = vmul.f32 %v1062, 0.3275911
        %v1095 = vmul.f32 %v1063, 0.3275911
        %v1096 = vmul.f32 %v1064, 0.3275911
        %v1097 = vmul.f32 %v1065, 0.3275911
        %v1098 = vmul.f32 %v1066, 0.3275911
        %v1099 = vmul.f32 %v1067, 0.3275911
        %v1100 = vmul.f32 %v1068, 0.3275911
        %v1101 = vmul.f32 %v1069, 0.3275911
        %v1102 = vmul.f32 %v1070, 0.3275911
        %v1103 = vmul.f32 %v1071, 0.3275911
        %v1104 = vmul.f32 %v1072, 0.3275911
        %v1105 = vmul.f32 %v1073, 0.3275911
        %v1106 = vmul.f32 %v1074, 0.3275911
        %v1107 = vmul.f32 %v1075, 0.3275911
        %v1108 = vmul.f32 %v1076, 0.3275911
        %v1109 = vmul.f32 %v1077, 0.3275911
        %v1110 = vmul.f32 %v1078, 0.3275911
        %v1111 = vmul.f32 %v1079, 0.3275911
        %v1112 = vmul.f32 %v1080, 0.3275911
        %v1113 = vmul.f32 %v1081, 0.3275911
        %v1114 = vmul.f32 %v1082, 0.3275911
        %v1115 = vmul.f32 %v1083, 0.3275911
        %v1116 = vmul.f32 %v1084, 0.3275911
        %v1117 = vmul.f32 %v1085, 0.3275911
        %v1118 = vmul.f32 %v1086, 0.3275911
        %v1119 = vmul.f32 %v1087, 0.3275911
        %v1120 = vmul.f32 %v1088, 0.3275911
        %v1121 = vmul.f32 %v1089, 0.3275911
        %v1122 = vmul.f32 %v1090, 0.3275911
        %v1123 = vmul.f32 %v1091, 0.3275911
        %v1124 = vmul.f32 %v1092, 0.3275911
        %v1125 = vmul.f32 %v1093, 0.3275911
        %v1126 = vadd.f32 %v1094, 1.0
        %v1127 = vadd.f32 %v1095, 1.0
        %v1128 = vadd.f32 %v1096, 1.0
        %v1129 = vadd.f32 %v1097, 1.0
        %v1130 = vadd.f32 %v1098, 1.0
        %v1131 = vadd.f32 %v1099, 1.0
        %v1132 = vadd.f32 %v1100, 1.0
        %v1133 = vadd.f32 %v1101, 1.0
        %v1134 = vadd.f32 %v1102, 1.0
        %v1135 = vadd.f32 %v1103, 1.0
        %v1136 = vadd.f32 %v1104, 1.0
        %v1137 = vadd.f32 %v1105, 1.0
        %v1138 = vadd.f32 %v1106, 1.0
        %v1139 = vadd.f32 %v1107, 1.0
        %v1140 = vadd.f32 %v1108, 1.0
        %v1141 = vadd.f32 %v1109, 1.0
        %v1142 = vadd.f32 %v1110, 1.0
        %v1143 = vadd.f32 %v1111, 1.0
        %v1144 = vadd.f32 %v1112, 1.0
        %v1145 = vadd.f32 %v1113, 1.0
        %v1146 = vadd.f32 %v1114, 1.0
        %v1147 = vadd.f32 %v1115, 1.0
        %v1148 = vadd.f32 %v1116, 1.0
        %v1149 = vadd.f32 %v1117, 1.0
        %v1150 = vadd.f32 %v1118, 1.0
        %v1151 = vadd.f32 %v1119, 1.0
        %v1152 = vadd.f32 %v1120, 1.0
        %v1153 = vadd.f32 %v1121, 1.0
        %v1154 = vadd.f32 %v1122, 1.0
        %v1155 = vadd.f32 %v1123, 1.0
        %v1156 = vadd.f32 %v1124, 1.0
        %v1157 = vadd.f32 %v1125, 1.0
        %v1158 = vrcp.pop %v1126
        %v1159 = vmul.f32 1.0, %v1158
        %v1160 = vrcp.pop %v1127
        %v1161 = vmul.f32 1.0, %v1160
        %v1162 = vrcp.pop %v1128
        %v1163 = vmul.f32 1.0, %v1162
        %v1164 = vrcp.pop %v1129
        %v1165 = vmul.f32 1.0, %v1164
        %v1166 = vrcp.pop %v1130
        %v1167 = vmul.f32 1.0, %v1166
        %v1168 = vrcp.pop %v1131
        %v1169 = vmul.f32 1.0, %v1168
        %v1170 = vrcp.pop %v1132
        %v1171 = vmul.f32 1.0, %v1170
        %v1172 = vrcp.pop %v1133
        %v1173 = vmul.f32 1.0, %v1172
        %v1174 = vrcp.pop %v1134
        %v1175 = vmul.f32 1.0, %v1174
        %v1176 = vrcp.pop %v1135
        %v1177 = vmul.f32 1.0, %v1176
        %v1178 = vrcp.pop %v1136
        %v1179 = vmul.f32 1.0, %v1178
        %v1180 = vrcp.pop %v1137
        %v1181 = vmul.f32 1.0, %v1180
        %v1182 = vrcp.pop %v1138
        %v1183 = vmul.f32 1.0, %v1182
        %v1184 = vrcp.pop %v1139
        %v1185 = vmul.f32 1.0, %v1184
        %v1186 = vrcp.pop %v1140
        %v1187 = vmul.f32 1.0, %v1186
        %v1188 = vrcp.pop %v1141
        %v1189 = vmul.f32 1.0, %v1188
        %v1190 = vrcp.pop %v1142
        %v1191 = vmul.f32 1.0, %v1190
        %v1192 = vrcp.pop %v1143
        %v1193 = vmul.f32 1.0, %v1192
        %v1194 = vrcp.pop %v1144
        %v1195 = vmul.f32 1.0, %v1194
        %v1196 = vrcp.pop %v1145
        %v1197 = vmul.f32 1.0, %v1196
        %v1198 = vrcp.pop %v1146
        %v1199 = vmul.f32 1.0, %v1198
        %v1200 = vrcp.pop %v1147
        %v1201 = vmul.f32 1.0, %v1200
        %v1202 = vrcp.pop %v1148
        %v1203 = vmul.f32 1.0, %v1202
        %v1204 = vrcp.pop %v1149
        %v1205 = vmul.f32 1.0, %v1204
        %v1206 = vrcp.pop %v1150
        %v1207 = vmul.f32 1.0, %v1206
        %v1208 = vrcp.pop %v1151
        %v1209 = vmul.f32 1.0, %v1208
        %v1210 = vrcp.pop %v1152
        %v1211 = vmul.f32 1.0, %v1210
        %v1212 = vrcp.pop %v1153
        %v1213 = vmul.f32 1.0, %v1212
        %v1214 = vrcp.pop %v1154
        %v1215 = vmul.f32 1.0, %v1214
        %v1216 = vrcp.pop %v1155
        %v1217 = vmul.f32 1.0, %v1216
        %v1218 = vrcp.pop %v1156
        %v1219 = vmul.f32 1.0, %v1218
        %v1220 = vrcp.pop %v1157
        %v1221 = vmul.f32 1.0, %v1220
        %v1222 = vmul.f32 %v1159, 1.0614054
        %v1223 = vmul.f32 %v1161, 1.0614054
        %v1224 = vmul.f32 %v1163, 1.0614054
        %v1225 = vmul.f32 %v1165, 1.0614054
        %v1226 = vmul.f32 %v1167, 1.0614054
        %v1227 = vmul.f32 %v1169, 1.0614054
        %v1228 = vmul.f32 %v1171, 1.0614054
        %v1229 = vmul.f32 %v1173, 1.0614054
        %v1230 = vmul.f32 %v1175, 1.0614054
        %v1231 = vmul.f32 %v1177, 1.0614054
        %v1232 = vmul.f32 %v1179, 1.0614054
        %v1233 = vmul.f32 %v1181, 1.0614054
        %v1234 = vmul.f32 %v1183, 1.0614054
        %v1235 = vmul.f32 %v1185, 1.0614054
        %v1236 = vmul.f32 %v1187, 1.0614054
        %v1237 = vmul.f32 %v1189, 1.0614054
        %v1238 = vmul.f32 %v1191, 1.0614054
        %v1239 = vmul.f32 %v1193, 1.0614054
        %v1240 = vmul.f32 %v1195, 1.0614054
        %v1241 = vmul.f32 %v1197, 1.0614054
        %v1242 = vmul.f32 %v1199, 1.0614054
        %v1243 = vmul.f32 %v1201, 1.0614054
        %v1244 = vmul.f32 %v1203, 1.0614054
        %v1245 = vmul.f32 %v1205, 1.0614054
        %v1246 = vmul.f32 %v1207, 1.0614054
        %v1247 = vmul.f32 %v1209, 1.0614054
        %v1248 = vmul.f32 %v1211, 1.0614054
        %v1249 = vmul.f32 %v1213, 1.0614054
        %v1250 = vmul.f32 %v1215, 1.0614054
        %v1251 = vmul.f32 %v1217, 1.0614054
        %v1252 = vmul.f32 %v1219, 1.0614054
        %v1253 = vmul.f32 %v1221, 1.0614054
        %v1254 = vadd.f32 %v1222, -1.4531521
        %v1255 = vadd.f32 %v1223, -1.4531521
        %v1256 = vadd.f32 %v1224, -1.4531521
        %v1257 = vadd.f32 %v1225, -1.4531521
        %v1258 = vadd.f32 %v1226, -1.4531521
        %v1259 = vadd.f32 %v1227, -1.4531521
        %v1260 = vadd.f32 %v1228, -1.4531521
        %v1261 = vadd.f32 %v1229, -1.4531521
        %v1262 = vadd.f32 %v1230, -1.4531521
        %v1263 = vadd.f32 %v1231, -1.4531521
        %v1264 = vadd.f32 %v1232, -1.4531521
        %v1265 = vadd.f32 %v1233, -1.4531521
        %v1266 = vadd.f32 %v1234, -1.4531521
        %v1267 = vadd.f32 %v1235, -1.4531521
        %v1268 = vadd.f32 %v1236, -1.4531521
        %v1269 = vadd.f32 %v1237, -1.4531521
        %v1270 = vadd.f32 %v1238, -1.4531521
        %v1271 = vadd.f32 %v1239, -1.4531521
        %v1272 = vadd.f32 %v1240, -1.4531521
        %v1273 = vadd.f32 %v1241, -1.4531521
        %v1274 = vadd.f32 %v1242, -1.4531521
        %v1275 = vadd.f32 %v1243, -1.4531521
        %v1276 = vadd.f32 %v1244, -1.4531521
        %v1277 = vadd.f32 %v1245, -1.4531521
        %v1278 = vadd.f32 %v1246, -1.4531521
        %v1279 = vadd.f32 %v1247, -1.4531521
        %v1280 = vadd.f32 %v1248, -1.4531521
        %v1281 = vadd.f32 %v1249, -1.4531521
        %v1282 = vadd.f32 %v1250, -1.4531521
        %v1283 = vadd.f32 %v1251, -1.4531521
        %v1284 = vadd.f32 %v1252, -1.4531521
        %v1285 = vadd.f32 %v1253, -1.4531521
        %v1286 = vmul.f32 %v1159, %v1254
        %v1287 = vmul.f32 %v1161, %v1255
        %v1288 = vmul.f32 %v1163, %v1256
        %v1289 = vmul.f32 %v1165, %v1257
        %v1290 = vmul.f32 %v1167, %v1258
        %v1291 = vmul.f32 %v1169, %v1259
        %v1292 = vmul.f32 %v1171, %v1260
        %v1293 = vmul.f32 %v1173, %v1261
        %v1294 = vmul.f32 %v1175, %v1262
        %v1295 = vmul.f32 %v1177, %v1263
        %v1296 = vmul.f32 %v1179, %v1264
        %v1297 = vmul.f32 %v1181, %v1265
        %v1298 = vmul.f32 %v1183, %v1266
        %v1299 = vmul.f32 %v1185, %v1267
        %v1300 = vmul.f32 %v1187, %v1268
        %v1301 = vmul.f32 %v1189, %v1269
        %v1302 = vmul.f32 %v1191, %v1270
        %v1303 = vmul.f32 %v1193, %v1271
        %v1304 = vmul.f32 %v1195, %v1272
        %v1305 = vmul.f32 %v1197, %v1273
        %v1306 = vmul.f32 %v1199, %v1274
        %v1307 = vmul.f32 %v1201, %v1275
        %v1308 = vmul.f32 %v1203, %v1276
        %v1309 = vmul.f32 %v1205, %v1277
        %v1310 = vmul.f32 %v1207, %v1278
        %v1311 = vmul.f32 %v1209, %v1279
        %v1312 = vmul.f32 %v1211, %v1280
        %v1313 = vmul.f32 %v1213, %v1281
        %v1314 = vmul.f32 %v1215, %v1282
        %v1315 = vmul.f32 %v1217, %v1283
        %v1316 = vmul.f32 %v1219, %v1284
        %v1317 = vmul.f32 %v1221, %v1285
        %v1318 = vadd.f32 %v1286, 1.4214138
        %v1319 = vadd.f32 %v1287, 1.4214138
        %v1320 = vadd.f32 %v1288, 1.4214138
        %v1321 = vadd.f32 %v1289, 1.4214138
        %v1322 = vadd.f32 %v1290, 1.4214138
        %v1323 = vadd.f32 %v1291, 1.4214138
        %v1324 = vadd.f32 %v1292, 1.4214138
        %v1325 = vadd.f32 %v1293, 1.4214138
        %v1326 = vadd.f32 %v1294, 1.4214138
        %v1327 = vadd.f32 %v1295, 1.4214138
        %v1328 = vadd.f32 %v1296, 1.4214138
        %v1329 = vadd.f32 %v1297, 1.4214138
        %v1330 = vadd.f32 %v1298, 1.4214138
        %v1331 = vadd.f32 %v1299, 1.4214138
        %v1332 = vadd.f32 %v1300, 1.4214138
        %v1333 = vadd.f32 %v1301, 1.4214138
        %v1334 = vadd.f32 %v1302, 1.4214138
        %v1335 = vadd.f32 %v1303, 1.4214138
        %v1336 = vadd.f32 %v1304, 1.4214138
        %v1337 = vadd.f32 %v1305, 1.4214138
        %v1338 = vadd.f32 %v1306, 1.4214138
        %v1339 = vadd.f32 %v1307, 1.4214138
        %v1340 = vadd.f32 %v1308, 1.4214138
        %v1341 = vadd.f32 %v1309, 1.4214138
        %v1342 = vadd.f32 %v1310, 1.4214138
        %v1343 = vadd.f32 %v1311, 1.4214138
        %v1344 = vadd.f32 %v1312, 1.4214138
        %v1345 = vadd.f32 %v1313, 1.4214138
        %v1346 = vadd.f32 %v1314, 1.4214138
        %v1347 = vadd.f32 %v1315, 1.4214138
        %v1348 = vadd.f32 %v1316, 1.4214138
        %v1349 = vadd.f32 %v1317, 1.4214138
        %v1350 = vmul.f32 %v1159, %v1318
        %v1351 = vmul.f32 %v1161, %v1319
        %v1352 = vmul.f32 %v1163, %v1320
        %v1353 = vmul.f32 %v1165, %v1321
        %v1354 = vmul.f32 %v1167, %v1322
        %v1355 = vmul.f32 %v1169, %v1323
        %v1356 = vmul.f32 %v1171, %v1324
        %v1357 = vmul.f32 %v1173, %v1325
        %v1358 = vmul.f32 %v1175, %v1326
        %v1359 = vmul.f32 %v1177, %v1327
        %v1360 = vmul.f32 %v1179, %v1328
        %v1361 = vmul.f32 %v1181, %v1329
        %v1362 = vmul.f32 %v1183, %v1330
        %v1363 = vmul.f32 %v1185, %v1331
        %v1364 = vmul.f32 %v1187, %v1332
        %v1365 = vmul.f32 %v1189, %v1333
        %v1366 = vmul.f32 %v1191, %v1334
        %v1367 = vmul.f32 %v1193, %v1335
        %v1368 = vmul.f32 %v1195, %v1336
        %v1369 = vmul.f32 %v1197, %v1337
        %v1370 = vmul.f32 %v1199, %v1338
        %v1371 = vmul.f32 %v1201, %v1339
        %v1372 = vmul.f32 %v1203, %v1340
        %v1373 = vmul.f32 %v1205, %v1341
        %v1374 = vmul.f32 %v1207, %v1342
        %v1375 = vmul.f32 %v1209, %v1343
        %v1376 = vmul.f32 %v1211, %v1344
        %v1377 = vmul.f32 %v1213, %v1345
        %v1378 = vmul.f32 %v1215, %v1346
        %v1379 = vmul.f32 %v1217, %v1347
        %v1380 = vmul.f32 %v1219, %v1348
        %v1381 = vmul.f32 %v1221, %v1349
        %v1382 = vadd.f32 %v1350, -0.28449672
        %v1383 = vadd.f32 %v1351, -0.28449672
        %v1384 = vadd.f32 %v1352, -0.28449672
        %v1385 = vadd.f32 %v1353, -0.28449672
        %v1386 = vadd.f32 %v1354, -0.28449672
        %v1387 = vadd.f32 %v1355, -0.28449672
        %v1388 = vadd.f32 %v1356, -0.28449672
        %v1389 = vadd.f32 %v1357, -0.28449672
        %v1390 = vadd.f32 %v1358, -0.28449672
        %v1391 = vadd.f32 %v1359, -0.28449672
        %v1392 = vadd.f32 %v1360, -0.28449672
        %v1393 = vadd.f32 %v1361, -0.28449672
        %v1394 = vadd.f32 %v1362, -0.28449672
        %v1395 = vadd.f32 %v1363, -0.28449672
        %v1396 = vadd.f32 %v1364, -0.28449672
        %v1397 = vadd.f32 %v1365, -0.28449672
        %v1398 = vadd.f32 %v1366, -0.28449672
        %v1399 = vadd.f32 %v1367, -0.28449672
        %v1400 = vadd.f32 %v1368, -0.28449672
        %v1401 = vadd.f32 %v1369, -0.28449672
        %v1402 = vadd.f32 %v1370, -0.28449672
        %v1403 = vadd.f32 %v1371, -0.28449672
        %v1404 = vadd.f32 %v1372, -0.28449672
        %v1405 = vadd.f32 %v1373, -0.28449672
        %v1406 = vadd.f32 %v1374, -0.28449672
        %v1407 = vadd.f32 %v1375, -0.28449672
        %v1408 = vadd.f32 %v1376, -0.28449672
        %v1409 = vadd.f32 %v1377, -0.28449672
        %v1410 = vadd.f32 %v1378, -0.28449672
        %v1411 = vadd.f32 %v1379, -0.28449672
        %v1412 = vadd.f32 %v1380, -0.28449672
        %v1413 = vadd.f32 %v1381, -0.28449672
        %v1414 = vmul.f32 %v1159, %v1382
        %v1415 = vmul.f32 %v1161, %v1383
        %v1416 = vmul.f32 %v1163, %v1384
        %v1417 = vmul.f32 %v1165, %v1385
        %v1418 = vmul.f32 %v1167, %v1386
        %v1419 = vmul.f32 %v1169, %v1387
        %v1420 = vmul.f32 %v1171, %v1388
        %v1421 = vmul.f32 %v1173, %v1389
        %v1422 = vmul.f32 %v1175, %v1390
        %v1423 = vmul.f32 %v1177, %v1391
        %v1424 = vmul.f32 %v1179, %v1392
        %v1425 = vmul.f32 %v1181, %v1393
        %v1426 = vmul.f32 %v1183, %v1394
        %v1427 = vmul.f32 %v1185, %v1395
        %v1428 = vmul.f32 %v1187, %v1396
        %v1429 = vmul.f32 %v1189, %v1397
        %v1430 = vmul.f32 %v1191, %v1398
        %v1431 = vmul.f32 %v1193, %v1399
        %v1432 = vmul.f32 %v1195, %v1400
        %v1433 = vmul.f32 %v1197, %v1401
        %v1434 = vmul.f32 %v1199, %v1402
        %v1435 = vmul.f32 %v1201, %v1403
        %v1436 = vmul.f32 %v1203, %v1404
        %v1437 = vmul.f32 %v1205, %v1405
        %v1438 = vmul.f32 %v1207, %v1406
        %v1439 = vmul.f32 %v1209, %v1407
        %v1440 = vmul.f32 %v1211, %v1408
        %v1441 = vmul.f32 %v1213, %v1409
        %v1442 = vmul.f32 %v1215, %v1410
        %v1443 = vmul.f32 %v1217, %v1411
        %v1444 = vmul.f32 %v1219, %v1412
        %v1445 = vmul.f32 %v1221, %v1413
        %v1446 = vadd.f32 %v1414, 0.2548296
        %v1447 = vadd.f32 %v1415, 0.2548296
        %v1448 = vadd.f32 %v1416, 0.2548296
        %v1449 = vadd.f32 %v1417, 0.2548296
        %v1450 = vadd.f32 %v1418, 0.2548296
        %v1451 = vadd.f32 %v1419, 0.2548296
        %v1452 = vadd.f32 %v1420, 0.2548296
        %v1453 = vadd.f32 %v1421, 0.2548296
        %v1454 = vadd.f32 %v1422, 0.2548296
        %v1455 = vadd.f32 %v1423, 0.2548296
        %v1456 = vadd.f32 %v1424, 0.2548296
        %v1457 = vadd.f32 %v1425, 0.2548296
        %v1458 = vadd.f32 %v1426, 0.2548296
        %v1459 = vadd.f32 %v1427, 0.2548296
        %v1460 = vadd.f32 %v1428, 0.2548296
        %v1461 = vadd.f32 %v1429, 0.2548296
        %v1462 = vadd.f32 %v1430, 0.2548296
        %v1463 = vadd.f32 %v1431, 0.2548296
        %v1464 = vadd.f32 %v1432, 0.2548296
        %v1465 = vadd.f32 %v1433, 0.2548296
        %v1466 = vadd.f32 %v1434, 0.2548296
        %v1467 = vadd.f32 %v1435, 0.2548296
        %v1468 = vadd.f32 %v1436, 0.2548296
        %v1469 = vadd.f32 %v1437, 0.2548296
        %v1470 = vadd.f32 %v1438, 0.2548296
        %v1471 = vadd.f32 %v1439, 0.2548296
        %v1472 = vadd.f32 %v1440, 0.2548296
        %v1473 = vadd.f32 %v1441, 0.2548296
        %v1474 = vadd.f32 %v1442, 0.2548296
        %v1475 = vadd.f32 %v1443, 0.2548296
        %v1476 = vadd.f32 %v1444, 0.2548296
        %v1477 = vadd.f32 %v1445, 0.2548296
        %v1478 = vmul.f32 %v1159, %v1446
        %v1479 = vmul.f32 %v1161, %v1447
        %v1480 = vmul.f32 %v1163, %v1448
        %v1481 = vmul.f32 %v1165, %v1449
        %v1482 = vmul.f32 %v1167, %v1450
        %v1483 = vmul.f32 %v1169, %v1451
        %v1484 = vmul.f32 %v1171, %v1452
        %v1485 = vmul.f32 %v1173, %v1453
        %v1486 = vmul.f32 %v1175, %v1454
        %v1487 = vmul.f32 %v1177, %v1455
        %v1488 = vmul.f32 %v1179, %v1456
        %v1489 = vmul.f32 %v1181, %v1457
        %v1490 = vmul.f32 %v1183, %v1458
        %v1491 = vmul.f32 %v1185, %v1459
        %v1492 = vmul.f32 %v1187, %v1460
        %v1493 = vmul.f32 %v1189, %v1461
        %v1494 = vmul.f32 %v1191, %v1462
        %v1495 = vmul.f32 %v1193, %v1463
        %v1496 = vmul.f32 %v1195, %v1464
        %v1497 = vmul.f32 %v1197, %v1465
        %v1498 = vmul.f32 %v1199, %v1466
        %v1499 = vmul.f32 %v1201, %v1467
        %v1500 = vmul.f32 %v1203, %v1468
        %v1501 = vmul.f32 %v1205, %v1469
        %v1502 = vmul.f32 %v1207, %v1470
        %v1503 = vmul.f32 %v1209, %v1471
        %v1504 = vmul.f32 %v1211, %v1472
        %v1505 = vmul.f32 %v1213, %v1473
        %v1506 = vmul.f32 %v1215, %v1474
        %v1507 = vmul.f32 %v1217, %v1475
        %v1508 = vmul.f32 %v1219, %v1476
        %v1509 = vmul.f32 %v1221, %v1477
        %v1510 = vsub.f32 0.0, %v1062
        %v1511 = vsub.f32 0.0, %v1063
        %v1512 = vsub.f32 0.0, %v1064
        %v1513 = vsub.f32 0.0, %v1065
        %v1514 = vsub.f32 0.0, %v1066
        %v1515 = vsub.f32 0.0, %v1067
        %v1516 = vsub.f32 0.0, %v1068
        %v1517 = vsub.f32 0.0, %v1069
        %v1518 = vsub.f32 0.0, %v1070
        %v1519 = vsub.f32 0.0, %v1071
        %v1520 = vsub.f32 0.0, %v1072
        %v1521 = vsub.f32 0.0, %v1073
        %v1522 = vsub.f32 0.0, %v1074
        %v1523 = vsub.f32 0.0, %v1075
        %v1524 = vsub.f32 0.0, %v1076
        %v1525 = vsub.f32 0.0, %v1077
        %v1526 = vsub.f32 0.0, %v1078
        %v1527 = vsub.f32 0.0, %v1079
        %v1528 = vsub.f32 0.0, %v1080
        %v1529 = vsub.f32 0.0, %v1081
        %v1530 = vsub.f32 0.0, %v1082
        %v1531 = vsub.f32 0.0, %v1083
        %v1532 = vsub.f32 0.0, %v1084
        %v1533 = vsub.f32 0.0, %v1085
        %v1534 = vsub.f32 0.0, %v1086
        %v1535 = vsub.f32 0.0, %v1087
        %v1536 = vsub.f32 0.0, %v1088
        %v1537 = vsub.f32 0.0, %v1089
        %v1538 = vsub.f32 0.0, %v1090
        %v1539 = vsub.f32 0.0, %v1091
        %v1540 = vsub.f32 0.0, %v1092
        %v1541 = vsub.f32 0.0, %v1093
        %v1542 = vmul.f32 %v1510, %v1062
        %v1543 = vmul.f32 %v1511, %v1063
        %v1544 = vmul.f32 %v1512, %v1064
        %v1545 = vmul.f32 %v1513, %v1065
        %v1546 = vmul.f32 %v1514, %v1066
        %v1547 = vmul.f32 %v1515, %v1067
        %v1548 = vmul.f32 %v1516, %v1068
        %v1549 = vmul.f32 %v1517, %v1069
        %v1550 = vmul.f32 %v1518, %v1070
        %v1551 = vmul.f32 %v1519, %v1071
        %v1552 = vmul.f32 %v1520, %v1072
        %v1553 = vmul.f32 %v1521, %v1073
        %v1554 = vmul.f32 %v1522, %v1074
        %v1555 = vmul.f32 %v1523, %v1075
        %v1556 = vmul.f32 %v1524, %v1076
        %v1557 = vmul.f32 %v1525, %v1077
        %v1558 = vmul.f32 %v1526, %v1078
        %v1559 = vmul.f32 %v1527, %v1079
        %v1560 = vmul.f32 %v1528, %v1080
        %v1561 = vmul.f32 %v1529, %v1081
        %v1562 = vmul.f32 %v1530, %v1082
        %v1563 = vmul.f32 %v1531, %v1083
        %v1564 = vmul.f32 %v1532, %v1084
        %v1565 = vmul.f32 %v1533, %v1085
        %v1566 = vmul.f32 %v1534, %v1086
        %v1567 = vmul.f32 %v1535, %v1087
        %v1568 = vmul.f32 %v1536, %v1088
        %v1569 = vmul.f32 %v1537, %v1089
        %v1570 = vmul.f32 %v1538, %v1090
        %v1571 = vmul.f32 %v1539, %v1091
        %v1572 = vmul.f32 %v1540, %v1092
        %v1573 = vmul.f32 %v1541, %v1093
        %v1574 = vmul.f32 %v1542, 1.442695
        %v1575 = vpow.pop %v1574
        %v1576 = vmul.f32 %v1543, 1.442695
        %v1577 = vpow.pop %v1576
        %v1578 = vmul.f32 %v1544, 1.442695
        %v1579 = vpow.pop %v1578
        %v1580 = vmul.f32 %v1545, 1.442695
        %v1581 = vpow.pop %v1580
        %v1582 = vmul.f32 %v1546, 1.442695
        %v1583 = vpow.pop %v1582
        %v1584 = vmul.f32 %v1547, 1.442695
        %v1585 = vpow.pop %v1584
        %v1586 = vmul.f32 %v1548, 1.442695
        %v1587 = vpow.pop %v1586
        %v1588 = vmul.f32 %v1549, 1.442695
        %v1589 = vpow.pop %v1588
        %v1590 = vmul.f32 %v1550, 1.442695
        %v1591 = vpow.pop %v1590
        %v1592 = vmul.f32 %v1551, 1.442695
        %v1593 = vpow.pop %v1592
        %v1594 = vmul.f32 %v1552, 1.442695
        %v1595 = vpow.pop %v1594
        %v1596 = vmul.f32 %v1553, 1.442695
        %v1597 = vpow.pop %v1596
        %v1598 = vmul.f32 %v1554, 1.442695
        %v1599 = vpow.pop %v1598
        %v1600 = vmul.f32 %v1555, 1.442695
        %v1601 = vpow.pop %v1600
        %v1602 = vmul.f32 %v1556, 1.442695
        %v1603 = vpow.pop %v1602
        %v1604 = vmul.f32 %v1557, 1.442695
        %v1605 = vpow.pop %v1604
        %v1606 = vmul.f32 %v1558, 1.442695
        %v1607 = vpow.pop %v1606
        %v1608 = vmul.f32 %v1559, 1.442695
        %v1609 = vpow.pop %v1608
        %v1610 = vmul.f32 %v1560, 1.442695
        %v1611 = vpow.pop %v1610
        %v1612 = vmul.f32 %v1561, 1.442695
        %v1613 = vpow.pop %v1612
        %v1614 = vmul.f32 %v1562, 1.442695
        %v1615 = vpow.pop %v1614
        %v1616 = vmul.f32 %v1563, 1.442695
        %v1617 = vpow.pop %v1616
        %v1618 = vmul.f32 %v1564, 1.442695
        %v1619 = vpow.pop %v1618
        %v1620 = vmul.f32 %v1565, 1.442695
        %v1621 = vpow.pop %v1620
        %v1622 = vmul.f32 %v1566, 1.442695
        %v1623 = vpow.pop %v1622
        %v1624 = vmul.f32 %v1567, 1.442695
        %v1625 = vpow.pop %v1624
        %v1626 = vmul.f32 %v1568, 1.442695
        %v1627 = vpow.pop %v1626
        %v1628 = vmul.f32 %v1569, 1.442695
        %v1629 = vpow.pop %v1628
        %v1630 = vmul.f32 %v1570, 1.442695
        %v1631 = vpow.pop %v1630
        %v1632 = vmul.f32 %v1571, 1.442695
        %v1633 = vpow.pop %v1632
        %v1634 = vmul.f32 %v1572, 1.442695
        %v1635 = vpow.pop %v1634
        %v1636 = vmul.f32 %v1573, 1.442695
        %v1637 = vpow.pop %v1636
        %v1638 = vmul.f32 %v1478, %v1575
        %v1639 = vmul.f32 %v1479, %v1577
        %v1640 = vmul.f32 %v1480, %v1579
        %v1641 = vmul.f32 %v1481, %v1581
        %v1642 = vmul.f32 %v1482, %v1583
        %v1643 = vmul.f32 %v1483, %v1585
        %v1644 = vmul.f32 %v1484, %v1587
        %v1645 = vmul.f32 %v1485, %v1589
        %v1646 = vmul.f32 %v1486, %v1591
        %v1647 = vmul.f32 %v1487, %v1593
        %v1648 = vmul.f32 %v1488, %v1595
        %v1649 = vmul.f32 %v1489, %v1597
        %v1650 = vmul.f32 %v1490, %v1599
        %v1651 = vmul.f32 %v1491, %v1601
        %v1652 = vmul.f32 %v1492, %v1603
        %v1653 = vmul.f32 %v1493, %v1605
        %v1654 = vmul.f32 %v1494, %v1607
        %v1655 = vmul.f32 %v1495, %v1609
        %v1656 = vmul.f32 %v1496, %v1611
        %v1657 = vmul.f32 %v1497, %v1613
        %v1658 = vmul.f32 %v1498, %v1615
        %v1659 = vmul.f32 %v1499, %v1617
        %v1660 = vmul.f32 %v1500, %v1619
        %v1661 = vmul.f32 %v1501, %v1621
        %v1662 = vmul.f32 %v1502, %v1623
        %v1663 = vmul.f32 %v1503, %v1625
        %v1664 = vmul.f32 %v1504, %v1627
        %v1665 = vmul.f32 %v1505, %v1629
        %v1666 = vmul.f32 %v1506, %v1631
        %v1667 = vmul.f32 %v1507, %v1633
        %v1668 = vmul.f32 %v1508, %v1635
        %v1669 = vmul.f32 %v1509, %v1637
        %v1670 = vsub.f32 1.0, %v1638
        %v1671 = vsub.f32 1.0, %v1639
        %v1672 = vsub.f32 1.0, %v1640
        %v1673 = vsub.f32 1.0, %v1641
        %v1674 = vsub.f32 1.0, %v1642
        %v1675 = vsub.f32 1.0, %v1643
        %v1676 = vsub.f32 1.0, %v1644
        %v1677 = vsub.f32 1.0, %v1645
        %v1678 = vsub.f32 1.0, %v1646
        %v1679 = vsub.f32 1.0, %v1647
        %v1680 = vsub.f32 1.0, %v1648
        %v1681 = vsub.f32 1.0, %v1649
        %v1682 = vsub.f32 1.0, %v1650
        %v1683 = vsub.f32 1.0, %v1651
        %v1684 = vsub.f32 1.0, %v1652
        %v1685 = vsub.f32 1.0, %v1653
        %v1686 = vsub.f32 1.0, %v1654
        %v1687 = vsub.f32 1.0, %v1655
        %v1688 = vsub.f32 1.0, %v1656
        %v1689 = vsub.f32 1.0, %v1657
        %v1690 = vsub.f32 1.0, %v1658
        %v1691 = vsub.f32 1.0, %v1659
        %v1692 = vsub.f32 1.0, %v1660
        %v1693 = vsub.f32 1.0, %v1661
        %v1694 = vsub.f32 1.0, %v1662
        %v1695 = vsub.f32 1.0, %v1663
        %v1696 = vsub.f32 1.0, %v1664
        %v1697 = vsub.f32 1.0, %v1665
        %v1698 = vsub.f32 1.0, %v1666
        %v1699 = vsub.f32 1.0, %v1667
        %v1700 = vsub.f32 1.0, %v1668
        %v1701 = vsub.f32 1.0, %v1669
        %vm1702 = vcmp.ge.f32.partialorder %v1030, 0.0
        %vm1703 = vcmp.ge.f32.partialorder %v1031, 0.0
        %vm1704 = vcmp.ge.f32.partialorder %v1032, 0.0
        %vm1705 = vcmp.ge.f32.partialorder %v1033, 0.0
        %vm1706 = vcmp.ge.f32.partialorder %v1034, 0.0
        %vm1707 = vcmp.ge.f32.partialorder %v1035, 0.0
        %vm1708 = vcmp.ge.f32.partialorder %v1036, 0.0
        %vm1709 = vcmp.ge.f32.partialorder %v1037, 0.0
        %vm1710 = vcmp.ge.f32.partialorder %v1038, 0.0
        %vm1711 = vcmp.ge.f32.partialorder %v1039, 0.0
        %vm1712 = vcmp.ge.f32.partialorder %v1040, 0.0
        %vm1713 = vcmp.ge.f32.partialorder %v1041, 0.0
        %vm1714 = vcmp.ge.f32.partialorder %v1042, 0.0
        %vm1715 = vcmp.ge.f32.partialorder %v1043, 0.0
        %vm1716 = vcmp.ge.f32.partialorder %v1044, 0.0
        %vm1717 = vcmp.ge.f32.partialorder %v1045, 0.0
        %vm1718 = vcmp.ge.f32.partialorder %v1046, 0.0
        %vm1719 = vcmp.ge.f32.partialorder %v1047, 0.0
        %vm1720 = vcmp.ge.f32.partialorder %v1048, 0.0
        %vm1721 = vcmp.ge.f32.partialorder %v1049, 0.0
        %vm1722 = vcmp.ge.f32.partialorder %v1050, 0.0
        %vm1723 = vcmp.ge.f32.partialorder %v1051, 0.0
        %vm1724 = vcmp.ge.f32.partialorder %v1052, 0.0
        %vm1725 = vcmp.ge.f32.partialorder %v1053, 0.0
        %vm1726 = vcmp.ge.f32.partialorder %v1054, 0.0
        %vm1727 = vcmp.ge.f32.partialorder %v1055, 0.0
        %vm1728 = vcmp.ge.f32.partialorder %v1056, 0.0
        %vm1729 = vcmp.ge.f32.partialorder %v1057, 0.0
        %vm1730 = vcmp.ge.f32.partialorder %v1058, 0.0
        %vm1731 = vcmp.ge.f32.partialorder %v1059, 0.0
        %vm1732 = vcmp.ge.f32.partialorder %v1060, 0.0
        %vm1733 = vcmp.ge.f32.partialorder %v1061, 0.0
        %v1734 = vsub.f32 0.0, %v1670
        %v1735 = vsub.f32 0.0, %v1671
        %v1736 = vsub.f32 0.0, %v1672
        %v1737 = vsub.f32 0.0, %v1673
        %v1738 = vsub.f32 0.0, %v1674
        %v1739 = vsub.f32 0.0, %v1675
        %v1740 = vsub.f32 0.0, %v1676
        %v1741 = vsub.f32 0.0, %v1677
        %v1742 = vsub.f32 0.0, %v1678
        %v1743 = vsub.f32 0.0, %v1679
        %v1744 = vsub.f32 0.0, %v1680
        %v1745 = vsub.f32 0.0, %v1681
        %v1746 = vsub.f32 0.0, %v1682
        %v1747 = vsub.f32 0.0, %v1683
        %v1748 = vsub.f32 0.0, %v1684
        %v1749 = vsub.f32 0.0, %v1685
        %v1750 = vsub.f32 0.0, %v1686
        %v1751 = vsub.f32 0.0, %v1687
        %v1752 = vsub.f32 0.0, %v1688
        %v1753 = vsub.f32 0.0, %v1689
        %v1754 = vsub.f32 0.0, %v1690
        %v1755 = vsub.f32 0.0, %v1691
        %v1756 = vsub.f32 0.0, %v1692
        %v1757 = vsub.f32 0.0, %v1693
        %v1758 = vsub.f32 0.0, %v1694
        %v1759 = vsub.f32 0.0, %v1695
        %v1760 = vsub.f32 0.0, %v1696
        %v1761 = vsub.f32 0.0, %v1697
        %v1762 = vsub.f32 0.0, %v1698
        %v1763 = vsub.f32 0.0, %v1699
        %v1764 = vsub.f32 0.0, %v1700
        %v1765 = vsub.f32 0.0, %v1701
        %v1766 = vsel %vm1702, %v1670, %v1734
        %v1767 = vsel %vm1703, %v1671, %v1735
        %v1768 = vsel %vm1704, %v1672, %v1736
        %v1769 = vsel %vm1705, %v1673, %v1737
        %v1770 = vsel %vm1706, %v1674, %v1738
        %v1771 = vsel %vm1707, %v1675, %v1739
        %v1772 = vsel %vm1708, %v1676, %v1740
        %v1773 = vsel %vm1709, %v1677, %v1741
        %v1774 = vsel %vm1710, %v1678, %v1742
        %v1775 = vsel %vm1711, %v1679, %v1743
        %v1776 = vsel %vm1712, %v1680, %v1744
        %v1777 = vsel %vm1713, %v1681, %v1745
        %v1778 = vsel %vm1714, %v1682, %v1746
        %v1779 = vsel %vm1715, %v1683, %v1747
        %v1780 = vsel %vm1716, %v1684, %v1748
        %v1781 = vsel %vm1717, %v1685, %v1749
        %v1782 = vsel %vm1718, %v1686, %v1750
        %v1783 = vsel %vm1719, %v1687, %v1751
        %v1784 = vsel %vm1720, %v1688, %v1752
        %v1785 = vsel %vm1721, %v1689, %v1753
        %v1786 = vsel %vm1722, %v1690, %v1754
        %v1787 = vsel %vm1723, %v1691, %v1755
        %v1788 = vsel %vm1724, %v1692, %v1756
        %v1789 = vsel %vm1725, %v1693, %v1757
        %v1790 = vsel %vm1726, %v1694, %v1758
        %v1791 = vsel %vm1727, %v1695, %v1759
        %v1792 = vsel %vm1728, %v1696, %v1760
        %v1793 = vsel %vm1729, %v1697, %v1761
        %v1794 = vsel %vm1730, %v1698, %v1762
        %v1795 = vsel %vm1731, %v1699, %v1763
        %v1796 = vsel %vm1732, %v1700, %v1764
        %v1797 = vsel %vm1733, %v1701, %v1765
        %v1798 = vmul.f32 %v936, 0.5
        %v1799 = vmul.f32 %v938, 0.5
        %v1800 = vmul.f32 %v942, 0.5
        %v1801 = vmul.f32 %v944, 0.5
        %v1802 = vmul.f32 %v948, 0.5
        %v1803 = vmul.f32 %v950, 0.5
        %v1804 = vmul.f32 %v954, 0.5
        %v1805 = vmul.f32 %v956, 0.5
        %v1806 = vmul.f32 %v960, 0.5
        %v1807 = vmul.f32 %v962, 0.5
        %v1808 = vmul.f32 %v966, 0.5
        %v1809 = vmul.f32 %v968, 0.5
        %v1810 = vmul.f32 %v972, 0.5
        %v1811 = vmul.f32 %v974, 0.5
        %v1812 = vmul.f32 %v978, 0.5
        %v1813 = vmul.f32 %v980, 0.5
        %v1814 = vmul.f32 %v984, 0.5
        %v1815 = vmul.f32 %v986, 0.5
        %v1816 = vmul.f32 %v990, 0.5
        %v1817 = vmul.f32 %v992, 0.5
        %v1818 = vmul.f32 %v996, 0.5
        %v1819 = vmul.f32 %v998, 0.5
        %v1820 = vmul.f32 %v1002, 0.5
        %v1821 = vmul.f32 %v1004, 0.5
        %v1822 = vmul.f32 %v1008, 0.5
        %v1823 = vmul.f32 %v1010, 0.5
        %v1824 = vmul.f32 %v1014, 0.5
        %v1825 = vmul.f32 %v1016, 0.5
        %v1826 = vmul.f32 %v1020, 0.5
        %v1827 = vmul.f32 %v1022, 0.5
        %v1828 = vmul.f32 %v1026, 0.5
        %v1829 = vmul.f32 %v1028, 0.5
        %v1830 = vadd.f32 %v1766, 1.0
        %v1831 = vadd.f32 %v1767, 1.0
        %v1832 = vadd.f32 %v1768, 1.0
        %v1833 = vadd.f32 %v1769, 1.0
        %v1834 = vadd.f32 %v1770, 1.0
        %v1835 = vadd.f32 %v1771, 1.0
        %v1836 = vadd.f32 %v1772, 1.0
        %v1837 = vadd.f32 %v1773, 1.0
        %v1838 = vadd.f32 %v1774, 1.0
        %v1839 = vadd.f32 %v1775, 1.0
        %v1840 = vadd.f32 %v1776, 1.0
        %v1841 = vadd.f32 %v1777, 1.0
        %v1842 = vadd.f32 %v1778, 1.0
        %v1843 = vadd.f32 %v1779, 1.0
        %v1844 = vadd.f32 %v1780, 1.0
        %v1845 = vadd.f32 %v1781, 1.0
        %v1846 = vadd.f32 %v1782, 1.0
        %v1847 = vadd.f32 %v1783, 1.0
        %v1848 = vadd.f32 %v1784, 1.0
        %v1849 = vadd.f32 %v1785, 1.0
        %v1850 = vadd.f32 %v1786, 1.0
        %v1851 = vadd.f32 %v1787, 1.0
        %v1852 = vadd.f32 %v1788, 1.0
        %v1853 = vadd.f32 %v1789, 1.0
        %v1854 = vadd.f32 %v1790, 1.0
        %v1855 = vadd.f32 %v1791, 1.0
        %v1856 = vadd.f32 %v1792, 1.0
        %v1857 = vadd.f32 %v1793, 1.0
        %v1858 = vadd.f32 %v1794, 1.0
        %v1859 = vadd.f32 %v1795, 1.0
        %v1860 = vadd.f32 %v1796, 1.0
        %v1861 = vadd.f32 %v1797, 1.0
        %v1862 = vmul.f32 %v1798, %v1830
        %v1863 = vmul.f32 %v1799, %v1831
        %v1864 = vmul.f32 %v1800, %v1832
        %v1865 = vmul.f32 %v1801, %v1833
        %v1866 = vmul.f32 %v1802, %v1834
        %v1867 = vmul.f32 %v1803, %v1835
        %v1868 = vmul.f32 %v1804, %v1836
        %v1869 = vmul.f32 %v1805, %v1837
        %v1870 = vmul.f32 %v1806, %v1838
        %v1871 = vmul.f32 %v1807, %v1839
        %v1872 = vmul.f32 %v1808, %v1840
        %v1873 = vmul.f32 %v1809, %v1841
        %v1874 = vmul.f32 %v1810, %v1842
        %v1875 = vmul.f32 %v1811, %v1843
        %v1876 = vmul.f32 %v1812, %v1844
        %v1877 = vmul.f32 %v1813, %v1845
        %v1878 = vmul.f32 %v1814, %v1846
        %v1879 = vmul.f32 %v1815, %v1847
        %v1880 = vmul.f32 %v1816, %v1848
        %v1881 = vmul.f32 %v1817, %v1849
        %v1882 = vmul.f32 %v1818, %v1850
        %v1883 = vmul.f32 %v1819, %v1851
        %v1884 = vmul.f32 %v1820, %v1852
        %v1885 = vmul.f32 %v1821, %v1853
        %v1886 = vmul.f32 %v1822, %v1854
        %v1887 = vmul.f32 %v1823, %v1855
        %v1888 = vmul.f32 %v1824, %v1856
        %v1889 = vmul.f32 %v1825, %v1857
        %v1890 = vmul.f32 %v1826, %v1858
        %v1891 = vmul.f32 %v1827, %v1859
        %v1892 = vmul.f32 %v1828, %v1860
        %v1893 = vmul.f32 %v1829, %v1861
        %v1894 = vld [vmem:[%s6] sm:$0xff]
        %v1895 = vld [vmem:[%s6 + $0x8] sm:$0xff]
        %v1896 = vld [vmem:[%s6 + $0x10] sm:$0xff]
        %v1897 = vld [vmem:[%s6 + $0x18] sm:$0xff]
        %v1898 = vld [vmem:[%s6 + $0x20] sm:$0xff]
        %v1899 = vld [vmem:[%s6 + $0x28] sm:$0xff]
        %v1900 = vld [vmem:[%s6 + $0x30] sm:$0xff]
        %v1901 = vld [vmem:[%s6 + $0x38] sm:$0xff]
        %v1902 = vld [vmem:[%s7] sm:$0xff]
        %v1903 = vld [vmem:[%s7 + $0x8] sm:$0xff]
        %v1904 = vld [vmem:[%s7 + $0x10] sm:$0xff]
        %v1905 = vld [vmem:[%s7 + $0x18] sm:$0xff]
        %v1906 = vld [vmem:[%s7 + $0x20] sm:$0xff]
        %v1907 = vld [vmem:[%s7 + $0x28] sm:$0xff]
        %v1908 = vld [vmem:[%s7 + $0x30] sm:$0xff]
        %v1909 = vld [vmem:[%s7 + $0x38] sm:$0xff]
        %1911 = vset.pattern.permute.xlu0 0
        %1912 = vperm.xlu0 %1911, %v1902
        %v1913 = vpop.permute.xlu0 %1912
        %1916 = vset.pattern.permute.xlu0 0
        %1917 = vperm.xlu0 %1916, %v1903
        %v1918 = vpop.permute.xlu0 %1917
        %1921 = vset.pattern.permute.xlu0 0
        %1922 = vperm.xlu0 %1921, %v1904
        %v1923 = vpop.permute.xlu0 %1922
        %1926 = vset.pattern.permute.xlu0 0
        %1927 = vperm.xlu0 %1926, %v1905
        %v1928 = vpop.permute.xlu0 %1927
        %1931 = vset.pattern.permute.xlu0 0
        %1932 = vperm.xlu0 %1931, %v1906
        %v1933 = vpop.permute.xlu0 %1932
        %1936 = vset.pattern.permute.xlu0 0
        %1937 = vperm.xlu0 %1936, %v1907
        %v1938 = vpop.permute.xlu0 %1937
        %1941 = vset.pattern.permute.xlu0 0
        %1942 = vperm.xlu0 %1941, %v1908
        %v1943 = vpop.permute.xlu0 %1942
        %1946 = vset.pattern.permute.xlu0 0
        %1947 = vperm.xlu0 %1946, %v1909
        %v1948 = vpop.permute.xlu0 %1947
        %1950 = vmatprep.subr.mxu0 %v1863
        %1951 = vmatpush1.msra.mxu0 %v1862
        %1952 = vmatprep.subr.mxu0 %v1865
        %1953 = vmatpush1.msra.mxu0 %v1864
        %1954 = vmatprep.subr.mxu0 %v1867
        %1955 = vmatpush1.msra.mxu0 %v1866
        %1956 = vmatprep.subr.mxu0 %v1869
        %1957 = vmatpush1.msra.mxu0 %v1868
        %1958 = vmatprep.subr.mxu0 %v1871
        %1959 = vmatpush1.msra.mxu0 %v1870
        %1960 = vmatprep.subr.mxu0 %v1873
        %1961 = vmatpush1.msra.mxu0 %v1872
        %1962 = vmatprep.subr.mxu0 %v1875
        %1963 = vmatpush1.msra.mxu0 %v1874
        %1964 = vmatprep.subr.mxu0 %v1877
        %1965 = vmatpush1.msra.mxu0 %v1876
        %1966 = vmatprep.subr.mxu0 %v1879
        %1967 = vmatpush1.msra.mxu0 %v1878
        %1968 = vmatprep.subr.mxu0 %v1881
        %1969 = vmatpush1.msra.mxu0 %v1880
        %1970 = vmatprep.subr.mxu0 %v1883
        %1971 = vmatpush1.msra.mxu0 %v1882
        %1972 = vmatprep.subr.mxu0 %v1885
        %1973 = vmatpush1.msra.mxu0 %v1884
        %1974 = vmatprep.subr.mxu0 %v1887
        %1975 = vmatpush1.msra.mxu0 %v1886
        %1976 = vmatprep.subr.mxu0 %v1889
        %1977 = vmatpush1.msra.mxu0 %v1888
        %1978 = vmatprep.subr.mxu0 %v1891
        %1979 = vmatpush1.msra.mxu0 %v1890
        %1980 = vmatprep.subr.mxu0 %v1893
        %1981 = vmatpush1.msra.mxu0 %v1892
        %1982 = vmatprep.subr.mxu0 0.0
        %1983 = vmatpush1.msra.mxu0 0.0
        %1984 = vmatprep.subr.mxu0 0.0
        %1985 = vmatpush1.msra.mxu0 0.0
        %1986 = vmatprep.subr.mxu0 0.0
        %1987 = vmatpush1.msra.mxu0 0.0
        %1988 = vmatprep.subr.mxu0 0.0
        %1989 = vmatpush1.msra.mxu0 0.0
        %1990 = vmatprep.subr.mxu0 0.0
        %1991 = vmatpush1.msra.mxu0 0.0
        %1992 = vmatprep.subr.mxu0 0.0
        %1993 = vmatpush1.msra.mxu0 0.0
        %1994 = vmatprep.subr.mxu0 0.0
        %1995 = vmatpush1.msra.mxu0 0.0
        %1996 = vmatprep.subr.mxu0 0.0
        %1997 = vmatpush1.msra.mxu0 0.0
        %1998 = vmatprep.subr.mxu0 0.0
        %1999 = vmatpush1.msra.mxu0 0.0
        %2000 = vmatprep.subr.mxu0 0.0
        %2001 = vmatpush1.msra.mxu0 0.0
        %2002 = vmatprep.subr.mxu0 0.0
        %2003 = vmatpush1.msra.mxu0 0.0
        %2004 = vmatprep.subr.mxu0 0.0
        %2005 = vmatpush1.msra.mxu0 0.0
        %2006 = vmatprep.subr.mxu0 0.0
        %2007 = vmatpush1.msra.mxu0 0.0
        %2008 = vmatprep.subr.mxu0 0.0
        %2009 = vmatpush1.msra.mxu0 0.0
        %2010 = vmatprep.subr.mxu0 0.0
        %2011 = vmatpush1.msra.mxu0 0.0
        %2012 = vmatprep.subr.mxu0 0.0
        %2013 = vmatpush1.msra.mxu0 0.0
        %2014 = vmatprep.mubr.f32.mxu0 0.0
        %2015 = vmatmul.mubr.f32.gmra.mrb[0].mxu0 %v1894
        %v2016 = vpop.f32.mrb[0].mxu0
        %v2017 = vadd.f32 %v1913, %v2016
        %v2018 = vpop.f32.mrb[0].mxu0
        %v2019 = vadd.f32 %v1913, %v2018
        %2020 = vmatprep.mubr.f32.mxu0 0.0
        %2021 = vmatmul.mubr.f32.gmra.mrb[0].mxu0 %v1895
        %v2022 = vpop.f32.mrb[0].mxu0
        %v2023 = vadd.f32 %v1918, %v2022
        %v2024 = vpop.f32.mrb[0].mxu0
        %v2025 = vadd.f32 %v1918, %v2024
        %2026 = vmatprep.mubr.f32.mxu0 0.0
        %2027 = vmatmul.mubr.f32.gmra.mrb[0].mxu0 %v1896
        %v2028 = vpop.f32.mrb[0].mxu0
        %v2029 = vadd.f32 %v1923, %v2028
        %v2030 = vpop.f32.mrb[0].mxu0
        %v2031 = vadd.f32 %v1923, %v2030
        %2032 = vmatprep.mubr.f32.mxu0 0.0
        %2033 = vmatmul.mubr.f32.gmra.mrb[0].mxu0 %v1897
        %v2034 = vpop.f32.mrb[0].mxu0
        %v2035 = vadd.f32 %v1928, %v2034
        %v2036 = vpop.f32.mrb[0].mxu0
        %v2037 = vadd.f32 %v1928, %v2036
        %2038 = vmatprep.mubr.f32.mxu0 0.0
        %2039 = vmatmul.mubr.f32.gmra.mrb[0].mxu0 %v1898
        %v2040 = vpop.f32.mrb[0].mxu0
        %v2041 = vadd.f32 %v1933, %v2040
        %v2042 = vpop.f32.mrb[0].mxu0
        %v2043 = vadd.f32 %v1933, %v2042
        %2044 = vmatprep.mubr.f32.mxu0 0.0
        %2045 = vmatmul.mubr.f32.gmra.mrb[0].mxu0 %v1899
        %v2046 = vpop.f32.mrb[0].mxu0
        %v2047 = vadd.f32 %v1938, %v2046
        %v2048 = vpop.f32.mrb[0].mxu0
        %v2049 = vadd.f32 %v1938, %v2048
        %2050 = vmatprep.mubr.f32.mxu0 0.0
        %2051 = vmatmul.mubr.f32.gmra.mrb[0].mxu0 %v1900
        %v2052 = vpop.f32.mrb[0].mxu0
        %v2053 = vadd.f32 %v1943, %v2052
        %v2054 = vpop.f32.mrb[0].mxu0
        %v2055 = vadd.f32 %v1943, %v2054
        %2056 = vmatprep.mubr.f32.mxu0 0.0
        %2057 = vmatmul.mubr.f32.gmra.mrb[0].mxu0 %v1901
        %v2058 = vpop.f32.mrb[0].mxu0
        %v2059 = vadd.f32 %v1948, %v2058
        %v2060 = vpop.f32.mrb[0].mxu0
        %v2061 = vadd.f32 %v1948, %v2060
        %2062 = vdwg.mxu0
        %v2063 = vadd.f32 %v455, %v2017
        %v2064 = vadd.f32 %v456, %v2019
        %v2065 = vadd.f32 %v457, %v2023
        %v2066 = vadd.f32 %v458, %v2025
        %v2067 = vadd.f32 %v459, %v2029
        %v2068 = vadd.f32 %v460, %v2031
        %v2069 = vadd.f32 %v461, %v2035
        %v2070 = vadd.f32 %v462, %v2037
        %v2071 = vadd.f32 %v463, %v2041
        %v2072 = vadd.f32 %v464, %v2043
        %v2073 = vadd.f32 %v465, %v2047
        %v2074 = vadd.f32 %v466, %v2049
        %v2075 = vadd.f32 %v467, %v2053
        %v2076 = vadd.f32 %v468, %v2055
        %v2077 = vadd.f32 %v469, %v2059
        %v2078 = vadd.f32 %v470, %v2061
        %2079 = vst [vmem:[%s419] sm:$0xff] %v2063
        %2080 = vst [vmem:[%s419 + $0x8] sm:$0xff] %v2064
        %2081 = vst [vmem:[%s419 + $0x10] sm:$0xff] %v2065
        %2082 = vst [vmem:[%s419 + $0x18] sm:$0xff] %v2066
        %2083 = vst [vmem:[%s419 + $0x20] sm:$0xff] %v2067
        %2084 = vst [vmem:[%s419 + $0x28] sm:$0xff] %v2068
        %2085 = vst [vmem:[%s419 + $0x30] sm:$0xff] %v2069
        %2086 = vst [vmem:[%s419 + $0x38] sm:$0xff] %v2070
        %2087 = vst [vmem:[%s419 + $0x40] sm:$0xff] %v2071
        %2088 = vst [vmem:[%s419 + $0x48] sm:$0xff] %v2072
        %2089 = vst [vmem:[%s419 + $0x50] sm:$0xff] %v2073
        %2090 = vst [vmem:[%s419 + $0x58] sm:$0xff] %v2074
        %2091 = vst [vmem:[%s419 + $0x60] sm:$0xff] %v2075
        %2092 = vst [vmem:[%s419 + $0x68] sm:$0xff] %v2076
        %2093 = vst [vmem:[%s419 + $0x70] sm:$0xff] %v2077
        %2094 = vst [vmem:[%s419 + $0x78] sm:$0xff] %v2078
        %s2095 = sand.u32 %s205, 1
        %s2096 = sand.u32 %s205, 1
        %s2097 = smul.addr %s2096, 128
        %s2098 = scalar_lea.vmem [#allocation4], %s2097
        // Predicated region
        $region99: #{swin_model.8} parent=89 // pred_check
          %p2099 = pneg %p215
        $region100: #{swin_model.8} parent=89 // pred_check_branch
          %2101 = sbr.rel (%p2099) target = $region102
        $region101: #{swin_model.8} parent=89 // pred_region
          %s2102 = smul.u32 2, %s19
          %s2103 = smul.addr %s2102, 8
          %s2104 = scalar_lea.vmem %s8, %s2103
          // Predicated region
          $region103: #{swin_model.8} parent=101 // pred_check
            _
          $region104: #{swin_model.8} parent=101 // pred_check_branch
            %2106 = sbr.rel (0) target = $region106
          $region105: #{swin_model.8} parent=101 // pred_region
            // Predicated region
            $region107: #{swin_model.8} parent=105 // pred_check
              _
            $region108: #{swin_model.8} parent=105 // pred_check_branch
              %2108 = sbr.rel (0) target = $region110
            $region109: #{swin_model.8} parent=105 // pred_region
              loop: start=0, step=1, limit=1
              $region111: #{swin_model.8} parent=109 // loop_pre_header
                _
              $region112: #{swin_model.8} parent=109 // loop_header
                %s2110 = sphi 0, %s2114
                %p2111 = scmp.ge.s32.totalorder %s2110, 1
                %s2115 = sphi %s2098, %s2098
                %s2116 = sphi %s2104, %s2104
              $region113: #{swin_model.8} parent=109 // loop_header_branch
                %2113 = sbr.rel (%p2111) target = $region117
              $region114: #{swin_model.8} parent=109 // loop_body
                %v2117 = vld [vmem:[%s2115] sm:$0xff]
                %2118 = vst [vmem:[%s2116] sm:$0xff] %v2117
                %v2119 = vld [vmem:[%s2115 + $0x8] sm:$0xff]
                %2120 = vst [vmem:[%s2116 + $0x8] sm:$0xff] %v2119
                %v2121 = vld [vmem:[%s2115 + $0x10] sm:$0xff]
                %2122 = vst [vmem:[%s2116 + $0x20] sm:$0xff] %v2121
                %v2123 = vld [vmem:[%s2115 + $0x18] sm:$0xff]
                %2124 = vst [vmem:[%s2116 + $0x28] sm:$0xff] %v2123
                %v2125 = vld [vmem:[%s2115 + $0x20] sm:$0xff]
                %2126 = vst [vmem:[%s2116 + $0x40] sm:$0xff] %v2125
                %v2127 = vld [vmem:[%s2115 + $0x28] sm:$0xff]
                %2128 = vst [vmem:[%s2116 + $0x48] sm:$0xff] %v2127
                %v2129 = vld [vmem:[%s2115 + $0x30] sm:$0xff]
                %2130 = vst [vmem:[%s2116 + $0x60] sm:$0xff] %v2129
                %v2131 = vld [vmem:[%s2115 + $0x38] sm:$0xff]
                %2132 = vst [vmem:[%s2116 + $0x68] sm:$0xff] %v2131
                %v2133 = vld [vmem:[%s2115 + $0x40] sm:$0xff]
                %2134 = vst [vmem:[%s2116 + $0x80] sm:$0xff] %v2133
                %v2135 = vld [vmem:[%s2115 + $0x48] sm:$0xff]
                %2136 = vst [vmem:[%s2116 + $0x88] sm:$0xff] %v2135
                %v2137 = vld [vmem:[%s2115 + $0x50] sm:$0xff]
                %2138 = vst [vmem:[%s2116 + $0xa0] sm:$0xff] %v2137
                %v2139 = vld [vmem:[%s2115 + $0x58] sm:$0xff]
                %2140 = vst [vmem:[%s2116 + $0xa8] sm:$0xff] %v2139
                %v2141 = vld [vmem:[%s2115 + $0x60] sm:$0xff]
                %2142 = vst [vmem:[%s2116 + $0xc0] sm:$0xff] %v2141
                %v2143 = vld [vmem:[%s2115 + $0x68] sm:$0xff]
                %2144 = vst [vmem:[%s2116 + $0xc8] sm:$0xff] %v2143
                %v2145 = vld [vmem:[%s2115 + $0x70] sm:$0xff]
                %2146 = vst [vmem:[%s2116 + $0xe0] sm:$0xff] %v2145
                %v2147 = vld [vmem:[%s2115 + $0x78] sm:$0xff]
                %2148 = vst [vmem:[%s2116 + $0xe8] sm:$0xff] %v2147
              $region115: #{swin_model.8} parent=109 // loop_footer
                %s2114 = sadd.s32 1, %s2110
              $region116: #{swin_model.8} parent=109 // loop_footer_branch
                %2109 = sbr.rel target = $region112
              $region117: #{swin_model.8} parent=109 // loop_exit
                _
            $region110: #{swin_model.8} parent=105 // pred_fallthru
              _
            // Predicated region
            $region118: #{swin_model.8} parent=105 // pred_check
              _
            $region119: #{swin_model.8} parent=105 // pred_check_branch
              %2150 = sbr.rel target = $region121
            $region120: #{swin_model.8} parent=105 // pred_region
              _
            $region121: #{swin_model.8} parent=105 // pred_fallthru
              _
          $region106: #{swin_model.8} parent=101 // pred_fallthru
            _
          %2151 = vnop
        $region102: #{swin_model.8} parent=89 // pred_fallthru
          _
      $region90: #{swin_model.8} parent=5 // pred_fallthru
        _
      %p2152 = scmp.le.s32.totalorder 2, %s14
      // Predicated region
      $region122: #{swin_model.8} parent=5 // pred_check
        %p2153 = pneg %p2152
      $region123: #{swin_model.8} parent=5 // pred_check_branch
        %2155 = sbr.rel (%p2153) target = $region125
      $region124: #{swin_model.8} parent=5 // pred_region
        %s2156 = ssub.s32 %s14, 2
        // Predicated region
        $region126: #{swin_model.8} parent=124 // pred_check
          %p2157 = pneg %p221
        $region127: #{swin_model.8} parent=124 // pred_check_branch
          %2159 = sbr.rel (%p2157) target = $region129
        $region128: #{swin_model.8} parent=124 // pred_region
          %s2160 = sand.u32 %s206, 1
          %s2161 = sand.u32 %s206, 1
          %s2162 = smul.addr %s2161, 128
          %s2163 = scalar_lea.vmem [#allocation4], %s2162
        $region129: #{swin_model.8} parent=124 // pred_fallthru
          _
      $region125: #{swin_model.8} parent=5 // pred_fallthru
        _
    $region6: #{swin_model.8} parent=1 // loop_footer
      %s18 = sadd.s32 1, %s14
    $region7: #{swin_model.8} parent=1 // loop_footer_branch
      %13 = sbr.rel target = $region3
    $region8: #{swin_model.8} parent=1 // loop_exit
      _

// kernel: swin_model.7
$region0: #{swin_model.7}
  #allocation0 [shape = 'u32[]', space=smem, size = 0x4, offset = 0x4, fixed_abs, tag = 'smem constant byte address 0x4 - core index']
  #allocation1 [shape = 'u32[144,128]{1,0:T(1,128)}', space=vmem, size = 0x12000, scoped, tag = 'internal scratch']
  %s0 = inlined_call_operand.vmem [shape: f32[64,512], index: 0, kind: input, shape index: {}]
  %s1 = inlined_call_operand.vmem [shape: f32[192,64], index: 1, kind: input, shape index: {}]
  %s2 = inlined_call_operand.vmem [shape: f32[192,1], index: 2, kind: input, shape index: {}]
  %s3 = inlined_call_operand.vmem [shape: f32[64,64], index: 3, kind: input, shape index: {}]
  %s4 = inlined_call_operand.vmem [shape: f32[64,1], index: 4, kind: input, shape index: {}, may-alias: {4,6}]
  %s5 = inlined_call_operand.vmem [shape: f32[64,1], index: 5, kind: input, shape index: {}]
  %s6 = inlined_call_operand.vmem [shape: f32[64,1], index: 6, kind: input, shape index: {}, may-alias: {4,6}]
  %s7 = inlined_call_operand.vmem [shape: f32[128,1], index: 7, kind: input, shape index: {}]
  %s8 = inlined_call_operand.vmem [shape: f32[64,512], index: 8, kind: output, shape index: {}]
  %s9 = sld [smem:[#allocation0]]
  $region42: #{swin_model.7} parent=0
    _
  %s11 = ssub.s32 1, %s9
  %s12 = scalar_select 0, %s11, %s9
  // Predicated region
  $region2: #{swin_model.7} parent=0 // pred_check
    _
  $region3: #{swin_model.7} parent=0 // pred_check_branch
    %14 = sbr.rel (0) target = $region5
  $region4: #{swin_model.7} parent=0 // pred_region
    _
  $region5: #{swin_model.7} parent=0 // pred_fallthru
    _
  // Predicated region
  $region6: #{swin_model.7} parent=0 // pred_check
    _
  $region7: #{swin_model.7} parent=0 // pred_check_branch
    %16 = sbr.rel (0) target = $region9
  $region8: #{swin_model.7} parent=0 // pred_region
    _
  $region9: #{swin_model.7} parent=0 // pred_fallthru
    _
  // Predicated region
  $region10: #{swin_model.7} parent=0 // pred_check
    _
  $region11: #{swin_model.7} parent=0 // pred_check_branch
    %18 = sbr.rel (0) target = $region13
  $region12: #{swin_model.7} parent=0 // pred_region
    _
  $region13: #{swin_model.7} parent=0 // pred_fallthru
    _
  // Predicated region
  $region14: #{swin_model.7} parent=0 // pred_check
    _
  $region15: #{swin_model.7} parent=0 // pred_check_branch
    %20 = sbr.rel (0) target = $region17
  $region16: #{swin_model.7} parent=0 // pred_region
    _
  $region17: #{swin_model.7} parent=0 // pred_fallthru
    _
  // Predicated region
  $region18: #{swin_model.7} parent=0 // pred_check
    _
  $region19: #{swin_model.7} parent=0 // pred_check_branch
    %22 = sbr.rel (0) target = $region21
  $region20: #{swin_model.7} parent=0 // pred_region
    _
  $region21: #{swin_model.7} parent=0 // pred_fallthru
    _
  // Predicated region
  $region22: #{swin_model.7} parent=0 // pred_check
    _
  $region23: #{swin_model.7} parent=0 // pred_check_branch
    %24 = sbr.rel (0) target = $region25
  $region24: #{swin_model.7} parent=0 // pred_region
    _
  $region25: #{swin_model.7} parent=0 // pred_fallthru
    _
  // Predicated region
  $region26: #{swin_model.7} parent=0 // pred_check
    _
  $region27: #{swin_model.7} parent=0 // pred_check_branch
    %26 = sbr.rel (0) target = $region29
  $region28: #{swin_model.7} parent=0 // pred_region
    _
  $region29: #{swin_model.7} parent=0 // pred_fallthru
    _
  // Predicated region
  $region30: #{swin_model.7} parent=0 // pred_check
    _
  $region31: #{swin_model.7} parent=0 // pred_check_branch
    %28 = sbr.rel (0) target = $region33
  $region32: #{swin_model.7} parent=0 // pred_region
    _
  $region33: #{swin_model.7} parent=0 // pred_fallthru
    _
  %v29 = vld [vmem:[%s0] sm:$0xff]
  %v30 = vld [vmem:[%s0 + $0x8] sm:$0xff]
  %v31 = vld [vmem:[%s0 + $0x10] sm:$0xff]
  %v32 = vld [vmem:[%s0 + $0x18] sm:$0xff]
  %v33 = vld [vmem:[%s0 + $0x20] sm:$0xff]
  %v34 = vld [vmem:[%s0 + $0x28] sm:$0xff]
  %v35 = vld [vmem:[%s0 + $0x30] sm:$0xff]
  %v36 = vld [vmem:[%s0 + $0x38] sm:$0xff]
  %v37 = vld [vmem:[%s0 + $0x40] sm:$0xff]
  %v38 = vld [vmem:[%s0 + $0x48] sm:$0xff]
  %v39 = vld [vmem:[%s0 + $0x50] sm:$0xff]
  %v40 = vld [vmem:[%s0 + $0x58] sm:$0xff]
  %v41 = vld [vmem:[%s0 + $0x60] sm:$0xff]
  %v42 = vld [vmem:[%s0 + $0x68] sm:$0xff]
  %v43 = vld [vmem:[%s0 + $0x70] sm:$0xff]
  %v44 = vld [vmem:[%s0 + $0x78] sm:$0xff]
  %v45 = vld [vmem:[%s0 + $0x80] sm:$0xff]
  %v46 = vld [vmem:[%s0 + $0x88] sm:$0xff]
  %v47 = vld [vmem:[%s0 + $0x90] sm:$0xff]
  %v48 = vld [vmem:[%s0 + $0x98] sm:$0xff]
  %v49 = vld [vmem:[%s0 + $0xa0] sm:$0xff]
  %v50 = vld [vmem:[%s0 + $0xa8] sm:$0xff]
  %v51 = vld [vmem:[%s0 + $0xb0] sm:$0xff]
  %v52 = vld [vmem:[%s0 + $0xb8] sm:$0xff]
  %v53 = vld [vmem:[%s0 + $0xc0] sm:$0xff]
  %v54 = vld [vmem:[%s0 + $0xc8] sm:$0xff]
  %v55 = vld [vmem:[%s0 + $0xd0] sm:$0xff]
  %v56 = vld [vmem:[%s0 + $0xd8] sm:$0xff]
  %v57 = vld [vmem:[%s0 + $0xe0] sm:$0xff]
  %v58 = vld [vmem:[%s0 + $0xe8] sm:$0xff]
  %v59 = vld [vmem:[%s0 + $0xf0] sm:$0xff]
  %v60 = vld [vmem:[%s0 + $0xf8] sm:$0xff]
  %v61 = vadd.f32 %v29, %v33
  %v62 = vadd.f32 %v61, %v37
  %v63 = vadd.f32 %v62, %v41
  %v64 = vadd.f32 %v63, %v45
  %v65 = vadd.f32 %v64, %v49
  %v66 = vadd.f32 %v65, %v53
  %v67 = vadd.f32 %v66, %v57
  %v68 = vrot.slane %v67, 4
  %v69 = vadd.f32 %v67, %v68
  %v70 = vrot.slane %v69, 2
  %v71 = vadd.f32 %v69, %v70
  %v72 = vrot.slane %v71, 1
  %v73 = vadd.f32 %v71, %v72
  %v74 = vadd.f32 %v30, %v34
  %v75 = vadd.f32 %v74, %v38
  %v76 = vadd.f32 %v75, %v42
  %v77 = vadd.f32 %v76, %v46
  %v78 = vadd.f32 %v77, %v50
  %v79 = vadd.f32 %v78, %v54
  %v80 = vadd.f32 %v79, %v58
  %v81 = vrot.slane %v80, 4
  %v82 = vadd.f32 %v80, %v81
  %v83 = vrot.slane %v82, 2
  %v84 = vadd.f32 %v82, %v83
  %v85 = vrot.slane %v84, 1
  %v86 = vadd.f32 %v84, %v85
  %v87 = vadd.f32 %v31, %v35
  %v88 = vadd.f32 %v87, %v39
  %v89 = vadd.f32 %v88, %v43
  %v90 = vadd.f32 %v89, %v47
  %v91 = vadd.f32 %v90, %v51
  %v92 = vadd.f32 %v91, %v55
  %v93 = vadd.f32 %v92, %v59
  %v94 = vrot.slane %v93, 4
  %v95 = vadd.f32 %v93, %v94
  %v96 = vrot.slane %v95, 2
  %v97 = vadd.f32 %v95, %v96
  %v98 = vrot.slane %v97, 1
  %v99 = vadd.f32 %v97, %v98
  %v100 = vadd.f32 %v32, %v36
  %v101 = vadd.f32 %v100, %v40
  %v102 = vadd.f32 %v101, %v44
  %v103 = vadd.f32 %v102, %v48
  %v104 = vadd.f32 %v103, %v52
  %v105 = vadd.f32 %v104, %v56
  %v106 = vadd.f32 %v105, %v60
  %v107 = vrot.slane %v106, 4
  %v108 = vadd.f32 %v106, %v107
  %v109 = vrot.slane %v108, 2
  %v110 = vadd.f32 %v108, %v109
  %v111 = vrot.slane %v110, 1
  %v112 = vadd.f32 %v110, %v111
  %v113 = vrcp.pop 64.0
  %v114 = vmul.f32 %v73, %v113
  %v115 = vmul.f32 %v86, %v113
  %v116 = vmul.f32 %v99, %v113
  %v117 = vmul.f32 %v112, %v113
  %v118 = vsub.f32 %v29, %v114
  %v119 = vsub.f32 %v30, %v115
  %v120 = vsub.f32 %v31, %v116
  %v121 = vsub.f32 %v32, %v117
  %v122 = vsub.f32 %v33, %v114
  %v123 = vsub.f32 %v34, %v115
  %v124 = vsub.f32 %v35, %v116
  %v125 = vsub.f32 %v36, %v117
  %v126 = vsub.f32 %v37, %v114
  %v127 = vsub.f32 %v38, %v115
  %v128 = vsub.f32 %v39, %v116
  %v129 = vsub.f32 %v40, %v117
  %v130 = vsub.f32 %v41, %v114
  %v131 = vsub.f32 %v42, %v115
  %v132 = vsub.f32 %v43, %v116
  %v133 = vsub.f32 %v44, %v117
  %v134 = vsub.f32 %v45, %v114
  %v135 = vsub.f32 %v46, %v115
  %v136 = vsub.f32 %v47, %v116
  %v137 = vsub.f32 %v48, %v117
  %v138 = vsub.f32 %v49, %v114
  %v139 = vsub.f32 %v50, %v115
  %v140 = vsub.f32 %v51, %v116
  %v141 = vsub.f32 %v52, %v117
  %v142 = vsub.f32 %v53, %v114
  %v143 = vsub.f32 %v54, %v115
  %v144 = vsub.f32 %v55, %v116
  %v145 = vsub.f32 %v56, %v117
  %v146 = vsub.f32 %v57, %v114
  %v147 = vsub.f32 %v58, %v115
  %v148 = vsub.f32 %v59, %v116
  %v149 = vsub.f32 %v60, %v117
  %v150 = vmul.f32 %v118, %v118
  %v151 = vmul.f32 %v119, %v119
  %v152 = vmul.f32 %v120, %v120
  %v153 = vmul.f32 %v121, %v121
  %v154 = vmul.f32 %v122, %v122
  %v155 = vmul.f32 %v123, %v123
  %v156 = vmul.f32 %v124, %v124
  %v157 = vmul.f32 %v125, %v125
  %v158 = vmul.f32 %v126, %v126
  %v159 = vmul.f32 %v127, %v127
  %v160 = vmul.f32 %v128, %v128
  %v161 = vmul.f32 %v129, %v129
  %v162 = vmul.f32 %v130, %v130
  %v163 = vmul.f32 %v131, %v131
  %v164 = vmul.f32 %v132, %v132
  %v165 = vmul.f32 %v133, %v133
  %v166 = vmul.f32 %v134, %v134
  %v167 = vmul.f32 %v135, %v135
  %v168 = vmul.f32 %v136, %v136
  %v169 = vmul.f32 %v137, %v137
  %v170 = vmul.f32 %v138, %v138
  %v171 = vmul.f32 %v139, %v139
  %v172 = vmul.f32 %v140, %v140
  %v173 = vmul.f32 %v141, %v141
  %v174 = vmul.f32 %v142, %v142
  %v175 = vmul.f32 %v143, %v143
  %v176 = vmul.f32 %v144, %v144
  %v177 = vmul.f32 %v145, %v145
  %v178 = vmul.f32 %v146, %v146
  %v179 = vmul.f32 %v147, %v147
  %v180 = vmul.f32 %v148, %v148
  %v181 = vmul.f32 %v149, %v149
  %v182 = vadd.f32 %v150, %v154
  %v183 = vadd.f32 %v182, %v158
  %v184 = vadd.f32 %v183, %v162
  %v185 = vadd.f32 %v184, %v166
  %v186 = vadd.f32 %v185, %v170
  %v187 = vadd.f32 %v186, %v174
  %v188 = vadd.f32 %v187, %v178
  %v189 = vrot.slane %v188, 4
  %v190 = vadd.f32 %v188, %v189
  %v191 = vrot.slane %v190, 2
  %v192 = vadd.f32 %v190, %v191
  %v193 = vrot.slane %v192, 1
  %v194 = vadd.f32 %v192, %v193
  %v195 = vadd.f32 %v151, %v155
  %v196 = vadd.f32 %v195, %v159
  %v197 = vadd.f32 %v196, %v163
  %v198 = vadd.f32 %v197, %v167
  %v199 = vadd.f32 %v198, %v171
  %v200 = vadd.f32 %v199, %v175
  %v201 = vadd.f32 %v200, %v179
  %v202 = vrot.slane %v201, 4
  %v203 = vadd.f32 %v201, %v202
  %v204 = vrot.slane %v203, 2
  %v205 = vadd.f32 %v203, %v204
  %v206 = vrot.slane %v205, 1
  %v207 = vadd.f32 %v205, %v206
  %v208 = vadd.f32 %v152, %v156
  %v209 = vadd.f32 %v208, %v160
  %v210 = vadd.f32 %v209, %v164
  %v211 = vadd.f32 %v210, %v168
  %v212 = vadd.f32 %v211, %v172
  %v213 = vadd.f32 %v212, %v176
  %v214 = vadd.f32 %v213, %v180
  %v215 = vrot.slane %v214, 4
  %v216 = vadd.f32 %v214, %v215
  %v217 = vrot.slane %v216, 2
  %v218 = vadd.f32 %v216, %v217
  %v219 = vrot.slane %v218, 1
  %v220 = vadd.f32 %v218, %v219
  %v221 = vadd.f32 %v153, %v157
  %v222 = vadd.f32 %v221, %v161
  %v223 = vadd.f32 %v222, %v165
  %v224 = vadd.f32 %v223, %v169
  %v225 = vadd.f32 %v224, %v173
  %v226 = vadd.f32 %v225, %v177
  %v227 = vadd.f32 %v226, %v181
  %v228 = vrot.slane %v227, 4
  %v229 = vadd.f32 %v227, %v228
  %v230 = vrot.slane %v229, 2
  %v231 = vadd.f32 %v229, %v230
  %v232 = vrot.slane %v231, 1
  %v233 = vadd.f32 %v231, %v232
  %v234 = vmul.f32 %v194, %v113
  %v235 = vmul.f32 %v207, %v113
  %v236 = vmul.f32 %v220, %v113
  %v237 = vmul.f32 %v233, %v113
  %v238 = vadd.f32 %v234, 1e-05
  %v239 = vadd.f32 %v235, 1e-05
  %v240 = vadd.f32 %v236, 1e-05
  %v241 = vadd.f32 %v237, 1e-05
  %v242 = vrsqrt.pop %v238
  %v243 = vrsqrt.pop %v239
  %v244 = vrsqrt.pop %v240
  %v245 = vrsqrt.pop %v241
  %v246 = vmul.f32 %v118, %v242
  %v247 = vmul.f32 %v119, %v243
  %v248 = vmul.f32 %v120, %v244
  %v249 = vmul.f32 %v121, %v245
  %v250 = vmul.f32 %v122, %v242
  %v251 = vmul.f32 %v123, %v243
  %v252 = vmul.f32 %v124, %v244
  %v253 = vmul.f32 %v125, %v245
  %v254 = vmul.f32 %v126, %v242
  %v255 = vmul.f32 %v127, %v243
  %v256 = vmul.f32 %v128, %v244
  %v257 = vmul.f32 %v129, %v245
  %v258 = vmul.f32 %v130, %v242
  %v259 = vmul.f32 %v131, %v243
  %v260 = vmul.f32 %v132, %v244
  %v261 = vmul.f32 %v133, %v245
  %v262 = vmul.f32 %v134, %v242
  %v263 = vmul.f32 %v135, %v243
  %v264 = vmul.f32 %v136, %v244
  %v265 = vmul.f32 %v137, %v245
  %v266 = vmul.f32 %v138, %v242
  %v267 = vmul.f32 %v139, %v243
  %v268 = vmul.f32 %v140, %v244
  %v269 = vmul.f32 %v141, %v245
  %v270 = vmul.f32 %v142, %v242
  %v271 = vmul.f32 %v143, %v243
  %v272 = vmul.f32 %v144, %v244
  %v273 = vmul.f32 %v145, %v245
  %v274 = vmul.f32 %v146, %v242
  %v275 = vmul.f32 %v147, %v243
  %v276 = vmul.f32 %v148, %v244
  %v277 = vmul.f32 %v149, %v245
  %v278 = vld [vmem:[%s5] sm:$0xff]
  %v279 = vld [vmem:[%s5 + $0x8] sm:$0xff]
  %v280 = vld [vmem:[%s5 + $0x10] sm:$0xff]
  %v281 = vld [vmem:[%s5 + $0x18] sm:$0xff]
  %v282 = vld [vmem:[%s5 + $0x20] sm:$0xff]
  %v283 = vld [vmem:[%s5 + $0x28] sm:$0xff]
  %v284 = vld [vmem:[%s5 + $0x30] sm:$0xff]
  %v285 = vld [vmem:[%s5 + $0x38] sm:$0xff]
  %287 = vset.pattern.permute.xlu0 0
  %288 = vperm.xlu0 %287, %v278
  %v289 = vpop.permute.xlu0 %288
  %292 = vset.pattern.permute.xlu0 0
  %293 = vperm.xlu0 %292, %v279
  %v294 = vpop.permute.xlu0 %293
  %297 = vset.pattern.permute.xlu0 0
  %298 = vperm.xlu0 %297, %v280
  %v299 = vpop.permute.xlu0 %298
  %302 = vset.pattern.permute.xlu0 0
  %303 = vperm.xlu0 %302, %v281
  %v304 = vpop.permute.xlu0 %303
  %307 = vset.pattern.permute.xlu0 0
  %308 = vperm.xlu0 %307, %v282
  %v309 = vpop.permute.xlu0 %308
  %312 = vset.pattern.permute.xlu0 0
  %313 = vperm.xlu0 %312, %v283
  %v314 = vpop.permute.xlu0 %313
  %317 = vset.pattern.permute.xlu0 0
  %318 = vperm.xlu0 %317, %v284
  %v319 = vpop.permute.xlu0 %318
  %322 = vset.pattern.permute.xlu0 0
  %323 = vperm.xlu0 %322, %v285
  %v324 = vpop.permute.xlu0 %323
  %v326 = vmul.f32 %v246, %v289
  %v327 = vmul.f32 %v247, %v289
  %v328 = vmul.f32 %v248, %v289
  %v329 = vmul.f32 %v249, %v289
  %v330 = vmul.f32 %v250, %v294
  %v331 = vmul.f32 %v251, %v294
  %v332 = vmul.f32 %v252, %v294
  %v333 = vmul.f32 %v253, %v294
  %v334 = vmul.f32 %v254, %v299
  %v335 = vmul.f32 %v255, %v299
  %v336 = vmul.f32 %v256, %v299
  %v337 = vmul.f32 %v257, %v299
  %v338 = vmul.f32 %v258, %v304
  %v339 = vmul.f32 %v259, %v304
  %v340 = vmul.f32 %v260, %v304
  %v341 = vmul.f32 %v261, %v304
  %v342 = vmul.f32 %v262, %v309
  %v343 = vmul.f32 %v263, %v309
  %v344 = vmul.f32 %v264, %v309
  %v345 = vmul.f32 %v265, %v309
  %v346 = vmul.f32 %v266, %v314
  %v347 = vmul.f32 %v267, %v314
  %v348 = vmul.f32 %v268, %v314
  %v349 = vmul.f32 %v269, %v314
  %v350 = vmul.f32 %v270, %v319
  %v351 = vmul.f32 %v271, %v319
  %v352 = vmul.f32 %v272, %v319
  %v353 = vmul.f32 %v273, %v319
  %v354 = vmul.f32 %v274, %v324
  %v355 = vmul.f32 %v275, %v324
  %v356 = vmul.f32 %v276, %v324
  %v357 = vmul.f32 %v277, %v324
  %v358 = vld [vmem:[%s6] sm:$0xff]
  %v359 = vld [vmem:[%s6 + $0x8] sm:$0xff]
  %v360 = vld [vmem:[%s6 + $0x10] sm:$0xff]
  %v361 = vld [vmem:[%s6 + $0x18] sm:$0xff]
  %v362 = vld [vmem:[%s6 + $0x20] sm:$0xff]
  %v363 = vld [vmem:[%s6 + $0x28] sm:$0xff]
  %v364 = vld [vmem:[%s6 + $0x30] sm:$0xff]
  %v365 = vld [vmem:[%s6 + $0x38] sm:$0xff]
  %367 = vset.pattern.permute.xlu0 0
  %368 = vperm.xlu0 %367, %v358
  %v369 = vpop.permute.xlu0 %368
  %372 = vset.pattern.permute.xlu0 0
  %373 = vperm.xlu0 %372, %v359
  %v374 = vpop.permute.xlu0 %373
  %377 = vset.pattern.permute.xlu0 0
  %378 = vperm.xlu0 %377, %v360
  %v379 = vpop.permute.xlu0 %378
  %382 = vset.pattern.permute.xlu0 0
  %383 = vperm.xlu0 %382, %v361
  %v384 = vpop.permute.xlu0 %383
  %387 = vset.pattern.permute.xlu0 0
  %388 = vperm.xlu0 %387, %v362
  %v389 = vpop.permute.xlu0 %388
  %392 = vset.pattern.permute.xlu0 0
  %393 = vperm.xlu0 %392, %v363
  %v394 = vpop.permute.xlu0 %393
  %397 = vset.pattern.permute.xlu0 0
  %398 = vperm.xlu0 %397, %v364
  %v399 = vpop.permute.xlu0 %398
  %402 = vset.pattern.permute.xlu0 0
  %403 = vperm.xlu0 %402, %v365
  %v404 = vpop.permute.xlu0 %403
  %v406 = vadd.f32 %v326, %v369
  %v407 = vadd.f32 %v327, %v369
  %v408 = vadd.f32 %v328, %v369
  %v409 = vadd.f32 %v329, %v369
  %v410 = vadd.f32 %v330, %v374
  %v411 = vadd.f32 %v331, %v374
  %v412 = vadd.f32 %v332, %v374
  %v413 = vadd.f32 %v333, %v374
  %v414 = vadd.f32 %v334, %v379
  %v415 = vadd.f32 %v335, %v379
  %v416 = vadd.f32 %v336, %v379
  %v417 = vadd.f32 %v337, %v379
  %v418 = vadd.f32 %v338, %v384
  %v419 = vadd.f32 %v339, %v384
  %v420 = vadd.f32 %v340, %v384
  %v421 = vadd.f32 %v341, %v384
  %v422 = vadd.f32 %v342, %v389
  %v423 = vadd.f32 %v343, %v389
  %v424 = vadd.f32 %v344, %v389
  %v425 = vadd.f32 %v345, %v389
  %v426 = vadd.f32 %v346, %v394
  %v427 = vadd.f32 %v347, %v394
  %v428 = vadd.f32 %v348, %v394
  %v429 = vadd.f32 %v349, %v394
  %v430 = vadd.f32 %v350, %v399
  %v431 = vadd.f32 %v351, %v399
  %v432 = vadd.f32 %v352, %v399
  %v433 = vadd.f32 %v353, %v399
  %v434 = vadd.f32 %v354, %v404
  %v435 = vadd.f32 %v355, %v404
  %v436 = vadd.f32 %v356, %v404
  %v437 = vadd.f32 %v357, %v404
  %v438 = vld [vmem:[%s1] sm:$0xff]
  %v439 = vld [vmem:[%s1 + $0x8] sm:$0xff]
  %v440 = vld [vmem:[%s1 + $0x10] sm:$0xff]
  %v441 = vld [vmem:[%s1 + $0x18] sm:$0xff]
  %v442 = vld [vmem:[%s1 + $0x20] sm:$0xff]
  %v443 = vld [vmem:[%s1 + $0x28] sm:$0xff]
  %v444 = vld [vmem:[%s1 + $0x30] sm:$0xff]
  %v445 = vld [vmem:[%s1 + $0x38] sm:$0xff]
  %v446 = vld [vmem:[%s1 + $0x40] sm:$0xff]
  %v447 = vld [vmem:[%s1 + $0x48] sm:$0xff]
  %v448 = vld [vmem:[%s1 + $0x50] sm:$0xff]
  %v449 = vld [vmem:[%s1 + $0x58] sm:$0xff]
  %v450 = vld [vmem:[%s1 + $0x60] sm:$0xff]
  %v451 = vld [vmem:[%s1 + $0x68] sm:$0xff]
  %v452 = vld [vmem:[%s1 + $0x70] sm:$0xff]
  %v453 = vld [vmem:[%s1 + $0x78] sm:$0xff]
  %v454 = vld [vmem:[%s1 + $0x80] sm:$0xff]
  %v455 = vld [vmem:[%s1 + $0x88] sm:$0xff]
  %v456 = vld [vmem:[%s1 + $0x90] sm:$0xff]
  %v457 = vld [vmem:[%s1 + $0x98] sm:$0xff]
  %v458 = vld [vmem:[%s1 + $0xa0] sm:$0xff]
  %v459 = vld [vmem:[%s1 + $0xa8] sm:$0xff]
  %v460 = vld [vmem:[%s1 + $0xb0] sm:$0xff]
  %v461 = vld [vmem:[%s1 + $0xb8] sm:$0xff]
  %v462 = vld [vmem:[%s2] sm:$0xff]
  %v463 = vld [vmem:[%s2 + $0x8] sm:$0xff]
  %v464 = vld [vmem:[%s2 + $0x10] sm:$0xff]
  %v465 = vld [vmem:[%s2 + $0x18] sm:$0xff]
  %v466 = vld [vmem:[%s2 + $0x20] sm:$0xff]
  %v467 = vld [vmem:[%s2 + $0x28] sm:$0xff]
  %v468 = vld [vmem:[%s2 + $0x30] sm:$0xff]
  %v469 = vld [vmem:[%s2 + $0x38] sm:$0xff]
  %v470 = vld [vmem:[%s2 + $0x40] sm:$0xff]
  %v471 = vld [vmem:[%s2 + $0x48] sm:$0xff]
  %v472 = vld [vmem:[%s2 + $0x50] sm:$0xff]
  %v473 = vld [vmem:[%s2 + $0x58] sm:$0xff]
  %v474 = vld [vmem:[%s2 + $0x60] sm:$0xff]
  %v475 = vld [vmem:[%s2 + $0x68] sm:$0xff]
  %v476 = vld [vmem:[%s2 + $0x70] sm:$0xff]
  %v477 = vld [vmem:[%s2 + $0x78] sm:$0xff]
  %v478 = vld [vmem:[%s2 + $0x80] sm:$0xff]
  %v479 = vld [vmem:[%s2 + $0x88] sm:$0xff]
  %v480 = vld [vmem:[%s2 + $0x90] sm:$0xff]
  %v481 = vld [vmem:[%s2 + $0x98] sm:$0xff]
  %v482 = vld [vmem:[%s2 + $0xa0] sm:$0xff]
  %v483 = vld [vmem:[%s2 + $0xa8] sm:$0xff]
  %v484 = vld [vmem:[%s2 + $0xb0] sm:$0xff]
  %v485 = vld [vmem:[%s2 + $0xb8] sm:$0xff]
  %487 = vset.pattern.permute.xlu0 0
  %488 = vperm.xlu0 %487, %v462
  %v489 = vpop.permute.xlu0 %488
  %492 = vset.pattern.permute.xlu0 0
  %493 = vperm.xlu0 %492, %v463
  %v494 = vpop.permute.xlu0 %493
  %497 = vset.pattern.permute.xlu0 0
  %498 = vperm.xlu0 %497, %v464
  %v499 = vpop.permute.xlu0 %498
  %502 = vset.pattern.permute.xlu0 0
  %503 = vperm.xlu0 %502, %v465
  %v504 = vpop.permute.xlu0 %503
  %507 = vset.pattern.permute.xlu0 0
  %508 = vperm.xlu0 %507, %v466
  %v509 = vpop.permute.xlu0 %508
  %512 = vset.pattern.permute.xlu0 0
  %513 = vperm.xlu0 %512, %v467
  %v514 = vpop.permute.xlu0 %513
  %517 = vset.pattern.permute.xlu0 0
  %518 = vperm.xlu0 %517, %v468
  %v519 = vpop.permute.xlu0 %518
  %522 = vset.pattern.permute.xlu0 0
  %523 = vperm.xlu0 %522, %v469
  %v524 = vpop.permute.xlu0 %523
  %527 = vset.pattern.permute.xlu0 0
  %528 = vperm.xlu0 %527, %v470
  %v529 = vpop.permute.xlu0 %528
  %532 = vset.pattern.permute.xlu0 0
  %533 = vperm.xlu0 %532, %v471
  %v534 = vpop.permute.xlu0 %533
  %537 = vset.pattern.permute.xlu0 0
  %538 = vperm.xlu0 %537, %v472
  %v539 = vpop.permute.xlu0 %538
  %542 = vset.pattern.permute.xlu0 0
  %543 = vperm.xlu0 %542, %v473
  %v544 = vpop.permute.xlu0 %543
  %547 = vset.pattern.permute.xlu0 0
  %548 = vperm.xlu0 %547, %v474
  %v549 = vpop.permute.xlu0 %548
  %552 = vset.pattern.permute.xlu0 0
  %553 = vperm.xlu0 %552, %v475
  %v554 = vpop.permute.xlu0 %553
  %557 = vset.pattern.permute.xlu0 0
  %558 = vperm.xlu0 %557, %v476
  %v559 = vpop.permute.xlu0 %558
  %562 = vset.pattern.permute.xlu0 0
  %563 = vperm.xlu0 %562, %v477
  %v564 = vpop.permute.xlu0 %563
  %567 = vset.pattern.permute.xlu0 0
  %568 = vperm.xlu0 %567, %v478
  %v569 = vpop.permute.xlu0 %568
  %572 = vset.pattern.permute.xlu0 0
  %573 = vperm.xlu0 %572, %v479
  %v574 = vpop.permute.xlu0 %573
  %577 = vset.pattern.permute.xlu0 0
  %578 = vperm.xlu0 %577, %v480
  %v579 = vpop.permute.xlu0 %578
  %582 = vset.pattern.permute.xlu0 0
  %583 = vperm.xlu0 %582, %v481
  %v584 = vpop.permute.xlu0 %583
  %587 = vset.pattern.permute.xlu0 0
  %588 = vperm.xlu0 %587, %v482
  %v589 = vpop.permute.xlu0 %588
  %592 = vset.pattern.permute.xlu0 0
  %593 = vperm.xlu0 %592, %v483
  %v594 = vpop.permute.xlu0 %593
  %597 = vset.pattern.permute.xlu0 0
  %598 = vperm.xlu0 %597, %v484
  %v599 = vpop.permute.xlu0 %598
  %602 = vset.pattern.permute.xlu0 0
  %603 = vperm.xlu0 %602, %v485
  %v604 = vpop.permute.xlu0 %603
  %vm606 = vcmask 523264
  %v608 = vsel %vm606, %v438, 0
  %v611 = vsel %vm606, %v439, 0
  %v614 = vsel %vm606, %v440, 0
  %v617 = vsel %vm606, %v441, 0
  %v620 = vsel %vm606, %v442, 0
  %v623 = vsel %vm606, %v443, 0
  %v626 = vsel %vm606, %v444, 0
  %v629 = vsel %vm606, %v445, 0
  %v632 = vsel %vm606, %v446, 0
  %v635 = vsel %vm606, %v447, 0
  %v638 = vsel %vm606, %v448, 0
  %v641 = vsel %vm606, %v449, 0
  %v644 = vsel %vm606, %v450, 0
  %v647 = vsel %vm606, %v451, 0
  %v650 = vsel %vm606, %v452, 0
  %v653 = vsel %vm606, %v453, 0
  %v656 = vsel %vm606, %v454, 0
  %v659 = vsel %vm606, %v455, 0
  %v662 = vsel %vm606, %v456, 0
  %v665 = vsel %vm606, %v457, 0
  %v668 = vsel %vm606, %v458, 0
  %v671 = vsel %vm606, %v459, 0
  %v674 = vsel %vm606, %v460, 0
  %v677 = vsel %vm606, %v461, 0
  %679 = vmatprep.subr.mxu0 %v407
  %680 = vmatpush1.msra.mxu0 %v406
  %681 = vmatprep.subr.mxu0 %v411
  %682 = vmatpush1.msra.mxu0 %v410
  %683 = vmatprep.subr.mxu0 %v415
  %684 = vmatpush1.msra.mxu0 %v414
  %685 = vmatprep.subr.mxu0 %v419
  %686 = vmatpush1.msra.mxu0 %v418
  %687 = vmatprep.subr.mxu0 %v423
  %688 = vmatpush1.msra.mxu0 %v422
  %689 = vmatprep.subr.mxu0 %v427
  %690 = vmatpush1.msra.mxu0 %v426
  %691 = vmatprep.subr.mxu0 %v431
  %692 = vmatpush1.msra.mxu0 %v430
  %693 = vmatprep.subr.mxu0 %v435
  %694 = vmatpush1.msra.mxu0 %v434
  %695 = vmatprep.subr.mxu0 0.0
  %696 = vmatpush1.msra.mxu0 0.0
  %697 = vmatprep.subr.mxu0 0.0
  %698 = vmatpush1.msra.mxu0 0.0
  %699 = vmatprep.subr.mxu0 0.0
  %700 = vmatpush1.msra.mxu0 0.0
  %701 = vmatprep.subr.mxu0 0.0
  %702 = vmatpush1.msra.mxu0 0.0
  %703 = vmatprep.subr.mxu0 0.0
  %704 = vmatpush1.msra.mxu0 0.0
  %705 = vmatprep.subr.mxu0 0.0
  %706 = vmatpush1.msra.mxu0 0.0
  %707 = vmatprep.subr.mxu0 0.0
  %708 = vmatpush1.msra.mxu0 0.0
  %709 = vmatprep.subr.mxu0 0.0
  %710 = vmatpush1.msra.mxu0 0.0
  %711 = vmatprep.subr.mxu0 0.0
  %712 = vmatpush1.msra.mxu0 0.0
  %713 = vmatprep.subr.mxu0 0.0
  %714 = vmatpush1.msra.mxu0 0.0
  %715 = vmatprep.subr.mxu0 0.0
  %716 = vmatpush1.msra.mxu0 0.0
  %717 = vmatprep.subr.mxu0 0.0
  %718 = vmatpush1.msra.mxu0 0.0
  %719 = vmatprep.subr.mxu0 0.0
  %720 = vmatpush1.msra.mxu0 0.0
  %721 = vmatprep.subr.mxu0 0.0
  %722 = vmatpush1.msra.mxu0 0.0
  %723 = vmatprep.subr.mxu0 0.0
  %724 = vmatpush1.msra.mxu0 0.0
  %725 = vmatprep.subr.mxu0 0.0
  %726 = vmatpush1.msra.mxu0 0.0
  %727 = vmatprep.subr.mxu0 0.0
  %728 = vmatpush1.msra.mxu0 0.0
  %729 = vmatprep.subr.mxu0 0.0
  %730 = vmatpush1.msra.mxu0 0.0
  %731 = vmatprep.subr.mxu0 0.0
  %732 = vmatpush1.msra.mxu0 0.0
  %733 = vmatprep.subr.mxu0 0.0
  %734 = vmatpush1.msra.mxu0 0.0
  %735 = vmatprep.subr.mxu0 0.0
  %736 = vmatpush1.msra.mxu0 0.0
  %737 = vmatprep.subr.mxu0 0.0
  %738 = vmatpush1.msra.mxu0 0.0
  %739 = vmatprep.subr.mxu0 0.0
  %740 = vmatpush1.msra.mxu0 0.0
  %741 = vmatprep.subr.mxu0 0.0
  %742 = vmatpush1.msra.mxu0 0.0
  %743 = vmatprep.mubr.f32.mxu0 0.0
  %744 = vmatmul.mubr.f32.gmra.mrb[0].mxu0 %v608
  %v745 = vpop.f32.mrb[0].mxu0
  %v746 = vadd.f32 %v489, %v745
  %v747 = vpop.f32.mrb[0].mxu0
  %v748 = vadd.f32 %v489, %v747
  %749 = vmatprep.mubr.f32.mxu0 0.0
  %750 = vmatmul.mubr.f32.gmra.mrb[0].mxu0 %v611
  %v751 = vpop.f32.mrb[0].mxu0
  %v752 = vadd.f32 %v494, %v751
  %v753 = vpop.f32.mrb[0].mxu0
  %v754 = vadd.f32 %v494, %v753
  %755 = vmatprep.mubr.f32.mxu0 0.0
  %756 = vmatmul.mubr.f32.gmra.mrb[0].mxu0 %v614
  %v757 = vpop.f32.mrb[0].mxu0
  %v758 = vadd.f32 %v499, %v757
  %v759 = vpop.f32.mrb[0].mxu0
  %v760 = vadd.f32 %v499, %v759
  %761 = vmatprep.mubr.f32.mxu0 0.0
  %762 = vmatmul.mubr.f32.gmra.mrb[0].mxu0 %v617
  %v763 = vpop.f32.mrb[0].mxu0
  %v764 = vadd.f32 %v504, %v763
  %v765 = vpop.f32.mrb[0].mxu0
  %v766 = vadd.f32 %v504, %v765
  %767 = vmatprep.mubr.f32.mxu0 0.0
  %768 = vmatmul.mubr.f32.gmra.mrb[0].mxu0 %v620
  %v769 = vpop.f32.mrb[0].mxu0
  %v770 = vadd.f32 %v509, %v769
  %v771 = vpop.f32.mrb[0].mxu0
  %v772 = vadd.f32 %v509, %v771
  %773 = vmatprep.mubr.f32.mxu0 0.0
  %774 = vmatmul.mubr.f32.gmra.mrb[0].mxu0 %v623
  %v775 = vpop.f32.mrb[0].mxu0
  %v776 = vadd.f32 %v514, %v775
  %v777 = vpop.f32.mrb[0].mxu0
  %v778 = vadd.f32 %v514, %v777
  %779 = vmatprep.mubr.f32.mxu0 0.0
  %780 = vmatmul.mubr.f32.gmra.mrb[0].mxu0 %v626
  %v781 = vpop.f32.mrb[0].mxu0
  %v782 = vadd.f32 %v519, %v781
  %v783 = vpop.f32.mrb[0].mxu0
  %v784 = vadd.f32 %v519, %v783
  %785 = vmatprep.mubr.f32.mxu0 0.0
  %786 = vmatmul.mubr.f32.gmra.mrb[0].mxu0 %v629
  %v787 = vpop.f32.mrb[0].mxu0
  %v788 = vadd.f32 %v524, %v787
  %v789 = vpop.f32.mrb[0].mxu0
  %v790 = vadd.f32 %v524, %v789
  %791 = vmatprep.mubr.f32.mxu0 0.0
  %792 = vmatmul.mubr.f32.gmra.mrb[0].mxu0 %v632
  %v793 = vpop.f32.mrb[0].mxu0
  %v794 = vadd.f32 %v529, %v793
  %v795 = vpop.f32.mrb[0].mxu0
  %v796 = vadd.f32 %v529, %v795
  %797 = vmatprep.mubr.f32.mxu0 0.0
  %798 = vmatmul.mubr.f32.gmra.mrb[0].mxu0 %v635
  %v799 = vpop.f32.mrb[0].mxu0
  %v800 = vadd.f32 %v534, %v799
  %v801 = vpop.f32.mrb[0].mxu0
  %v802 = vadd.f32 %v534, %v801
  %803 = vmatprep.mubr.f32.mxu0 0.0
  %804 = vmatmul.mubr.f32.gmra.mrb[0].mxu0 %v638
  %v805 = vpop.f32.mrb[0].mxu0
  %v806 = vadd.f32 %v539, %v805
  %v807 = vpop.f32.mrb[0].mxu0
  %v808 = vadd.f32 %v539, %v807
  %809 = vmatprep.mubr.f32.mxu0 0.0
  %810 = vmatmul.mubr.f32.gmra.mrb[0].mxu0 %v641
  %v811 = vpop.f32.mrb[0].mxu0
  %v812 = vadd.f32 %v544, %v811
  %v813 = vpop.f32.mrb[0].mxu0
  %v814 = vadd.f32 %v544, %v813
  %815 = vmatprep.mubr.f32.mxu0 0.0
  %816 = vmatmul.mubr.f32.gmra.mrb[0].mxu0 %v644
  %v817 = vpop.f32.mrb[0].mxu0
  %v818 = vadd.f32 %v549, %v817
  %v819 = vpop.f32.mrb[0].mxu0
  %v820 = vadd.f32 %v549, %v819
  %821 = vmatprep.mubr.f32.mxu0 0.0
  %822 = vmatmul.mubr.f32.gmra.mrb[0].mxu0 %v647
  %v823 = vpop.f32.mrb[0].mxu0
  %v824 = vadd.f32 %v554, %v823
  %v825 = vpop.f32.mrb[0].mxu0
  %v826 = vadd.f32 %v554, %v825
  %827 = vmatprep.mubr.f32.mxu0 0.0
  %828 = vmatmul.mubr.f32.gmra.mrb[0].mxu0 %v650
  %v829 = vpop.f32.mrb[0].mxu0
  %v830 = vadd.f32 %v559, %v829
  %v831 = vpop.f32.mrb[0].mxu0
  %v832 = vadd.f32 %v559, %v831
  %833 = vmatprep.mubr.f32.mxu0 0.0
  %834 = vmatmul.mubr.f32.gmra.mrb[0].mxu0 %v653
  %v835 = vpop.f32.mrb[0].mxu0
  %v836 = vadd.f32 %v564, %v835
  %v837 = vpop.f32.mrb[0].mxu0
  %v838 = vadd.f32 %v564, %v837
  %839 = vmatprep.mubr.f32.mxu0 0.0
  %840 = vmatmul.mubr.f32.gmra.mrb[0].mxu0 %v656
  %v841 = vpop.f32.mrb[0].mxu0
  %v842 = vadd.f32 %v569, %v841
  %v843 = vpop.f32.mrb[0].mxu0
  %v844 = vadd.f32 %v569, %v843
  %845 = vmatprep.mubr.f32.mxu0 0.0
  %846 = vmatmul.mubr.f32.gmra.mrb[0].mxu0 %v659
  %v847 = vpop.f32.mrb[0].mxu0
  %v848 = vadd.f32 %v574, %v847
  %v849 = vpop.f32.mrb[0].mxu0
  %v850 = vadd.f32 %v574, %v849
  %851 = vmatprep.mubr.f32.mxu0 0.0
  %852 = vmatmul.mubr.f32.gmra.mrb[0].mxu0 %v662
  %v853 = vpop.f32.mrb[0].mxu0
  %v854 = vadd.f32 %v579, %v853
  %v855 = vpop.f32.mrb[0].mxu0
  %v856 = vadd.f32 %v579, %v855
  %857 = vmatprep.mubr.f32.mxu0 0.0
  %858 = vmatmul.mubr.f32.gmra.mrb[0].mxu0 %v665
  %v859 = vpop.f32.mrb[0].mxu0
  %v860 = vadd.f32 %v584, %v859
  %v861 = vpop.f32.mrb[0].mxu0
  %v862 = vadd.f32 %v584, %v861
  %863 = vmatprep.mubr.f32.mxu0 0.0
  %864 = vmatmul.mubr.f32.gmra.mrb[0].mxu0 %v668
  %v865 = vpop.f32.mrb[0].mxu0
  %v866 = vadd.f32 %v589, %v865
  %v867 = vpop.f32.mrb[0].mxu0
  %v868 = vadd.f32 %v589, %v867
  %869 = vmatprep.mubr.f32.mxu0 0.0
  %870 = vmatmul.mubr.f32.gmra.mrb[0].mxu0 %v671
  %v871 = vpop.f32.mrb[0].mxu0
  %v872 = vadd.f32 %v594, %v871
  %v873 = vpop.f32.mrb[0].mxu0
  %v874 = vadd.f32 %v594, %v873
  %875 = vmatprep.mubr.f32.mxu0 0.0
  %876 = vmatmul.mubr.f32.gmra.mrb[0].mxu0 %v674
  %v877 = vpop.f32.mrb[0].mxu0
  %v878 = vadd.f32 %v599, %v877
  %v879 = vpop.f32.mrb[0].mxu0
  %v880 = vadd.f32 %v599, %v879
  %881 = vmatprep.mubr.f32.mxu0 0.0
  %882 = vmatmul.mubr.f32.gmra.mrb[0].mxu0 %v677
  %v883 = vpop.f32.mrb[0].mxu0
  %v884 = vadd.f32 %v604, %v883
  %v885 = vpop.f32.mrb[0].mxu0
  %v886 = vadd.f32 %v604, %v885
  %887 = vdwg.mxu0
  %888 = vmatprep.subr.mxu0 %v409
  %889 = vmatpush1.msra.mxu0 %v408
  %890 = vmatprep.subr.mxu0 %v413
  %891 = vmatpush1.msra.mxu0 %v412
  %892 = vmatprep.subr.mxu0 %v417
  %893 = vmatpush1.msra.mxu0 %v416
  %894 = vmatprep.subr.mxu0 %v421
  %895 = vmatpush1.msra.mxu0 %v420
  %896 = vmatprep.subr.mxu0 %v425
  %897 = vmatpush1.msra.mxu0 %v424
  %898 = vmatprep.subr.mxu0 %v429
  %899 = vmatpush1.msra.mxu0 %v428
  %900 = vmatprep.subr.mxu0 %v433
  %901 = vmatpush1.msra.mxu0 %v432
  %902 = vmatprep.subr.mxu0 %v437
  %903 = vmatpush1.msra.mxu0 %v436
  %904 = vmatprep.subr.mxu0 0.0
  %905 = vmatpush1.msra.mxu0 0.0
  %906 = vmatprep.subr.mxu0 0.0
  %907 = vmatpush1.msra.mxu0 0.0
  %908 = vmatprep.subr.mxu0 0.0
  %909 = vmatpush1.msra.mxu0 0.0
  %910 = vmatprep.subr.mxu0 0.0
  %911 = vmatpush1.msra.mxu0 0.0
  %912 = vmatprep.subr.mxu0 0.0
  %913 = vmatpush1.msra.mxu0 0.0
  %914 = vmatprep.subr.mxu0 0.0
  %915 = vmatpush1.msra.mxu0 0.0
  %916 = vmatprep.subr.mxu0 0.0
  %917 = vmatpush1.msra.mxu0 0.0
  %918 = vmatprep.subr.mxu0 0.0
  %919 = vmatpush1.msra.mxu0 0.0
  %920 = vmatprep.subr.mxu0 0.0
  %921 = vmatpush1.msra.mxu0 0.0
  %922 = vmatprep.subr.mxu0 0.0
  %923 = vmatpush1.msra.mxu0 0.0
  %924 = vmatprep.subr.mxu0 0.0
  %925 = vmatpush1.msra.mxu0 0.0
  %926 = vmatprep.subr.mxu0 0.0
  %927 = vmatpush1.msra.mxu0 0.0
  %928 = vmatprep.subr.mxu0 0.0
  %929 = vmatpush1.msra.mxu0 0.0
  %930 = vmatprep.subr.mxu0 0.0
  %931 = vmatpush1.msra.mxu0 0.0
  %932 = vmatprep.subr.mxu0 0.0
  %933 = vmatpush1.msra.mxu0 0.0
  %934 = vmatprep.subr.mxu0 0.0
  %935 = vmatpush1.msra.mxu0 0.0
  %936 = vmatprep.subr.mxu0 0.0
  %937 = vmatpush1.msra.mxu0 0.0
  %938 = vmatprep.subr.mxu0 0.0
  %939 = vmatpush1.msra.mxu0 0.0
  %940 = vmatprep.subr.mxu0 0.0
  %941 = vmatpush1.msra.mxu0 0.0
  %942 = vmatprep.subr.mxu0 0.0
  %943 = vmatpush1.msra.mxu0 0.0
  %944 = vmatprep.subr.mxu0 0.0
  %945 = vmatpush1.msra.mxu0 0.0
  %946 = vmatprep.subr.mxu0 0.0
  %947 = vmatpush1.msra.mxu0 0.0
  %948 = vmatprep.subr.mxu0 0.0
  %949 = vmatpush1.msra.mxu0 0.0
  %950 = vmatprep.subr.mxu0 0.0
  %951 = vmatpush1.msra.mxu0 0.0
  %952 = vmatprep.mubr.f32.mxu0 0.0
  %953 = vmatmul.mubr.f32.gmra.mrb[0].mxu0 %v608
  %v954 = vpop.f32.mrb[0].mxu0
  %v955 = vadd.f32 %v489, %v954
  %v956 = vpop.f32.mrb[0].mxu0
  %v957 = vadd.f32 %v489, %v956
  %958 = vmatprep.mubr.f32.mxu0 0.0
  %959 = vmatmul.mubr.f32.gmra.mrb[0].mxu0 %v611
  %v960 = vpop.f32.mrb[0].mxu0
  %v961 = vadd.f32 %v494, %v960
  %v962 = vpop.f32.mrb[0].mxu0
  %v963 = vadd.f32 %v494, %v962
  %964 = vmatprep.mubr.f32.mxu0 0.0
  %965 = vmatmul.mubr.f32.gmra.mrb[0].mxu0 %v614
  %v966 = vpop.f32.mrb[0].mxu0
  %v967 = vadd.f32 %v499, %v966
  %v968 = vpop.f32.mrb[0].mxu0
  %v969 = vadd.f32 %v499, %v968
  %970 = vmatprep.mubr.f32.mxu0 0.0
  %971 = vmatmul.mubr.f32.gmra.mrb[0].mxu0 %v617
  %v972 = vpop.f32.mrb[0].mxu0
  %v973 = vadd.f32 %v504, %v972
  %v974 = vpop.f32.mrb[0].mxu0
  %v975 = vadd.f32 %v504, %v974
  %976 = vmatprep.mubr.f32.mxu0 0.0
  %977 = vmatmul.mubr.f32.gmra.mrb[0].mxu0 %v620
  %v978 = vpop.f32.mrb[0].mxu0
  %v979 = vadd.f32 %v509, %v978
  %v980 = vpop.f32.mrb[0].mxu0
  %v981 = vadd.f32 %v509, %v980
  %982 = vmatprep.mubr.f32.mxu0 0.0
  %983 = vmatmul.mubr.f32.gmra.mrb[0].mxu0 %v623
  %v984 = vpop.f32.mrb[0].mxu0
  %v985 = vadd.f32 %v514, %v984
  %v986 = vpop.f32.mrb[0].mxu0
  %v987 = vadd.f32 %v514, %v986
  %988 = vmatprep.mubr.f32.mxu0 0.0
  %989 = vmatmul.mubr.f32.gmra.mrb[0].mxu0 %v626
  %v990 = vpop.f32.mrb[0].mxu0
  %v991 = vadd.f32 %v519, %v990
  %v992 = vpop.f32.mrb[0].mxu0
  %v993 = vadd.f32 %v519, %v992
  %994 = vmatprep.mubr.f32.mxu0 0.0
  %995 = vmatmul.mubr.f32.gmra.mrb[0].mxu0 %v629
  %v996 = vpop.f32.mrb[0].mxu0
  %v997 = vadd.f32 %v524, %v996
  %v998 = vpop.f32.mrb[0].mxu0
  %v999 = vadd.f32 %v524, %v998
  %1000 = vmatprep.mubr.f32.mxu0 0.0
  %1001 = vmatmul.mubr.f32.gmra.mrb[0].mxu0 %v632
  %v1002 = vpop.f32.mrb[0].mxu0
  %v1003 = vadd.f32 %v529, %v1002
  %v1004 = vpop.f32.mrb[0].mxu0
  %v1005 = vadd.f32 %v529, %v1004
  %1006 = vmatprep.mubr.f32.mxu0 0.0
  %1007 = vmatmul.mubr.f32.gmra.mrb[0].mxu0 %v635
  %v1008 = vpop.f32.mrb[0].mxu0
  %v1009 = vadd.f32 %v534, %v1008
  %v1010 = vpop.f32.mrb[0].mxu0
  %v1011 = vadd.f32 %v534, %v1010
  %1012 = vmatprep.mubr.f32.mxu0 0.0
  %1013 = vmatmul.mubr.f32.gmra.mrb[0].mxu0 %v638
  %v1014 = vpop.f32.mrb[0].mxu0
  %v1015 = vadd.f32 %v539, %v1014
  %v1016 = vpop.f32.mrb[0].mxu0
  %v1017 = vadd.f32 %v539, %v1016
  %1018 = vmatprep.mubr.f32.mxu0 0.0
  %1019 = vmatmul.mubr.f32.gmra.mrb[0].mxu0 %v641
  %v1020 = vpop.f32.mrb[0].mxu0
  %v1021 = vadd.f32 %v544, %v1020
  %v1022 = vpop.f32.mrb[0].mxu0
  %v1023 = vadd.f32 %v544, %v1022
  %1024 = vmatprep.mubr.f32.mxu0 0.0
  %1025 = vmatmul.mubr.f32.gmra.mrb[0].mxu0 %v644
  %v1026 = vpop.f32.mrb[0].mxu0
  %v1027 = vadd.f32 %v549, %v1026
  %v1028 = vpop.f32.mrb[0].mxu0
  %v1029 = vadd.f32 %v549, %v1028
  %1030 = vmatprep.mubr.f32.mxu0 0.0
  %1031 = vmatmul.mubr.f32.gmra.mrb[0].mxu0 %v647
  %v1032 = vpop.f32.mrb[0].mxu0
  %v1033 = vadd.f32 %v554, %v1032
  %v1034 = vpop.f32.mrb[0].mxu0
  %v1035 = vadd.f32 %v554, %v1034
  %1036 = vmatprep.mubr.f32.mxu0 0.0
  %1037 = vmatmul.mubr.f32.gmra.mrb[0].mxu0 %v650
  %v1038 = vpop.f32.mrb[0].mxu0
  %v1039 = vadd.f32 %v559, %v1038
  %v1040 = vpop.f32.mrb[0].mxu0
  %v1041 = vadd.f32 %v559, %v1040
  %1042 = vmatprep.mubr.f32.mxu0 0.0
  %1043 = vmatmul.mubr.f32.gmra.mrb[0].mxu0 %v653
  %v1044 = vpop.f32.mrb[0].mxu0
  %v1045 = vadd.f32 %v564, %v1044
  %v1046 = vpop.f32.mrb[0].mxu0
  %v1047 = vadd.f32 %v564, %v1046
  %1048 = vmatprep.mubr.f32.mxu0 0.0
  %1049 = vmatmul.mubr.f32.gmra.mrb[0].mxu0 %v656
  %v1050 = vpop.f32.mrb[0].mxu0
  %v1051 = vadd.f32 %v569, %v1050
  %v1052 = vpop.f32.mrb[0].mxu0
  %v1053 = vadd.f32 %v569, %v1052
  %1054 = vmatprep.mubr.f32.mxu0 0.0
  %1055 = vmatmul.mubr.f32.gmra.mrb[0].mxu0 %v659
  %v1056 = vpop.f32.mrb[0].mxu0
  %v1057 = vadd.f32 %v574, %v1056
  %v1058 = vpop.f32.mrb[0].mxu0
  %v1059 = vadd.f32 %v574, %v1058
  %1060 = vmatprep.mubr.f32.mxu0 0.0
  %1061 = vmatmul.mubr.f32.gmra.mrb[0].mxu0 %v662
  %v1062 = vpop.f32.mrb[0].mxu0
  %v1063 = vadd.f32 %v579, %v1062
  %v1064 = vpop.f32.mrb[0].mxu0
  %v1065 = vadd.f32 %v579, %v1064
  %1066 = vmatprep.mubr.f32.mxu0 0.0
  %1067 = vmatmul.mubr.f32.gmra.mrb[0].mxu0 %v665
  %v1068 = vpop.f32.mrb[0].mxu0
  %v1069 = vadd.f32 %v584, %v1068
  %v1070 = vpop.f32.mrb[0].mxu0
  %v1071 = vadd.f32 %v584, %v1070
  %1072 = vmatprep.mubr.f32.mxu0 0.0
  %1073 = vmatmul.mubr.f32.gmra.mrb[0].mxu0 %v668
  %v1074 = vpop.f32.mrb[0].mxu0
  %v1075 = vadd.f32 %v589, %v1074
  %v1076 = vpop.f32.mrb[0].mxu0
  %v1077 = vadd.f32 %v589, %v1076
  %1078 = vmatprep.mubr.f32.mxu0 0.0
  %1079 = vmatmul.mubr.f32.gmra.mrb[0].mxu0 %v671
  %v1080 = vpop.f32.mrb[0].mxu0
  %v1081 = vadd.f32 %v594, %v1080
  %v1082 = vpop.f32.mrb[0].mxu0
  %v1083 = vadd.f32 %v594, %v1082
  %1084 = vmatprep.mubr.f32.mxu0 0.0
  %1085 = vmatmul.mubr.f32.gmra.mrb[0].mxu0 %v674
  %v1086 = vpop.f32.mrb[0].mxu0
  %v1087 = vadd.f32 %v599, %v1086
  %v1088 = vpop.f32.mrb[0].mxu0
  %v1089 = vadd.f32 %v599, %v1088
  %1090 = vmatprep.mubr.f32.mxu0 0.0
  %1091 = vmatmul.mubr.f32.gmra.mrb[0].mxu0 %v677
  %v1092 = vpop.f32.mrb[0].mxu0
  %v1093 = vadd.f32 %v604, %v1092
  %v1094 = vpop.f32.mrb[0].mxu0
  %v1095 = vadd.f32 %v604, %v1094
  %1096 = vdwg.mxu0
  %v1097 = vld [vmem:[%s7] sm:$0xff]
  %v1098 = vld [vmem:[%s7 + $0x8] sm:$0xff]
  %v1099 = vld [vmem:[%s7 + $0x10] sm:$0xff]
  %v1100 = vld [vmem:[%s7 + $0x18] sm:$0xff]
  %v1101 = vld [vmem:[%s7 + $0x20] sm:$0xff]
  %v1102 = vld [vmem:[%s7 + $0x28] sm:$0xff]
  %v1103 = vld [vmem:[%s7 + $0x30] sm:$0xff]
  %v1104 = vld [vmem:[%s7 + $0x38] sm:$0xff]
  %v1105 = vld [vmem:[%s7 + $0x40] sm:$0xff]
  %v1106 = vld [vmem:[%s7 + $0x48] sm:$0xff]
  %v1107 = vld [vmem:[%s7 + $0x50] sm:$0xff]
  %v1108 = vld [vmem:[%s7 + $0x58] sm:$0xff]
  %v1109 = vld [vmem:[%s7 + $0x60] sm:$0xff]
  %v1110 = vld [vmem:[%s7 + $0x68] sm:$0xff]
  %v1111 = vld [vmem:[%s7 + $0x70] sm:$0xff]
  %v1112 = vld [vmem:[%s7 + $0x78] sm:$0xff]
  %v1113 = vmul.f32 %v746, %v794
  %v1114 = vmul.f32 %v752, %v800
  %v1115 = vmul.f32 %v758, %v806
  %v1116 = vmul.f32 %v764, %v812
  %v1117 = vmul.f32 %v770, %v818
  %v1118 = vmul.f32 %v776, %v824
  %v1119 = vmul.f32 %v782, %v830
  %v1120 = vmul.f32 %v788, %v836
  %v1121 = vadd.f32 %v1113, %v1114
  %v1122 = vadd.f32 %v1121, %v1115
  %v1123 = vadd.f32 %v1122, %v1116
  %v1124 = vadd.f32 %v1123, %v1117
  %v1125 = vadd.f32 %v1124, %v1118
  %v1126 = vadd.f32 %v1125, %v1119
  %v1127 = vadd.f32 %v1126, %v1120
  %1129 = vset.pattern.permute.xlu0 0
  %1130 = vperm.xlu0 %1129, %v1097
  %v1131 = vpop.permute.xlu0 %1130
  %v1133 = vadd.f32 %v1127, %v1131
  %v1134 = vmul.f32 %v746, %v796
  %v1135 = vmul.f32 %v752, %v802
  %v1136 = vmul.f32 %v758, %v808
  %v1137 = vmul.f32 %v764, %v814
  %v1138 = vmul.f32 %v770, %v820
  %v1139 = vmul.f32 %v776, %v826
  %v1140 = vmul.f32 %v782, %v832
  %v1141 = vmul.f32 %v788, %v838
  %v1142 = vadd.f32 %v1134, %v1135
  %v1143 = vadd.f32 %v1142, %v1136
  %v1144 = vadd.f32 %v1143, %v1137
  %v1145 = vadd.f32 %v1144, %v1138
  %v1146 = vadd.f32 %v1145, %v1139
  %v1147 = vadd.f32 %v1146, %v1140
  %v1148 = vadd.f32 %v1147, %v1141
  %1150 = vset.pattern.permute.xlu0 0
  %1151 = vperm.xlu0 %1150, %v1098
  %v1152 = vpop.permute.xlu0 %1151
  %v1154 = vadd.f32 %v1148, %v1152
  %v1155 = vmul.f32 %v746, %v1003
  %v1156 = vmul.f32 %v752, %v1009
  %v1157 = vmul.f32 %v758, %v1015
  %v1158 = vmul.f32 %v764, %v1021
  %v1159 = vmul.f32 %v770, %v1027
  %v1160 = vmul.f32 %v776, %v1033
  %v1161 = vmul.f32 %v782, %v1039
  %v1162 = vmul.f32 %v788, %v1045
  %v1163 = vadd.f32 %v1155, %v1156
  %v1164 = vadd.f32 %v1163, %v1157
  %v1165 = vadd.f32 %v1164, %v1158
  %v1166 = vadd.f32 %v1165, %v1159
  %v1167 = vadd.f32 %v1166, %v1160
  %v1168 = vadd.f32 %v1167, %v1161
  %v1169 = vadd.f32 %v1168, %v1162
  %1171 = vset.pattern.permute.xlu0 0
  %1172 = vperm.xlu0 %1171, %v1099
  %v1173 = vpop.permute.xlu0 %1172
  %v1175 = vadd.f32 %v1169, %v1173
  %v1176 = vmul.f32 %v746, %v1005
  %v1177 = vmul.f32 %v752, %v1011
  %v1178 = vmul.f32 %v758, %v1017
  %v1179 = vmul.f32 %v764, %v1023
  %v1180 = vmul.f32 %v770, %v1029
  %v1181 = vmul.f32 %v776, %v1035
  %v1182 = vmul.f32 %v782, %v1041
  %v1183 = vmul.f32 %v788, %v1047
  %v1184 = vadd.f32 %v1176, %v1177
  %v1185 = vadd.f32 %v1184, %v1178
  %v1186 = vadd.f32 %v1185, %v1179
  %v1187 = vadd.f32 %v1186, %v1180
  %v1188 = vadd.f32 %v1187, %v1181
  %v1189 = vadd.f32 %v1188, %v1182
  %v1190 = vadd.f32 %v1189, %v1183
  %1192 = vset.pattern.permute.xlu0 0
  %1193 = vperm.xlu0 %1192, %v1100
  %v1194 = vpop.permute.xlu0 %1193
  %v1196 = vadd.f32 %v1190, %v1194
  %v1197 = vmul.f32 %v748, %v794
  %v1198 = vmul.f32 %v754, %v800
  %v1199 = vmul.f32 %v760, %v806
  %v1200 = vmul.f32 %v766, %v812
  %v1201 = vmul.f32 %v772, %v818
  %v1202 = vmul.f32 %v778, %v824
  %v1203 = vmul.f32 %v784, %v830
  %v1204 = vmul.f32 %v790, %v836
  %v1205 = vadd.f32 %v1197, %v1198
  %v1206 = vadd.f32 %v1205, %v1199
  %v1207 = vadd.f32 %v1206, %v1200
  %v1208 = vadd.f32 %v1207, %v1201
  %v1209 = vadd.f32 %v1208, %v1202
  %v1210 = vadd.f32 %v1209, %v1203
  %v1211 = vadd.f32 %v1210, %v1204
  %1213 = vset.pattern.permute.xlu0 0
  %1214 = vperm.xlu0 %1213, %v1101
  %v1215 = vpop.permute.xlu0 %1214
  %v1217 = vadd.f32 %v1211, %v1215
  %v1218 = vmul.f32 %v748, %v796
  %v1219 = vmul.f32 %v754, %v802
  %v1220 = vmul.f32 %v760, %v808
  %v1221 = vmul.f32 %v766, %v814
  %v1222 = vmul.f32 %v772, %v820
  %v1223 = vmul.f32 %v778, %v826
  %v1224 = vmul.f32 %v784, %v832
  %v1225 = vmul.f32 %v790, %v838
  %v1226 = vadd.f32 %v1218, %v1219
  %v1227 = vadd.f32 %v1226, %v1220
  %v1228 = vadd.f32 %v1227, %v1221
  %v1229 = vadd.f32 %v1228, %v1222
  %v1230 = vadd.f32 %v1229, %v1223
  %v1231 = vadd.f32 %v1230, %v1224
  %v1232 = vadd.f32 %v1231, %v1225
  %1234 = vset.pattern.permute.xlu0 0
  %1235 = vperm.xlu0 %1234, %v1102
  %v1236 = vpop.permute.xlu0 %1235
  %v1238 = vadd.f32 %v1232, %v1236
  %v1239 = vmul.f32 %v748, %v1003
  %v1240 = vmul.f32 %v754, %v1009
  %v1241 = vmul.f32 %v760, %v1015
  %v1242 = vmul.f32 %v766, %v1021
  %v1243 = vmul.f32 %v772, %v1027
  %v1244 = vmul.f32 %v778, %v1033
  %v1245 = vmul.f32 %v784, %v1039
  %v1246 = vmul.f32 %v790, %v1045
  %v1247 = vadd.f32 %v1239, %v1240
  %v1248 = vadd.f32 %v1247, %v1241
  %v1249 = vadd.f32 %v1248, %v1242
  %v1250 = vadd.f32 %v1249, %v1243
  %v1251 = vadd.f32 %v1250, %v1244
  %v1252 = vadd.f32 %v1251, %v1245
  %v1253 = vadd.f32 %v1252, %v1246
  %1255 = vset.pattern.permute.xlu0 0
  %1256 = vperm.xlu0 %1255, %v1103
  %v1257 = vpop.permute.xlu0 %1256
  %v1259 = vadd.f32 %v1253, %v1257
  %v1260 = vmul.f32 %v748, %v1005
  %v1261 = vmul.f32 %v754, %v1011
  %v1262 = vmul.f32 %v760, %v1017
  %v1263 = vmul.f32 %v766, %v1023
  %v1264 = vmul.f32 %v772, %v1029
  %v1265 = vmul.f32 %v778, %v1035
  %v1266 = vmul.f32 %v784, %v1041
  %v1267 = vmul.f32 %v790, %v1047
  %v1268 = vadd.f32 %v1260, %v1261
  %v1269 = vadd.f32 %v1268, %v1262
  %v1270 = vadd.f32 %v1269, %v1263
  %v1271 = vadd.f32 %v1270, %v1264
  %v1272 = vadd.f32 %v1271, %v1265
  %v1273 = vadd.f32 %v1272, %v1266
  %v1274 = vadd.f32 %v1273, %v1267
  %1276 = vset.pattern.permute.xlu0 0
  %1277 = vperm.xlu0 %1276, %v1104
  %v1278 = vpop.permute.xlu0 %1277
  %v1280 = vadd.f32 %v1274, %v1278
  %v1281 = vmul.f32 %v955, %v794
  %v1282 = vmul.f32 %v961, %v800
  %v1283 = vmul.f32 %v967, %v806
  %v1284 = vmul.f32 %v973, %v812
  %v1285 = vmul.f32 %v979, %v818
  %v1286 = vmul.f32 %v985, %v824
  %v1287 = vmul.f32 %v991, %v830
  %v1288 = vmul.f32 %v997, %v836
  %v1289 = vadd.f32 %v1281, %v1282
  %v1290 = vadd.f32 %v1289, %v1283
  %v1291 = vadd.f32 %v1290, %v1284
  %v1292 = vadd.f32 %v1291, %v1285
  %v1293 = vadd.f32 %v1292, %v1286
  %v1294 = vadd.f32 %v1293, %v1287
  %v1295 = vadd.f32 %v1294, %v1288
  %1297 = vset.pattern.permute.xlu0 0
  %1298 = vperm.xlu0 %1297, %v1105
  %v1299 = vpop.permute.xlu0 %1298
  %v1301 = vadd.f32 %v1295, %v1299
  %v1302 = vmul.f32 %v955, %v796
  %v1303 = vmul.f32 %v961, %v802
  %v1304 = vmul.f32 %v967, %v808
  %v1305 = vmul.f32 %v973, %v814
  %v1306 = vmul.f32 %v979, %v820
  %v1307 = vmul.f32 %v985, %v826
  %v1308 = vmul.f32 %v991, %v832
  %v1309 = vmul.f32 %v997, %v838
  %v1310 = vadd.f32 %v1302, %v1303
  %v1311 = vadd.f32 %v1310, %v1304
  %v1312 = vadd.f32 %v1311, %v1305
  %v1313 = vadd.f32 %v1312, %v1306
  %v1314 = vadd.f32 %v1313, %v1307
  %v1315 = vadd.f32 %v1314, %v1308
  %v1316 = vadd.f32 %v1315, %v1309
  %1318 = vset.pattern.permute.xlu0 0
  %1319 = vperm.xlu0 %1318, %v1106
  %v1320 = vpop.permute.xlu0 %1319
  %v1322 = vadd.f32 %v1316, %v1320
  %v1323 = vmul.f32 %v955, %v1003
  %v1324 = vmul.f32 %v961, %v1009
  %v1325 = vmul.f32 %v967, %v1015
  %v1326 = vmul.f32 %v973, %v1021
  %v1327 = vmul.f32 %v979, %v1027
  %v1328 = vmul.f32 %v985, %v1033
  %v1329 = vmul.f32 %v991, %v1039
  %v1330 = vmul.f32 %v997, %v1045
  %v1331 = vadd.f32 %v1323, %v1324
  %v1332 = vadd.f32 %v1331, %v1325
  %v1333 = vadd.f32 %v1332, %v1326
  %v1334 = vadd.f32 %v1333, %v1327
  %v1335 = vadd.f32 %v1334, %v1328
  %v1336 = vadd.f32 %v1335, %v1329
  %v1337 = vadd.f32 %v1336, %v1330
  %1339 = vset.pattern.permute.xlu0 0
  %1340 = vperm.xlu0 %1339, %v1107
  %v1341 = vpop.permute.xlu0 %1340
  %v1343 = vadd.f32 %v1337, %v1341
  %v1344 = vmul.f32 %v955, %v1005
  %v1345 = vmul.f32 %v961, %v1011
  %v1346 = vmul.f32 %v967, %v1017
  %v1347 = vmul.f32 %v973, %v1023
  %v1348 = vmul.f32 %v979, %v1029
  %v1349 = vmul.f32 %v985, %v1035
  %v1350 = vmul.f32 %v991, %v1041
  %v1351 = vmul.f32 %v997, %v1047
  %v1352 = vadd.f32 %v1344, %v1345
  %v1353 = vadd.f32 %v1352, %v1346
  %v1354 = vadd.f32 %v1353, %v1347
  %v1355 = vadd.f32 %v1354, %v1348
  %v1356 = vadd.f32 %v1355, %v1349
  %v1357 = vadd.f32 %v1356, %v1350
  %v1358 = vadd.f32 %v1357, %v1351
  %1360 = vset.pattern.permute.xlu0 0
  %1361 = vperm.xlu0 %1360, %v1108
  %v1362 = vpop.permute.xlu0 %1361
  %v1364 = vadd.f32 %v1358, %v1362
  %v1365 = vmul.f32 %v957, %v794
  %v1366 = vmul.f32 %v963, %v800
  %v1367 = vmul.f32 %v969, %v806
  %v1368 = vmul.f32 %v975, %v812
  %v1369 = vmul.f32 %v981, %v818
  %v1370 = vmul.f32 %v987, %v824
  %v1371 = vmul.f32 %v993, %v830
  %v1372 = vmul.f32 %v999, %v836
  %v1373 = vadd.f32 %v1365, %v1366
  %v1374 = vadd.f32 %v1373, %v1367
  %v1375 = vadd.f32 %v1374, %v1368
  %v1376 = vadd.f32 %v1375, %v1369
  %v1377 = vadd.f32 %v1376, %v1370
  %v1378 = vadd.f32 %v1377, %v1371
  %v1379 = vadd.f32 %v1378, %v1372
  %1381 = vset.pattern.permute.xlu0 0
  %1382 = vperm.xlu0 %1381, %v1109
  %v1383 = vpop.permute.xlu0 %1382
  %v1385 = vadd.f32 %v1379, %v1383
  %v1386 = vmul.f32 %v957, %v796
  %v1387 = vmul.f32 %v963, %v802
  %v1388 = vmul.f32 %v969, %v808
  %v1389 = vmul.f32 %v975, %v814
  %v1390 = vmul.f32 %v981, %v820
  %v1391 = vmul.f32 %v987, %v826
  %v1392 = vmul.f32 %v993, %v832
  %v1393 = vmul.f32 %v999, %v838
  %v1394 = vadd.f32 %v1386, %v1387
  %v1395 = vadd.f32 %v1394, %v1388
  %v1396 = vadd.f32 %v1395, %v1389
  %v1397 = vadd.f32 %v1396, %v1390
  %v1398 = vadd.f32 %v1397, %v1391
  %v1399 = vadd.f32 %v1398, %v1392
  %v1400 = vadd.f32 %v1399, %v1393
  %1402 = vset.pattern.permute.xlu0 0
  %1403 = vperm.xlu0 %1402, %v1110
  %v1404 = vpop.permute.xlu0 %1403
  %v1406 = vadd.f32 %v1400, %v1404
  %v1407 = vmul.f32 %v957, %v1003
  %v1408 = vmul.f32 %v963, %v1009
  %v1409 = vmul.f32 %v969, %v1015
  %v1410 = vmul.f32 %v975, %v1021
  %v1411 = vmul.f32 %v981, %v1027
  %v1412 = vmul.f32 %v987, %v1033
  %v1413 = vmul.f32 %v993, %v1039
  %v1414 = vmul.f32 %v999, %v1045
  %v1415 = vadd.f32 %v1407, %v1408
  %v1416 = vadd.f32 %v1415, %v1409
  %v1417 = vadd.f32 %v1416, %v1410
  %v1418 = vadd.f32 %v1417, %v1411
  %v1419 = vadd.f32 %v1418, %v1412
  %v1420 = vadd.f32 %v1419, %v1413
  %v1421 = vadd.f32 %v1420, %v1414
  %1423 = vset.pattern.permute.xlu0 0
  %1424 = vperm.xlu0 %1423, %v1111
  %v1425 = vpop.permute.xlu0 %1424
  %v1427 = vadd.f32 %v1421, %v1425
  %v1428 = vmul.f32 %v957, %v1005
  %v1429 = vmul.f32 %v963, %v1011
  %v1430 = vmul.f32 %v969, %v1017
  %v1431 = vmul.f32 %v975, %v1023
  %v1432 = vmul.f32 %v981, %v1029
  %v1433 = vmul.f32 %v987, %v1035
  %v1434 = vmul.f32 %v993, %v1041
  %v1435 = vmul.f32 %v999, %v1047
  %v1436 = vadd.f32 %v1428, %v1429
  %v1437 = vadd.f32 %v1436, %v1430
  %v1438 = vadd.f32 %v1437, %v1431
  %v1439 = vadd.f32 %v1438, %v1432
  %v1440 = vadd.f32 %v1439, %v1433
  %v1441 = vadd.f32 %v1440, %v1434
  %v1442 = vadd.f32 %v1441, %v1435
  %1444 = vset.pattern.permute.xlu0 0
  %1445 = vperm.xlu0 %1444, %v1112
  %v1446 = vpop.permute.xlu0 %1445
  %v1448 = vadd.f32 %v1442, %v1446
  %v1449 = vmax.f32 %v1133, %v1154
  %v1450 = vmax.f32 %v1449, %v1175
  %v1451 = vmax.f32 %v1450, %v1196
  %v1452 = vsub.f32 %v1133, %v1451
  %v1453 = vmul.f32 %v1452, 1.442695
  %v1454 = vpow.pop %v1453
  %v1455 = vsub.f32 %v1154, %v1451
  %v1456 = vmul.f32 %v1455, 1.442695
  %v1457 = vpow.pop %v1456
  %v1458 = vsub.f32 %v1175, %v1451
  %v1459 = vmul.f32 %v1458, 1.442695
  %v1460 = vpow.pop %v1459
  %v1461 = vsub.f32 %v1196, %v1451
  %v1462 = vmul.f32 %v1461, 1.442695
  %v1463 = vpow.pop %v1462
  %v1464 = vadd.f32 %v1454, %v1457
  %v1465 = vadd.f32 %v1464, %v1460
  %v1466 = vadd.f32 %v1465, %v1463
  %v1467 = vrcp.pop %v1466
  %v1468 = vmul.f32 1.0, %v1467
  %v1469 = vmul.f32 %v1454, %v1468
  %v1470 = vmul.f32 %v1457, %v1468
  %v1471 = vmul.f32 %v1460, %v1468
  %v1472 = vmul.f32 %v1463, %v1468
  %v1473 = vmul.f32 %v1469, %v842
  %v1474 = vmul.f32 %v1470, %v844
  %v1475 = vadd.f32 %v1473, %v1474
  %v1476 = vmul.f32 %v1471, %v1051
  %v1477 = vadd.f32 %v1475, %v1476
  %v1478 = vmul.f32 %v1472, %v1053
  %v1479 = vadd.f32 %v1477, %v1478
  %v1480 = vmul.f32 %v1469, %v848
  %v1481 = vmul.f32 %v1470, %v850
  %v1482 = vadd.f32 %v1480, %v1481
  %v1483 = vmul.f32 %v1471, %v1057
  %v1484 = vadd.f32 %v1482, %v1483
  %v1485 = vmul.f32 %v1472, %v1059
  %v1486 = vadd.f32 %v1484, %v1485
  %v1487 = vmul.f32 %v1469, %v854
  %v1488 = vmul.f32 %v1470, %v856
  %v1489 = vadd.f32 %v1487, %v1488
  %v1490 = vmul.f32 %v1471, %v1063
  %v1491 = vadd.f32 %v1489, %v1490
  %v1492 = vmul.f32 %v1472, %v1065
  %v1493 = vadd.f32 %v1491, %v1492
  %v1494 = vmul.f32 %v1469, %v860
  %v1495 = vmul.f32 %v1470, %v862
  %v1496 = vadd.f32 %v1494, %v1495
  %v1497 = vmul.f32 %v1471, %v1069
  %v1498 = vadd.f32 %v1496, %v1497
  %v1499 = vmul.f32 %v1472, %v1071
  %v1500 = vadd.f32 %v1498, %v1499
  %v1501 = vmul.f32 %v1469, %v866
  %v1502 = vmul.f32 %v1470, %v868
  %v1503 = vadd.f32 %v1501, %v1502
  %v1504 = vmul.f32 %v1471, %v1075
  %v1505 = vadd.f32 %v1503, %v1504
  %v1506 = vmul.f32 %v1472, %v1077
  %v1507 = vadd.f32 %v1505, %v1506
  %v1508 = vmul.f32 %v1469, %v872
  %v1509 = vmul.f32 %v1470, %v874
  %v1510 = vadd.f32 %v1508, %v1509
  %v1511 = vmul.f32 %v1471, %v1081
  %v1512 = vadd.f32 %v1510, %v1511
  %v1513 = vmul.f32 %v1472, %v1083
  %v1514 = vadd.f32 %v1512, %v1513
  %v1515 = vmul.f32 %v1469, %v878
  %v1516 = vmul.f32 %v1470, %v880
  %v1517 = vadd.f32 %v1515, %v1516
  %v1518 = vmul.f32 %v1471, %v1087
  %v1519 = vadd.f32 %v1517, %v1518
  %v1520 = vmul.f32 %v1472, %v1089
  %v1521 = vadd.f32 %v1519, %v1520
  %v1522 = vmul.f32 %v1469, %v884
  %v1523 = vmul.f32 %v1470, %v886
  %v1524 = vadd.f32 %v1522, %v1523
  %v1525 = vmul.f32 %v1471, %v1093
  %v1526 = vadd.f32 %v1524, %v1525
  %v1527 = vmul.f32 %v1472, %v1095
  %v1528 = vadd.f32 %v1526, %v1527
  %v1529 = vmax.f32 %v1217, %v1238
  %v1530 = vmax.f32 %v1529, %v1259
  %v1531 = vmax.f32 %v1530, %v1280
  %v1532 = vsub.f32 %v1217, %v1531
  %v1533 = vmul.f32 %v1532, 1.442695
  %v1534 = vpow.pop %v1533
  %v1535 = vsub.f32 %v1238, %v1531
  %v1536 = vmul.f32 %v1535, 1.442695
  %v1537 = vpow.pop %v1536
  %v1538 = vsub.f32 %v1259, %v1531
  %v1539 = vmul.f32 %v1538, 1.442695
  %v1540 = vpow.pop %v1539
  %v1541 = vsub.f32 %v1280, %v1531
  %v1542 = vmul.f32 %v1541, 1.442695
  %v1543 = vpow.pop %v1542
  %v1544 = vadd.f32 %v1534, %v1537
  %v1545 = vadd.f32 %v1544, %v1540
  %v1546 = vadd.f32 %v1545, %v1543
  %v1547 = vrcp.pop %v1546
  %v1548 = vmul.f32 1.0, %v1547
  %v1549 = vmul.f32 %v1534, %v1548
  %v1550 = vmul.f32 %v1537, %v1548
  %v1551 = vmul.f32 %v1540, %v1548
  %v1552 = vmul.f32 %v1543, %v1548
  %v1553 = vmul.f32 %v1549, %v842
  %v1554 = vmul.f32 %v1550, %v844
  %v1555 = vadd.f32 %v1553, %v1554
  %v1556 = vmul.f32 %v1551, %v1051
  %v1557 = vadd.f32 %v1555, %v1556
  %v1558 = vmul.f32 %v1552, %v1053
  %v1559 = vadd.f32 %v1557, %v1558
  %v1560 = vmul.f32 %v1549, %v848
  %v1561 = vmul.f32 %v1550, %v850
  %v1562 = vadd.f32 %v1560, %v1561
  %v1563 = vmul.f32 %v1551, %v1057
  %v1564 = vadd.f32 %v1562, %v1563
  %v1565 = vmul.f32 %v1552, %v1059
  %v1566 = vadd.f32 %v1564, %v1565
  %v1567 = vmul.f32 %v1549, %v854
  %v1568 = vmul.f32 %v1550, %v856
  %v1569 = vadd.f32 %v1567, %v1568
  %v1570 = vmul.f32 %v1551, %v1063
  %v1571 = vadd.f32 %v1569, %v1570
  %v1572 = vmul.f32 %v1552, %v1065
  %v1573 = vadd.f32 %v1571, %v1572
  %v1574 = vmul.f32 %v1549, %v860
  %v1575 = vmul.f32 %v1550, %v862
  %v1576 = vadd.f32 %v1574, %v1575
  %v1577 = vmul.f32 %v1551, %v1069
  %v1578 = vadd.f32 %v1576, %v1577
  %v1579 = vmul.f32 %v1552, %v1071
  %v1580 = vadd.f32 %v1578, %v1579
  %v1581 = vmul.f32 %v1549, %v866
  %v1582 = vmul.f32 %v1550, %v868
  %v1583 = vadd.f32 %v1581, %v1582
  %v1584 = vmul.f32 %v1551, %v1075
  %v1585 = vadd.f32 %v1583, %v1584
  %v1586 = vmul.f32 %v1552, %v1077
  %v1587 = vadd.f32 %v1585, %v1586
  %v1588 = vmul.f32 %v1549, %v872
  %v1589 = vmul.f32 %v1550, %v874
  %v1590 = vadd.f32 %v1588, %v1589
  %v1591 = vmul.f32 %v1551, %v1081
  %v1592 = vadd.f32 %v1590, %v1591
  %v1593 = vmul.f32 %v1552, %v1083
  %v1594 = vadd.f32 %v1592, %v1593
  %v1595 = vmul.f32 %v1549, %v878
  %v1596 = vmul.f32 %v1550, %v880
  %v1597 = vadd.f32 %v1595, %v1596
  %v1598 = vmul.f32 %v1551, %v1087
  %v1599 = vadd.f32 %v1597, %v1598
  %v1600 = vmul.f32 %v1552, %v1089
  %v1601 = vadd.f32 %v1599, %v1600
  %v1602 = vmul.f32 %v1549, %v884
  %v1603 = vmul.f32 %v1550, %v886
  %v1604 = vadd.f32 %v1602, %v1603
  %v1605 = vmul.f32 %v1551, %v1093
  %v1606 = vadd.f32 %v1604, %v1605
  %v1607 = vmul.f32 %v1552, %v1095
  %v1608 = vadd.f32 %v1606, %v1607
  %v1609 = vmax.f32 %v1301, %v1322
  %v1610 = vmax.f32 %v1609, %v1343
  %v1611 = vmax.f32 %v1610, %v1364
  %v1612 = vsub.f32 %v1301, %v1611
  %v1613 = vmul.f32 %v1612, 1.442695
  %v1614 = vpow.pop %v1613
  %v1615 = vsub.f32 %v1322, %v1611
  %v1616 = vmul.f32 %v1615, 1.442695
  %v1617 = vpow.pop %v1616
  %v1618 = vsub.f32 %v1343, %v1611
  %v1619 = vmul.f32 %v1618, 1.442695
  %v1620 = vpow.pop %v1619
  %v1621 = vsub.f32 %v1364, %v1611
  %v1622 = vmul.f32 %v1621, 1.442695
  %v1623 = vpow.pop %v1622
  %v1624 = vadd.f32 %v1614, %v1617
  %v1625 = vadd.f32 %v1624, %v1620
  %v1626 = vadd.f32 %v1625, %v1623
  %v1627 = vrcp.pop %v1626
  %v1628 = vmul.f32 1.0, %v1627
  %v1629 = vmul.f32 %v1614, %v1628
  %v1630 = vmul.f32 %v1617, %v1628
  %v1631 = vmul.f32 %v1620, %v1628
  %v1632 = vmul.f32 %v1623, %v1628
  %v1633 = vmul.f32 %v1629, %v842
  %v1634 = vmul.f32 %v1630, %v844
  %v1635 = vadd.f32 %v1633, %v1634
  %v1636 = vmul.f32 %v1631, %v1051
  %v1637 = vadd.f32 %v1635, %v1636
  %v1638 = vmul.f32 %v1632, %v1053
  %v1639 = vadd.f32 %v1637, %v1638
  %v1640 = vmul.f32 %v1629, %v848
  %v1641 = vmul.f32 %v1630, %v850
  %v1642 = vadd.f32 %v1640, %v1641
  %v1643 = vmul.f32 %v1631, %v1057
  %v1644 = vadd.f32 %v1642, %v1643
  %v1645 = vmul.f32 %v1632, %v1059
  %v1646 = vadd.f32 %v1644, %v1645
  %v1647 = vmul.f32 %v1629, %v854
  %v1648 = vmul.f32 %v1630, %v856
  %v1649 = vadd.f32 %v1647, %v1648
  %v1650 = vmul.f32 %v1631, %v1063
  %v1651 = vadd.f32 %v1649, %v1650
  %v1652 = vmul.f32 %v1632, %v1065
  %v1653 = vadd.f32 %v1651, %v1652
  %v1654 = vmul.f32 %v1629, %v860
  %v1655 = vmul.f32 %v1630, %v862
  %v1656 = vadd.f32 %v1654, %v1655
  %v1657 = vmul.f32 %v1631, %v1069
  %v1658 = vadd.f32 %v1656, %v1657
  %v1659 = vmul.f32 %v1632, %v1071
  %v1660 = vadd.f32 %v1658, %v1659
  %v1661 = vmul.f32 %v1629, %v866
  %v1662 = vmul.f32 %v1630, %v868
  %v1663 = vadd.f32 %v1661, %v1662
  %v1664 = vmul.f32 %v1631, %v1075
  %v1665 = vadd.f32 %v1663, %v1664
  %v1666 = vmul.f32 %v1632, %v1077
  %v1667 = vadd.f32 %v1665, %v1666
  %v1668 = vmul.f32 %v1629, %v872
  %v1669 = vmul.f32 %v1630, %v874
  %v1670 = vadd.f32 %v1668, %v1669
  %v1671 = vmul.f32 %v1631, %v1081
  %v1672 = vadd.f32 %v1670, %v1671
  %v1673 = vmul.f32 %v1632, %v1083
  %v1674 = vadd.f32 %v1672, %v1673
  %v1675 = vmul.f32 %v1629, %v878
  %v1676 = vmul.f32 %v1630, %v880
  %v1677 = vadd.f32 %v1675, %v1676
  %v1678 = vmul.f32 %v1631, %v1087
  %v1679 = vadd.f32 %v1677, %v1678
  %v1680 = vmul.f32 %v1632, %v1089
  %v1681 = vadd.f32 %v1679, %v1680
  %v1682 = vmul.f32 %v1629, %v884
  %v1683 = vmul.f32 %v1630, %v886
  %v1684 = vadd.f32 %v1682, %v1683
  %v1685 = vmul.f32 %v1631, %v1093
  %v1686 = vadd.f32 %v1684, %v1685
  %v1687 = vmul.f32 %v1632, %v1095
  %v1688 = vadd.f32 %v1686, %v1687
  %v1689 = vmax.f32 %v1385, %v1406
  %v1690 = vmax.f32 %v1689, %v1427
  %v1691 = vmax.f32 %v1690, %v1448
  %v1692 = vsub.f32 %v1385, %v1691
  %v1693 = vmul.f32 %v1692, 1.442695
  %v1694 = vpow.pop %v1693
  %v1695 = vsub.f32 %v1406, %v1691
  %v1696 = vmul.f32 %v1695, 1.442695
  %v1697 = vpow.pop %v1696
  %v1698 = vsub.f32 %v1427, %v1691
  %v1699 = vmul.f32 %v1698, 1.442695
  %v1700 = vpow.pop %v1699
  %v1701 = vsub.f32 %v1448, %v1691
  %v1702 = vmul.f32 %v1701, 1.442695
  %v1703 = vpow.pop %v1702
  %v1704 = vadd.f32 %v1694, %v1697
  %v1705 = vadd.f32 %v1704, %v1700
  %v1706 = vadd.f32 %v1705, %v1703
  %v1707 = vrcp.pop %v1706
  %v1708 = vmul.f32 1.0, %v1707
  %v1709 = vmul.f32 %v1694, %v1708
  %v1710 = vmul.f32 %v1697, %v1708
  %v1711 = vmul.f32 %v1700, %v1708
  %v1712 = vmul.f32 %v1703, %v1708
  %v1713 = vmul.f32 %v1709, %v842
  %v1714 = vmul.f32 %v1710, %v844
  %v1715 = vadd.f32 %v1713, %v1714
  %v1716 = vmul.f32 %v1711, %v1051
  %v1717 = vadd.f32 %v1715, %v1716
  %v1718 = vmul.f32 %v1712, %v1053
  %v1719 = vadd.f32 %v1717, %v1718
  %v1720 = vmul.f32 %v1709, %v848
  %v1721 = vmul.f32 %v1710, %v850
  %v1722 = vadd.f32 %v1720, %v1721
  %v1723 = vmul.f32 %v1711, %v1057
  %v1724 = vadd.f32 %v1722, %v1723
  %v1725 = vmul.f32 %v1712, %v1059
  %v1726 = vadd.f32 %v1724, %v1725
  %v1727 = vmul.f32 %v1709, %v854
  %v1728 = vmul.f32 %v1710, %v856
  %v1729 = vadd.f32 %v1727, %v1728
  %v1730 = vmul.f32 %v1711, %v1063
  %v1731 = vadd.f32 %v1729, %v1730
  %v1732 = vmul.f32 %v1712, %v1065
  %v1733 = vadd.f32 %v1731, %v1732
  %v1734 = vmul.f32 %v1709, %v860
  %v1735 = vmul.f32 %v1710, %v862
  %v1736 = vadd.f32 %v1734, %v1735
  %v1737 = vmul.f32 %v1711, %v1069
  %v1738 = vadd.f32 %v1736, %v1737
  %v1739 = vmul.f32 %v1712, %v1071
  %v1740 = vadd.f32 %v1738, %v1739
  %v1741 = vmul.f32 %v1709, %v866
  %v1742 = vmul.f32 %v1710, %v868
  %v1743 = vadd.f32 %v1741, %v1742
  %v1744 = vmul.f32 %v1711, %v1075
  %v1745 = vadd.f32 %v1743, %v1744
  %v1746 = vmul.f32 %v1712, %v1077
  %v1747 = vadd.f32 %v1745, %v1746
  %v1748 = vmul.f32 %v1709, %v872
  %v1749 = vmul.f32 %v1710, %v874
  %v1750 = vadd.f32 %v1748, %v1749
  %v1751 = vmul.f32 %v1711, %v1081
  %v1752 = vadd.f32 %v1750, %v1751
  %v1753 = vmul.f32 %v1712, %v1083
  %v1754 = vadd.f32 %v1752, %v1753
  %v1755 = vmul.f32 %v1709, %v878
  %v1756 = vmul.f32 %v1710, %v880
  %v1757 = vadd.f32 %v1755, %v1756
  %v1758 = vmul.f32 %v1711, %v1087
  %v1759 = vadd.f32 %v1757, %v1758
  %v1760 = vmul.f32 %v1712, %v1089
  %v1761 = vadd.f32 %v1759, %v1760
  %v1762 = vmul.f32 %v1709, %v884
  %v1763 = vmul.f32 %v1710, %v886
  %v1764 = vadd.f32 %v1762, %v1763
  %v1765 = vmul.f32 %v1711, %v1093
  %v1766 = vadd.f32 %v1764, %v1765
  %v1767 = vmul.f32 %v1712, %v1095
  %v1768 = vadd.f32 %v1766, %v1767
  %v1769 = vld [vmem:[%s3] sm:$0xff]
  %v1770 = vld [vmem:[%s3 + $0x8] sm:$0xff]
  %v1771 = vld [vmem:[%s3 + $0x10] sm:$0xff]
  %v1772 = vld [vmem:[%s3 + $0x18] sm:$0xff]
  %v1773 = vld [vmem:[%s3 + $0x20] sm:$0xff]
  %v1774 = vld [vmem:[%s3 + $0x28] sm:$0xff]
  %v1775 = vld [vmem:[%s3 + $0x30] sm:$0xff]
  %v1776 = vld [vmem:[%s3 + $0x38] sm:$0xff]
  %v1777 = vld [vmem:[%s4] sm:$0xff]
  %v1778 = vld [vmem:[%s4 + $0x8] sm:$0xff]
  %v1779 = vld [vmem:[%s4 + $0x10] sm:$0xff]
  %v1780 = vld [vmem:[%s4 + $0x18] sm:$0xff]
  %v1781 = vld [vmem:[%s4 + $0x20] sm:$0xff]
  %v1782 = vld [vmem:[%s4 + $0x28] sm:$0xff]
  %v1783 = vld [vmem:[%s4 + $0x30] sm:$0xff]
  %v1784 = vld [vmem:[%s4 + $0x38] sm:$0xff]
  %1786 = vset.pattern.permute.xlu0 0
  %1787 = vperm.xlu0 %1786, %v1777
  %v1788 = vpop.permute.xlu0 %1787
  %1791 = vset.pattern.permute.xlu0 0
  %1792 = vperm.xlu0 %1791, %v1778
  %v1793 = vpop.permute.xlu0 %1792
  %1796 = vset.pattern.permute.xlu0 0
  %1797 = vperm.xlu0 %1796, %v1779
  %v1798 = vpop.permute.xlu0 %1797
  %1801 = vset.pattern.permute.xlu0 0
  %1802 = vperm.xlu0 %1801, %v1780
  %v1803 = vpop.permute.xlu0 %1802
  %1806 = vset.pattern.permute.xlu0 0
  %1807 = vperm.xlu0 %1806, %v1781
  %v1808 = vpop.permute.xlu0 %1807
  %1811 = vset.pattern.permute.xlu0 0
  %1812 = vperm.xlu0 %1811, %v1782
  %v1813 = vpop.permute.xlu0 %1812
  %1816 = vset.pattern.permute.xlu0 0
  %1817 = vperm.xlu0 %1816, %v1783
  %v1818 = vpop.permute.xlu0 %1817
  %1821 = vset.pattern.permute.xlu0 0
  %1822 = vperm.xlu0 %1821, %v1784
  %v1823 = vpop.permute.xlu0 %1822
  %v1826 = vsel %vm606, %v1769, 0
  %v1829 = vsel %vm606, %v1770, 0
  %v1832 = vsel %vm606, %v1771, 0
  %v1835 = vsel %vm606, %v1772, 0
  %v1838 = vsel %vm606, %v1773, 0
  %v1841 = vsel %vm606, %v1774, 0
  %v1844 = vsel %vm606, %v1775, 0
  %v1847 = vsel %vm606, %v1776, 0
  %1849 = vmatprep.subr.mxu0 %v1559
  %1850 = vmatpush1.msra.mxu0 %v1479
  %1851 = vmatprep.subr.mxu0 %v1566
  %1852 = vmatpush1.msra.mxu0 %v1486
  %1853 = vmatprep.subr.mxu0 %v1573
  %1854 = vmatpush1.msra.mxu0 %v1493
  %1855 = vmatprep.subr.mxu0 %v1580
  %1856 = vmatpush1.msra.mxu0 %v1500
  %1857 = vmatprep.subr.mxu0 %v1587
  %1858 = vmatpush1.msra.mxu0 %v1507
  %1859 = vmatprep.subr.mxu0 %v1594
  %1860 = vmatpush1.msra.mxu0 %v1514
  %1861 = vmatprep.subr.mxu0 %v1601
  %1862 = vmatpush1.msra.mxu0 %v1521
  %1863 = vmatprep.subr.mxu0 %v1608
  %1864 = vmatpush1.msra.mxu0 %v1528
  %1865 = vmatprep.subr.mxu0 0.0
  %1866 = vmatpush1.msra.mxu0 0.0
  %1867 = vmatprep.subr.mxu0 0.0
  %1868 = vmatpush1.msra.mxu0 0.0
  %1869 = vmatprep.subr.mxu0 0.0
  %1870 = vmatpush1.msra.mxu0 0.0
  %1871 = vmatprep.subr.mxu0 0.0
  %1872 = vmatpush1.msra.mxu0 0.0
  %1873 = vmatprep.subr.mxu0 0.0
  %1874 = vmatpush1.msra.mxu0 0.0
  %1875 = vmatprep.subr.mxu0 0.0
  %1876 = vmatpush1.msra.mxu0 0.0
  %1877 = vmatprep.subr.mxu0 0.0
  %1878 = vmatpush1.msra.mxu0 0.0
  %1879 = vmatprep.subr.mxu0 0.0
  %1880 = vmatpush1.msra.mxu0 0.0
  %1881 = vmatprep.subr.mxu0 0.0
  %1882 = vmatpush1.msra.mxu0 0.0
  %1883 = vmatprep.subr.mxu0 0.0
  %1884 = vmatpush1.msra.mxu0 0.0
  %1885 = vmatprep.subr.mxu0 0.0
  %1886 = vmatpush1.msra.mxu0 0.0
  %1887 = vmatprep.subr.mxu0 0.0
  %1888 = vmatpush1.msra.mxu0 0.0
  %1889 = vmatprep.subr.mxu0 0.0
  %1890 = vmatpush1.msra.mxu0 0.0
  %1891 = vmatprep.subr.mxu0 0.0
  %1892 = vmatpush1.msra.mxu0 0.0
  %1893 = vmatprep.subr.mxu0 0.0
  %1894 = vmatpush1.msra.mxu0 0.0
  %1895 = vmatprep.subr.mxu0 0.0
  %1896 = vmatpush1.msra.mxu0 0.0
  %1897 = vmatprep.subr.mxu0 0.0
  %1898 = vmatpush1.msra.mxu0 0.0
  %1899 = vmatprep.subr.mxu0 0.0
  %1900 = vmatpush1.msra.mxu0 0.0
  %1901 = vmatprep.subr.mxu0 0.0
  %1902 = vmatpush1.msra.mxu0 0.0
  %1903 = vmatprep.subr.mxu0 0.0
  %1904 = vmatpush1.msra.mxu0 0.0
  %1905 = vmatprep.subr.mxu0 0.0
  %1906 = vmatpush1.msra.mxu0 0.0
  %1907 = vmatprep.subr.mxu0 0.0
  %1908 = vmatpush1.msra.mxu0 0.0
  %1909 = vmatprep.subr.mxu0 0.0
  %1910 = vmatpush1.msra.mxu0 0.0
  %1911 = vmatprep.subr.mxu0 0.0
  %1912 = vmatpush1.msra.mxu0 0.0
  %1913 = vmatprep.mubr.f32.mxu0 0.0
  %1914 = vmatmul.mubr.f32.gmra.mrb[0].mxu0 %v1826
  %v1915 = vpop.f32.mrb[0].mxu0
  %v1916 = vadd.f32 %v1788, %v1915
  %v1917 = vpop.f32.mrb[0].mxu0
  %v1918 = vadd.f32 %v1788, %v1917
  %1919 = vmatprep.mubr.f32.mxu0 0.0
  %1920 = vmatmul.mubr.f32.gmra.mrb[0].mxu0 %v1829
  %v1921 = vpop.f32.mrb[0].mxu0
  %v1922 = vadd.f32 %v1793, %v1921
  %v1923 = vpop.f32.mrb[0].mxu0
  %v1924 = vadd.f32 %v1793, %v1923
  %1925 = vmatprep.mubr.f32.mxu0 0.0
  %1926 = vmatmul.mubr.f32.gmra.mrb[0].mxu0 %v1832
  %v1927 = vpop.f32.mrb[0].mxu0
  %v1928 = vadd.f32 %v1798, %v1927
  %v1929 = vpop.f32.mrb[0].mxu0
  %v1930 = vadd.f32 %v1798, %v1929
  %1931 = vmatprep.mubr.f32.mxu0 0.0
  %1932 = vmatmul.mubr.f32.gmra.mrb[0].mxu0 %v1835
  %v1933 = vpop.f32.mrb[0].mxu0
  %v1934 = vadd.f32 %v1803, %v1933
  %v1935 = vpop.f32.mrb[0].mxu0
  %v1936 = vadd.f32 %v1803, %v1935
  %1937 = vmatprep.mubr.f32.mxu0 0.0
  %1938 = vmatmul.mubr.f32.gmra.mrb[0].mxu0 %v1838
  %v1939 = vpop.f32.mrb[0].mxu0
  %v1940 = vadd.f32 %v1808, %v1939
  %v1941 = vpop.f32.mrb[0].mxu0
  %v1942 = vadd.f32 %v1808, %v1941
  %1943 = vmatprep.mubr.f32.mxu0 0.0
  %1944 = vmatmul.mubr.f32.gmra.mrb[0].mxu0 %v1841
  %v1945 = vpop.f32.mrb[0].mxu0
  %v1946 = vadd.f32 %v1813, %v1945
  %v1947 = vpop.f32.mrb[0].mxu0
  %v1948 = vadd.f32 %v1813, %v1947
  %1949 = vmatprep.mubr.f32.mxu0 0.0
  %1950 = vmatmul.mubr.f32.gmra.mrb[0].mxu0 %v1844
  %v1951 = vpop.f32.mrb[0].mxu0
  %v1952 = vadd.f32 %v1818, %v1951
  %v1953 = vpop.f32.mrb[0].mxu0
  %v1954 = vadd.f32 %v1818, %v1953
  %1955 = vmatprep.mubr.f32.mxu0 0.0
  %1956 = vmatmul.mubr.f32.gmra.mrb[0].mxu0 %v1847
  %v1957 = vpop.f32.mrb[0].mxu0
  %v1958 = vadd.f32 %v1823, %v1957
  %v1959 = vpop.f32.mrb[0].mxu0
  %v1960 = vadd.f32 %v1823, %v1959
  %1961 = vdwg.mxu0
  %1962 = vmatprep.subr.mxu0 %v1719
  %1963 = vmatpush1.msra.mxu0 %v1639
  %1964 = vmatprep.subr.mxu0 %v1726
  %1965 = vmatpush1.msra.mxu0 %v1646
  %1966 = vmatprep.subr.mxu0 %v1733
  %1967 = vmatpush1.msra.mxu0 %v1653
  %1968 = vmatprep.subr.mxu0 %v1740
  %1969 = vmatpush1.msra.mxu0 %v1660
  %1970 = vmatprep.subr.mxu0 %v1747
  %1971 = vmatpush1.msra.mxu0 %v1667
  %1972 = vmatprep.subr.mxu0 %v1754
  %1973 = vmatpush1.msra.mxu0 %v1674
  %1974 = vmatprep.subr.mxu0 %v1761
  %1975 = vmatpush1.msra.mxu0 %v1681
  %1976 = vmatprep.subr.mxu0 %v1768
  %1977 = vmatpush1.msra.mxu0 %v1688
  %1978 = vmatprep.subr.mxu0 0.0
  %1979 = vmatpush1.msra.mxu0 0.0
  %1980 = vmatprep.subr.mxu0 0.0
  %1981 = vmatpush1.msra.mxu0 0.0
  %1982 = vmatprep.subr.mxu0 0.0
  %1983 = vmatpush1.msra.mxu0 0.0
  %1984 = vmatprep.subr.mxu0 0.0
  %1985 = vmatpush1.msra.mxu0 0.0
  %1986 = vmatprep.subr.mxu0 0.0
  %1987 = vmatpush1.msra.mxu0 0.0
  %1988 = vmatprep.subr.mxu0 0.0
  %1989 = vmatpush1.msra.mxu0 0.0
  %1990 = vmatprep.subr.mxu0 0.0
  %1991 = vmatpush1.msra.mxu0 0.0
  %1992 = vmatprep.subr.mxu0 0.0
  %1993 = vmatpush1.msra.mxu0 0.0
  %1994 = vmatprep.subr.mxu0 0.0
  %1995 = vmatpush1.msra.mxu0 0.0
  %1996 = vmatprep.subr.mxu0 0.0
  %1997 = vmatpush1.msra.mxu0 0.0
  %1998 = vmatprep.subr.mxu0 0.0
  %1999 = vmatpush1.msra.mxu0 0.0
  %2000 = vmatprep.subr.mxu0 0.0
  %2001 = vmatpush1.msra.mxu0 0.0
  %2002 = vmatprep.subr.mxu0 0.0
  %2003 = vmatpush1.msra.mxu0 0.0
  %2004 = vmatprep.subr.mxu0 0.0
  %2005 = vmatpush1.msra.mxu0 0.0
  %2006 = vmatprep.subr.mxu0 0.0
  %2007 = vmatpush1.msra.mxu0 0.0
  %2008 = vmatprep.subr.mxu0 0.0
  %2009 = vmatpush1.msra.mxu0 0.0
  %2010 = vmatprep.subr.mxu0 0.0
  %2011 = vmatpush1.msra.mxu0 0.0
  %2012 = vmatprep.subr.mxu0 0.0
  %2013 = vmatpush1.msra.mxu0 0.0
  %2014 = vmatprep.subr.mxu0 0.0
  %2015 = vmatpush1.msra.mxu0 0.0
  %2016 = vmatprep.subr.mxu0 0.0
  %2017 = vmatpush1.msra.mxu0 0.0
  %2018 = vmatprep.subr.mxu0 0.0
  %2019 = vmatpush1.msra.mxu0 0.0
  %2020 = vmatprep.subr.mxu0 0.0
  %2021 = vmatpush1.msra.mxu0 0.0
  %2022 = vmatprep.subr.mxu0 0.0
  %2023 = vmatpush1.msra.mxu0 0.0
  %2024 = vmatprep.subr.mxu0 0.0
  %2025 = vmatpush1.msra.mxu0 0.0
  %2026 = vmatprep.mubr.f32.mxu0 0.0
  %2027 = vmatmul.mubr.f32.gmra.mrb[0].mxu0 %v1826
  %v2028 = vpop.f32.mrb[0].mxu0
  %v2029 = vadd.f32 %v1788, %v2028
  %v2030 = vpop.f32.mrb[0].mxu0
  %v2031 = vadd.f32 %v1788, %v2030
  %2032 = vmatprep.mubr.f32.mxu0 0.0
  %2033 = vmatmul.mubr.f32.gmra.mrb[0].mxu0 %v1829
  %v2034 = vpop.f32.mrb[0].mxu0
  %v2035 = vadd.f32 %v1793, %v2034
  %v2036 = vpop.f32.mrb[0].mxu0
  %v2037 = vadd.f32 %v1793, %v2036
  %2038 = vmatprep.mubr.f32.mxu0 0.0
  %2039 = vmatmul.mubr.f32.gmra.mrb[0].mxu0 %v1832
  %v2040 = vpop.f32.mrb[0].mxu0
  %v2041 = vadd.f32 %v1798, %v2040
  %v2042 = vpop.f32.mrb[0].mxu0
  %v2043 = vadd.f32 %v1798, %v2042
  %2044 = vmatprep.mubr.f32.mxu0 0.0
  %2045 = vmatmul.mubr.f32.gmra.mrb[0].mxu0 %v1835
  %v2046 = vpop.f32.mrb[0].mxu0
  %v2047 = vadd.f32 %v1803, %v2046
  %v2048 = vpop.f32.mrb[0].mxu0
  %v2049 = vadd.f32 %v1803, %v2048
  %2050 = vmatprep.mubr.f32.mxu0 0.0
  %2051 = vmatmul.mubr.f32.gmra.mrb[0].mxu0 %v1838
  %v2052 = vpop.f32.mrb[0].mxu0
  %v2053 = vadd.f32 %v1808, %v2052
  %v2054 = vpop.f32.mrb[0].mxu0
  %v2055 = vadd.f32 %v1808, %v2054
  %2056 = vmatprep.mubr.f32.mxu0 0.0
  %2057 = vmatmul.mubr.f32.gmra.mrb[0].mxu0 %v1841
  %v2058 = vpop.f32.mrb[0].mxu0
  %v2059 = vadd.f32 %v1813, %v2058
  %v2060 = vpop.f32.mrb[0].mxu0
  %v2061 = vadd.f32 %v1813, %v2060
  %2062 = vmatprep.mubr.f32.mxu0 0.0
  %2063 = vmatmul.mubr.f32.gmra.mrb[0].mxu0 %v1844
  %v2064 = vpop.f32.mrb[0].mxu0
  %v2065 = vadd.f32 %v1818, %v2064
  %v2066 = vpop.f32.mrb[0].mxu0
  %v2067 = vadd.f32 %v1818, %v2066
  %2068 = vmatprep.mubr.f32.mxu0 0.0
  %2069 = vmatmul.mubr.f32.gmra.mrb[0].mxu0 %v1847
  %v2070 = vpop.f32.mrb[0].mxu0
  %v2071 = vadd.f32 %v1823, %v2070
  %v2072 = vpop.f32.mrb[0].mxu0
  %v2073 = vadd.f32 %v1823, %v2072
  %2074 = vdwg.mxu0
  %2075 = vst [vmem:[%s8] sm:$0xff] %v1916
  %2076 = vst [vmem:[%s8 + $0x8] sm:$0xff] %v1918
  %2077 = vst [vmem:[%s8 + $0x10] sm:$0xff] %v2029
  %2078 = vst [vmem:[%s8 + $0x18] sm:$0xff] %v2031
  %2079 = vst [vmem:[%s8 + $0x20] sm:$0xff] %v1922
  %2080 = vst [vmem:[%s8 + $0x28] sm:$0xff] %v1924
  %2081 = vst [vmem:[%s8 + $0x30] sm:$0xff] %v2035
  %2082 = vst [vmem:[%s8 + $0x38] sm:$0xff] %v2037
  %2083 = vst [vmem:[%s8 + $0x40] sm:$0xff] %v1928
  %2084 = vst [vmem:[%s8 + $0x48] sm:$0xff] %v1930
  %2085 = vst [vmem:[%s8 + $0x50] sm:$0xff] %v2041
  %2086 = vst [vmem:[%s8 + $0x58] sm:$0xff] %v2043
  %2087 = vst [vmem:[%s8 + $0x60] sm:$0xff] %v1934
  %2088 = vst [vmem:[%s8 + $0x68] sm:$0xff] %v1936
  %2089 = vst [vmem:[%s8 + $0x70] sm:$0xff] %v2047
  %2090 = vst [vmem:[%s8 + $0x78] sm:$0xff] %v2049
  %2091 = vst [vmem:[%s8 + $0x80] sm:$0xff] %v1940
  %2092 = vst [vmem:[%s8 + $0x88] sm:$0xff] %v1942
  %2093 = vst [vmem:[%s8 + $0x90] sm:$0xff] %v2053
  %2094 = vst [vmem:[%s8 + $0x98] sm:$0xff] %v2055
  %2095 = vst [vmem:[%s8 + $0xa0] sm:$0xff] %v1946
  %2096 = vst [vmem:[%s8 + $0xa8] sm:$0xff] %v1948
  %2097 = vst [vmem:[%s8 + $0xb0] sm:$0xff] %v2059
  %2098 = vst [vmem:[%s8 + $0xb8] sm:$0xff] %v2061
  %2099 = vst [vmem:[%s8 + $0xc0] sm:$0xff] %v1952
  %2100 = vst [vmem:[%s8 + $0xc8] sm:$0xff] %v1954
  %2101 = vst [vmem:[%s8 + $0xd0] sm:$0xff] %v2065
  %2102 = vst [vmem:[%s8 + $0xd8] sm:$0xff] %v2067
  %2103 = vst [vmem:[%s8 + $0xe0] sm:$0xff] %v1958
  %2104 = vst [vmem:[%s8 + $0xe8] sm:$0xff] %v1960
  %2105 = vst [vmem:[%s8 + $0xf0] sm:$0xff] %v2071
  %2106 = vst [vmem:[%s8 + $0xf8] sm:$0xff] %v2073
  // Predicated region
  $region34: #{swin_model.7} parent=0 // pred_check
    _
  $region35: #{swin_model.7} parent=0 // pred_check_branch
    %2108 = sbr.rel (0) target = $region37
  $region36: #{swin_model.7} parent=0 // pred_region
    _
  $region37: #{swin_model.7} parent=0 // pred_fallthru
    _
  // Predicated region
  $region38: #{swin_model.7} parent=0 // pred_check
    _
  $region39: #{swin_model.7} parent=0 // pred_check_branch
    %2110 = sbr.rel (0) target = $region41
  $region40: #{swin_model.7} parent=0 // pred_region
    _
  $region41: #{swin_model.7} parent=0 // pred_fallthru
    _

// kernel: swin_model.11
$region0: #{swin_model.11}
  #allocation0 [shape = 'u32[]', space=smem, size = 0x4, offset = 0x4, fixed_abs, tag = 'smem constant byte address 0x4 - core index']
  #allocation1 [shape = 'u32[144,128]{1,0:T(1,128)}', space=vmem, size = 0x12000, scoped, tag = 'internal scratch']
  %s0 = inlined_call_operand.vmem [shape: f32[128,256], index: 0, kind: input, shape index: {}]
  %s1 = inlined_call_operand.vmem [shape: f32[256,128], index: 1, kind: input, shape index: {}]
  %s2 = inlined_call_operand.vmem [shape: f32[64,6], index: 2, kind: input, shape index: {}]
  %s3 = inlined_call_operand.vmem [shape: f32[1,6], index: 3, kind: input, shape index: {}]
  %s4 = inlined_call_operand.hbm [shape: f32[2,6], index: 4, kind: output, shape index: {}]
  %s5 = sld [smem:[#allocation0]]
  $region26: #{swin_model.11} parent=0
    _
  %s7 = ssub.s32 1, %s5
  %s8 = scalar_select 0, %s7, %s5
  $region1: #{swin_model.11} parent=0
    #allocation2 [shape = 'u8[1024]{0}', space=vmem, size = 0x400, scoped, tag = 'output window, operand 0, single buffered']
    #allocation3 [shape = 's32[1]{0}', space=sflag, size = 0x4, scoped, tag = 'scoped memory for swin_model.11']
    %9 = vsyncpa [#allocation3], 0
    // Predicated region
    $region2: #{swin_model.11} parent=1 // pred_check
      _
    $region3: #{swin_model.11} parent=1 // pred_check_branch
      %11 = sbr.rel (0) target = $region5
    $region4: #{swin_model.11} parent=1 // pred_region
      _
    $region5: #{swin_model.11} parent=1 // pred_fallthru
      _
    // Predicated region
    $region6: #{swin_model.11} parent=1 // pred_check
      _
    $region7: #{swin_model.11} parent=1 // pred_check_branch
      %13 = sbr.rel (0) target = $region9
    $region8: #{swin_model.11} parent=1 // pred_region
      _
    $region9: #{swin_model.11} parent=1 // pred_fallthru
      _
    // Predicated region
    $region10: #{swin_model.11} parent=1 // pred_check
      _
    $region11: #{swin_model.11} parent=1 // pred_check_branch
      %15 = sbr.rel (0) target = $region13
    $region12: #{swin_model.11} parent=1 // pred_region
      _
    $region13: #{swin_model.11} parent=1 // pred_fallthru
      _
    // Predicated region
    $region14: #{swin_model.11} parent=1 // pred_check
      _
    $region15: #{swin_model.11} parent=1 // pred_check_branch
      %17 = sbr.rel (0) target = $region17
    $region16: #{swin_model.11} parent=1 // pred_region
      _
    $region17: #{swin_model.11} parent=1 // pred_fallthru
      _
    %v18 = vld [vmem:[%s0] sm:$0xff]
    %v19 = vld [vmem:[%s0 + $0x8] sm:$0xff]
    %v20 = vld [vmem:[%s0 + $0x10] sm:$0xff]
    %v21 = vld [vmem:[%s0 + $0x18] sm:$0xff]
    %v22 = vld [vmem:[%s0 + $0x20] sm:$0xff]
    %v23 = vld [vmem:[%s0 + $0x28] sm:$0xff]
    %v24 = vld [vmem:[%s0 + $0x30] sm:$0xff]
    %v25 = vld [vmem:[%s0 + $0x38] sm:$0xff]
    %v26 = vld [vmem:[%s0 + $0x40] sm:$0xff]
    %v27 = vld [vmem:[%s0 + $0x48] sm:$0xff]
    %v28 = vld [vmem:[%s0 + $0x50] sm:$0xff]
    %v29 = vld [vmem:[%s0 + $0x58] sm:$0xff]
    %v30 = vld [vmem:[%s0 + $0x60] sm:$0xff]
    %v31 = vld [vmem:[%s0 + $0x68] sm:$0xff]
    %v32 = vld [vmem:[%s0 + $0x70] sm:$0xff]
    %v33 = vld [vmem:[%s0 + $0x78] sm:$0xff]
    %v34 = vld [vmem:[%s0 + $0x80] sm:$0xff]
    %v35 = vld [vmem:[%s0 + $0x88] sm:$0xff]
    %v36 = vld [vmem:[%s0 + $0x90] sm:$0xff]
    %v37 = vld [vmem:[%s0 + $0x98] sm:$0xff]
    %v38 = vld [vmem:[%s0 + $0xa0] sm:$0xff]
    %v39 = vld [vmem:[%s0 + $0xa8] sm:$0xff]
    %v40 = vld [vmem:[%s0 + $0xb0] sm:$0xff]
    %v41 = vld [vmem:[%s0 + $0xb8] sm:$0xff]
    %v42 = vld [vmem:[%s0 + $0xc0] sm:$0xff]
    %v43 = vld [vmem:[%s0 + $0xc8] sm:$0xff]
    %v44 = vld [vmem:[%s0 + $0xd0] sm:$0xff]
    %v45 = vld [vmem:[%s0 + $0xd8] sm:$0xff]
    %v46 = vld [vmem:[%s0 + $0xe0] sm:$0xff]
    %v47 = vld [vmem:[%s0 + $0xe8] sm:$0xff]
    %v48 = vld [vmem:[%s0 + $0xf0] sm:$0xff]
    %v49 = vld [vmem:[%s0 + $0xf8] sm:$0xff]
    %v50 = vld [vmem:[%s1] sm:$0xff]
    %v51 = vld [vmem:[%s1 + $0x8] sm:$0xff]
    %v52 = vld [vmem:[%s1 + $0x10] sm:$0xff]
    %v53 = vld [vmem:[%s1 + $0x18] sm:$0xff]
    %v54 = vld [vmem:[%s1 + $0x20] sm:$0xff]
    %v55 = vld [vmem:[%s1 + $0x28] sm:$0xff]
    %v56 = vld [vmem:[%s1 + $0x30] sm:$0xff]
    %v57 = vld [vmem:[%s1 + $0x38] sm:$0xff]
    %v58 = vld [vmem:[%s1 + $0x40] sm:$0xff]
    %v59 = vld [vmem:[%s1 + $0x48] sm:$0xff]
    %v60 = vld [vmem:[%s1 + $0x50] sm:$0xff]
    %v61 = vld [vmem:[%s1 + $0x58] sm:$0xff]
    %v62 = vld [vmem:[%s1 + $0x60] sm:$0xff]
    %v63 = vld [vmem:[%s1 + $0x68] sm:$0xff]
    %v64 = vld [vmem:[%s1 + $0x70] sm:$0xff]
    %v65 = vld [vmem:[%s1 + $0x78] sm:$0xff]
    %v66 = vld [vmem:[%s1 + $0x80] sm:$0xff]
    %v67 = vld [vmem:[%s1 + $0x88] sm:$0xff]
    %v68 = vld [vmem:[%s1 + $0x90] sm:$0xff]
    %v69 = vld [vmem:[%s1 + $0x98] sm:$0xff]
    %v70 = vld [vmem:[%s1 + $0xa0] sm:$0xff]
    %v71 = vld [vmem:[%s1 + $0xa8] sm:$0xff]
    %v72 = vld [vmem:[%s1 + $0xb0] sm:$0xff]
    %v73 = vld [vmem:[%s1 + $0xb8] sm:$0xff]
    %v74 = vld [vmem:[%s1 + $0xc0] sm:$0xff]
    %v75 = vld [vmem:[%s1 + $0xc8] sm:$0xff]
    %v76 = vld [vmem:[%s1 + $0xd0] sm:$0xff]
    %v77 = vld [vmem:[%s1 + $0xd8] sm:$0xff]
    %v78 = vld [vmem:[%s1 + $0xe0] sm:$0xff]
    %v79 = vld [vmem:[%s1 + $0xe8] sm:$0xff]
    %v80 = vld [vmem:[%s1 + $0xf0] sm:$0xff]
    %v81 = vld [vmem:[%s1 + $0xf8] sm:$0xff]
    %82 = vmatprep.subr.mxu0 0.0
    %83 = vmatpush1.msra.mxu0 %v50
    %84 = vmatprep.subr.mxu0 0.0
    %85 = vmatpush1.msra.mxu0 %v51
    %86 = vmatprep.subr.mxu0 0.0
    %87 = vmatpush1.msra.mxu0 %v52
    %88 = vmatprep.subr.mxu0 0.0
    %89 = vmatpush1.msra.mxu0 %v53
    %90 = vmatprep.subr.mxu0 0.0
    %91 = vmatpush1.msra.mxu0 %v54
    %92 = vmatprep.subr.mxu0 0.0
    %93 = vmatpush1.msra.mxu0 %v55
    %94 = vmatprep.subr.mxu0 0.0
    %95 = vmatpush1.msra.mxu0 %v56
    %96 = vmatprep.subr.mxu0 0.0
    %97 = vmatpush1.msra.mxu0 %v57
    %98 = vmatprep.subr.mxu0 0.0
    %99 = vmatpush1.msra.mxu0 %v58
    %100 = vmatprep.subr.mxu0 0.0
    %101 = vmatpush1.msra.mxu0 %v59
    %102 = vmatprep.subr.mxu0 0.0
    %103 = vmatpush1.msra.mxu0 %v60
    %104 = vmatprep.subr.mxu0 0.0
    %105 = vmatpush1.msra.mxu0 %v61
    %106 = vmatprep.subr.mxu0 0.0
    %107 = vmatpush1.msra.mxu0 %v62
    %108 = vmatprep.subr.mxu0 0.0
    %109 = vmatpush1.msra.mxu0 %v63
    %110 = vmatprep.subr.mxu0 0.0
    %111 = vmatpush1.msra.mxu0 %v64
    %112 = vmatprep.subr.mxu0 0.0
    %113 = vmatpush1.msra.mxu0 %v65
    %114 = vmatprep.subr.mxu0 0.0
    %115 = vmatpush1.msra.mxu0 %v66
    %116 = vmatprep.subr.mxu0 0.0
    %117 = vmatpush1.msra.mxu0 %v67
    %118 = vmatprep.subr.mxu0 0.0
    %119 = vmatpush1.msra.mxu0 %v68
    %120 = vmatprep.subr.mxu0 0.0
    %121 = vmatpush1.msra.mxu0 %v69
    %122 = vmatprep.subr.mxu0 0.0
    %123 = vmatpush1.msra.mxu0 %v70
    %124 = vmatprep.subr.mxu0 0.0
    %125 = vmatpush1.msra.mxu0 %v71
    %126 = vmatprep.subr.mxu0 0.0
    %127 = vmatpush1.msra.mxu0 %v72
    %128 = vmatprep.subr.mxu0 0.0
    %129 = vmatpush1.msra.mxu0 %v73
    %130 = vmatprep.subr.mxu0 0.0
    %131 = vmatpush1.msra.mxu0 %v74
    %132 = vmatprep.subr.mxu0 0.0
    %133 = vmatpush1.msra.mxu0 %v75
    %134 = vmatprep.subr.mxu0 0.0
    %135 = vmatpush1.msra.mxu0 %v76
    %136 = vmatprep.subr.mxu0 0.0
    %137 = vmatpush1.msra.mxu0 %v77
    %138 = vmatprep.subr.mxu0 0.0
    %139 = vmatpush1.msra.mxu0 %v78
    %140 = vmatprep.subr.mxu0 0.0
    %141 = vmatpush1.msra.mxu0 %v79
    %142 = vmatprep.subr.mxu0 0.0
    %143 = vmatpush1.msra.mxu0 %v80
    %144 = vmatprep.subr.mxu0 0.0
    %145 = vmatpush1.msra.mxu0 %v81
    %146 = vmatprep.mubr.f32.mxu0 %v19
    %147 = vmatmul.mubr.f32.gmra.mrb[0].mxu0 %v18
    %v148 = vpop.f32.mrb[0].mxu0
    %v149 = vadd.f32 0.0, %v148
    %v150 = vpop.f32.mrb[0].mxu0
    %151 = vmatprep.mubr.f32.mxu0 %v21
    %152 = vmatmul.mubr.f32.gmra.mrb[0].mxu0 %v20
    %v153 = vpop.f32.mrb[0].mxu0
    %v154 = vadd.f32 0.0, %v153
    %v155 = vpop.f32.mrb[0].mxu0
    %156 = vmatprep.mubr.f32.mxu0 %v23
    %157 = vmatmul.mubr.f32.gmra.mrb[0].mxu0 %v22
    %v158 = vpop.f32.mrb[0].mxu0
    %v159 = vadd.f32 0.0, %v158
    %v160 = vpop.f32.mrb[0].mxu0
    %161 = vmatprep.mubr.f32.mxu0 %v25
    %162 = vmatmul.mubr.f32.gmra.mrb[0].mxu0 %v24
    %v163 = vpop.f32.mrb[0].mxu0
    %v164 = vadd.f32 0.0, %v163
    %v165 = vpop.f32.mrb[0].mxu0
    %166 = vmatprep.mubr.f32.mxu0 %v27
    %167 = vmatmul.mubr.f32.gmra.mrb[0].mxu0 %v26
    %v168 = vpop.f32.mrb[0].mxu0
    %v169 = vadd.f32 0.0, %v168
    %v170 = vpop.f32.mrb[0].mxu0
    %171 = vmatprep.mubr.f32.mxu0 %v29
    %172 = vmatmul.mubr.f32.gmra.mrb[0].mxu0 %v28
    %v173 = vpop.f32.mrb[0].mxu0
    %v174 = vadd.f32 0.0, %v173
    %v175 = vpop.f32.mrb[0].mxu0
    %176 = vmatprep.mubr.f32.mxu0 %v31
    %177 = vmatmul.mubr.f32.gmra.mrb[0].mxu0 %v30
    %v178 = vpop.f32.mrb[0].mxu0
    %v179 = vadd.f32 0.0, %v178
    %v180 = vpop.f32.mrb[0].mxu0
    %181 = vmatprep.mubr.f32.mxu0 %v33
    %182 = vmatmul.mubr.f32.gmra.mrb[0].mxu0 %v32
    %v183 = vpop.f32.mrb[0].mxu0
    %v184 = vadd.f32 0.0, %v183
    %v185 = vpop.f32.mrb[0].mxu0
    %186 = vmatprep.mubr.f32.mxu0 %v35
    %187 = vmatmul.mubr.f32.gmra.mrb[0].mxu0 %v34
    %v188 = vpop.f32.mrb[0].mxu0
    %v189 = vadd.f32 0.0, %v188
    %v190 = vpop.f32.mrb[0].mxu0
    %191 = vmatprep.mubr.f32.mxu0 %v37
    %192 = vmatmul.mubr.f32.gmra.mrb[0].mxu0 %v36
    %v193 = vpop.f32.mrb[0].mxu0
    %v194 = vadd.f32 0.0, %v193
    %v195 = vpop.f32.mrb[0].mxu0
    %196 = vmatprep.mubr.f32.mxu0 %v39
    %197 = vmatmul.mubr.f32.gmra.mrb[0].mxu0 %v38
    %v198 = vpop.f32.mrb[0].mxu0
    %v199 = vadd.f32 0.0, %v198
    %v200 = vpop.f32.mrb[0].mxu0
    %201 = vmatprep.mubr.f32.mxu0 %v41
    %202 = vmatmul.mubr.f32.gmra.mrb[0].mxu0 %v40
    %v203 = vpop.f32.mrb[0].mxu0
    %v204 = vadd.f32 0.0, %v203
    %v205 = vpop.f32.mrb[0].mxu0
    %206 = vmatprep.mubr.f32.mxu0 %v43
    %207 = vmatmul.mubr.f32.gmra.mrb[0].mxu0 %v42
    %v208 = vpop.f32.mrb[0].mxu0
    %v209 = vadd.f32 0.0, %v208
    %v210 = vpop.f32.mrb[0].mxu0
    %211 = vmatprep.mubr.f32.mxu0 %v45
    %212 = vmatmul.mubr.f32.gmra.mrb[0].mxu0 %v44
    %v213 = vpop.f32.mrb[0].mxu0
    %v214 = vadd.f32 0.0, %v213
    %v215 = vpop.f32.mrb[0].mxu0
    %216 = vmatprep.mubr.f32.mxu0 %v47
    %217 = vmatmul.mubr.f32.gmra.mrb[0].mxu0 %v46
    %v218 = vpop.f32.mrb[0].mxu0
    %v219 = vadd.f32 0.0, %v218
    %v220 = vpop.f32.mrb[0].mxu0
    %221 = vmatprep.mubr.f32.mxu0 %v49
    %222 = vmatmul.mubr.f32.gmra.mrb[0].mxu0 %v48
    %v223 = vpop.f32.mrb[0].mxu0
    %v224 = vadd.f32 0.0, %v223
    %v225 = vpop.f32.mrb[0].mxu0
    %226 = vdwg.mxu0
    %227 = vadd.xlane.f32.xlu0 %v149
    %v228 = vpop.xlane.xlu0 %227
    %229 = vadd.xlane.f32.xlu0 %v154
    %v230 = vpop.xlane.xlu0 %229
    %231 = vadd.xlane.f32.xlu0 %v159
    %v232 = vpop.xlane.xlu0 %231
    %233 = vadd.xlane.f32.xlu0 %v164
    %v234 = vpop.xlane.xlu0 %233
    %235 = vadd.xlane.f32.xlu0 %v169
    %v236 = vpop.xlane.xlu0 %235
    %237 = vadd.xlane.f32.xlu0 %v174
    %v238 = vpop.xlane.xlu0 %237
    %239 = vadd.xlane.f32.xlu0 %v179
    %v240 = vpop.xlane.xlu0 %239
    %241 = vadd.xlane.f32.xlu0 %v184
    %v242 = vpop.xlane.xlu0 %241
    %243 = vadd.xlane.f32.xlu0 %v189
    %v244 = vpop.xlane.xlu0 %243
    %245 = vadd.xlane.f32.xlu0 %v194
    %v246 = vpop.xlane.xlu0 %245
    %247 = vadd.xlane.f32.xlu0 %v199
    %v248 = vpop.xlane.xlu0 %247
    %249 = vadd.xlane.f32.xlu0 %v204
    %v250 = vpop.xlane.xlu0 %249
    %251 = vadd.xlane.f32.xlu0 %v209
    %v252 = vpop.xlane.xlu0 %251
    %253 = vadd.xlane.f32.xlu0 %v214
    %v254 = vpop.xlane.xlu0 %253
    %255 = vadd.xlane.f32.xlu0 %v219
    %v256 = vpop.xlane.xlu0 %255
    %257 = vadd.xlane.f32.xlu0 %v224
    %v258 = vpop.xlane.xlu0 %257
    %v259 = vrcp.pop 128.0
    %v260 = vmul.f32 %v228, %v259
    %v261 = vmul.f32 %v230, %v259
    %v262 = vmul.f32 %v232, %v259
    %v263 = vmul.f32 %v234, %v259
    %v264 = vmul.f32 %v236, %v259
    %v265 = vmul.f32 %v238, %v259
    %v266 = vmul.f32 %v240, %v259
    %v267 = vmul.f32 %v242, %v259
    %v268 = vmul.f32 %v244, %v259
    %v269 = vmul.f32 %v246, %v259
    %v270 = vmul.f32 %v248, %v259
    %v271 = vmul.f32 %v250, %v259
    %v272 = vmul.f32 %v252, %v259
    %v273 = vmul.f32 %v254, %v259
    %v274 = vmul.f32 %v256, %v259
    %v275 = vmul.f32 %v258, %v259
    %v276 = vld [vmem:[%s2] sm:$0xff]
    %v277 = vld [vmem:[%s2 + $0x8] sm:$0xff]
    %v278 = vld [vmem:[%s2 + $0x10] sm:$0xff]
    %v279 = vld [vmem:[%s2 + $0x18] sm:$0xff]
    %v280 = vld [vmem:[%s2 + $0x20] sm:$0xff]
    %v281 = vld [vmem:[%s2 + $0x28] sm:$0xff]
    %v282 = vld [vmem:[%s2 + $0x30] sm:$0xff]
    %v283 = vld [vmem:[%s2 + $0x38] sm:$0xff]
    %v284 = vld [vmem:[%s3] sm:$0x1]
    %v285 = vmul.f32 %v260, %v276
    %v286 = vmul.f32 %v261, %v277
    %v287 = vmul.f32 %v262, %v278
    %v288 = vmul.f32 %v263, %v279
    %v289 = vmul.f32 %v264, %v280
    %v290 = vmul.f32 %v265, %v281
    %v291 = vmul.f32 %v266, %v282
    %v292 = vmul.f32 %v267, %v283
    %vm293 = vcmask 48128
    %v294 = vsel %vm293, %v285, 0.0
    %v295 = vsel %vm293, %v286, 0.0
    %v296 = vadd.f32 %v294, %v295
    %v297 = vsel %vm293, %v287, 0.0
    %v298 = vadd.f32 %v296, %v297
    %v299 = vsel %vm293, %v288, 0.0
    %v300 = vadd.f32 %v298, %v299
    %v301 = vsel %vm293, %v289, 0.0
    %v302 = vadd.f32 %v300, %v301
    %v303 = vsel %vm293, %v290, 0.0
    %v304 = vadd.f32 %v302, %v303
    %v305 = vsel %vm293, %v291, 0.0
    %v306 = vadd.f32 %v304, %v305
    %v307 = vsel %vm293, %v292, 0.0
    %v308 = vadd.f32 %v306, %v307
    %v309 = vrot.slane %v308, 4
    %v310 = vadd.f32 %v308, %v309
    %v311 = vrot.slane %v310, 2
    %v312 = vadd.f32 %v310, %v311
    %v313 = vrot.slane %v312, 1
    %v314 = vadd.f32 %v312, %v313
    %v315 = vadd.f32 %v314, %v284
    %vm316 = vcmask 40960
    %317 = vst.msk [vmem:[#allocation2] sm:$0x1] %vm316, %v315
    %v318 = vmul.f32 %v268, %v276
    %v319 = vmul.f32 %v269, %v277
    %v320 = vmul.f32 %v270, %v278
    %v321 = vmul.f32 %v271, %v279
    %v322 = vmul.f32 %v272, %v280
    %v323 = vmul.f32 %v273, %v281
    %v324 = vmul.f32 %v274, %v282
    %v325 = vmul.f32 %v275, %v283
    %v326 = vsel %vm293, %v318, 0.0
    %v327 = vsel %vm293, %v319, 0.0
    %v328 = vadd.f32 %v326, %v327
    %v329 = vsel %vm293, %v320, 0.0
    %v330 = vadd.f32 %v328, %v329
    %v331 = vsel %vm293, %v321, 0.0
    %v332 = vadd.f32 %v330, %v331
    %v333 = vsel %vm293, %v322, 0.0
    %v334 = vadd.f32 %v332, %v333
    %v335 = vsel %vm293, %v323, 0.0
    %v336 = vadd.f32 %v334, %v335
    %v337 = vsel %vm293, %v324, 0.0
    %v338 = vadd.f32 %v336, %v337
    %v339 = vsel %vm293, %v325, 0.0
    %v340 = vadd.f32 %v338, %v339
    %v341 = vrot.slane %v340, 4
    %v342 = vadd.f32 %v340, %v341
    %v343 = vrot.slane %v342, 2
    %v344 = vadd.f32 %v342, %v343
    %v345 = vrot.slane %v344, 1
    %v346 = vadd.f32 %v344, %v345
    %v347 = vadd.f32 %v346, %v284
    %348 = vst.msk [vmem:[#allocation2 + $0x1] sm:$0x1] %vm316, %v347
    // Predicated region
    $region18: #{swin_model.11} parent=1 // pred_check
      _
    $region19: #{swin_model.11} parent=1 // pred_check_branch
      %350 = sbr.rel (0) target = $region21
    $region20: #{swin_model.11} parent=1 // pred_region
      %s352 = ssub.s32 32, 32
      %353 = vsyncadd [#allocation3], %s352
      %s355 = sshll.u32 [#allocation2], 4
      %s356 = int_to_ptr.vmem [resolvable:$true] %s355
      %358 = dma.vmem_to_hbm [thread:$0]  %s356, 32, %s4, [#allocation3]
    $region21: #{swin_model.11} parent=1 // pred_fallthru
      _
    // Predicated region
    $region22: #{swin_model.11} parent=1 // pred_check
      _
    $region23: #{swin_model.11} parent=1 // pred_check_branch
      %360 = sbr.rel (0) target = $region25
    $region24: #{swin_model.11} parent=1 // pred_region
      %361 = dma.done [#allocation3], 32
    $region25: #{swin_model.11} parent=1 // pred_fallthru
      _
    %362 = vsyncpa [#allocation3], 1

</llo_original>
